<compile_context>
chip_gen: v7x
topology: tpu7x:2x2x1
jax: 0.10.0
libtpu: 0.0.40
codegen_flags: <defaults>
</compile_context>

<pallas_src>
import functools

import jax
import jax.numpy as jnp
import numpy as np
from jax import lax
from jax.experimental import pallas as pl
from jax.experimental.pallas import tpu as pltpu

N_ACTIONS = 7
HEAD_PAD = 128      # merged actor+critic output padded to a full 128-lane store
MARGIN = 24         # >= (W+2)+1 row margin for the shifted conv reads; multiple of 8
HI = lax.Precision.HIGHEST   # used only by the pure-JAX reference


def _const_spec(shape):
    """Full-array block whose index is the same for every grid step (weights/mask)."""
    n = len(shape)
    return pl.BlockSpec(shape, lambda i, d, _n=n: (0,) * _n)


# ------------------------- fused Pallas kernel -------------------------

def _conv3x3_relu(read, w_ref, b_ref, mask, pw):
    """3x3 SAME conv + ReLU on a zero-padded, row-flattened (P, cin) image.

    read(s) returns rows [s, s+P) of the zero-margined input (the image
    shifted by s flattened rows).  w_ref is (9, cin, cout) tap-major,
    b_ref is (1, cout).  Non-interior rows are zeroed afterwards, which both
    implements zero padding for the next conv and keeps the avg-pool exact.
    """
    p, cout = mask.shape[0], w_ref.shape[2]
    acc = jnp.zeros((p, cout), jnp.float32)
    for kh in range(3):
        for kw in range(3):
            s = (kh - 1) * pw + (kw - 1)
            acc = acc + jnp.dot(read(s), w_ref[kh * 3 + kw],
                                preferred_element_type=jnp.float32)
    y = jnp.maximum(acc + b_ref[...], 0.0)
    return jnp.where(mask, y, 0.0)


def _fused_forward_kernel(H, W,
                          dir_ref,                       # scalar prefetch: (B,) int32 in SMEM
                          x_ref, mask_ref,               # (BUF, 3), (P, 1)
                          w1_ref, b1_ref, w2_ref, b2_ref, emb_ref,
                          w1i_ref, w1d_ref, bf1_ref, wf2_ref, bf2_ref,
                          wh_ref, bh_ref,
                          out_ref,                       # (1, HEAD_PAD)
                          ybuf_ref):                     # VMEM scratch (BUF, 16)
    pw = W + 2
    p = (H + 2) * pw
    m = MARGIN

    mask = mask_ref[...] != 0.0                                        # (P, 1) bool

    # conv1: Conv2d(3, 16, 3, padding=1) + ReLU -- 9 shifted views of the
    # zero-margined input block, read with static slices.
    y1 = _conv3x3_relu(lambda s: x_ref[m + s:m + s + p, :],
                       w1_ref, b1_ref, mask, pw)                       # (P, 16)

    # stage y1 in VMEM scratch (zero margins), then conv2: Conv2d(16, 32, 3) + ReLU.
    ybuf_ref[0:m, :] = jnp.zeros((m, 16), jnp.float32)
    ybuf_ref[m + p:m + p + m, :] = jnp.zeros((m, 16), jnp.float32)
    ybuf_ref[m:m + p, :] = y1
    y2 = _conv3x3_relu(lambda s: ybuf_ref[m + s:m + s + p, :],
                       w2_ref, b2_ref, mask, pw)                       # (P, 32)

    # AdaptiveAvgPool2d((1,1)) + Flatten: mean over the H*W interior rows
    # (padding rows of y2 are exactly zero, so summing all rows is exact).
    pooled = jnp.sum(y2, axis=0, keepdims=True) * (1.0 / (H * W))      # (1, 32)

    # nn.Embedding(4, 8): one-hot(direction) @ table, direction scalar from SMEM.
    d = dir_ref[pl.program_id(0)]
    onehot = (lax.broadcasted_iota(jnp.int32, (1, 4), 1) == d).astype(jnp.float32)
    dir_feat = jnp.dot(onehot, emb_ref[...], preferred_element_type=jnp.float32)   # (1, 8)

    # shared MLP; concat([pooled, dir_feat]) @ W1 == pooled @ W1[:32] + dir @ W1[32:].
    h1 = jnp.dot(pooled, w1i_ref[...], preferred_element_type=jnp.float32)
    h1 = h1 + jnp.dot(dir_feat, w1d_ref[...], preferred_element_type=jnp.float32)
    h1 = jnp.maximum(h1 + bf1_ref[...], 0.0)                           # (1, 128)
    h2 = jnp.dot(h1, wf2_ref[...], preferred_element_type=jnp.float32)
    h2 = jnp.maximum(h2 + bf2_ref[...], 0.0)                           # (1, 64)

    # merged actor+critic head: lanes [0:7] = logits, lane [7] = value, rest zero.
    out_ref[...] = (jnp.dot(h2, wh_ref[...], preferred_element_type=jnp.float32)
                    + bh_ref[...])


# ------------------------- wrapper -------------------------

def pallas_forward(kp, image_nhwc, direction, n_actions=N_ACTIONS):
    B, H, W, C = image_nhwc.shape
    ph, pw = H + 2, W + 2
    p = ph * pw
    buf = p + 2 * MARGIN

    # Input prep only (no intermediate HBM round-trips): SAME zero-pad, flatten
    # spatial to rows, add a zero row margin so the 9 shifted conv views are
    # plain static slices inside the kernel.
    x = image_nhwc.astype(jnp.float32)
    xpad = jnp.pad(x, ((0, 0), (1, 1), (1, 1), (0, 0))).reshape(B, p, C)
    xpad = jnp.pad(xpad, ((0, 0), (MARGIN, MARGIN), (0, 0)))           # (B, buf, C)
    dir_s = direction.astype(jnp.int32).reshape(B)

    m2d = np.zeros((ph, pw), np.float32)
    m2d[1:H + 1, 1:W + 1] = 1.0
    mask = jnp.asarray(m2d.reshape(p, 1))                              # interior mask

    weights = (kp["w1_taps"], kp["b1"], kp["w2_taps"], kp["b2"], kp["emb"],
               kp["w1_img"], kp["w1_dir"], kp["b_fc1"],
               kp["w_fc2"], kp["b_fc2"], kp["w_head"], kp["b_head"])

    grid_spec = pltpu.PrefetchScalarGridSpec(
        num_scalar_prefetch=1,                        # direction -> SMEM
        grid=(B,),                                    # one image per grid step
        in_specs=[pl.BlockSpec((None, buf, C), lambda i, d: (i, 0, 0))]
                 + [_const_spec(mask.shape)]
                 + [_const_spec(w.shape) for w in weights],
        out_specs=pl.BlockSpec((None, 1, HEAD_PAD), lambda i, d: (i, 0, 0)),
        scratch_shapes=[pltpu.VMEM((buf, 16), jnp.float32)],
    )

    out = pl.pallas_call(
        functools.partial(_fused_forward_kernel, H, W),
        out_shape=jax.ShapeDtypeStruct((B, 1, HEAD_PAD), jnp.float32),
        grid_spec=grid_spec,
        compiler_params=pltpu.CompilerParams(
            dimension_semantics=("parallel",)),       # shard batch across v7x's 2 TCs
    )(dir_s, xpad, mask, *weights)

    out = out[:, 0, :]
    return out[:, :n_actions], out[:, n_actions]      # logits, value.squeeze(-1)


# ------------------------- parameters -------------------------

def init_params(key, n_actions=N_ACTIONS):
    ks = jax.random.split(key, 13)

    def dense(k, shape, fan_in):
        return jax.random.normal(k, shape, jnp.float32) / np.sqrt(fan_in)

    # PyTorch-layout parameters (conv: OIHW, linear: (out, in)).
    tp = dict(
        conv1_w=dense(ks[0], (16, 3, 3, 3), 27),
        conv1_b=dense(ks[1], (16,), 27),
        conv2_w=dense(ks[2], (32, 16, 3, 3), 144),
        conv2_b=dense(ks[3], (32,), 144),
        emb=jax.random.normal(ks[4], (4, 8), jnp.float32),
        fc1_w=dense(ks[5], (128, 40), 40),
        fc1_b=dense(ks[6], (128,), 40),
        fc2_w=dense(ks[7], (64, 128), 128),
        fc2_b=dense(ks[8], (64,), 128),
        actor_w=dense(ks[9], (n_actions, 64), 64),
        actor_b=dense(ks[10], (n_actions,), 64),
        critic_w=dense(ks[11], (1, 64), 64),
        critic_b=dense(ks[12], (1,), 64),
    )

    # Kernel-layout parameters.
    fc1_wT = tp["fc1_w"].T                                             # (40, 128)
    head_w = jnp.zeros((64, HEAD_PAD), jnp.float32)
    head_w = head_w.at[:, :n_actions].set(tp["actor_w"].T)
    head_w = head_w.at[:, n_actions:n_actions + 1].set(tp["critic_w"].T)
    head_b = jnp.zeros((1, HEAD_PAD), jnp.float32)
    head_b = head_b.at[0, :n_actions].set(tp["actor_b"])
    head_b = head_b.at[0, n_actions].set(tp["critic_b"][0])

    kp = dict(
        w1_taps=jnp.transpose(tp["conv1_w"], (2, 3, 1, 0)).reshape(9, 3, 16),
        b1=tp["conv1_b"].reshape(1, 16),
        w2_taps=jnp.transpose(tp["conv2_w"], (2, 3, 1, 0)).reshape(9, 16, 32),
        b2=tp["conv2_b"].reshape(1, 32),
        emb=tp["emb"],
        w1_img=fc1_wT[:32], w1_dir=fc1_wT[32:], b_fc1=tp["fc1_b"].reshape(1, 128),
        w_fc2=tp["fc2_w"].T, b_fc2=tp["fc2_b"].reshape(1, 64),
        w_head=head_w, b_head=head_b,
    )
    return tp, kp


# ------------------------- pure-JAX reference (ground truth) -------------------------

def reference_forward(tp, image_nhwc, direction):
    x = image_nhwc.astype(jnp.float32)
    dn = ("NHWC", "HWIO", "NHWC")
    w1 = jnp.transpose(tp["conv1_w"], (2, 3, 1, 0))
    y = lax.conv_general_dilated(x, w1, (1, 1), "SAME",
                                 dimension_numbers=dn, precision=HI)
    y = jnp.maximum(y + tp["conv1_b"], 0.0)
    w2 = jnp.transpose(tp["conv2_w"], (2, 3, 1, 0))
    y = lax.conv_general_dilated(y, w2, (1, 1), "SAME",
                                 dimension_numbers=dn, precision=HI)
    y = jnp.maximum(y + tp["conv2_b"], 0.0)
    pooled = jnp.mean(y, axis=(1, 2))                                  # (B, 32)
    dir_feat = tp["emb"][direction.astype(jnp.int32)]                  # (B, 8)
    comb = jnp.concatenate([pooled, dir_feat], axis=-1)                # (B, 40)
    h1 = jnp.maximum(jnp.dot(comb, tp["fc1_w"].T, precision=HI) + tp["fc1_b"], 0.0)
    h2 = jnp.maximum(jnp.dot(h1, tp["fc2_w"].T, precision=HI) + tp["fc2_b"], 0.0)
    logits = jnp.dot(h2, tp["actor_w"].T, precision=HI) + tp["actor_b"]
    value = (jnp.dot(h2, tp["critic_w"].T, precision=HI) + tp["critic_b"])[:, 0]
    return logits, value


# ------------------------- main -------------------------

if __name__ == "__main__":
    key = jax.random.PRNGKey(0)
    k_img, k_dir, k_par = jax.random.split(key, 3)

    B, H, W = 2, 16, 16
    image = jax.random.uniform(k_img, (B, H, W, 3), jnp.float32)       # NHWC obs image
    direction = jax.random.randint(k_dir, (B,), 0, 4, jnp.int32)

    torch_params, kernel_params = init_params(k_par)

    fwd = jax.jit(functools.partial(pallas_forward, kernel_params))
    logits, value = fwd(image, direction)
    jax.block_until_ready((logits, value))

    ref_logits, ref_value = reference_forward(torch_params, image, direction)
    np.testing.assert_allclose(np.asarray(logits), np.asarray(ref_logits),
                               rtol=2e-2, atol=2e-2)
    np.testing.assert_allclose(np.asarray(value), np.asarray(ref_value),
                               rtol=2e-2, atol=2e-2)
    assert logits.shape == (B, N_ACTIONS) and value.shape == (B,)

    print("KERNEL_OK")
</pallas_src>

<mosaic_0001>
module attributes {stable_mosaic.version = 11 : i64} {
  func.func @_fused_forward_kernel(%arg0: i32, %arg1: memref<2xi32, #tpu.memory_space<smem>>, %arg2: memref<1x372x3xf32, #tpu.memory_space<vmem>>, %arg3: memref<324x1xf32, #tpu.memory_space<vmem>>, %arg4: memref<9x3x16xf32, #tpu.memory_space<vmem>>, %arg5: memref<1x16xf32, #tpu.memory_space<vmem>>, %arg6: memref<9x16x32xf32, #tpu.memory_space<vmem>>, %arg7: memref<1x32xf32, #tpu.memory_space<vmem>>, %arg8: memref<4x8xf32, #tpu.memory_space<vmem>>, %arg9: memref<32x128xf32, #tpu.memory_space<vmem>>, %arg10: memref<8x128xf32, #tpu.memory_space<vmem>>, %arg11: memref<1x128xf32, #tpu.memory_space<vmem>>, %arg12: memref<128x64xf32, #tpu.memory_space<vmem>>, %arg13: memref<1x64xf32, #tpu.memory_space<vmem>>, %arg14: memref<64x128xf32, #tpu.memory_space<vmem>>, %arg15: memref<1x128xf32, #tpu.memory_space<vmem>>, %arg16: memref<1x1x128xf32, #tpu.memory_space<vmem>>, %arg17: memref<372x16xf32, #tpu.memory_space<vmem>>) attributes {dimension_semantics = [#tpu.dimension_semantics<parallel>], iteration_bounds = array<i64: 2>, scalar_prefetch = 1 : i64, scratch_operands = 1 : i64, tpu.core_type = #tpu.core_type<tc>, window_params = [{transform_indices = @transform_0, window_bounds = array<i64: 1, 372, 3>}, {pipeline_mode = #tpu.pipeline_mode<synchronous>, transform_indices = @transform_1, window_bounds = array<i64: 324, 1>}, {pipeline_mode = #tpu.pipeline_mode<synchronous>, transform_indices = @transform_2, window_bounds = array<i64: 9, 3, 16>}, {pipeline_mode = #tpu.pipeline_mode<synchronous>, transform_indices = @transform_3, window_bounds = array<i64: 1, 16>}, {pipeline_mode = #tpu.pipeline_mode<synchronous>, transform_indices = @transform_4, window_bounds = array<i64: 9, 16, 32>}, {pipeline_mode = #tpu.pipeline_mode<synchronous>, transform_indices = @transform_5, window_bounds = array<i64: 1, 32>}, {pipeline_mode = #tpu.pipeline_mode<synchronous>, transform_indices = @transform_6, window_bounds = array<i64: 4, 8>}, {pipeline_mode = #tpu.pipeline_mode<synchronous>, transform_indices = @transform_7, window_bounds = array<i64: 32, 128>}, {pipeline_mode = #tpu.pipeline_mode<synchronous>, transform_indices = @transform_8, window_bounds = array<i64: 8, 128>}, {pipeline_mode = #tpu.pipeline_mode<synchronous>, transform_indices = @transform_9, window_bounds = array<i64: 1, 128>}, {pipeline_mode = #tpu.pipeline_mode<synchronous>, transform_indices = @transform_10, window_bounds = array<i64: 128, 64>}, {pipeline_mode = #tpu.pipeline_mode<synchronous>, transform_indices = @transform_11, window_bounds = array<i64: 1, 64>}, {pipeline_mode = #tpu.pipeline_mode<synchronous>, transform_indices = @transform_12, window_bounds = array<i64: 64, 128>}, {pipeline_mode = #tpu.pipeline_mode<synchronous>, transform_indices = @transform_13, window_bounds = array<i64: 1, 128>}, {transform_indices = @transform_14, window_bounds = array<i64: 1, 1, 128>}]} {
    %c0 = arith.constant 0 : index
    %c0_0 = arith.constant 0 : index
    %0 = vector.load %arg3[%c0, %c0_0] : memref<324x1xf32, #tpu.memory_space<vmem>>, vector<324x1xf32>
    %cst = arith.constant 0.000000e+00 : f32
    %1 = vector.broadcast %cst : f32 to vector<324x1xf32>
    %2 = arith.cmpf one, %0, %1 : vector<324x1xf32>
    %cst_1 = arith.constant 0.000000e+00 : f32
    %3 = vector.broadcast %cst_1 : f32 to vector<324x16xf32>
    %c0_2 = arith.constant 0 : index
    %c5 = arith.constant 5 : index
    %c0_3 = arith.constant 0 : index
    %4 = vector.load %arg2[%c0_2, %c5, %c0_3] : memref<1x372x3xf32, #tpu.memory_space<vmem>>, vector<1x324x3xf32>
    %5 = vector.shape_cast %4 : vector<1x324x3xf32> to vector<324x3xf32>
    %c0_4 = arith.constant 0 : index
    %c0_5 = arith.constant 0 : index
    %c0_6 = arith.constant 0 : index
    %6 = vector.load %arg4[%c0_4, %c0_5, %c0_6] : memref<9x3x16xf32, #tpu.memory_space<vmem>>, vector<1x3x16xf32>
    %7 = vector.shape_cast %6 : vector<1x3x16xf32> to vector<3x16xf32>
    %cst_7 = arith.constant dense<0.000000e+00> : vector<324x16xf32>
    %8 = tpu.matmul %5, %7, %cst_7 {dimension_numbers = #tpu.dot_dimension_numbers<[1], [0], [0], [1], [0, 0, 1, 1], [], []>} : vector<324x3xf32>, vector<3x16xf32>, vector<324x16xf32> -> vector<324x16xf32>
    %9 = arith.addf %3, %8 : vector<324x16xf32>
    %c0_8 = arith.constant 0 : index
    %c6 = arith.constant 6 : index
    %c0_9 = arith.constant 0 : index
    %10 = vector.load %arg2[%c0_8, %c6, %c0_9] : memref<1x372x3xf32, #tpu.memory_space<vmem>>, vector<1x324x3xf32>
    %11 = vector.shape_cast %10 : vector<1x324x3xf32> to vector<324x3xf32>
    %c1 = arith.constant 1 : index
    %c0_10 = arith.constant 0 : index
    %c0_11 = arith.constant 0 : index
    %12 = vector.load %arg4[%c1, %c0_10, %c0_11] : memref<9x3x16xf32, #tpu.memory_space<vmem>>, vector<1x3x16xf32>
    %13 = vector.shape_cast %12 : vector<1x3x16xf32> to vector<3x16xf32>
    %cst_12 = arith.constant dense<0.000000e+00> : vector<324x16xf32>
    %14 = tpu.matmul %11, %13, %cst_12 {dimension_numbers = #tpu.dot_dimension_numbers<[1], [0], [0], [1], [0, 0, 1, 1], [], []>} : vector<324x3xf32>, vector<3x16xf32>, vector<324x16xf32> -> vector<324x16xf32>
    %15 = arith.addf %9, %14 : vector<324x16xf32>
    %c0_13 = arith.constant 0 : index
    %c7 = arith.constant 7 : index
    %c0_14 = arith.constant 0 : index
    %16 = vector.load %arg2[%c0_13, %c7, %c0_14] : memref<1x372x3xf32, #tpu.memory_space<vmem>>, vector<1x324x3xf32>
    %17 = vector.shape_cast %16 : vector<1x324x3xf32> to vector<324x3xf32>
    %c2 = arith.constant 2 : index
    %c0_15 = arith.constant 0 : index
    %c0_16 = arith.constant 0 : index
    %18 = vector.load %arg4[%c2, %c0_15, %c0_16] : memref<9x3x16xf32, #tpu.memory_space<vmem>>, vector<1x3x16xf32>
    %19 = vector.shape_cast %18 : vector<1x3x16xf32> to vector<3x16xf32>
    %cst_17 = arith.constant dense<0.000000e+00> : vector<324x16xf32>
    %20 = tpu.matmul %17, %19, %cst_17 {dimension_numbers = #tpu.dot_dimension_numbers<[1], [0], [0], [1], [0, 0, 1, 1], [], []>} : vector<324x3xf32>, vector<3x16xf32>, vector<324x16xf32> -> vector<324x16xf32>
    %21 = arith.addf %15, %20 : vector<324x16xf32>
    %c0_18 = arith.constant 0 : index
    %c23 = arith.constant 23 : index
    %c0_19 = arith.constant 0 : index
    %22 = vector.load %arg2[%c0_18, %c23, %c0_19] : memref<1x372x3xf32, #tpu.memory_space<vmem>>, vector<1x324x3xf32>
    %23 = vector.shape_cast %22 : vector<1x324x3xf32> to vector<324x3xf32>
    %c3 = arith.constant 3 : index
    %c0_20 = arith.constant 0 : index
    %c0_21 = arith.constant 0 : index
    %24 = vector.load %arg4[%c3, %c0_20, %c0_21] : memref<9x3x16xf32, #tpu.memory_space<vmem>>, vector<1x3x16xf32>
    %25 = vector.shape_cast %24 : vector<1x3x16xf32> to vector<3x16xf32>
    %cst_22 = arith.constant dense<0.000000e+00> : vector<324x16xf32>
    %26 = tpu.matmul %23, %25, %cst_22 {dimension_numbers = #tpu.dot_dimension_numbers<[1], [0], [0], [1], [0, 0, 1, 1], [], []>} : vector<324x3xf32>, vector<3x16xf32>, vector<324x16xf32> -> vector<324x16xf32>
    %27 = arith.addf %21, %26 : vector<324x16xf32>
    %c0_23 = arith.constant 0 : index
    %c24 = arith.constant 24 : index
    %c0_24 = arith.constant 0 : index
    %28 = vector.load %arg2[%c0_23, %c24, %c0_24] : memref<1x372x3xf32, #tpu.memory_space<vmem>>, vector<1x324x3xf32>
    %29 = vector.shape_cast %28 : vector<1x324x3xf32> to vector<324x3xf32>
    %c4 = arith.constant 4 : index
    %c0_25 = arith.constant 0 : index
    %c0_26 = arith.constant 0 : index
    %30 = vector.load %arg4[%c4, %c0_25, %c0_26] : memref<9x3x16xf32, #tpu.memory_space<vmem>>, vector<1x3x16xf32>
    %31 = vector.shape_cast %30 : vector<1x3x16xf32> to vector<3x16xf32>
    %cst_27 = arith.constant dense<0.000000e+00> : vector<324x16xf32>
    %32 = tpu.matmul %29, %31, %cst_27 {dimension_numbers = #tpu.dot_dimension_numbers<[1], [0], [0], [1], [0, 0, 1, 1], [], []>} : vector<324x3xf32>, vector<3x16xf32>, vector<324x16xf32> -> vector<324x16xf32>
    %33 = arith.addf %27, %32 : vector<324x16xf32>
    %c0_28 = arith.constant 0 : index
    %c25 = arith.constant 25 : index
    %c0_29 = arith.constant 0 : index
    %34 = vector.load %arg2[%c0_28, %c25, %c0_29] : memref<1x372x3xf32, #tpu.memory_space<vmem>>, vector<1x324x3xf32>
    %35 = vector.shape_cast %34 : vector<1x324x3xf32> to vector<324x3xf32>
    %c5_30 = arith.constant 5 : index
    %c0_31 = arith.constant 0 : index
    %c0_32 = arith.constant 0 : index
    %36 = vector.load %arg4[%c5_30, %c0_31, %c0_32] : memref<9x3x16xf32, #tpu.memory_space<vmem>>, vector<1x3x16xf32>
    %37 = vector.shape_cast %36 : vector<1x3x16xf32> to vector<3x16xf32>
    %cst_33 = arith.constant dense<0.000000e+00> : vector<324x16xf32>
    %38 = tpu.matmul %35, %37, %cst_33 {dimension_numbers = #tpu.dot_dimension_numbers<[1], [0], [0], [1], [0, 0, 1, 1], [], []>} : vector<324x3xf32>, vector<3x16xf32>, vector<324x16xf32> -> vector<324x16xf32>
    %39 = arith.addf %33, %38 : vector<324x16xf32>
    %c0_34 = arith.constant 0 : index
    %c41 = arith.constant 41 : index
    %c0_35 = arith.constant 0 : index
    %40 = vector.load %arg2[%c0_34, %c41, %c0_35] : memref<1x372x3xf32, #tpu.memory_space<vmem>>, vector<1x324x3xf32>
    %41 = vector.shape_cast %40 : vector<1x324x3xf32> to vector<324x3xf32>
    %c6_36 = arith.constant 6 : index
    %c0_37 = arith.constant 0 : index
    %c0_38 = arith.constant 0 : index
    %42 = vector.load %arg4[%c6_36, %c0_37, %c0_38] : memref<9x3x16xf32, #tpu.memory_space<vmem>>, vector<1x3x16xf32>
    %43 = vector.shape_cast %42 : vector<1x3x16xf32> to vector<3x16xf32>
    %cst_39 = arith.constant dense<0.000000e+00> : vector<324x16xf32>
    %44 = tpu.matmul %41, %43, %cst_39 {dimension_numbers = #tpu.dot_dimension_numbers<[1], [0], [0], [1], [0, 0, 1, 1], [], []>} : vector<324x3xf32>, vector<3x16xf32>, vector<324x16xf32> -> vector<324x16xf32>
    %45 = arith.addf %39, %44 : vector<324x16xf32>
    %c0_40 = arith.constant 0 : index
    %c42 = arith.constant 42 : index
    %c0_41 = arith.constant 0 : index
    %46 = vector.load %arg2[%c0_40, %c42, %c0_41] : memref<1x372x3xf32, #tpu.memory_space<vmem>>, vector<1x324x3xf32>
    %47 = vector.shape_cast %46 : vector<1x324x3xf32> to vector<324x3xf32>
    %c7_42 = arith.constant 7 : index
    %c0_43 = arith.constant 0 : index
    %c0_44 = arith.constant 0 : index
    %48 = vector.load %arg4[%c7_42, %c0_43, %c0_44] : memref<9x3x16xf32, #tpu.memory_space<vmem>>, vector<1x3x16xf32>
    %49 = vector.shape_cast %48 : vector<1x3x16xf32> to vector<3x16xf32>
    %cst_45 = arith.constant dense<0.000000e+00> : vector<324x16xf32>
    %50 = tpu.matmul %47, %49, %cst_45 {dimension_numbers = #tpu.dot_dimension_numbers<[1], [0], [0], [1], [0, 0, 1, 1], [], []>} : vector<324x3xf32>, vector<3x16xf32>, vector<324x16xf32> -> vector<324x16xf32>
    %51 = arith.addf %45, %50 : vector<324x16xf32>
    %c0_46 = arith.constant 0 : index
    %c43 = arith.constant 43 : index
    %c0_47 = arith.constant 0 : index
    %52 = vector.load %arg2[%c0_46, %c43, %c0_47] : memref<1x372x3xf32, #tpu.memory_space<vmem>>, vector<1x324x3xf32>
    %53 = vector.shape_cast %52 : vector<1x324x3xf32> to vector<324x3xf32>
    %c8 = arith.constant 8 : index
    %c0_48 = arith.constant 0 : index
    %c0_49 = arith.constant 0 : index
    %54 = vector.load %arg4[%c8, %c0_48, %c0_49] : memref<9x3x16xf32, #tpu.memory_space<vmem>>, vector<1x3x16xf32>
    %55 = vector.shape_cast %54 : vector<1x3x16xf32> to vector<3x16xf32>
    %cst_50 = arith.constant dense<0.000000e+00> : vector<324x16xf32>
    %56 = tpu.matmul %53, %55, %cst_50 {dimension_numbers = #tpu.dot_dimension_numbers<[1], [0], [0], [1], [0, 0, 1, 1], [], []>} : vector<324x3xf32>, vector<3x16xf32>, vector<324x16xf32> -> vector<324x16xf32>
    %57 = arith.addf %51, %56 : vector<324x16xf32>
    %c0_51 = arith.constant 0 : index
    %c0_52 = arith.constant 0 : index
    %58 = vector.load %arg5[%c0_51, %c0_52] : memref<1x16xf32, #tpu.memory_space<vmem>>, vector<1x16xf32>
    %59 = vector.broadcast %58 : vector<1x16xf32> to vector<324x16xf32>
    %60 = arith.addf %57, %59 : vector<324x16xf32>
    %cst_53 = arith.constant 0.000000e+00 : f32
    %61 = vector.broadcast %cst_53 : f32 to vector<324x16xf32>
    %62 = arith.maximumf %60, %61 : vector<324x16xf32>
    %cst_54 = arith.constant 0.000000e+00 : f32
    %63 = vector.shape_cast %2 : vector<324x1xi1> to vector<324x1xi1>
    %64 = vector.broadcast %63 : vector<324x1xi1> to vector<324x16xi1>
    %65 = vector.broadcast %cst_54 : f32 to vector<324x16xf32>
    %66 = arith.select %64, %62, %65 : vector<324x16xi1>, vector<324x16xf32>
    %cst_55 = arith.constant 0.000000e+00 : f32
    %67 = vector.broadcast %cst_55 : f32 to vector<24x16xf32>
    %c0_56 = arith.constant 0 : index
    %c0_57 = arith.constant 0 : index
    %68 = vector.load %arg17[%c0_56, %c0_57] : memref<372x16xf32, #tpu.memory_space<vmem>>, vector<24x16xf32>
    tpu.vector_store %arg17[%c0_56, %c0_57], %67 {strides = array<i32>} : memref<372x16xf32, #tpu.memory_space<vmem>>, vector<24x16xf32>,
    %cst_58 = arith.constant 0.000000e+00 : f32
    %69 = vector.broadcast %cst_58 : f32 to vector<24x16xf32>
    %c348 = arith.constant 348 : index
    %c0_59 = arith.constant 0 : index
    %70 = vector.load %arg17[%c348, %c0_59] : memref<372x16xf32, #tpu.memory_space<vmem>>, vector<24x16xf32>
    tpu.vector_store %arg17[%c348, %c0_59], %69 {strides = array<i32>} : memref<372x16xf32, #tpu.memory_space<vmem>>, vector<24x16xf32>,
    %c24_60 = arith.constant 24 : index
    %c0_61 = arith.constant 0 : index
    %71 = vector.load %arg17[%c24_60, %c0_61] : memref<372x16xf32, #tpu.memory_space<vmem>>, vector<324x16xf32>
    tpu.vector_store %arg17[%c24_60, %c0_61], %66 {strides = array<i32>} : memref<372x16xf32, #tpu.memory_space<vmem>>, vector<324x16xf32>,
    %cst_62 = arith.constant 0.000000e+00 : f32
    %72 = vector.broadcast %cst_62 : f32 to vector<324x32xf32>
    %c5_63 = arith.constant 5 : index
    %c0_64 = arith.constant 0 : index
    %73 = vector.load %arg17[%c5_63, %c0_64] : memref<372x16xf32, #tpu.memory_space<vmem>>, vector<324x16xf32>
    %c0_65 = arith.constant 0 : index
    %c0_66 = arith.constant 0 : index
    %c0_67 = arith.constant 0 : index
    %74 = vector.load %arg6[%c0_65, %c0_66, %c0_67] : memref<9x16x32xf32, #tpu.memory_space<vmem>>, vector<1x16x32xf32>
    %75 = vector.shape_cast %74 : vector<1x16x32xf32> to vector<16x32xf32>
    %cst_68 = arith.constant dense<0.000000e+00> : vector<324x32xf32>
    %76 = tpu.matmul %73, %75, %cst_68 {dimension_numbers = #tpu.dot_dimension_numbers<[1], [0], [0], [1], [0, 0, 1, 1], [], []>} : vector<324x16xf32>, vector<16x32xf32>, vector<324x32xf32> -> vector<324x32xf32>
    %77 = arith.addf %72, %76 : vector<324x32xf32>
    %c6_69 = arith.constant 6 : index
    %c0_70 = arith.constant 0 : index
    %78 = vector.load %arg17[%c6_69, %c0_70] : memref<372x16xf32, #tpu.memory_space<vmem>>, vector<324x16xf32>
    %c1_71 = arith.constant 1 : index
    %c0_72 = arith.constant 0 : index
    %c0_73 = arith.constant 0 : index
    %79 = vector.load %arg6[%c1_71, %c0_72, %c0_73] : memref<9x16x32xf32, #tpu.memory_space<vmem>>, vector<1x16x32xf32>
    %80 = vector.shape_cast %79 : vector<1x16x32xf32> to vector<16x32xf32>
    %cst_74 = arith.constant dense<0.000000e+00> : vector<324x32xf32>
    %81 = tpu.matmul %78, %80, %cst_74 {dimension_numbers = #tpu.dot_dimension_numbers<[1], [0], [0], [1], [0, 0, 1, 1], [], []>} : vector<324x16xf32>, vector<16x32xf32>, vector<324x32xf32> -> vector<324x32xf32>
    %82 = arith.addf %77, %81 : vector<324x32xf32>
    %c7_75 = arith.constant 7 : index
    %c0_76 = arith.constant 0 : index
    %83 = vector.load %arg17[%c7_75, %c0_76] : memref<372x16xf32, #tpu.memory_space<vmem>>, vector<324x16xf32>
    %c2_77 = arith.constant 2 : index
    %c0_78 = arith.constant 0 : index
    %c0_79 = arith.constant 0 : index
    %84 = vector.load %arg6[%c2_77, %c0_78, %c0_79] : memref<9x16x32xf32, #tpu.memory_space<vmem>>, vector<1x16x32xf32>
    %85 = vector.shape_cast %84 : vector<1x16x32xf32> to vector<16x32xf32>
    %cst_80 = arith.constant dense<0.000000e+00> : vector<324x32xf32>
    %86 = tpu.matmul %83, %85, %cst_80 {dimension_numbers = #tpu.dot_dimension_numbers<[1], [0], [0], [1], [0, 0, 1, 1], [], []>} : vector<324x16xf32>, vector<16x32xf32>, vector<324x32xf32> -> vector<324x32xf32>
    %87 = arith.addf %82, %86 : vector<324x32xf32>
    %c23_81 = arith.constant 23 : index
    %c0_82 = arith.constant 0 : index
    %88 = vector.load %arg17[%c23_81, %c0_82] : memref<372x16xf32, #tpu.memory_space<vmem>>, vector<324x16xf32>
    %c3_83 = arith.constant 3 : index
    %c0_84 = arith.constant 0 : index
    %c0_85 = arith.constant 0 : index
    %89 = vector.load %arg6[%c3_83, %c0_84, %c0_85] : memref<9x16x32xf32, #tpu.memory_space<vmem>>, vector<1x16x32xf32>
    %90 = vector.shape_cast %89 : vector<1x16x32xf32> to vector<16x32xf32>
    %cst_86 = arith.constant dense<0.000000e+00> : vector<324x32xf32>
    %91 = tpu.matmul %88, %90, %cst_86 {dimension_numbers = #tpu.dot_dimension_numbers<[1], [0], [0], [1], [0, 0, 1, 1], [], []>} : vector<324x16xf32>, vector<16x32xf32>, vector<324x32xf32> -> vector<324x32xf32>
    %92 = arith.addf %87, %91 : vector<324x32xf32>
    %c24_87 = arith.constant 24 : index
    %c0_88 = arith.constant 0 : index
    %93 = vector.load %arg17[%c24_87, %c0_88] : memref<372x16xf32, #tpu.memory_space<vmem>>, vector<324x16xf32>
    %c4_89 = arith.constant 4 : index
    %c0_90 = arith.constant 0 : index
    %c0_91 = arith.constant 0 : index
    %94 = vector.load %arg6[%c4_89, %c0_90, %c0_91] : memref<9x16x32xf32, #tpu.memory_space<vmem>>, vector<1x16x32xf32>
    %95 = vector.shape_cast %94 : vector<1x16x32xf32> to vector<16x32xf32>
    %cst_92 = arith.constant dense<0.000000e+00> : vector<324x32xf32>
    %96 = tpu.matmul %93, %95, %cst_92 {dimension_numbers = #tpu.dot_dimension_numbers<[1], [0], [0], [1], [0, 0, 1, 1], [], []>} : vector<324x16xf32>, vector<16x32xf32>, vector<324x32xf32> -> vector<324x32xf32>
    %97 = arith.addf %92, %96 : vector<324x32xf32>
    %c25_93 = arith.constant 25 : index
    %c0_94 = arith.constant 0 : index
    %98 = vector.load %arg17[%c25_93, %c0_94] : memref<372x16xf32, #tpu.memory_space<vmem>>, vector<324x16xf32>
    %c5_95 = arith.constant 5 : index
    %c0_96 = arith.constant 0 : index
    %c0_97 = arith.constant 0 : index
    %99 = vector.load %arg6[%c5_95, %c0_96, %c0_97] : memref<9x16x32xf32, #tpu.memory_space<vmem>>, vector<1x16x32xf32>
    %100 = vector.shape_cast %99 : vector<1x16x32xf32> to vector<16x32xf32>
    %cst_98 = arith.constant dense<0.000000e+00> : vector<324x32xf32>
    %101 = tpu.matmul %98, %100, %cst_98 {dimension_numbers = #tpu.dot_dimension_numbers<[1], [0], [0], [1], [0, 0, 1, 1], [], []>} : vector<324x16xf32>, vector<16x32xf32>, vector<324x32xf32> -> vector<324x32xf32>
    %102 = arith.addf %97, %101 : vector<324x32xf32>
    %c41_99 = arith.constant 41 : index
    %c0_100 = arith.constant 0 : index
    %103 = vector.load %arg17[%c41_99, %c0_100] : memref<372x16xf32, #tpu.memory_space<vmem>>, vector<324x16xf32>
    %c6_101 = arith.constant 6 : index
    %c0_102 = arith.constant 0 : index
    %c0_103 = arith.constant 0 : index
    %104 = vector.load %arg6[%c6_101, %c0_102, %c0_103] : memref<9x16x32xf32, #tpu.memory_space<vmem>>, vector<1x16x32xf32>
    %105 = vector.shape_cast %104 : vector<1x16x32xf32> to vector<16x32xf32>
    %cst_104 = arith.constant dense<0.000000e+00> : vector<324x32xf32>
    %106 = tpu.matmul %103, %105, %cst_104 {dimension_numbers = #tpu.dot_dimension_numbers<[1], [0], [0], [1], [0, 0, 1, 1], [], []>} : vector<324x16xf32>, vector<16x32xf32>, vector<324x32xf32> -> vector<324x32xf32>
    %107 = arith.addf %102, %106 : vector<324x32xf32>
    %c42_105 = arith.constant 42 : index
    %c0_106 = arith.constant 0 : index
    %108 = vector.load %arg17[%c42_105, %c0_106] : memref<372x16xf32, #tpu.memory_space<vmem>>, vector<324x16xf32>
    %c7_107 = arith.constant 7 : index
    %c0_108 = arith.constant 0 : index
    %c0_109 = arith.constant 0 : index
    %109 = vector.load %arg6[%c7_107, %c0_108, %c0_109] : memref<9x16x32xf32, #tpu.memory_space<vmem>>, vector<1x16x32xf32>
    %110 = vector.shape_cast %109 : vector<1x16x32xf32> to vector<16x32xf32>
    %cst_110 = arith.constant dense<0.000000e+00> : vector<324x32xf32>
    %111 = tpu.matmul %108, %110, %cst_110 {dimension_numbers = #tpu.dot_dimension_numbers<[1], [0], [0], [1], [0, 0, 1, 1], [], []>} : vector<324x16xf32>, vector<16x32xf32>, vector<324x32xf32> -> vector<324x32xf32>
    %112 = arith.addf %107, %111 : vector<324x32xf32>
    %c43_111 = arith.constant 43 : index
    %c0_112 = arith.constant 0 : index
    %113 = vector.load %arg17[%c43_111, %c0_112] : memref<372x16xf32, #tpu.memory_space<vmem>>, vector<324x16xf32>
    %c8_113 = arith.constant 8 : index
    %c0_114 = arith.constant 0 : index
    %c0_115 = arith.constant 0 : index
    %114 = vector.load %arg6[%c8_113, %c0_114, %c0_115] : memref<9x16x32xf32, #tpu.memory_space<vmem>>, vector<1x16x32xf32>
    %115 = vector.shape_cast %114 : vector<1x16x32xf32> to vector<16x32xf32>
    %cst_116 = arith.constant dense<0.000000e+00> : vector<324x32xf32>
    %116 = tpu.matmul %113, %115, %cst_116 {dimension_numbers = #tpu.dot_dimension_numbers<[1], [0], [0], [1], [0, 0, 1, 1], [], []>} : vector<324x16xf32>, vector<16x32xf32>, vector<324x32xf32> -> vector<324x32xf32>
    %117 = arith.addf %112, %116 : vector<324x32xf32>
    %c0_117 = arith.constant 0 : index
    %c0_118 = arith.constant 0 : index
    %118 = vector.load %arg7[%c0_117, %c0_118] : memref<1x32xf32, #tpu.memory_space<vmem>>, vector<1x32xf32>
    %119 = vector.broadcast %118 : vector<1x32xf32> to vector<324x32xf32>
    %120 = arith.addf %117, %119 : vector<324x32xf32>
    %cst_119 = arith.constant 0.000000e+00 : f32
    %121 = vector.broadcast %cst_119 : f32 to vector<324x32xf32>
    %122 = arith.maximumf %120, %121 : vector<324x32xf32>
    %cst_120 = arith.constant 0.000000e+00 : f32
    %123 = vector.shape_cast %2 : vector<324x1xi1> to vector<324x1xi1>
    %124 = vector.broadcast %123 : vector<324x1xi1> to vector<324x32xi1>
    %125 = vector.broadcast %cst_120 : f32 to vector<324x32xf32>
    %126 = arith.select %124, %122, %125 : vector<324x32xi1>, vector<324x32xf32>
    %cst_121 = arith.constant dense<0.000000e+00> : vector<32xf32>
    %127 = vector.multi_reduction <add>, %126, %cst_121 [0] : vector<324x32xf32> to vector<32xf32>
    %128 = vector.shape_cast %127 : vector<32xf32> to vector<1x32xf32>
    %cst_122 = arith.constant 3.906250e-03 : f32
    %129 = vector.broadcast %cst_122 : f32 to vector<1x32xf32>
    %130 = arith.mulf %128, %129 : vector<1x32xf32>
    %131 = arith.index_cast %arg0 : i32 to index
    %132 = memref.load %arg1[%131] : memref<2xi32, #tpu.memory_space<smem>>
    %133 = tpu.iota {dimensions = array<i32: 1>} : vector<1x4xi32>
    %134 = vector.broadcast %132 : i32 to vector<1x4xi32>
    %135 = arith.cmpi eq, %133, %134 : vector<1x4xi32>
    %136 = arith.extui %135 : vector<1x4xi1> to vector<1x4xi32>
    %137 = arith.sitofp %136 : vector<1x4xi32> to vector<1x4xf32>
    %c0_123 = arith.constant 0 : index
    %c0_124 = arith.constant 0 : index
    %138 = vector.load %arg8[%c0_123, %c0_124] : memref<4x8xf32, #tpu.memory_space<vmem>>, vector<4x8xf32>
    %cst_125 = arith.constant dense<0.000000e+00> : vector<1x8xf32>
    %139 = tpu.matmul %137, %138, %cst_125 {dimension_numbers = #tpu.dot_dimension_numbers<[1], [0], [0], [1], [0, 0, 1, 1], [], []>} : vector<1x4xf32>, vector<4x8xf32>, vector<1x8xf32> -> vector<1x8xf32>
    %c0_126 = arith.constant 0 : index
    %c0_127 = arith.constant 0 : index
    %140 = vector.load %arg9[%c0_126, %c0_127] : memref<32x128xf32, #tpu.memory_space<vmem>>, vector<32x128xf32>
    %cst_128 = arith.constant dense<0.000000e+00> : vector<1x128xf32>
    %141 = tpu.matmul %130, %140, %cst_128 {dimension_numbers = #tpu.dot_dimension_numbers<[1], [0], [0], [1], [0, 0, 1, 1], [], []>} : vector<1x32xf32>, vector<32x128xf32>, vector<1x128xf32> -> vector<1x128xf32>
    %c0_129 = arith.constant 0 : index
    %c0_130 = arith.constant 0 : index
    %142 = vector.load %arg10[%c0_129, %c0_130] : memref<8x128xf32, #tpu.memory_space<vmem>>, vector<8x128xf32>
    %cst_131 = arith.constant dense<0.000000e+00> : vector<1x128xf32>
    %143 = tpu.matmul %139, %142, %cst_131 {dimension_numbers = #tpu.dot_dimension_numbers<[1], [0], [0], [1], [0, 0, 1, 1], [], []>} : vector<1x8xf32>, vector<8x128xf32>, vector<1x128xf32> -> vector<1x128xf32>
    %144 = arith.addf %141, %143 : vector<1x128xf32>
    %c0_132 = arith.constant 0 : index
    %c0_133 = arith.constant 0 : index
    %145 = vector.load %arg11[%c0_132, %c0_133] : memref<1x128xf32, #tpu.memory_space<vmem>>, vector<1x128xf32>
    %146 = arith.addf %144, %145 : vector<1x128xf32>
    %cst_134 = arith.constant 0.000000e+00 : f32
    %147 = vector.broadcast %cst_134 : f32 to vector<1x128xf32>
    %148 = arith.maximumf %146, %147 : vector<1x128xf32>
    %c0_135 = arith.constant 0 : index
    %c0_136 = arith.constant 0 : index
    %149 = vector.load %arg12[%c0_135, %c0_136] : memref<128x64xf32, #tpu.memory_space<vmem>>, vector<128x64xf32>
    %cst_137 = arith.constant dense<0.000000e+00> : vector<1x64xf32>
    %150 = tpu.matmul %148, %149, %cst_137 {dimension_numbers = #tpu.dot_dimension_numbers<[1], [0], [0], [1], [0, 0, 1, 1], [], []>} : vector<1x128xf32>, vector<128x64xf32>, vector<1x64xf32> -> vector<1x64xf32>
    %c0_138 = arith.constant 0 : index
    %c0_139 = arith.constant 0 : index
    %151 = vector.load %arg13[%c0_138, %c0_139] : memref<1x64xf32, #tpu.memory_space<vmem>>, vector<1x64xf32>
    %152 = arith.addf %150, %151 : vector<1x64xf32>
    %cst_140 = arith.constant 0.000000e+00 : f32
    %153 = vector.broadcast %cst_140 : f32 to vector<1x64xf32>
    %154 = arith.maximumf %152, %153 : vector<1x64xf32>
    %c0_141 = arith.constant 0 : index
    %c0_142 = arith.constant 0 : index
    %155 = vector.load %arg14[%c0_141, %c0_142] : memref<64x128xf32, #tpu.memory_space<vmem>>, vector<64x128xf32>
    %cst_143 = arith.constant dense<0.000000e+00> : vector<1x128xf32>
    %156 = tpu.matmul %154, %155, %cst_143 {dimension_numbers = #tpu.dot_dimension_numbers<[1], [0], [0], [1], [0, 0, 1, 1], [], []>} : vector<1x64xf32>, vector<64x128xf32>, vector<1x128xf32> -> vector<1x128xf32>
    %c0_144 = arith.constant 0 : index
    %c0_145 = arith.constant 0 : index
    %157 = vector.load %arg15[%c0_144, %c0_145] : memref<1x128xf32, #tpu.memory_space<vmem>>, vector<1x128xf32>
    %158 = arith.addf %156, %157 : vector<1x128xf32>
    %c0_146 = arith.constant 0 : index
    %c0_147 = arith.constant 0 : index
    %c0_148 = arith.constant 0 : index
    %159 = vector.load %arg16[%c0_146, %c0_147, %c0_148] : memref<1x1x128xf32, #tpu.memory_space<vmem>>, vector<1x1x128xf32>
    %160 = vector.shape_cast %159 : vector<1x1x128xf32> to vector<1x128xf32>
    %161 = vector.shape_cast %158 : vector<1x128xf32> to vector<1x1x128xf32>
    tpu.vector_store %arg16[%c0_146, %c0_147, %c0_148], %161 {strides = array<i32>} : memref<1x1x128xf32, #tpu.memory_space<vmem>>, vector<1x1x128xf32>,
    return
  }
  func.func @transform_0(%arg0: i32, %arg1: memref<2xi32, #tpu.memory_space<smem>>) -> (i32, i32, i32) {
    %c0_i32 = arith.constant 0 : i32
    %c0_i32_0 = arith.constant 0 : i32
    %c0_i32_1 = arith.constant 0 : i32
    return %arg0, %c0_i32, %c0_i32_0 : i32, i32, i32
  }
  func.func @transform_1(%arg0: i32, %arg1: memref<2xi32, #tpu.memory_space<smem>>) -> (i32, i32) {
    %c0_i32 = arith.constant 0 : i32
    %c0_i32_0 = arith.constant 0 : i32
    %c0_i32_1 = arith.constant 0 : i32
    return %c0_i32, %c0_i32_0 : i32, i32
  }
  func.func @transform_2(%arg0: i32, %arg1: memref<2xi32, #tpu.memory_space<smem>>) -> (i32, i32, i32) {
    %c0_i32 = arith.constant 0 : i32
    %c0_i32_0 = arith.constant 0 : i32
    %c0_i32_1 = arith.constant 0 : i32
    %c0_i32_2 = arith.constant 0 : i32
    return %c0_i32, %c0_i32_0, %c0_i32_1 : i32, i32, i32
  }
  func.func @transform_3(%arg0: i32, %arg1: memref<2xi32, #tpu.memory_space<smem>>) -> (i32, i32) {
    %c0_i32 = arith.constant 0 : i32
    %c0_i32_0 = arith.constant 0 : i32
    %c0_i32_1 = arith.constant 0 : i32
    return %c0_i32, %c0_i32_0 : i32, i32
  }
  func.func @transform_4(%arg0: i32, %arg1: memref<2xi32, #tpu.memory_space<smem>>) -> (i32, i32, i32) {
    %c0_i32 = arith.constant 0 : i32
    %c0_i32_0 = arith.constant 0 : i32
    %c0_i32_1 = arith.constant 0 : i32
    %c0_i32_2 = arith.constant 0 : i32
    return %c0_i32, %c0_i32_0, %c0_i32_1 : i32, i32, i32
  }
  func.func @transform_5(%arg0: i32, %arg1: memref<2xi32, #tpu.memory_space<smem>>) -> (i32, i32) {
    %c0_i32 = arith.constant 0 : i32
    %c0_i32_0 = arith.constant 0 : i32
    %c0_i32_1 = arith.constant 0 : i32
    return %c0_i32, %c0_i32_0 : i32, i32
  }
  func.func @transform_6(%arg0: i32, %arg1: memref<2xi32, #tpu.memory_space<smem>>) -> (i32, i32) {
    %c0_i32 = arith.constant 0 : i32
    %c0_i32_0 = arith.constant 0 : i32
    %c0_i32_1 = arith.constant 0 : i32
    return %c0_i32, %c0_i32_0 : i32, i32
  }
  func.func @transform_7(%arg0: i32, %arg1: memref<2xi32, #tpu.memory_space<smem>>) -> (i32, i32) {
    %c0_i32 = arith.constant 0 : i32
    %c0_i32_0 = arith.constant 0 : i32
    %c0_i32_1 = arith.constant 0 : i32
    return %c0_i32, %c0_i32_0 : i32, i32
  }
  func.func @transform_8(%arg0: i32, %arg1: memref<2xi32, #tpu.memory_space<smem>>) -> (i32, i32) {
    %c0_i32 = arith.constant 0 : i32
    %c0_i32_0 = arith.constant 0 : i32
    %c0_i32_1 = arith.constant 0 : i32
    return %c0_i32, %c0_i32_0 : i32, i32
  }
  func.func @transform_9(%arg0: i32, %arg1: memref<2xi32, #tpu.memory_space<smem>>) -> (i32, i32) {
    %c0_i32 = arith.constant 0 : i32
    %c0_i32_0 = arith.constant 0 : i32
    %c0_i32_1 = arith.constant 0 : i32
    return %c0_i32, %c0_i32_0 : i32, i32
  }
  func.func @transform_10(%arg0: i32, %arg1: memref<2xi32, #tpu.memory_space<smem>>) -> (i32, i32) {
    %c0_i32 = arith.constant 0 : i32
    %c0_i32_0 = arith.constant 0 : i32
    %c0_i32_1 = arith.constant 0 : i32
    return %c0_i32, %c0_i32_0 : i32, i32
  }
  func.func @transform_11(%arg0: i32, %arg1: memref<2xi32, #tpu.memory_space<smem>>) -> (i32, i32) {
    %c0_i32 = arith.constant 0 : i32
    %c0_i32_0 = arith.constant 0 : i32
    %c0_i32_1 = arith.constant 0 : i32
    return %c0_i32, %c0_i32_0 : i32, i32
  }
  func.func @transform_12(%arg0: i32, %arg1: memref<2xi32, #tpu.memory_space<smem>>) -> (i32, i32) {
    %c0_i32 = arith.constant 0 : i32
    %c0_i32_0 = arith.constant 0 : i32
    %c0_i32_1 = arith.constant 0 : i32
    return %c0_i32, %c0_i32_0 : i32, i32
  }
  func.func @transform_13(%arg0: i32, %arg1: memref<2xi32, #tpu.memory_space<smem>>) -> (i32, i32) {
    %c0_i32 = arith.constant 0 : i32
    %c0_i32_0 = arith.constant 0 : i32
    %c0_i32_1 = arith.constant 0 : i32
    return %c0_i32, %c0_i32_0 : i32, i32
  }
  func.func @transform_14(%arg0: i32, %arg1: memref<2xi32, #tpu.memory_space<smem>>) -> (i32, i32, i32) {
    %c0_i32 = arith.constant 0 : i32
    %c0_i32_0 = arith.constant 0 : i32
    %c0_i32_1 = arith.constant 0 : i32
    return %arg0, %c0_i32, %c0_i32_0 : i32, i32, i32
  }
}

</mosaic_0001>

<llo_original>
// kernel: pallas_forward.1
$region0: #{pallas_forward.1}
  #allocation0 [shape = 'u32[]', space=smem, size = 0x4, offset = 0x4, fixed_abs, tag = 'smem constant byte address 0x4 - core index']
  #allocation1 [shape = 'u32[144,128]{1,0:T(1,128)}', space=vmem, size = 0x12000, scoped, tag = 'internal scratch']
  #allocation2 [shape = 'f32[372,16]{1,0:T(8,128)}', space=vmem, size = 0x2f000, scoped, tag = 'scratch operand']
  #allocation3 [shape = 's32[1]{0}', space=sflag, size = 0x4, scoped, tag = 'scoped memory for pallas_forward.1']
  #allocation4 [shape = 'u8[512]{0}', space=smem, size = 0x200, scoped, tag = 'prefetched SMEM operand 0']
  %s0 = inlined_call_operand.vmem [shape: s32[2], index: 0, kind: input, shape index: {}]
  %s1 = inlined_call_operand.vmem [shape: f32[2,372,3], index: 1, kind: input, shape index: {}]
  %s2 = inlined_call_operand.vmem [shape: f32[324,1], index: 2, kind: input, shape index: {}]
  %s3 = inlined_call_operand.vmem [shape: f32[9,3,16], index: 3, kind: input, shape index: {}]
  %s4 = inlined_call_operand.vmem [shape: f32[1,16], index: 4, kind: input, shape index: {}]
  %s5 = inlined_call_operand.vmem [shape: f32[9,16,32], index: 5, kind: input, shape index: {}]
  %s6 = inlined_call_operand.vmem [shape: f32[1,32], index: 6, kind: input, shape index: {}]
  %s7 = inlined_call_operand.vmem [shape: f32[4,8], index: 7, kind: input, shape index: {}]
  %s8 = inlined_call_operand.vmem [shape: f32[32,128], index: 8, kind: input, shape index: {}]
  %s9 = inlined_call_operand.vmem [shape: f32[8,128], index: 9, kind: input, shape index: {}]
  %s10 = inlined_call_operand.vmem [shape: f32[1,128], index: 10, kind: input, shape index: {}]
  %s11 = inlined_call_operand.vmem [shape: f32[128,64], index: 11, kind: input, shape index: {}]
  %s12 = inlined_call_operand.vmem [shape: f32[1,64], index: 12, kind: input, shape index: {}]
  %s13 = inlined_call_operand.vmem [shape: f32[64,128], index: 13, kind: input, shape index: {}]
  %s14 = inlined_call_operand.vmem [shape: f32[1,128], index: 14, kind: input, shape index: {}]
  %s15 = inlined_call_operand.vmem [shape: f32[2,1,128], index: 15, kind: output, shape index: {}]
  %s16 = sld [smem:[#allocation0]]
  $region89: #{pallas_forward.1} parent=0
    _
  %s18 = ssub.s32 1, %s16
  %s19 = scalar_select 0, %s18, %s16
  %s20 = sshll.u32 %s0, 4
  %s21 = int_to_ptr.vmem [resolvable:$true] %s20
  %23 = dma.vmem_to_smem %s21, 16, [#allocation4], [#allocation3]
  %24 = dma.done [#allocation3], 16
  %25 = sfence
  loop: start=0, step=1, limit=4
  $region2: #{pallas_forward.1} parent=0 // loop_pre_header
    _
  $region3: #{pallas_forward.1} parent=0 // loop_header
    %s27 = sphi 0, %s31
    %p28 = scmp.ge.s32.totalorder %s27, 4
    %s37 = sphi 0, %s39
    %s40 = sphi 0, %s37
    %s41 = sphi 0, %s40
    %s57 = sphi 0, %s41
    %s61 = sphi 0, %s61
    %s63 = sphi 0, %s61
    %s64 = sphi 0, %s63
    %s78 = sphi 0, %s64
    %s82 = sphi 0, %s82
    %s84 = sphi 0, %s82
    %s85 = sphi 0, %s84
    %s99 = sphi 0, %s85
    %s103 = sphi 0, %s103
    %s105 = sphi 0, %s103
    %s106 = sphi 0, %s105
    %s120 = sphi 0, %s106
    %s124 = sphi 0, %s124
    %s126 = sphi 0, %s124
    %s127 = sphi 0, %s126
    %s141 = sphi 0, %s127
    %s145 = sphi 0, %s145
    %s147 = sphi 0, %s145
    %s148 = sphi 0, %s147
    %s162 = sphi 0, %s148
    %s166 = sphi 0, %s166
    %s168 = sphi 0, %s166
    %s169 = sphi 0, %s168
    %s183 = sphi 0, %s169
    %s187 = sphi 0, %s187
    %s189 = sphi 0, %s187
    %s190 = sphi 0, %s189
    %s204 = sphi 0, %s190
    %s208 = sphi 0, %s208
    %s210 = sphi 0, %s208
    %s211 = sphi 0, %s210
    %s225 = sphi 0, %s211
    %s229 = sphi 0, %s229
    %s231 = sphi 0, %s229
    %s232 = sphi 0, %s231
    %s246 = sphi 0, %s232
    %s250 = sphi 0, %s250
    %s252 = sphi 0, %s250
    %s253 = sphi 0, %s252
    %s267 = sphi 0, %s253
    %s271 = sphi 0, %s271
    %s273 = sphi 0, %s271
    %s274 = sphi 0, %s273
    %s288 = sphi 0, %s274
    %s292 = sphi 0, %s292
    %s294 = sphi 0, %s292
    %s295 = sphi 0, %s294
    %s309 = sphi 0, %s295
    %s313 = sphi 0, %s313
    %s315 = sphi 0, %s313
    %s316 = sphi 0, %s315
    %s330 = sphi 0, %s316
    %s336 = sphi 0, %s338
    %s339 = sphi 0, %s336
    %s340 = sphi 0, %s339
    %s356 = sphi 0, %s340
  $region4: #{pallas_forward.1} parent=0 // loop_header_branch
    %30 = sbr.rel (%p28) target = $region8
  $region5: #{pallas_forward.1} parent=0 // loop_body
    %s32 = ssub.s32 %s27, 1
    %s33 = ssub.s32 %s27, 2
    %s34 = sadd.s32 %s27, 1
    %s35 = ssub.s32 %s27, %s34
    %p36 = scmp.eq.s32.totalorder %s35, 0
    %s38 = sadd.s32 %s37, 1
    %s39 = scalar_select %p36, %s37, %s38
    %p42 = pneg %p36
    %p43 = scmp.eq.s32.totalorder %s27, 1
    %p44 = por %p42, %p43
    %p45 = scmp.ne.s32.totalorder %s37, %s40
    %p46 = scmp.eq.s32.totalorder %s27, 0
    %p47 = por %p45, %p46
    %p48 = scmp.ne.s32.totalorder %s37, %s40
    %p49 = scmp.eq.s32.totalorder %s32, 1
    %p50 = por %p48, %p49
    %p51 = scmp.ne.s32.totalorder %s40, %s41
    %p52 = scmp.eq.s32.totalorder %s32, 0
    %p53 = por %p51, %p52
    %p54 = scmp.ne.s32.totalorder %s40, %s41
    %p55 = scmp.eq.s32.totalorder %s33, 1
    %p56 = por %p54, %p55
    %p58 = scmp.ne.s32.totalorder %s41, %s57
    %p59 = scmp.eq.s32.totalorder %s33, 0
    %p60 = por %p58, %p59
    %s62 = sadd.s32 %s61, 1
    %p65 = scmp.eq.s32.totalorder %s27, 1
    %p66 = scmp.ne.s32.totalorder %s61, %s63
    %p67 = scmp.eq.s32.totalorder %s27, 0
    %p68 = por %p66, %p67
    %p69 = scmp.ne.s32.totalorder %s61, %s63
    %p70 = scmp.eq.s32.totalorder %s32, 1
    %p71 = por %p69, %p70
    %p72 = scmp.ne.s32.totalorder %s63, %s64
    %p73 = scmp.eq.s32.totalorder %s32, 0
    %p74 = por %p72, %p73
    %p75 = scmp.ne.s32.totalorder %s63, %s64
    %p76 = scmp.eq.s32.totalorder %s33, 1
    %p77 = por %p75, %p76
    %p79 = scmp.ne.s32.totalorder %s64, %s78
    %p80 = scmp.eq.s32.totalorder %s33, 0
    %p81 = por %p79, %p80
    %s83 = sadd.s32 %s82, 1
    %p86 = scmp.eq.s32.totalorder %s27, 1
    %p87 = scmp.ne.s32.totalorder %s82, %s84
    %p88 = scmp.eq.s32.totalorder %s27, 0
    %p89 = por %p87, %p88
    %p90 = scmp.ne.s32.totalorder %s82, %s84
    %p91 = scmp.eq.s32.totalorder %s32, 1
    %p92 = por %p90, %p91
    %p93 = scmp.ne.s32.totalorder %s84, %s85
    %p94 = scmp.eq.s32.totalorder %s32, 0
    %p95 = por %p93, %p94
    %p96 = scmp.ne.s32.totalorder %s84, %s85
    %p97 = scmp.eq.s32.totalorder %s33, 1
    %p98 = por %p96, %p97
    %p100 = scmp.ne.s32.totalorder %s85, %s99
    %p101 = scmp.eq.s32.totalorder %s33, 0
    %p102 = por %p100, %p101
    %s104 = sadd.s32 %s103, 1
    %p107 = scmp.eq.s32.totalorder %s27, 1
    %p108 = scmp.ne.s32.totalorder %s103, %s105
    %p109 = scmp.eq.s32.totalorder %s27, 0
    %p110 = por %p108, %p109
    %p111 = scmp.ne.s32.totalorder %s103, %s105
    %p112 = scmp.eq.s32.totalorder %s32, 1
    %p113 = por %p111, %p112
    %p114 = scmp.ne.s32.totalorder %s105, %s106
    %p115 = scmp.eq.s32.totalorder %s32, 0
    %p116 = por %p114, %p115
    %p117 = scmp.ne.s32.totalorder %s105, %s106
    %p118 = scmp.eq.s32.totalorder %s33, 1
    %p119 = por %p117, %p118
    %p121 = scmp.ne.s32.totalorder %s106, %s120
    %p122 = scmp.eq.s32.totalorder %s33, 0
    %p123 = por %p121, %p122
    %s125 = sadd.s32 %s124, 1
    %p128 = scmp.eq.s32.totalorder %s27, 1
    %p129 = scmp.ne.s32.totalorder %s124, %s126
    %p130 = scmp.eq.s32.totalorder %s27, 0
    %p131 = por %p129, %p130
    %p132 = scmp.ne.s32.totalorder %s124, %s126
    %p133 = scmp.eq.s32.totalorder %s32, 1
    %p134 = por %p132, %p133
    %p135 = scmp.ne.s32.totalorder %s126, %s127
    %p136 = scmp.eq.s32.totalorder %s32, 0
    %p137 = por %p135, %p136
    %p138 = scmp.ne.s32.totalorder %s126, %s127
    %p139 = scmp.eq.s32.totalorder %s33, 1
    %p140 = por %p138, %p139
    %p142 = scmp.ne.s32.totalorder %s127, %s141
    %p143 = scmp.eq.s32.totalorder %s33, 0
    %p144 = por %p142, %p143
    %s146 = sadd.s32 %s145, 1
    %p149 = scmp.eq.s32.totalorder %s27, 1
    %p150 = scmp.ne.s32.totalorder %s145, %s147
    %p151 = scmp.eq.s32.totalorder %s27, 0
    %p152 = por %p150, %p151
    %p153 = scmp.ne.s32.totalorder %s145, %s147
    %p154 = scmp.eq.s32.totalorder %s32, 1
    %p155 = por %p153, %p154
    %p156 = scmp.ne.s32.totalorder %s147, %s148
    %p157 = scmp.eq.s32.totalorder %s32, 0
    %p158 = por %p156, %p157
    %p159 = scmp.ne.s32.totalorder %s147, %s148
    %p160 = scmp.eq.s32.totalorder %s33, 1
    %p161 = por %p159, %p160
    %p163 = scmp.ne.s32.totalorder %s148, %s162
    %p164 = scmp.eq.s32.totalorder %s33, 0
    %p165 = por %p163, %p164
    %s167 = sadd.s32 %s166, 1
    %p170 = scmp.eq.s32.totalorder %s27, 1
    %p171 = scmp.ne.s32.totalorder %s166, %s168
    %p172 = scmp.eq.s32.totalorder %s27, 0
    %p173 = por %p171, %p172
    %p174 = scmp.ne.s32.totalorder %s166, %s168
    %p175 = scmp.eq.s32.totalorder %s32, 1
    %p176 = por %p174, %p175
    %p177 = scmp.ne.s32.totalorder %s168, %s169
    %p178 = scmp.eq.s32.totalorder %s32, 0
    %p179 = por %p177, %p178
    %p180 = scmp.ne.s32.totalorder %s168, %s169
    %p181 = scmp.eq.s32.totalorder %s33, 1
    %p182 = por %p180, %p181
    %p184 = scmp.ne.s32.totalorder %s169, %s183
    %p185 = scmp.eq.s32.totalorder %s33, 0
    %p186 = por %p184, %p185
    %s188 = sadd.s32 %s187, 1
    %p191 = scmp.eq.s32.totalorder %s27, 1
    %p192 = scmp.ne.s32.totalorder %s187, %s189
    %p193 = scmp.eq.s32.totalorder %s27, 0
    %p194 = por %p192, %p193
    %p195 = scmp.ne.s32.totalorder %s187, %s189
    %p196 = scmp.eq.s32.totalorder %s32, 1
    %p197 = por %p195, %p196
    %p198 = scmp.ne.s32.totalorder %s189, %s190
    %p199 = scmp.eq.s32.totalorder %s32, 0
    %p200 = por %p198, %p199
    %p201 = scmp.ne.s32.totalorder %s189, %s190
    %p202 = scmp.eq.s32.totalorder %s33, 1
    %p203 = por %p201, %p202
    %p205 = scmp.ne.s32.totalorder %s190, %s204
    %p206 = scmp.eq.s32.totalorder %s33, 0
    %p207 = por %p205, %p206
    %s209 = sadd.s32 %s208, 1
    %p212 = scmp.eq.s32.totalorder %s27, 1
    %p213 = scmp.ne.s32.totalorder %s208, %s210
    %p214 = scmp.eq.s32.totalorder %s27, 0
    %p215 = por %p213, %p214
    %p216 = scmp.ne.s32.totalorder %s208, %s210
    %p217 = scmp.eq.s32.totalorder %s32, 1
    %p218 = por %p216, %p217
    %p219 = scmp.ne.s32.totalorder %s210, %s211
    %p220 = scmp.eq.s32.totalorder %s32, 0
    %p221 = por %p219, %p220
    %p222 = scmp.ne.s32.totalorder %s210, %s211
    %p223 = scmp.eq.s32.totalorder %s33, 1
    %p224 = por %p222, %p223
    %p226 = scmp.ne.s32.totalorder %s211, %s225
    %p227 = scmp.eq.s32.totalorder %s33, 0
    %p228 = por %p226, %p227
    %s230 = sadd.s32 %s229, 1
    %p233 = scmp.eq.s32.totalorder %s27, 1
    %p234 = scmp.ne.s32.totalorder %s229, %s231
    %p235 = scmp.eq.s32.totalorder %s27, 0
    %p236 = por %p234, %p235
    %p237 = scmp.ne.s32.totalorder %s229, %s231
    %p238 = scmp.eq.s32.totalorder %s32, 1
    %p239 = por %p237, %p238
    %p240 = scmp.ne.s32.totalorder %s231, %s232
    %p241 = scmp.eq.s32.totalorder %s32, 0
    %p242 = por %p240, %p241
    %p243 = scmp.ne.s32.totalorder %s231, %s232
    %p244 = scmp.eq.s32.totalorder %s33, 1
    %p245 = por %p243, %p244
    %p247 = scmp.ne.s32.totalorder %s232, %s246
    %p248 = scmp.eq.s32.totalorder %s33, 0
    %p249 = por %p247, %p248
    %s251 = sadd.s32 %s250, 1
    %p254 = scmp.eq.s32.totalorder %s27, 1
    %p255 = scmp.ne.s32.totalorder %s250, %s252
    %p256 = scmp.eq.s32.totalorder %s27, 0
    %p257 = por %p255, %p256
    %p258 = scmp.ne.s32.totalorder %s250, %s252
    %p259 = scmp.eq.s32.totalorder %s32, 1
    %p260 = por %p258, %p259
    %p261 = scmp.ne.s32.totalorder %s252, %s253
    %p262 = scmp.eq.s32.totalorder %s32, 0
    %p263 = por %p261, %p262
    %p264 = scmp.ne.s32.totalorder %s252, %s253
    %p265 = scmp.eq.s32.totalorder %s33, 1
    %p266 = por %p264, %p265
    %p268 = scmp.ne.s32.totalorder %s253, %s267
    %p269 = scmp.eq.s32.totalorder %s33, 0
    %p270 = por %p268, %p269
    %s272 = sadd.s32 %s271, 1
    %p275 = scmp.eq.s32.totalorder %s27, 1
    %p276 = scmp.ne.s32.totalorder %s271, %s273
    %p277 = scmp.eq.s32.totalorder %s27, 0
    %p278 = por %p276, %p277
    %p279 = scmp.ne.s32.totalorder %s271, %s273
    %p280 = scmp.eq.s32.totalorder %s32, 1
    %p281 = por %p279, %p280
    %p282 = scmp.ne.s32.totalorder %s273, %s274
    %p283 = scmp.eq.s32.totalorder %s32, 0
    %p284 = por %p282, %p283
    %p285 = scmp.ne.s32.totalorder %s273, %s274
    %p286 = scmp.eq.s32.totalorder %s33, 1
    %p287 = por %p285, %p286
    %p289 = scmp.ne.s32.totalorder %s274, %s288
    %p290 = scmp.eq.s32.totalorder %s33, 0
    %p291 = por %p289, %p290
    %s293 = sadd.s32 %s292, 1
    %p296 = scmp.eq.s32.totalorder %s27, 1
    %p297 = scmp.ne.s32.totalorder %s292, %s294
    %p298 = scmp.eq.s32.totalorder %s27, 0
    %p299 = por %p297, %p298
    %p300 = scmp.ne.s32.totalorder %s292, %s294
    %p301 = scmp.eq.s32.totalorder %s32, 1
    %p302 = por %p300, %p301
    %p303 = scmp.ne.s32.totalorder %s294, %s295
    %p304 = scmp.eq.s32.totalorder %s32, 0
    %p305 = por %p303, %p304
    %p306 = scmp.ne.s32.totalorder %s294, %s295
    %p307 = scmp.eq.s32.totalorder %s33, 1
    %p308 = por %p306, %p307
    %p310 = scmp.ne.s32.totalorder %s295, %s309
    %p311 = scmp.eq.s32.totalorder %s33, 0
    %p312 = por %p310, %p311
    %s314 = sadd.s32 %s313, 1
    %p317 = scmp.eq.s32.totalorder %s27, 1
    %p318 = scmp.ne.s32.totalorder %s313, %s315
    %p319 = scmp.eq.s32.totalorder %s27, 0
    %p320 = por %p318, %p319
    %p321 = scmp.ne.s32.totalorder %s313, %s315
    %p322 = scmp.eq.s32.totalorder %s32, 1
    %p323 = por %p321, %p322
    %p324 = scmp.ne.s32.totalorder %s315, %s316
    %p325 = scmp.eq.s32.totalorder %s32, 0
    %p326 = por %p324, %p325
    %p327 = scmp.ne.s32.totalorder %s315, %s316
    %p328 = scmp.eq.s32.totalorder %s33, 1
    %p329 = por %p327, %p328
    %p331 = scmp.ne.s32.totalorder %s316, %s330
    %p332 = scmp.eq.s32.totalorder %s33, 0
    %p333 = por %p331, %p332
    %s334 = ssub.s32 %s27, %s34
    %p335 = scmp.eq.s32.totalorder %s334, 0
    %s337 = sadd.s32 %s336, 1
    %s338 = scalar_select %p335, %s336, %s337
    %p341 = pneg %p335
    %p342 = scmp.eq.s32.totalorder %s27, 1
    %p343 = por %p341, %p342
    %p344 = scmp.ne.s32.totalorder %s336, %s339
    %p345 = scmp.eq.s32.totalorder %s27, 0
    %p346 = por %p344, %p345
    %p347 = scmp.ne.s32.totalorder %s336, %s339
    %p348 = scmp.eq.s32.totalorder %s32, 1
    %p349 = por %p347, %p348
    %p350 = scmp.ne.s32.totalorder %s339, %s340
    %p351 = scmp.eq.s32.totalorder %s32, 0
    %p352 = por %p350, %p351
    %p353 = scmp.ne.s32.totalorder %s339, %s340
    %p354 = scmp.eq.s32.totalorder %s33, 1
    %p355 = por %p353, %p354
    %p357 = scmp.ne.s32.totalorder %s340, %s356
    %p358 = scmp.eq.s32.totalorder %s33, 0
    %p359 = por %p357, %p358
    %p360 = scmp.le.s32.totalorder 1, %s27
    %p361 = scmp.lt.s32.totalorder %s27, 3
    %p362 = pnand %p360, %p361
    %p363 = pneg %p362
    // Predicated region
    $region9: #{pallas_forward.1} parent=5 // pred_check
      _
    $region10: #{pallas_forward.1} parent=5 // pred_check_branch
      %365 = sbr.rel (%p362) target = $region12
    $region11: #{pallas_forward.1} parent=5 // pred_region
      %s366 = ssub.s32 %s27, 1
      // Predicated region
      $region13: #{pallas_forward.1} parent=11 // pred_check
        %p367 = pneg %p74
      $region14: #{pallas_forward.1} parent=11 // pred_check_branch
        %369 = sbr.rel (%p367) target = $region16
      $region15: #{pallas_forward.1} parent=11 // pred_region
        _
      $region16: #{pallas_forward.1} parent=11 // pred_fallthru
        _
      // Predicated region
      $region17: #{pallas_forward.1} parent=11 // pred_check
        %p370 = pneg %p95
      $region18: #{pallas_forward.1} parent=11 // pred_check_branch
        %372 = sbr.rel (%p370) target = $region20
      $region19: #{pallas_forward.1} parent=11 // pred_region
        _
      $region20: #{pallas_forward.1} parent=11 // pred_fallthru
        _
      // Predicated region
      $region21: #{pallas_forward.1} parent=11 // pred_check
        %p373 = pneg %p116
      $region22: #{pallas_forward.1} parent=11 // pred_check_branch
        %375 = sbr.rel (%p373) target = $region24
      $region23: #{pallas_forward.1} parent=11 // pred_region
        _
      $region24: #{pallas_forward.1} parent=11 // pred_fallthru
        _
      // Predicated region
      $region25: #{pallas_forward.1} parent=11 // pred_check
        %p376 = pneg %p137
      $region26: #{pallas_forward.1} parent=11 // pred_check_branch
        %378 = sbr.rel (%p376) target = $region28
      $region27: #{pallas_forward.1} parent=11 // pred_region
        _
      $region28: #{pallas_forward.1} parent=11 // pred_fallthru
        _
      // Predicated region
      $region29: #{pallas_forward.1} parent=11 // pred_check
        %p379 = pneg %p158
      $region30: #{pallas_forward.1} parent=11 // pred_check_branch
        %381 = sbr.rel (%p379) target = $region32
      $region31: #{pallas_forward.1} parent=11 // pred_region
        _
      $region32: #{pallas_forward.1} parent=11 // pred_fallthru
        _
      // Predicated region
      $region33: #{pallas_forward.1} parent=11 // pred_check
        %p382 = pneg %p179
      $region34: #{pallas_forward.1} parent=11 // pred_check_branch
        %384 = sbr.rel (%p382) target = $region36
      $region35: #{pallas_forward.1} parent=11 // pred_region
        _
      $region36: #{pallas_forward.1} parent=11 // pred_fallthru
        _
      // Predicated region
      $region37: #{pallas_forward.1} parent=11 // pred_check
        %p385 = pneg %p200
      $region38: #{pallas_forward.1} parent=11 // pred_check_branch
        %387 = sbr.rel (%p385) target = $region40
      $region39: #{pallas_forward.1} parent=11 // pred_region
        _
      $region40: #{pallas_forward.1} parent=11 // pred_fallthru
        _
      // Predicated region
      $region41: #{pallas_forward.1} parent=11 // pred_check
        %p388 = pneg %p221
      $region42: #{pallas_forward.1} parent=11 // pred_check_branch
        %390 = sbr.rel (%p388) target = $region44
      $region43: #{pallas_forward.1} parent=11 // pred_region
        _
      $region44: #{pallas_forward.1} parent=11 // pred_fallthru
        _
      // Predicated region
      $region45: #{pallas_forward.1} parent=11 // pred_check
        %p391 = pneg %p242
      $region46: #{pallas_forward.1} parent=11 // pred_check_branch
        %393 = sbr.rel (%p391) target = $region48
      $region47: #{pallas_forward.1} parent=11 // pred_region
        _
      $region48: #{pallas_forward.1} parent=11 // pred_fallthru
        _
      // Predicated region
      $region49: #{pallas_forward.1} parent=11 // pred_check
        %p394 = pneg %p263
      $region50: #{pallas_forward.1} parent=11 // pred_check_branch
        %396 = sbr.rel (%p394) target = $region52
      $region51: #{pallas_forward.1} parent=11 // pred_region
        _
      $region52: #{pallas_forward.1} parent=11 // pred_fallthru
        _
      // Predicated region
      $region53: #{pallas_forward.1} parent=11 // pred_check
        %p397 = pneg %p284
      $region54: #{pallas_forward.1} parent=11 // pred_check_branch
        %399 = sbr.rel (%p397) target = $region56
      $region55: #{pallas_forward.1} parent=11 // pred_region
        _
      $region56: #{pallas_forward.1} parent=11 // pred_fallthru
        _
      // Predicated region
      $region57: #{pallas_forward.1} parent=11 // pred_check
        %p400 = pneg %p305
      $region58: #{pallas_forward.1} parent=11 // pred_check_branch
        %402 = sbr.rel (%p400) target = $region60
      $region59: #{pallas_forward.1} parent=11 // pred_region
        _
      $region60: #{pallas_forward.1} parent=11 // pred_fallthru
        _
      // Predicated region
      $region61: #{pallas_forward.1} parent=11 // pred_check
        %p403 = pneg %p326
      $region62: #{pallas_forward.1} parent=11 // pred_check_branch
        %405 = sbr.rel (%p403) target = $region64
      $region63: #{pallas_forward.1} parent=11 // pred_region
        _
      $region64: #{pallas_forward.1} parent=11 // pred_fallthru
        _
    $region12: #{pallas_forward.1} parent=5 // pred_fallthru
      _
    %p406 = scmp.lt.s32.totalorder %s27, 2
    // Predicated region
    $region65: #{pallas_forward.1} parent=5 // pred_check
      %p407 = pneg %p406
    $region66: #{pallas_forward.1} parent=5 // pred_check_branch
      %409 = sbr.rel (%p407) target = $region68
    $region67: #{pallas_forward.1} parent=5 // pred_region
      // Predicated region
      $region69: #{pallas_forward.1} parent=67 // pred_check
        %p410 = pneg %p47
      $region70: #{pallas_forward.1} parent=67 // pred_check_branch
        %412 = sbr.rel (%p410) target = $region72
      $region71: #{pallas_forward.1} parent=67 // pred_region
        %p413 = scmp.lt.s32.totalorder %s27, 1
        %s414 = scalar_select %p413, %s27, 1
        %s415 = smul.addr %s414, 47
        %s416 = smul.addr %s415, 8
        %s417 = scalar_lea.vmem %s1, %s416
      $region72: #{pallas_forward.1} parent=67 // pred_fallthru
        _
    $region68: #{pallas_forward.1} parent=5 // pred_fallthru
      _
    %p418 = scmp.le.s32.totalorder 1, %s27
    %p419 = scmp.lt.s32.totalorder %s27, 3
    %p420 = pnand %p418, %p419
    %p421 = pneg %p420
    // Predicated region
    $region73: #{pallas_forward.1} parent=5 // pred_check
      _
    $region74: #{pallas_forward.1} parent=5 // pred_check_branch
      %423 = sbr.rel (%p420) target = $region76
    $region75: #{pallas_forward.1} parent=5 // pred_region
      %s424 = ssub.s32 %s27, 1
      %p425 = scmp.lt.s32.totalorder %s32, 1
      %s426 = scalar_select %p425, %s32, 1
      %s427 = smul.addr %s426, 47
      %s428 = smul.addr %s427, 8
      %s429 = scalar_lea.vmem %s1, %s428
      %p430 = pneg %p53
      %p431 = pneg %p50
      %p432 = pneg %p74
      %p433 = pneg %p71
      %p434 = pneg %p95
      %p435 = pneg %p92
      %p436 = pneg %p116
      %p437 = pneg %p113
      %p438 = pneg %p137
      %p439 = pneg %p134
      %p440 = pneg %p158
      %p441 = pneg %p155
      %p442 = pneg %p179
      %p443 = pneg %p176
      %p444 = pneg %p200
      %p445 = pneg %p197
      %p446 = pneg %p221
      %p447 = pneg %p218
      %p448 = pneg %p242
      %p449 = pneg %p239
      %p450 = pneg %p263
      %p451 = pneg %p260
      %p452 = pneg %p284
      %p453 = pneg %p281
      %p454 = pneg %p305
      %p455 = pneg %p302
      %p456 = pneg %p326
      %p457 = pneg %p323
      %p458 = pneg %p352
      %p459 = pneg %p349
      %p460 = scmp.lt.s32.totalorder %s32, 1
      %s461 = scalar_select %p460, %s32, 1
      %s462 = scalar_lea.vmem %s15, %s461
      %p463 = scmp.lt.s32.totalorder %s32, 1
      %s464 = scalar_select %p463, %s32, 1
      %s465 = smul.addr %s464, 47
      %s466 = smul.addr %s465, 8
      %s467 = scalar_lea.vmem %s1, %s466
      %p468 = scmp.lt.s32.totalorder %s32, 1
      %s469 = scalar_select %p468, %s32, 1
      %s470 = scalar_lea.vmem %s15, %s469
      %v471 = vld [vmem:[%s2] sm:$0xff]
      %v472 = vld [vmem:[%s2 + $0x8] sm:$0xff]
      %v473 = vld [vmem:[%s2 + $0x10] sm:$0xff]
      %v474 = vld [vmem:[%s2 + $0x18] sm:$0xff]
      %v475 = vld [vmem:[%s2 + $0x20] sm:$0xff]
      %v476 = vld [vmem:[%s2 + $0x28] sm:$0xff]
      %v477 = vld [vmem:[%s2 + $0x30] sm:$0xff]
      %v478 = vld [vmem:[%s2 + $0x38] sm:$0xff]
      %v479 = vld [vmem:[%s2 + $0x40] sm:$0xff]
      %v480 = vld [vmem:[%s2 + $0x48] sm:$0xff]
      %v481 = vld [vmem:[%s2 + $0x50] sm:$0xff]
      %v482 = vld [vmem:[%s2 + $0x58] sm:$0xff]
      %v483 = vld [vmem:[%s2 + $0x60] sm:$0xff]
      %v484 = vld [vmem:[%s2 + $0x68] sm:$0xff]
      %v485 = vld [vmem:[%s2 + $0x70] sm:$0xff]
      %v486 = vld [vmem:[%s2 + $0x78] sm:$0xff]
      %v487 = vld [vmem:[%s2 + $0x80] sm:$0xff]
      %v488 = vld [vmem:[%s2 + $0x88] sm:$0xff]
      %v489 = vld [vmem:[%s2 + $0x90] sm:$0xff]
      %v490 = vld [vmem:[%s2 + $0x98] sm:$0xff]
      %v491 = vld [vmem:[%s2 + $0xa0] sm:$0xff]
      %v492 = vld [vmem:[%s2 + $0xa8] sm:$0xff]
      %v493 = vld [vmem:[%s2 + $0xb0] sm:$0xff]
      %v494 = vld [vmem:[%s2 + $0xb8] sm:$0xff]
      %v495 = vld [vmem:[%s2 + $0xc0] sm:$0xff]
      %v496 = vld [vmem:[%s2 + $0xc8] sm:$0xff]
      %v497 = vld [vmem:[%s2 + $0xd0] sm:$0xff]
      %v498 = vld [vmem:[%s2 + $0xd8] sm:$0xff]
      %v499 = vld [vmem:[%s2 + $0xe0] sm:$0xff]
      %v500 = vld [vmem:[%s2 + $0xe8] sm:$0xff]
      %v501 = vld [vmem:[%s2 + $0xf0] sm:$0xff]
      %v502 = vld [vmem:[%s2 + $0xf8] sm:$0xff]
      %v503 = vld [vmem:[%s2 + $0x100] sm:$0xff]
      %v504 = vld [vmem:[%s2 + $0x108] sm:$0xff]
      %v505 = vld [vmem:[%s2 + $0x110] sm:$0xff]
      %v506 = vld [vmem:[%s2 + $0x118] sm:$0xff]
      %v507 = vld [vmem:[%s2 + $0x120] sm:$0xff]
      %v508 = vld [vmem:[%s2 + $0x128] sm:$0xff]
      %v509 = vld [vmem:[%s2 + $0x130] sm:$0xff]
      %v510 = vld [vmem:[%s2 + $0x138] sm:$0xff]
      %v511 = vld [vmem:[%s2 + $0x140] sm:$0xf]
      %vm512 = vcmp.ne.f32.partialorder %v471, 0.0
      %vm513 = vcmp.ne.f32.partialorder %v472, 0.0
      %vm514 = vcmp.ne.f32.partialorder %v473, 0.0
      %vm515 = vcmp.ne.f32.partialorder %v474, 0.0
      %vm516 = vcmp.ne.f32.partialorder %v475, 0.0
      %vm517 = vcmp.ne.f32.partialorder %v476, 0.0
      %vm518 = vcmp.ne.f32.partialorder %v477, 0.0
      %vm519 = vcmp.ne.f32.partialorder %v478, 0.0
      %vm520 = vcmp.ne.f32.partialorder %v479, 0.0
      %vm521 = vcmp.ne.f32.partialorder %v480, 0.0
      %vm522 = vcmp.ne.f32.partialorder %v481, 0.0
      %vm523 = vcmp.ne.f32.partialorder %v482, 0.0
      %vm524 = vcmp.ne.f32.partialorder %v483, 0.0
      %vm525 = vcmp.ne.f32.partialorder %v484, 0.0
      %vm526 = vcmp.ne.f32.partialorder %v485, 0.0
      %vm527 = vcmp.ne.f32.partialorder %v486, 0.0
      %vm528 = vcmp.ne.f32.partialorder %v487, 0.0
      %vm529 = vcmp.ne.f32.partialorder %v488, 0.0
      %vm530 = vcmp.ne.f32.partialorder %v489, 0.0
      %vm531 = vcmp.ne.f32.partialorder %v490, 0.0
      %vm532 = vcmp.ne.f32.partialorder %v491, 0.0
      %vm533 = vcmp.ne.f32.partialorder %v492, 0.0
      %vm534 = vcmp.ne.f32.partialorder %v493, 0.0
      %vm535 = vcmp.ne.f32.partialorder %v494, 0.0
      %vm536 = vcmp.ne.f32.partialorder %v495, 0.0
      %vm537 = vcmp.ne.f32.partialorder %v496, 0.0
      %vm538 = vcmp.ne.f32.partialorder %v497, 0.0
      %vm539 = vcmp.ne.f32.partialorder %v498, 0.0
      %vm540 = vcmp.ne.f32.partialorder %v499, 0.0
      %vm541 = vcmp.ne.f32.partialorder %v500, 0.0
      %vm542 = vcmp.ne.f32.partialorder %v501, 0.0
      %vm543 = vcmp.ne.f32.partialorder %v502, 0.0
      %vm544 = vcmp.ne.f32.partialorder %v503, 0.0
      %vm545 = vcmp.ne.f32.partialorder %v504, 0.0
      %vm546 = vcmp.ne.f32.partialorder %v505, 0.0
      %vm547 = vcmp.ne.f32.partialorder %v506, 0.0
      %vm548 = vcmp.ne.f32.partialorder %v507, 0.0
      %vm549 = vcmp.ne.f32.partialorder %v508, 0.0
      %vm550 = vcmp.ne.f32.partialorder %v509, 0.0
      %vm551 = vcmp.ne.f32.partialorder %v510, 0.0
      %vm552 = vcmp.ne.f32.partialorder %v511, 0.0
      %v553 = vld [vmem:[%s467 + $0x5] sm:$0xff]
      %v554 = vld [vmem:[%s467 + $0xd] sm:$0xff]
      %v555 = vld [vmem:[%s467 + $0x15] sm:$0xff]
      %v556 = vld [vmem:[%s467 + $0x1d] sm:$0xff]
      %v557 = vld [vmem:[%s467 + $0x25] sm:$0xff]
      %v558 = vld [vmem:[%s467 + $0x2d] sm:$0xff]
      %v559 = vld [vmem:[%s467 + $0x35] sm:$0xff]
      %v560 = vld [vmem:[%s467 + $0x3d] sm:$0xff]
      %v561 = vld [vmem:[%s467 + $0x45] sm:$0xff]
      %v562 = vld [vmem:[%s467 + $0x4d] sm:$0xff]
      %v563 = vld [vmem:[%s467 + $0x55] sm:$0xff]
      %v564 = vld [vmem:[%s467 + $0x5d] sm:$0xff]
      %v565 = vld [vmem:[%s467 + $0x65] sm:$0xff]
      %v566 = vld [vmem:[%s467 + $0x6d] sm:$0xff]
      %v567 = vld [vmem:[%s467 + $0x75] sm:$0xff]
      %v568 = vld [vmem:[%s467 + $0x7d] sm:$0xff]
      %v569 = vld [vmem:[%s467 + $0x85] sm:$0xff]
      %v570 = vld [vmem:[%s467 + $0x8d] sm:$0xff]
      %v571 = vld [vmem:[%s467 + $0x95] sm:$0xff]
      %v572 = vld [vmem:[%s467 + $0x9d] sm:$0xff]
      %v573 = vld [vmem:[%s467 + $0xa5] sm:$0xff]
      %v574 = vld [vmem:[%s467 + $0xad] sm:$0xff]
      %v575 = vld [vmem:[%s467 + $0xb5] sm:$0xff]
      %v576 = vld [vmem:[%s467 + $0xbd] sm:$0xff]
      %v577 = vld [vmem:[%s467 + $0xc5] sm:$0xff]
      %v578 = vld [vmem:[%s467 + $0xcd] sm:$0xff]
      %v579 = vld [vmem:[%s467 + $0xd5] sm:$0xff]
      %v580 = vld [vmem:[%s467 + $0xdd] sm:$0xff]
      %v581 = vld [vmem:[%s467 + $0xe5] sm:$0xff]
      %v582 = vld [vmem:[%s467 + $0xed] sm:$0xff]
      %v583 = vld [vmem:[%s467 + $0xf5] sm:$0xff]
      %v584 = vld [vmem:[%s467 + $0xfd] sm:$0xff]
      %v585 = vld [vmem:[%s467 + $0x105] sm:$0xff]
      %v586 = vld [vmem:[%s467 + $0x10d] sm:$0xff]
      %v587 = vld [vmem:[%s467 + $0x115] sm:$0xff]
      %v588 = vld [vmem:[%s467 + $0x11d] sm:$0xff]
      %v589 = vld [vmem:[%s467 + $0x125] sm:$0xff]
      %v590 = vld [vmem:[%s467 + $0x12d] sm:$0xff]
      %v591 = vld [vmem:[%s467 + $0x135] sm:$0xff]
      %v592 = vld [vmem:[%s467 + $0x13d] sm:$0xff]
      %v593 = vld [vmem:[%s467 + $0x145] sm:$0xf]
      %v594 = vld [vmem:[%s3] sm:$0x7]
      %v595 = vld [vmem:[%s467 + $0x6] sm:$0xff]
      %v596 = vld [vmem:[%s467 + $0xe] sm:$0xff]
      %v597 = vld [vmem:[%s467 + $0x16] sm:$0xff]
      %v598 = vld [vmem:[%s467 + $0x1e] sm:$0xff]
      %v599 = vld [vmem:[%s467 + $0x26] sm:$0xff]
      %v600 = vld [vmem:[%s467 + $0x2e] sm:$0xff]
      %v601 = vld [vmem:[%s467 + $0x36] sm:$0xff]
      %v602 = vld [vmem:[%s467 + $0x3e] sm:$0xff]
      %v603 = vld [vmem:[%s467 + $0x46] sm:$0xff]
      %v604 = vld [vmem:[%s467 + $0x4e] sm:$0xff]
      %v605 = vld [vmem:[%s467 + $0x56] sm:$0xff]
      %v606 = vld [vmem:[%s467 + $0x5e] sm:$0xff]
      %v607 = vld [vmem:[%s467 + $0x66] sm:$0xff]
      %v608 = vld [vmem:[%s467 + $0x6e] sm:$0xff]
      %v609 = vld [vmem:[%s467 + $0x76] sm:$0xff]
      %v610 = vld [vmem:[%s467 + $0x7e] sm:$0xff]
      %v611 = vld [vmem:[%s467 + $0x86] sm:$0xff]
      %v612 = vld [vmem:[%s467 + $0x8e] sm:$0xff]
      %v613 = vld [vmem:[%s467 + $0x96] sm:$0xff]
      %v614 = vld [vmem:[%s467 + $0x9e] sm:$0xff]
      %v615 = vld [vmem:[%s467 + $0xa6] sm:$0xff]
      %v616 = vld [vmem:[%s467 + $0xae] sm:$0xff]
      %v617 = vld [vmem:[%s467 + $0xb6] sm:$0xff]
      %v618 = vld [vmem:[%s467 + $0xbe] sm:$0xff]
      %v619 = vld [vmem:[%s467 + $0xc6] sm:$0xff]
      %v620 = vld [vmem:[%s467 + $0xce] sm:$0xff]
      %v621 = vld [vmem:[%s467 + $0xd6] sm:$0xff]
      %v622 = vld [vmem:[%s467 + $0xde] sm:$0xff]
      %v623 = vld [vmem:[%s467 + $0xe6] sm:$0xff]
      %v624 = vld [vmem:[%s467 + $0xee] sm:$0xff]
      %v625 = vld [vmem:[%s467 + $0xf6] sm:$0xff]
      %v626 = vld [vmem:[%s467 + $0xfe] sm:$0xff]
      %v627 = vld [vmem:[%s467 + $0x106] sm:$0xff]
      %v628 = vld [vmem:[%s467 + $0x10e] sm:$0xff]
      %v629 = vld [vmem:[%s467 + $0x116] sm:$0xff]
      %v630 = vld [vmem:[%s467 + $0x11e] sm:$0xff]
      %v631 = vld [vmem:[%s467 + $0x126] sm:$0xff]
      %v632 = vld [vmem:[%s467 + $0x12e] sm:$0xff]
      %v633 = vld [vmem:[%s467 + $0x136] sm:$0xff]
      %v634 = vld [vmem:[%s467 + $0x13e] sm:$0xff]
      %v635 = vld [vmem:[%s467 + $0x146] sm:$0xf]
      %s636 = scalar_lea.vmem %s3, 4
      %v637 = vld [vmem:[%s636] sm:$0x7]
      %vm638 = vcmask 23552
      %v640 = vsel %vm638, %v595, 0
      %v643 = vsel %vm638, %v596, 0
      %v646 = vsel %vm638, %v597, 0
      %v649 = vsel %vm638, %v598, 0
      %v652 = vsel %vm638, %v599, 0
      %v655 = vsel %vm638, %v600, 0
      %v658 = vsel %vm638, %v601, 0
      %v661 = vsel %vm638, %v602, 0
      %v664 = vsel %vm638, %v603, 0
      %v667 = vsel %vm638, %v604, 0
      %v670 = vsel %vm638, %v605, 0
      %v673 = vsel %vm638, %v606, 0
      %v676 = vsel %vm638, %v607, 0
      %v679 = vsel %vm638, %v608, 0
      %v682 = vsel %vm638, %v609, 0
      %v685 = vsel %vm638, %v610, 0
      %v688 = vsel %vm638, %v611, 0
      %v691 = vsel %vm638, %v612, 0
      %v694 = vsel %vm638, %v613, 0
      %v697 = vsel %vm638, %v614, 0
      %v700 = vsel %vm638, %v615, 0
      %v703 = vsel %vm638, %v616, 0
      %v706 = vsel %vm638, %v617, 0
      %v709 = vsel %vm638, %v618, 0
      %v712 = vsel %vm638, %v619, 0
      %v715 = vsel %vm638, %v620, 0
      %v718 = vsel %vm638, %v621, 0
      %v721 = vsel %vm638, %v622, 0
      %v724 = vsel %vm638, %v623, 0
      %v727 = vsel %vm638, %v624, 0
      %v730 = vsel %vm638, %v625, 0
      %v733 = vsel %vm638, %v626, 0
      %v736 = vsel %vm638, %v627, 0
      %v739 = vsel %vm638, %v628, 0
      %v742 = vsel %vm638, %v629, 0
      %v745 = vsel %vm638, %v630, 0
      %v748 = vsel %vm638, %v631, 0
      %v751 = vsel %vm638, %v632, 0
      %v754 = vsel %vm638, %v633, 0
      %v757 = vsel %vm638, %v634, 0
      %v760 = vsel %vm638, %v635, 0
      %vm762 = vcmask 1042432
      %v764 = vsel %vm762, %v637, 0
      %766 = vmatprep.subr.mxu0 0.0
      %767 = vmatpush1.msra.mxu0 %v764
      %768 = vmatprep.subr.mxu0 0.0
      %769 = vmatpush1.msra.mxu0 0.0
      %770 = vmatprep.subr.mxu0 0.0
      %771 = vmatpush1.msra.mxu0 0.0
      %772 = vmatprep.subr.mxu0 0.0
      %773 = vmatpush1.msra.mxu0 0.0
      %774 = vmatprep.subr.mxu0 0.0
      %775 = vmatpush1.msra.mxu0 0.0
      %776 = vmatprep.subr.mxu0 0.0
      %777 = vmatpush1.msra.mxu0 0.0
      %778 = vmatprep.subr.mxu0 0.0
      %779 = vmatpush1.msra.mxu0 0.0
      %780 = vmatprep.subr.mxu0 0.0
      %781 = vmatpush1.msra.mxu0 0.0
      %782 = vmatprep.subr.mxu0 0.0
      %783 = vmatpush1.msra.mxu0 0.0
      %784 = vmatprep.subr.mxu0 0.0
      %785 = vmatpush1.msra.mxu0 0.0
      %786 = vmatprep.subr.mxu0 0.0
      %787 = vmatpush1.msra.mxu0 0.0
      %788 = vmatprep.subr.mxu0 0.0
      %789 = vmatpush1.msra.mxu0 0.0
      %790 = vmatprep.subr.mxu0 0.0
      %791 = vmatpush1.msra.mxu0 0.0
      %792 = vmatprep.subr.mxu0 0.0
      %793 = vmatpush1.msra.mxu0 0.0
      %794 = vmatprep.subr.mxu0 0.0
      %795 = vmatpush1.msra.mxu0 0.0
      %796 = vmatprep.subr.mxu0 0.0
      %797 = vmatpush1.msra.mxu0 0.0
      %798 = vmatprep.subr.mxu0 0.0
      %799 = vmatpush1.msra.mxu0 0.0
      %800 = vmatprep.subr.mxu0 0.0
      %801 = vmatpush1.msra.mxu0 0.0
      %802 = vmatprep.subr.mxu0 0.0
      %803 = vmatpush1.msra.mxu0 0.0
      %804 = vmatprep.subr.mxu0 0.0
      %805 = vmatpush1.msra.mxu0 0.0
      %806 = vmatprep.subr.mxu0 0.0
      %807 = vmatpush1.msra.mxu0 0.0
      %808 = vmatprep.subr.mxu0 0.0
      %809 = vmatpush1.msra.mxu0 0.0
      %810 = vmatprep.subr.mxu0 0.0
      %811 = vmatpush1.msra.mxu0 0.0
      %812 = vmatprep.subr.mxu0 0.0
      %813 = vmatpush1.msra.mxu0 0.0
      %814 = vmatprep.subr.mxu0 0.0
      %815 = vmatpush1.msra.mxu0 0.0
      %816 = vmatprep.subr.mxu0 0.0
      %817 = vmatpush1.msra.mxu0 0.0
      %818 = vmatprep.subr.mxu0 0.0
      %819 = vmatpush1.msra.mxu0 0.0
      %820 = vmatprep.subr.mxu0 0.0
      %821 = vmatpush1.msra.mxu0 0.0
      %822 = vmatprep.subr.mxu0 0.0
      %823 = vmatpush1.msra.mxu0 0.0
      %824 = vmatprep.subr.mxu0 0.0
      %825 = vmatpush1.msra.mxu0 0.0
      %826 = vmatprep.subr.mxu0 0.0
      %827 = vmatpush1.msra.mxu0 0.0
      %828 = vmatprep.subr.mxu0 0.0
      %829 = vmatpush1.msra.mxu0 0.0
      %830 = vmatprep.mubr.f32.mxu0 0.0
      %831 = vmatmul.mubr.f32.gmra.mrb[0].mxu0 %v640
      %v832 = vpop.f32.mrb[0].mxu0
      %v833 = vadd.f32 0.0, %v832
      %v834 = vpop.f32.mrb[0].mxu0
      %835 = vmatprep.mubr.f32.mxu0 0.0
      %836 = vmatmul.mubr.f32.gmra.mrb[0].mxu0 %v643
      %v837 = vpop.f32.mrb[0].mxu0
      %v838 = vadd.f32 0.0, %v837
      %v839 = vpop.f32.mrb[0].mxu0
      %840 = vmatprep.mubr.f32.mxu0 0.0
      %841 = vmatmul.mubr.f32.gmra.mrb[0].mxu0 %v646
      %v842 = vpop.f32.mrb[0].mxu0
      %v843 = vadd.f32 0.0, %v842
      %v844 = vpop.f32.mrb[0].mxu0
      %845 = vmatprep.mubr.f32.mxu0 0.0
      %846 = vmatmul.mubr.f32.gmra.mrb[0].mxu0 %v649
      %v847 = vpop.f32.mrb[0].mxu0
      %v848 = vadd.f32 0.0, %v847
      %v849 = vpop.f32.mrb[0].mxu0
      %850 = vmatprep.mubr.f32.mxu0 0.0
      %851 = vmatmul.mubr.f32.gmra.mrb[0].mxu0 %v652
      %v852 = vpop.f32.mrb[0].mxu0
      %v853 = vadd.f32 0.0, %v852
      %v854 = vpop.f32.mrb[0].mxu0
      %855 = vmatprep.mubr.f32.mxu0 0.0
      %856 = vmatmul.mubr.f32.gmra.mrb[0].mxu0 %v655
      %v857 = vpop.f32.mrb[0].mxu0
      %v858 = vadd.f32 0.0, %v857
      %v859 = vpop.f32.mrb[0].mxu0
      %860 = vmatprep.mubr.f32.mxu0 0.0
      %861 = vmatmul.mubr.f32.gmra.mrb[0].mxu0 %v658
      %v862 = vpop.f32.mrb[0].mxu0
      %v863 = vadd.f32 0.0, %v862
      %v864 = vpop.f32.mrb[0].mxu0
      %865 = vmatprep.mubr.f32.mxu0 0.0
      %866 = vmatmul.mubr.f32.gmra.mrb[0].mxu0 %v661
      %v867 = vpop.f32.mrb[0].mxu0
      %v868 = vadd.f32 0.0, %v867
      %v869 = vpop.f32.mrb[0].mxu0
      %870 = vmatprep.mubr.f32.mxu0 0.0
      %871 = vmatmul.mubr.f32.gmra.mrb[0].mxu0 %v664
      %v872 = vpop.f32.mrb[0].mxu0
      %v873 = vadd.f32 0.0, %v872
      %v874 = vpop.f32.mrb[0].mxu0
      %875 = vmatprep.mubr.f32.mxu0 0.0
      %876 = vmatmul.mubr.f32.gmra.mrb[0].mxu0 %v667
      %v877 = vpop.f32.mrb[0].mxu0
      %v878 = vadd.f32 0.0, %v877
      %v879 = vpop.f32.mrb[0].mxu0
      %880 = vmatprep.mubr.f32.mxu0 0.0
      %881 = vmatmul.mubr.f32.gmra.mrb[0].mxu0 %v670
      %v882 = vpop.f32.mrb[0].mxu0
      %v883 = vadd.f32 0.0, %v882
      %v884 = vpop.f32.mrb[0].mxu0
      %885 = vmatprep.mubr.f32.mxu0 0.0
      %886 = vmatmul.mubr.f32.gmra.mrb[0].mxu0 %v673
      %v887 = vpop.f32.mrb[0].mxu0
      %v888 = vadd.f32 0.0, %v887
      %v889 = vpop.f32.mrb[0].mxu0
      %890 = vmatprep.mubr.f32.mxu0 0.0
      %891 = vmatmul.mubr.f32.gmra.mrb[0].mxu0 %v676
      %v892 = vpop.f32.mrb[0].mxu0
      %v893 = vadd.f32 0.0, %v892
      %v894 = vpop.f32.mrb[0].mxu0
      %895 = vmatprep.mubr.f32.mxu0 0.0
      %896 = vmatmul.mubr.f32.gmra.mrb[0].mxu0 %v679
      %v897 = vpop.f32.mrb[0].mxu0
      %v898 = vadd.f32 0.0, %v897
      %v899 = vpop.f32.mrb[0].mxu0
      %900 = vmatprep.mubr.f32.mxu0 0.0
      %901 = vmatmul.mubr.f32.gmra.mrb[0].mxu0 %v682
      %v902 = vpop.f32.mrb[0].mxu0
      %v903 = vadd.f32 0.0, %v902
      %v904 = vpop.f32.mrb[0].mxu0
      %905 = vmatprep.mubr.f32.mxu0 0.0
      %906 = vmatmul.mubr.f32.gmra.mrb[0].mxu0 %v685
      %v907 = vpop.f32.mrb[0].mxu0
      %v908 = vadd.f32 0.0, %v907
      %v909 = vpop.f32.mrb[0].mxu0
      %910 = vmatprep.mubr.f32.mxu0 0.0
      %911 = vmatmul.mubr.f32.gmra.mrb[0].mxu0 %v688
      %v912 = vpop.f32.mrb[0].mxu0
      %v913 = vadd.f32 0.0, %v912
      %v914 = vpop.f32.mrb[0].mxu0
      %915 = vmatprep.mubr.f32.mxu0 0.0
      %916 = vmatmul.mubr.f32.gmra.mrb[0].mxu0 %v691
      %v917 = vpop.f32.mrb[0].mxu0
      %v918 = vadd.f32 0.0, %v917
      %v919 = vpop.f32.mrb[0].mxu0
      %920 = vmatprep.mubr.f32.mxu0 0.0
      %921 = vmatmul.mubr.f32.gmra.mrb[0].mxu0 %v694
      %v922 = vpop.f32.mrb[0].mxu0
      %v923 = vadd.f32 0.0, %v922
      %v924 = vpop.f32.mrb[0].mxu0
      %925 = vmatprep.mubr.f32.mxu0 0.0
      %926 = vmatmul.mubr.f32.gmra.mrb[0].mxu0 %v697
      %v927 = vpop.f32.mrb[0].mxu0
      %v928 = vadd.f32 0.0, %v927
      %v929 = vpop.f32.mrb[0].mxu0
      %930 = vmatprep.mubr.f32.mxu0 0.0
      %931 = vmatmul.mubr.f32.gmra.mrb[0].mxu0 %v700
      %v932 = vpop.f32.mrb[0].mxu0
      %v933 = vadd.f32 0.0, %v932
      %v934 = vpop.f32.mrb[0].mxu0
      %935 = vmatprep.mubr.f32.mxu0 0.0
      %936 = vmatmul.mubr.f32.gmra.mrb[0].mxu0 %v703
      %v937 = vpop.f32.mrb[0].mxu0
      %v938 = vadd.f32 0.0, %v937
      %v939 = vpop.f32.mrb[0].mxu0
      %940 = vmatprep.mubr.f32.mxu0 0.0
      %941 = vmatmul.mubr.f32.gmra.mrb[0].mxu0 %v706
      %v942 = vpop.f32.mrb[0].mxu0
      %v943 = vadd.f32 0.0, %v942
      %v944 = vpop.f32.mrb[0].mxu0
      %945 = vmatprep.mubr.f32.mxu0 0.0
      %946 = vmatmul.mubr.f32.gmra.mrb[0].mxu0 %v709
      %v947 = vpop.f32.mrb[0].mxu0
      %v948 = vadd.f32 0.0, %v947
      %v949 = vpop.f32.mrb[0].mxu0
      %950 = vmatprep.mubr.f32.mxu0 0.0
      %951 = vmatmul.mubr.f32.gmra.mrb[0].mxu0 %v712
      %v952 = vpop.f32.mrb[0].mxu0
      %v953 = vadd.f32 0.0, %v952
      %v954 = vpop.f32.mrb[0].mxu0
      %955 = vmatprep.mubr.f32.mxu0 0.0
      %956 = vmatmul.mubr.f32.gmra.mrb[0].mxu0 %v715
      %v957 = vpop.f32.mrb[0].mxu0
      %v958 = vadd.f32 0.0, %v957
      %v959 = vpop.f32.mrb[0].mxu0
      %960 = vmatprep.mubr.f32.mxu0 0.0
      %961 = vmatmul.mubr.f32.gmra.mrb[0].mxu0 %v718
      %v962 = vpop.f32.mrb[0].mxu0
      %v963 = vadd.f32 0.0, %v962
      %v964 = vpop.f32.mrb[0].mxu0
      %965 = vmatprep.mubr.f32.mxu0 0.0
      %966 = vmatmul.mubr.f32.gmra.mrb[0].mxu0 %v721
      %v967 = vpop.f32.mrb[0].mxu0
      %v968 = vadd.f32 0.0, %v967
      %v969 = vpop.f32.mrb[0].mxu0
      %970 = vmatprep.mubr.f32.mxu0 0.0
      %971 = vmatmul.mubr.f32.gmra.mrb[0].mxu0 %v724
      %v972 = vpop.f32.mrb[0].mxu0
      %v973 = vadd.f32 0.0, %v972
      %v974 = vpop.f32.mrb[0].mxu0
      %975 = vmatprep.mubr.f32.mxu0 0.0
      %976 = vmatmul.mubr.f32.gmra.mrb[0].mxu0 %v727
      %v977 = vpop.f32.mrb[0].mxu0
      %v978 = vadd.f32 0.0, %v977
      %v979 = vpop.f32.mrb[0].mxu0
      %980 = vmatprep.mubr.f32.mxu0 0.0
      %981 = vmatmul.mubr.f32.gmra.mrb[0].mxu0 %v730
      %v982 = vpop.f32.mrb[0].mxu0
      %v983 = vadd.f32 0.0, %v982
      %v984 = vpop.f32.mrb[0].mxu0
      %985 = vmatprep.mubr.f32.mxu0 0.0
      %986 = vmatmul.mubr.f32.gmra.mrb[0].mxu0 %v733
      %v987 = vpop.f32.mrb[0].mxu0
      %v988 = vadd.f32 0.0, %v987
      %v989 = vpop.f32.mrb[0].mxu0
      %990 = vmatprep.mubr.f32.mxu0 0.0
      %991 = vmatmul.mubr.f32.gmra.mrb[0].mxu0 %v736
      %v992 = vpop.f32.mrb[0].mxu0
      %v993 = vadd.f32 0.0, %v992
      %v994 = vpop.f32.mrb[0].mxu0
      %995 = vmatprep.mubr.f32.mxu0 0.0
      %996 = vmatmul.mubr.f32.gmra.mrb[0].mxu0 %v739
      %v997 = vpop.f32.mrb[0].mxu0
      %v998 = vadd.f32 0.0, %v997
      %v999 = vpop.f32.mrb[0].mxu0
      %1000 = vmatprep.mubr.f32.mxu0 0.0
      %1001 = vmatmul.mubr.f32.gmra.mrb[0].mxu0 %v742
      %v1002 = vpop.f32.mrb[0].mxu0
      %v1003 = vadd.f32 0.0, %v1002
      %v1004 = vpop.f32.mrb[0].mxu0
      %1005 = vmatprep.mubr.f32.mxu0 0.0
      %1006 = vmatmul.mubr.f32.gmra.mrb[0].mxu0 %v745
      %v1007 = vpop.f32.mrb[0].mxu0
      %v1008 = vadd.f32 0.0, %v1007
      %v1009 = vpop.f32.mrb[0].mxu0
      %1010 = vmatprep.mubr.f32.mxu0 0.0
      %1011 = vmatmul.mubr.f32.gmra.mrb[0].mxu0 %v748
      %v1012 = vpop.f32.mrb[0].mxu0
      %v1013 = vadd.f32 0.0, %v1012
      %v1014 = vpop.f32.mrb[0].mxu0
      %1015 = vmatprep.mubr.f32.mxu0 0.0
      %1016 = vmatmul.mubr.f32.gmra.mrb[0].mxu0 %v751
      %v1017 = vpop.f32.mrb[0].mxu0
      %v1018 = vadd.f32 0.0, %v1017
      %v1019 = vpop.f32.mrb[0].mxu0
      %1020 = vmatprep.mubr.f32.mxu0 0.0
      %1021 = vmatmul.mubr.f32.gmra.mrb[0].mxu0 %v754
      %v1022 = vpop.f32.mrb[0].mxu0
      %v1023 = vadd.f32 0.0, %v1022
      %v1024 = vpop.f32.mrb[0].mxu0
      %1025 = vmatprep.mubr.f32.mxu0 0.0
      %1026 = vmatmul.mubr.f32.gmra.mrb[0].mxu0 %v757
      %v1027 = vpop.f32.mrb[0].mxu0
      %v1028 = vadd.f32 0.0, %v1027
      %v1029 = vpop.f32.mrb[0].mxu0
      %1030 = vmatprep.mubr.f32.mxu0 0.0
      %1031 = vmatmul.mubr.f32.gmra.mrb[0].mxu0 %v760
      %v1032 = vpop.f32.mrb[0].mxu0
      %v1033 = vadd.f32 0.0, %v1032
      %v1034 = vpop.f32.mrb[0].mxu0
      %1035 = vdwg.mxu0
      %v1037 = vsel %vm638, %v553, 0
      %v1040 = vsel %vm638, %v554, 0
      %v1043 = vsel %vm638, %v555, 0
      %v1046 = vsel %vm638, %v556, 0
      %v1049 = vsel %vm638, %v557, 0
      %v1052 = vsel %vm638, %v558, 0
      %v1055 = vsel %vm638, %v559, 0
      %v1058 = vsel %vm638, %v560, 0
      %v1061 = vsel %vm638, %v561, 0
      %v1064 = vsel %vm638, %v562, 0
      %v1067 = vsel %vm638, %v563, 0
      %v1070 = vsel %vm638, %v564, 0
      %v1073 = vsel %vm638, %v565, 0
      %v1076 = vsel %vm638, %v566, 0
      %v1079 = vsel %vm638, %v567, 0
      %v1082 = vsel %vm638, %v568, 0
      %v1085 = vsel %vm638, %v569, 0
      %v1088 = vsel %vm638, %v570, 0
      %v1091 = vsel %vm638, %v571, 0
      %v1094 = vsel %vm638, %v572, 0
      %v1097 = vsel %vm638, %v573, 0
      %v1100 = vsel %vm638, %v574, 0
      %v1103 = vsel %vm638, %v575, 0
      %v1106 = vsel %vm638, %v576, 0
      %v1109 = vsel %vm638, %v577, 0
      %v1112 = vsel %vm638, %v578, 0
      %v1115 = vsel %vm638, %v579, 0
      %v1118 = vsel %vm638, %v580, 0
      %v1121 = vsel %vm638, %v581, 0
      %v1124 = vsel %vm638, %v582, 0
      %v1127 = vsel %vm638, %v583, 0
      %v1130 = vsel %vm638, %v584, 0
      %v1133 = vsel %vm638, %v585, 0
      %v1136 = vsel %vm638, %v586, 0
      %v1139 = vsel %vm638, %v587, 0
      %v1142 = vsel %vm638, %v588, 0
      %v1145 = vsel %vm638, %v589, 0
      %v1148 = vsel %vm638, %v590, 0
      %v1151 = vsel %vm638, %v591, 0
      %v1154 = vsel %vm638, %v592, 0
      %v1157 = vsel %vm638, %v593, 0
      %v1160 = vsel %vm762, %v594, 0
      %1162 = vmatprep.subr.mxu0 0.0
      %1163 = vmatpush1.msra.mxu0 %v1160
      %1164 = vmatprep.subr.mxu0 0.0
      %1165 = vmatpush1.msra.mxu0 0.0
      %1166 = vmatprep.subr.mxu0 0.0
      %1167 = vmatpush1.msra.mxu0 0.0
      %1168 = vmatprep.subr.mxu0 0.0
      %1169 = vmatpush1.msra.mxu0 0.0
      %1170 = vmatprep.subr.mxu0 0.0
      %1171 = vmatpush1.msra.mxu0 0.0
      %1172 = vmatprep.subr.mxu0 0.0
      %1173 = vmatpush1.msra.mxu0 0.0
      %1174 = vmatprep.subr.mxu0 0.0
      %1175 = vmatpush1.msra.mxu0 0.0
      %1176 = vmatprep.subr.mxu0 0.0
      %1177 = vmatpush1.msra.mxu0 0.0
      %1178 = vmatprep.subr.mxu0 0.0
      %1179 = vmatpush1.msra.mxu0 0.0
      %1180 = vmatprep.subr.mxu0 0.0
      %1181 = vmatpush1.msra.mxu0 0.0
      %1182 = vmatprep.subr.mxu0 0.0
      %1183 = vmatpush1.msra.mxu0 0.0
      %1184 = vmatprep.subr.mxu0 0.0
      %1185 = vmatpush1.msra.mxu0 0.0
      %1186 = vmatprep.subr.mxu0 0.0
      %1187 = vmatpush1.msra.mxu0 0.0
      %1188 = vmatprep.subr.mxu0 0.0
      %1189 = vmatpush1.msra.mxu0 0.0
      %1190 = vmatprep.subr.mxu0 0.0
      %1191 = vmatpush1.msra.mxu0 0.0
      %1192 = vmatprep.subr.mxu0 0.0
      %1193 = vmatpush1.msra.mxu0 0.0
      %1194 = vmatprep.subr.mxu0 0.0
      %1195 = vmatpush1.msra.mxu0 0.0
      %1196 = vmatprep.subr.mxu0 0.0
      %1197 = vmatpush1.msra.mxu0 0.0
      %1198 = vmatprep.subr.mxu0 0.0
      %1199 = vmatpush1.msra.mxu0 0.0
      %1200 = vmatprep.subr.mxu0 0.0
      %1201 = vmatpush1.msra.mxu0 0.0
      %1202 = vmatprep.subr.mxu0 0.0
      %1203 = vmatpush1.msra.mxu0 0.0
      %1204 = vmatprep.subr.mxu0 0.0
      %1205 = vmatpush1.msra.mxu0 0.0
      %1206 = vmatprep.subr.mxu0 0.0
      %1207 = vmatpush1.msra.mxu0 0.0
      %1208 = vmatprep.subr.mxu0 0.0
      %1209 = vmatpush1.msra.mxu0 0.0
      %1210 = vmatprep.subr.mxu0 0.0
      %1211 = vmatpush1.msra.mxu0 0.0
      %1212 = vmatprep.subr.mxu0 0.0
      %1213 = vmatpush1.msra.mxu0 0.0
      %1214 = vmatprep.subr.mxu0 0.0
      %1215 = vmatpush1.msra.mxu0 0.0
      %1216 = vmatprep.subr.mxu0 0.0
      %1217 = vmatpush1.msra.mxu0 0.0
      %1218 = vmatprep.subr.mxu0 0.0
      %1219 = vmatpush1.msra.mxu0 0.0
      %1220 = vmatprep.subr.mxu0 0.0
      %1221 = vmatpush1.msra.mxu0 0.0
      %1222 = vmatprep.subr.mxu0 0.0
      %1223 = vmatpush1.msra.mxu0 0.0
      %1224 = vmatprep.subr.mxu0 0.0
      %1225 = vmatpush1.msra.mxu0 0.0
      %1226 = vmatprep.mubr.f32.mxu0 0.0
      %1227 = vmatmul.mubr.f32.gmra.mrb[0].mxu0 %v1037
      %v1228 = vpop.f32.mrb[0].mxu0
      %v1229 = vadd.f32 %v833, %v1228
      %v1230 = vpop.f32.mrb[0].mxu0
      %1231 = vmatprep.mubr.f32.mxu0 0.0
      %1232 = vmatmul.mubr.f32.gmra.mrb[0].mxu0 %v1040
      %v1233 = vpop.f32.mrb[0].mxu0
      %v1234 = vadd.f32 %v838, %v1233
      %v1235 = vpop.f32.mrb[0].mxu0
      %1236 = vmatprep.mubr.f32.mxu0 0.0
      %1237 = vmatmul.mubr.f32.gmra.mrb[0].mxu0 %v1043
      %v1238 = vpop.f32.mrb[0].mxu0
      %v1239 = vadd.f32 %v843, %v1238
      %v1240 = vpop.f32.mrb[0].mxu0
      %1241 = vmatprep.mubr.f32.mxu0 0.0
      %1242 = vmatmul.mubr.f32.gmra.mrb[0].mxu0 %v1046
      %v1243 = vpop.f32.mrb[0].mxu0
      %v1244 = vadd.f32 %v848, %v1243
      %v1245 = vpop.f32.mrb[0].mxu0
      %1246 = vmatprep.mubr.f32.mxu0 0.0
      %1247 = vmatmul.mubr.f32.gmra.mrb[0].mxu0 %v1049
      %v1248 = vpop.f32.mrb[0].mxu0
      %v1249 = vadd.f32 %v853, %v1248
      %v1250 = vpop.f32.mrb[0].mxu0
      %1251 = vmatprep.mubr.f32.mxu0 0.0
      %1252 = vmatmul.mubr.f32.gmra.mrb[0].mxu0 %v1052
      %v1253 = vpop.f32.mrb[0].mxu0
      %v1254 = vadd.f32 %v858, %v1253
      %v1255 = vpop.f32.mrb[0].mxu0
      %1256 = vmatprep.mubr.f32.mxu0 0.0
      %1257 = vmatmul.mubr.f32.gmra.mrb[0].mxu0 %v1055
      %v1258 = vpop.f32.mrb[0].mxu0
      %v1259 = vadd.f32 %v863, %v1258
      %v1260 = vpop.f32.mrb[0].mxu0
      %1261 = vmatprep.mubr.f32.mxu0 0.0
      %1262 = vmatmul.mubr.f32.gmra.mrb[0].mxu0 %v1058
      %v1263 = vpop.f32.mrb[0].mxu0
      %v1264 = vadd.f32 %v868, %v1263
      %v1265 = vpop.f32.mrb[0].mxu0
      %1266 = vmatprep.mubr.f32.mxu0 0.0
      %1267 = vmatmul.mubr.f32.gmra.mrb[0].mxu0 %v1061
      %v1268 = vpop.f32.mrb[0].mxu0
      %v1269 = vadd.f32 %v873, %v1268
      %v1270 = vpop.f32.mrb[0].mxu0
      %1271 = vmatprep.mubr.f32.mxu0 0.0
      %1272 = vmatmul.mubr.f32.gmra.mrb[0].mxu0 %v1064
      %v1273 = vpop.f32.mrb[0].mxu0
      %v1274 = vadd.f32 %v878, %v1273
      %v1275 = vpop.f32.mrb[0].mxu0
      %1276 = vmatprep.mubr.f32.mxu0 0.0
      %1277 = vmatmul.mubr.f32.gmra.mrb[0].mxu0 %v1067
      %v1278 = vpop.f32.mrb[0].mxu0
      %v1279 = vadd.f32 %v883, %v1278
      %v1280 = vpop.f32.mrb[0].mxu0
      %1281 = vmatprep.mubr.f32.mxu0 0.0
      %1282 = vmatmul.mubr.f32.gmra.mrb[0].mxu0 %v1070
      %v1283 = vpop.f32.mrb[0].mxu0
      %v1284 = vadd.f32 %v888, %v1283
      %v1285 = vpop.f32.mrb[0].mxu0
      %1286 = vmatprep.mubr.f32.mxu0 0.0
      %1287 = vmatmul.mubr.f32.gmra.mrb[0].mxu0 %v1073
      %v1288 = vpop.f32.mrb[0].mxu0
      %v1289 = vadd.f32 %v893, %v1288
      %v1290 = vpop.f32.mrb[0].mxu0
      %1291 = vmatprep.mubr.f32.mxu0 0.0
      %1292 = vmatmul.mubr.f32.gmra.mrb[0].mxu0 %v1076
      %v1293 = vpop.f32.mrb[0].mxu0
      %v1294 = vadd.f32 %v898, %v1293
      %v1295 = vpop.f32.mrb[0].mxu0
      %1296 = vmatprep.mubr.f32.mxu0 0.0
      %1297 = vmatmul.mubr.f32.gmra.mrb[0].mxu0 %v1079
      %v1298 = vpop.f32.mrb[0].mxu0
      %v1299 = vadd.f32 %v903, %v1298
      %v1300 = vpop.f32.mrb[0].mxu0
      %1301 = vmatprep.mubr.f32.mxu0 0.0
      %1302 = vmatmul.mubr.f32.gmra.mrb[0].mxu0 %v1082
      %v1303 = vpop.f32.mrb[0].mxu0
      %v1304 = vadd.f32 %v908, %v1303
      %v1305 = vpop.f32.mrb[0].mxu0
      %1306 = vmatprep.mubr.f32.mxu0 0.0
      %1307 = vmatmul.mubr.f32.gmra.mrb[0].mxu0 %v1085
      %v1308 = vpop.f32.mrb[0].mxu0
      %v1309 = vadd.f32 %v913, %v1308
      %v1310 = vpop.f32.mrb[0].mxu0
      %1311 = vmatprep.mubr.f32.mxu0 0.0
      %1312 = vmatmul.mubr.f32.gmra.mrb[0].mxu0 %v1088
      %v1313 = vpop.f32.mrb[0].mxu0
      %v1314 = vadd.f32 %v918, %v1313
      %v1315 = vpop.f32.mrb[0].mxu0
      %1316 = vmatprep.mubr.f32.mxu0 0.0
      %1317 = vmatmul.mubr.f32.gmra.mrb[0].mxu0 %v1091
      %v1318 = vpop.f32.mrb[0].mxu0
      %v1319 = vadd.f32 %v923, %v1318
      %v1320 = vpop.f32.mrb[0].mxu0
      %1321 = vmatprep.mubr.f32.mxu0 0.0
      %1322 = vmatmul.mubr.f32.gmra.mrb[0].mxu0 %v1094
      %v1323 = vpop.f32.mrb[0].mxu0
      %v1324 = vadd.f32 %v928, %v1323
      %v1325 = vpop.f32.mrb[0].mxu0
      %1326 = vmatprep.mubr.f32.mxu0 0.0
      %1327 = vmatmul.mubr.f32.gmra.mrb[0].mxu0 %v1097
      %v1328 = vpop.f32.mrb[0].mxu0
      %v1329 = vadd.f32 %v933, %v1328
      %v1330 = vpop.f32.mrb[0].mxu0
      %1331 = vmatprep.mubr.f32.mxu0 0.0
      %1332 = vmatmul.mubr.f32.gmra.mrb[0].mxu0 %v1100
      %v1333 = vpop.f32.mrb[0].mxu0
      %v1334 = vadd.f32 %v938, %v1333
      %v1335 = vpop.f32.mrb[0].mxu0
      %1336 = vmatprep.mubr.f32.mxu0 0.0
      %1337 = vmatmul.mubr.f32.gmra.mrb[0].mxu0 %v1103
      %v1338 = vpop.f32.mrb[0].mxu0
      %v1339 = vadd.f32 %v943, %v1338
      %v1340 = vpop.f32.mrb[0].mxu0
      %1341 = vmatprep.mubr.f32.mxu0 0.0
      %1342 = vmatmul.mubr.f32.gmra.mrb[0].mxu0 %v1106
      %v1343 = vpop.f32.mrb[0].mxu0
      %v1344 = vadd.f32 %v948, %v1343
      %v1345 = vpop.f32.mrb[0].mxu0
      %1346 = vmatprep.mubr.f32.mxu0 0.0
      %1347 = vmatmul.mubr.f32.gmra.mrb[0].mxu0 %v1109
      %v1348 = vpop.f32.mrb[0].mxu0
      %v1349 = vadd.f32 %v953, %v1348
      %v1350 = vpop.f32.mrb[0].mxu0
      %1351 = vmatprep.mubr.f32.mxu0 0.0
      %1352 = vmatmul.mubr.f32.gmra.mrb[0].mxu0 %v1112
      %v1353 = vpop.f32.mrb[0].mxu0
      %v1354 = vadd.f32 %v958, %v1353
      %v1355 = vpop.f32.mrb[0].mxu0
      %1356 = vmatprep.mubr.f32.mxu0 0.0
      %1357 = vmatmul.mubr.f32.gmra.mrb[0].mxu0 %v1115
      %v1358 = vpop.f32.mrb[0].mxu0
      %v1359 = vadd.f32 %v963, %v1358
      %v1360 = vpop.f32.mrb[0].mxu0
      %1361 = vmatprep.mubr.f32.mxu0 0.0
      %1362 = vmatmul.mubr.f32.gmra.mrb[0].mxu0 %v1118
      %v1363 = vpop.f32.mrb[0].mxu0
      %v1364 = vadd.f32 %v968, %v1363
      %v1365 = vpop.f32.mrb[0].mxu0
      %1366 = vmatprep.mubr.f32.mxu0 0.0
      %1367 = vmatmul.mubr.f32.gmra.mrb[0].mxu0 %v1121
      %v1368 = vpop.f32.mrb[0].mxu0
      %v1369 = vadd.f32 %v973, %v1368
      %v1370 = vpop.f32.mrb[0].mxu0
      %1371 = vmatprep.mubr.f32.mxu0 0.0
      %1372 = vmatmul.mubr.f32.gmra.mrb[0].mxu0 %v1124
      %v1373 = vpop.f32.mrb[0].mxu0
      %v1374 = vadd.f32 %v978, %v1373
      %v1375 = vpop.f32.mrb[0].mxu0
      %1376 = vmatprep.mubr.f32.mxu0 0.0
      %1377 = vmatmul.mubr.f32.gmra.mrb[0].mxu0 %v1127
      %v1378 = vpop.f32.mrb[0].mxu0
      %v1379 = vadd.f32 %v983, %v1378
      %v1380 = vpop.f32.mrb[0].mxu0
      %1381 = vmatprep.mubr.f32.mxu0 0.0
      %1382 = vmatmul.mubr.f32.gmra.mrb[0].mxu0 %v1130
      %v1383 = vpop.f32.mrb[0].mxu0
      %v1384 = vadd.f32 %v988, %v1383
      %v1385 = vpop.f32.mrb[0].mxu0
      %1386 = vmatprep.mubr.f32.mxu0 0.0
      %1387 = vmatmul.mubr.f32.gmra.mrb[0].mxu0 %v1133
      %v1388 = vpop.f32.mrb[0].mxu0
      %v1389 = vadd.f32 %v993, %v1388
      %v1390 = vpop.f32.mrb[0].mxu0
      %1391 = vmatprep.mubr.f32.mxu0 0.0
      %1392 = vmatmul.mubr.f32.gmra.mrb[0].mxu0 %v1136
      %v1393 = vpop.f32.mrb[0].mxu0
      %v1394 = vadd.f32 %v998, %v1393
      %v1395 = vpop.f32.mrb[0].mxu0
      %1396 = vmatprep.mubr.f32.mxu0 0.0
      %1397 = vmatmul.mubr.f32.gmra.mrb[0].mxu0 %v1139
      %v1398 = vpop.f32.mrb[0].mxu0
      %v1399 = vadd.f32 %v1003, %v1398
      %v1400 = vpop.f32.mrb[0].mxu0
      %1401 = vmatprep.mubr.f32.mxu0 0.0
      %1402 = vmatmul.mubr.f32.gmra.mrb[0].mxu0 %v1142
      %v1403 = vpop.f32.mrb[0].mxu0
      %v1404 = vadd.f32 %v1008, %v1403
      %v1405 = vpop.f32.mrb[0].mxu0
      %1406 = vmatprep.mubr.f32.mxu0 0.0
      %1407 = vmatmul.mubr.f32.gmra.mrb[0].mxu0 %v1145
      %v1408 = vpop.f32.mrb[0].mxu0
      %v1409 = vadd.f32 %v1013, %v1408
      %v1410 = vpop.f32.mrb[0].mxu0
      %1411 = vmatprep.mubr.f32.mxu0 0.0
      %1412 = vmatmul.mubr.f32.gmra.mrb[0].mxu0 %v1148
      %v1413 = vpop.f32.mrb[0].mxu0
      %v1414 = vadd.f32 %v1018, %v1413
      %v1415 = vpop.f32.mrb[0].mxu0
      %1416 = vmatprep.mubr.f32.mxu0 0.0
      %1417 = vmatmul.mubr.f32.gmra.mrb[0].mxu0 %v1151
      %v1418 = vpop.f32.mrb[0].mxu0
      %v1419 = vadd.f32 %v1023, %v1418
      %v1420 = vpop.f32.mrb[0].mxu0
      %1421 = vmatprep.mubr.f32.mxu0 0.0
      %1422 = vmatmul.mubr.f32.gmra.mrb[0].mxu0 %v1154
      %v1423 = vpop.f32.mrb[0].mxu0
      %v1424 = vadd.f32 %v1028, %v1423
      %v1425 = vpop.f32.mrb[0].mxu0
      %1426 = vmatprep.mubr.f32.mxu0 0.0
      %1427 = vmatmul.mubr.f32.gmra.mrb[0].mxu0 %v1157
      %v1428 = vpop.f32.mrb[0].mxu0
      %v1429 = vadd.f32 %v1033, %v1428
      %v1430 = vpop.f32.mrb[0].mxu0
      %1431 = vdwg.mxu0
      %v1432 = vld [vmem:[%s467 + $0x7] sm:$0xff]
      %v1433 = vld [vmem:[%s467 + $0xf] sm:$0xff]
      %v1434 = vld [vmem:[%s467 + $0x17] sm:$0xff]
      %v1435 = vld [vmem:[%s467 + $0x1f] sm:$0xff]
      %v1436 = vld [vmem:[%s467 + $0x27] sm:$0xff]
      %v1437 = vld [vmem:[%s467 + $0x2f] sm:$0xff]
      %v1438 = vld [vmem:[%s467 + $0x37] sm:$0xff]
      %v1439 = vld [vmem:[%s467 + $0x3f] sm:$0xff]
      %v1440 = vld [vmem:[%s467 + $0x47] sm:$0xff]
      %v1441 = vld [vmem:[%s467 + $0x4f] sm:$0xff]
      %v1442 = vld [vmem:[%s467 + $0x57] sm:$0xff]
      %v1443 = vld [vmem:[%s467 + $0x5f] sm:$0xff]
      %v1444 = vld [vmem:[%s467 + $0x67] sm:$0xff]
      %v1445 = vld [vmem:[%s467 + $0x6f] sm:$0xff]
      %v1446 = vld [vmem:[%s467 + $0x77] sm:$0xff]
      %v1447 = vld [vmem:[%s467 + $0x7f] sm:$0xff]
      %v1448 = vld [vmem:[%s467 + $0x87] sm:$0xff]
      %v1449 = vld [vmem:[%s467 + $0x8f] sm:$0xff]
      %v1450 = vld [vmem:[%s467 + $0x97] sm:$0xff]
      %v1451 = vld [vmem:[%s467 + $0x9f] sm:$0xff]
      %v1452 = vld [vmem:[%s467 + $0xa7] sm:$0xff]
      %v1453 = vld [vmem:[%s467 + $0xaf] sm:$0xff]
      %v1454 = vld [vmem:[%s467 + $0xb7] sm:$0xff]
      %v1455 = vld [vmem:[%s467 + $0xbf] sm:$0xff]
      %v1456 = vld [vmem:[%s467 + $0xc7] sm:$0xff]
      %v1457 = vld [vmem:[%s467 + $0xcf] sm:$0xff]
      %v1458 = vld [vmem:[%s467 + $0xd7] sm:$0xff]
      %v1459 = vld [vmem:[%s467 + $0xdf] sm:$0xff]
      %v1460 = vld [vmem:[%s467 + $0xe7] sm:$0xff]
      %v1461 = vld [vmem:[%s467 + $0xef] sm:$0xff]
      %v1462 = vld [vmem:[%s467 + $0xf7] sm:$0xff]
      %v1463 = vld [vmem:[%s467 + $0xff] sm:$0xff]
      %v1464 = vld [vmem:[%s467 + $0x107] sm:$0xff]
      %v1465 = vld [vmem:[%s467 + $0x10f] sm:$0xff]
      %v1466 = vld [vmem:[%s467 + $0x117] sm:$0xff]
      %v1467 = vld [vmem:[%s467 + $0x11f] sm:$0xff]
      %v1468 = vld [vmem:[%s467 + $0x127] sm:$0xff]
      %v1469 = vld [vmem:[%s467 + $0x12f] sm:$0xff]
      %v1470 = vld [vmem:[%s467 + $0x137] sm:$0xff]
      %v1471 = vld [vmem:[%s467 + $0x13f] sm:$0xff]
      %v1472 = vld [vmem:[%s467 + $0x147] sm:$0xf]
      %s1473 = scalar_lea.vmem %s3, 8
      %v1474 = vld [vmem:[%s1473] sm:$0x7]
      %v1476 = vsel %vm638, %v1432, 0
      %v1479 = vsel %vm638, %v1433, 0
      %v1482 = vsel %vm638, %v1434, 0
      %v1485 = vsel %vm638, %v1435, 0
      %v1488 = vsel %vm638, %v1436, 0
      %v1491 = vsel %vm638, %v1437, 0
      %v1494 = vsel %vm638, %v1438, 0
      %v1497 = vsel %vm638, %v1439, 0
      %v1500 = vsel %vm638, %v1440, 0
      %v1503 = vsel %vm638, %v1441, 0
      %v1506 = vsel %vm638, %v1442, 0
      %v1509 = vsel %vm638, %v1443, 0
      %v1512 = vsel %vm638, %v1444, 0
      %v1515 = vsel %vm638, %v1445, 0
      %v1518 = vsel %vm638, %v1446, 0
      %v1521 = vsel %vm638, %v1447, 0
      %v1524 = vsel %vm638, %v1448, 0
      %v1527 = vsel %vm638, %v1449, 0
      %v1530 = vsel %vm638, %v1450, 0
      %v1533 = vsel %vm638, %v1451, 0
      %v1536 = vsel %vm638, %v1452, 0
      %v1539 = vsel %vm638, %v1453, 0
      %v1542 = vsel %vm638, %v1454, 0
      %v1545 = vsel %vm638, %v1455, 0
      %v1548 = vsel %vm638, %v1456, 0
      %v1551 = vsel %vm638, %v1457, 0
      %v1554 = vsel %vm638, %v1458, 0
      %v1557 = vsel %vm638, %v1459, 0
      %v1560 = vsel %vm638, %v1460, 0
      %v1563 = vsel %vm638, %v1461, 0
      %v1566 = vsel %vm638, %v1462, 0
      %v1569 = vsel %vm638, %v1463, 0
      %v1572 = vsel %vm638, %v1464, 0
      %v1575 = vsel %vm638, %v1465, 0
      %v1578 = vsel %vm638, %v1466, 0
      %v1581 = vsel %vm638, %v1467, 0
      %v1584 = vsel %vm638, %v1468, 0
      %v1587 = vsel %vm638, %v1469, 0
      %v1590 = vsel %vm638, %v1470, 0
      %v1593 = vsel %vm638, %v1471, 0
      %v1596 = vsel %vm638, %v1472, 0
      %v1599 = vsel %vm762, %v1474, 0
      %1601 = vmatprep.subr.mxu0 0.0
      %1602 = vmatpush1.msra.mxu0 %v1599
      %1603 = vmatprep.subr.mxu0 0.0
      %1604 = vmatpush1.msra.mxu0 0.0
      %1605 = vmatprep.subr.mxu0 0.0
      %1606 = vmatpush1.msra.mxu0 0.0
      %1607 = vmatprep.subr.mxu0 0.0
      %1608 = vmatpush1.msra.mxu0 0.0
      %1609 = vmatprep.subr.mxu0 0.0
      %1610 = vmatpush1.msra.mxu0 0.0
      %1611 = vmatprep.subr.mxu0 0.0
      %1612 = vmatpush1.msra.mxu0 0.0
      %1613 = vmatprep.subr.mxu0 0.0
      %1614 = vmatpush1.msra.mxu0 0.0
      %1615 = vmatprep.subr.mxu0 0.0
      %1616 = vmatpush1.msra.mxu0 0.0
      %1617 = vmatprep.subr.mxu0 0.0
      %1618 = vmatpush1.msra.mxu0 0.0
      %1619 = vmatprep.subr.mxu0 0.0
      %1620 = vmatpush1.msra.mxu0 0.0
      %1621 = vmatprep.subr.mxu0 0.0
      %1622 = vmatpush1.msra.mxu0 0.0
      %1623 = vmatprep.subr.mxu0 0.0
      %1624 = vmatpush1.msra.mxu0 0.0
      %1625 = vmatprep.subr.mxu0 0.0
      %1626 = vmatpush1.msra.mxu0 0.0
      %1627 = vmatprep.subr.mxu0 0.0
      %1628 = vmatpush1.msra.mxu0 0.0
      %1629 = vmatprep.subr.mxu0 0.0
      %1630 = vmatpush1.msra.mxu0 0.0
      %1631 = vmatprep.subr.mxu0 0.0
      %1632 = vmatpush1.msra.mxu0 0.0
      %1633 = vmatprep.subr.mxu0 0.0
      %1634 = vmatpush1.msra.mxu0 0.0
      %1635 = vmatprep.subr.mxu0 0.0
      %1636 = vmatpush1.msra.mxu0 0.0
      %1637 = vmatprep.subr.mxu0 0.0
      %1638 = vmatpush1.msra.mxu0 0.0
      %1639 = vmatprep.subr.mxu0 0.0
      %1640 = vmatpush1.msra.mxu0 0.0
      %1641 = vmatprep.subr.mxu0 0.0
      %1642 = vmatpush1.msra.mxu0 0.0
      %1643 = vmatprep.subr.mxu0 0.0
      %1644 = vmatpush1.msra.mxu0 0.0
      %1645 = vmatprep.subr.mxu0 0.0
      %1646 = vmatpush1.msra.mxu0 0.0
      %1647 = vmatprep.subr.mxu0 0.0
      %1648 = vmatpush1.msra.mxu0 0.0
      %1649 = vmatprep.subr.mxu0 0.0
      %1650 = vmatpush1.msra.mxu0 0.0
      %1651 = vmatprep.subr.mxu0 0.0
      %1652 = vmatpush1.msra.mxu0 0.0
      %1653 = vmatprep.subr.mxu0 0.0
      %1654 = vmatpush1.msra.mxu0 0.0
      %1655 = vmatprep.subr.mxu0 0.0
      %1656 = vmatpush1.msra.mxu0 0.0
      %1657 = vmatprep.subr.mxu0 0.0
      %1658 = vmatpush1.msra.mxu0 0.0
      %1659 = vmatprep.subr.mxu0 0.0
      %1660 = vmatpush1.msra.mxu0 0.0
      %1661 = vmatprep.subr.mxu0 0.0
      %1662 = vmatpush1.msra.mxu0 0.0
      %1663 = vmatprep.subr.mxu0 0.0
      %1664 = vmatpush1.msra.mxu0 0.0
      %1665 = vmatprep.mubr.f32.mxu0 0.0
      %1666 = vmatmul.mubr.f32.gmra.mrb[0].mxu0 %v1476
      %v1667 = vpop.f32.mrb[0].mxu0
      %v1668 = vadd.f32 0.0, %v1667
      %v1669 = vpop.f32.mrb[0].mxu0
      %1670 = vmatprep.mubr.f32.mxu0 0.0
      %1671 = vmatmul.mubr.f32.gmra.mrb[0].mxu0 %v1479
      %v1672 = vpop.f32.mrb[0].mxu0
      %v1673 = vadd.f32 0.0, %v1672
      %v1674 = vpop.f32.mrb[0].mxu0
      %1675 = vmatprep.mubr.f32.mxu0 0.0
      %1676 = vmatmul.mubr.f32.gmra.mrb[0].mxu0 %v1482
      %v1677 = vpop.f32.mrb[0].mxu0
      %v1678 = vadd.f32 0.0, %v1677
      %v1679 = vpop.f32.mrb[0].mxu0
      %1680 = vmatprep.mubr.f32.mxu0 0.0
      %1681 = vmatmul.mubr.f32.gmra.mrb[0].mxu0 %v1485
      %v1682 = vpop.f32.mrb[0].mxu0
      %v1683 = vadd.f32 0.0, %v1682
      %v1684 = vpop.f32.mrb[0].mxu0
      %1685 = vmatprep.mubr.f32.mxu0 0.0
      %1686 = vmatmul.mubr.f32.gmra.mrb[0].mxu0 %v1488
      %v1687 = vpop.f32.mrb[0].mxu0
      %v1688 = vadd.f32 0.0, %v1687
      %v1689 = vpop.f32.mrb[0].mxu0
      %1690 = vmatprep.mubr.f32.mxu0 0.0
      %1691 = vmatmul.mubr.f32.gmra.mrb[0].mxu0 %v1491
      %v1692 = vpop.f32.mrb[0].mxu0
      %v1693 = vadd.f32 0.0, %v1692
      %v1694 = vpop.f32.mrb[0].mxu0
      %1695 = vmatprep.mubr.f32.mxu0 0.0
      %1696 = vmatmul.mubr.f32.gmra.mrb[0].mxu0 %v1494
      %v1697 = vpop.f32.mrb[0].mxu0
      %v1698 = vadd.f32 0.0, %v1697
      %v1699 = vpop.f32.mrb[0].mxu0
      %1700 = vmatprep.mubr.f32.mxu0 0.0
      %1701 = vmatmul.mubr.f32.gmra.mrb[0].mxu0 %v1497
      %v1702 = vpop.f32.mrb[0].mxu0
      %v1703 = vadd.f32 0.0, %v1702
      %v1704 = vpop.f32.mrb[0].mxu0
      %1705 = vmatprep.mubr.f32.mxu0 0.0
      %1706 = vmatmul.mubr.f32.gmra.mrb[0].mxu0 %v1500
      %v1707 = vpop.f32.mrb[0].mxu0
      %v1708 = vadd.f32 0.0, %v1707
      %v1709 = vpop.f32.mrb[0].mxu0
      %1710 = vmatprep.mubr.f32.mxu0 0.0
      %1711 = vmatmul.mubr.f32.gmra.mrb[0].mxu0 %v1503
      %v1712 = vpop.f32.mrb[0].mxu0
      %v1713 = vadd.f32 0.0, %v1712
      %v1714 = vpop.f32.mrb[0].mxu0
      %1715 = vmatprep.mubr.f32.mxu0 0.0
      %1716 = vmatmul.mubr.f32.gmra.mrb[0].mxu0 %v1506
      %v1717 = vpop.f32.mrb[0].mxu0
      %v1718 = vadd.f32 0.0, %v1717
      %v1719 = vpop.f32.mrb[0].mxu0
      %1720 = vmatprep.mubr.f32.mxu0 0.0
      %1721 = vmatmul.mubr.f32.gmra.mrb[0].mxu0 %v1509
      %v1722 = vpop.f32.mrb[0].mxu0
      %v1723 = vadd.f32 0.0, %v1722
      %v1724 = vpop.f32.mrb[0].mxu0
      %1725 = vmatprep.mubr.f32.mxu0 0.0
      %1726 = vmatmul.mubr.f32.gmra.mrb[0].mxu0 %v1512
      %v1727 = vpop.f32.mrb[0].mxu0
      %v1728 = vadd.f32 0.0, %v1727
      %v1729 = vpop.f32.mrb[0].mxu0
      %1730 = vmatprep.mubr.f32.mxu0 0.0
      %1731 = vmatmul.mubr.f32.gmra.mrb[0].mxu0 %v1515
      %v1732 = vpop.f32.mrb[0].mxu0
      %v1733 = vadd.f32 0.0, %v1732
      %v1734 = vpop.f32.mrb[0].mxu0
      %1735 = vmatprep.mubr.f32.mxu0 0.0
      %1736 = vmatmul.mubr.f32.gmra.mrb[0].mxu0 %v1518
      %v1737 = vpop.f32.mrb[0].mxu0
      %v1738 = vadd.f32 0.0, %v1737
      %v1739 = vpop.f32.mrb[0].mxu0
      %1740 = vmatprep.mubr.f32.mxu0 0.0
      %1741 = vmatmul.mubr.f32.gmra.mrb[0].mxu0 %v1521
      %v1742 = vpop.f32.mrb[0].mxu0
      %v1743 = vadd.f32 0.0, %v1742
      %v1744 = vpop.f32.mrb[0].mxu0
      %1745 = vmatprep.mubr.f32.mxu0 0.0
      %1746 = vmatmul.mubr.f32.gmra.mrb[0].mxu0 %v1524
      %v1747 = vpop.f32.mrb[0].mxu0
      %v1748 = vadd.f32 0.0, %v1747
      %v1749 = vpop.f32.mrb[0].mxu0
      %1750 = vmatprep.mubr.f32.mxu0 0.0
      %1751 = vmatmul.mubr.f32.gmra.mrb[0].mxu0 %v1527
      %v1752 = vpop.f32.mrb[0].mxu0
      %v1753 = vadd.f32 0.0, %v1752
      %v1754 = vpop.f32.mrb[0].mxu0
      %1755 = vmatprep.mubr.f32.mxu0 0.0
      %1756 = vmatmul.mubr.f32.gmra.mrb[0].mxu0 %v1530
      %v1757 = vpop.f32.mrb[0].mxu0
      %v1758 = vadd.f32 0.0, %v1757
      %v1759 = vpop.f32.mrb[0].mxu0
      %1760 = vmatprep.mubr.f32.mxu0 0.0
      %1761 = vmatmul.mubr.f32.gmra.mrb[0].mxu0 %v1533
      %v1762 = vpop.f32.mrb[0].mxu0
      %v1763 = vadd.f32 0.0, %v1762
      %v1764 = vpop.f32.mrb[0].mxu0
      %1765 = vmatprep.mubr.f32.mxu0 0.0
      %1766 = vmatmul.mubr.f32.gmra.mrb[0].mxu0 %v1536
      %v1767 = vpop.f32.mrb[0].mxu0
      %v1768 = vadd.f32 0.0, %v1767
      %v1769 = vpop.f32.mrb[0].mxu0
      %1770 = vmatprep.mubr.f32.mxu0 0.0
      %1771 = vmatmul.mubr.f32.gmra.mrb[0].mxu0 %v1539
      %v1772 = vpop.f32.mrb[0].mxu0
      %v1773 = vadd.f32 0.0, %v1772
      %v1774 = vpop.f32.mrb[0].mxu0
      %1775 = vmatprep.mubr.f32.mxu0 0.0
      %1776 = vmatmul.mubr.f32.gmra.mrb[0].mxu0 %v1542
      %v1777 = vpop.f32.mrb[0].mxu0
      %v1778 = vadd.f32 0.0, %v1777
      %v1779 = vpop.f32.mrb[0].mxu0
      %1780 = vmatprep.mubr.f32.mxu0 0.0
      %1781 = vmatmul.mubr.f32.gmra.mrb[0].mxu0 %v1545
      %v1782 = vpop.f32.mrb[0].mxu0
      %v1783 = vadd.f32 0.0, %v1782
      %v1784 = vpop.f32.mrb[0].mxu0
      %1785 = vmatprep.mubr.f32.mxu0 0.0
      %1786 = vmatmul.mubr.f32.gmra.mrb[0].mxu0 %v1548
      %v1787 = vpop.f32.mrb[0].mxu0
      %v1788 = vadd.f32 0.0, %v1787
      %v1789 = vpop.f32.mrb[0].mxu0
      %1790 = vmatprep.mubr.f32.mxu0 0.0
      %1791 = vmatmul.mubr.f32.gmra.mrb[0].mxu0 %v1551
      %v1792 = vpop.f32.mrb[0].mxu0
      %v1793 = vadd.f32 0.0, %v1792
      %v1794 = vpop.f32.mrb[0].mxu0
      %1795 = vmatprep.mubr.f32.mxu0 0.0
      %1796 = vmatmul.mubr.f32.gmra.mrb[0].mxu0 %v1554
      %v1797 = vpop.f32.mrb[0].mxu0
      %v1798 = vadd.f32 0.0, %v1797
      %v1799 = vpop.f32.mrb[0].mxu0
      %1800 = vmatprep.mubr.f32.mxu0 0.0
      %1801 = vmatmul.mubr.f32.gmra.mrb[0].mxu0 %v1557
      %v1802 = vpop.f32.mrb[0].mxu0
      %v1803 = vadd.f32 0.0, %v1802
      %v1804 = vpop.f32.mrb[0].mxu0
      %1805 = vmatprep.mubr.f32.mxu0 0.0
      %1806 = vmatmul.mubr.f32.gmra.mrb[0].mxu0 %v1560
      %v1807 = vpop.f32.mrb[0].mxu0
      %v1808 = vadd.f32 0.0, %v1807
      %v1809 = vpop.f32.mrb[0].mxu0
      %1810 = vmatprep.mubr.f32.mxu0 0.0
      %1811 = vmatmul.mubr.f32.gmra.mrb[0].mxu0 %v1563
      %v1812 = vpop.f32.mrb[0].mxu0
      %v1813 = vadd.f32 0.0, %v1812
      %v1814 = vpop.f32.mrb[0].mxu0
      %1815 = vmatprep.mubr.f32.mxu0 0.0
      %1816 = vmatmul.mubr.f32.gmra.mrb[0].mxu0 %v1566
      %v1817 = vpop.f32.mrb[0].mxu0
      %v1818 = vadd.f32 0.0, %v1817
      %v1819 = vpop.f32.mrb[0].mxu0
      %1820 = vmatprep.mubr.f32.mxu0 0.0
      %1821 = vmatmul.mubr.f32.gmra.mrb[0].mxu0 %v1569
      %v1822 = vpop.f32.mrb[0].mxu0
      %v1823 = vadd.f32 0.0, %v1822
      %v1824 = vpop.f32.mrb[0].mxu0
      %1825 = vmatprep.mubr.f32.mxu0 0.0
      %1826 = vmatmul.mubr.f32.gmra.mrb[0].mxu0 %v1572
      %v1827 = vpop.f32.mrb[0].mxu0
      %v1828 = vadd.f32 0.0, %v1827
      %v1829 = vpop.f32.mrb[0].mxu0
      %1830 = vmatprep.mubr.f32.mxu0 0.0
      %1831 = vmatmul.mubr.f32.gmra.mrb[0].mxu0 %v1575
      %v1832 = vpop.f32.mrb[0].mxu0
      %v1833 = vadd.f32 0.0, %v1832
      %v1834 = vpop.f32.mrb[0].mxu0
      %1835 = vmatprep.mubr.f32.mxu0 0.0
      %1836 = vmatmul.mubr.f32.gmra.mrb[0].mxu0 %v1578
      %v1837 = vpop.f32.mrb[0].mxu0
      %v1838 = vadd.f32 0.0, %v1837
      %v1839 = vpop.f32.mrb[0].mxu0
      %1840 = vmatprep.mubr.f32.mxu0 0.0
      %1841 = vmatmul.mubr.f32.gmra.mrb[0].mxu0 %v1581
      %v1842 = vpop.f32.mrb[0].mxu0
      %v1843 = vadd.f32 0.0, %v1842
      %v1844 = vpop.f32.mrb[0].mxu0
      %1845 = vmatprep.mubr.f32.mxu0 0.0
      %1846 = vmatmul.mubr.f32.gmra.mrb[0].mxu0 %v1584
      %v1847 = vpop.f32.mrb[0].mxu0
      %v1848 = vadd.f32 0.0, %v1847
      %v1849 = vpop.f32.mrb[0].mxu0
      %1850 = vmatprep.mubr.f32.mxu0 0.0
      %1851 = vmatmul.mubr.f32.gmra.mrb[0].mxu0 %v1587
      %v1852 = vpop.f32.mrb[0].mxu0
      %v1853 = vadd.f32 0.0, %v1852
      %v1854 = vpop.f32.mrb[0].mxu0
      %1855 = vmatprep.mubr.f32.mxu0 0.0
      %1856 = vmatmul.mubr.f32.gmra.mrb[0].mxu0 %v1590
      %v1857 = vpop.f32.mrb[0].mxu0
      %v1858 = vadd.f32 0.0, %v1857
      %v1859 = vpop.f32.mrb[0].mxu0
      %1860 = vmatprep.mubr.f32.mxu0 0.0
      %1861 = vmatmul.mubr.f32.gmra.mrb[0].mxu0 %v1593
      %v1862 = vpop.f32.mrb[0].mxu0
      %v1863 = vadd.f32 0.0, %v1862
      %v1864 = vpop.f32.mrb[0].mxu0
      %1865 = vmatprep.mubr.f32.mxu0 0.0
      %1866 = vmatmul.mubr.f32.gmra.mrb[0].mxu0 %v1596
      %v1867 = vpop.f32.mrb[0].mxu0
      %v1868 = vadd.f32 0.0, %v1867
      %v1869 = vpop.f32.mrb[0].mxu0
      %1870 = vdwg.mxu0
      %v1871 = vadd.f32 %v1229, %v1668
      %v1872 = vadd.f32 %v1234, %v1673
      %v1873 = vadd.f32 %v1239, %v1678
      %v1874 = vadd.f32 %v1244, %v1683
      %v1875 = vadd.f32 %v1249, %v1688
      %v1876 = vadd.f32 %v1254, %v1693
      %v1877 = vadd.f32 %v1259, %v1698
      %v1878 = vadd.f32 %v1264, %v1703
      %v1879 = vadd.f32 %v1269, %v1708
      %v1880 = vadd.f32 %v1274, %v1713
      %v1881 = vadd.f32 %v1279, %v1718
      %v1882 = vadd.f32 %v1284, %v1723
      %v1883 = vadd.f32 %v1289, %v1728
      %v1884 = vadd.f32 %v1294, %v1733
      %v1885 = vadd.f32 %v1299, %v1738
      %v1886 = vadd.f32 %v1304, %v1743
      %v1887 = vadd.f32 %v1309, %v1748
      %v1888 = vadd.f32 %v1314, %v1753
      %v1889 = vadd.f32 %v1319, %v1758
      %v1890 = vadd.f32 %v1324, %v1763
      %v1891 = vadd.f32 %v1329, %v1768
      %v1892 = vadd.f32 %v1334, %v1773
      %v1893 = vadd.f32 %v1339, %v1778
      %v1894 = vadd.f32 %v1344, %v1783
      %v1895 = vadd.f32 %v1349, %v1788
      %v1896 = vadd.f32 %v1354, %v1793
      %v1897 = vadd.f32 %v1359, %v1798
      %v1898 = vadd.f32 %v1364, %v1803
      %v1899 = vadd.f32 %v1369, %v1808
      %v1900 = vadd.f32 %v1374, %v1813
      %v1901 = vadd.f32 %v1379, %v1818
      %v1902 = vadd.f32 %v1384, %v1823
      %v1903 = vadd.f32 %v1389, %v1828
      %v1904 = vadd.f32 %v1394, %v1833
      %v1905 = vadd.f32 %v1399, %v1838
      %v1906 = vadd.f32 %v1404, %v1843
      %v1907 = vadd.f32 %v1409, %v1848
      %v1908 = vadd.f32 %v1414, %v1853
      %v1909 = vadd.f32 %v1419, %v1858
      %v1910 = vadd.f32 %v1424, %v1863
      %v1911 = vadd.f32 %v1429, %v1868
      %v1912 = vld [vmem:[%s467 + $0x17] sm:$0xff]
      %v1913 = vld [vmem:[%s467 + $0x1f] sm:$0xff]
      %v1914 = vld [vmem:[%s467 + $0x27] sm:$0xff]
      %v1915 = vld [vmem:[%s467 + $0x2f] sm:$0xff]
      %v1916 = vld [vmem:[%s467 + $0x37] sm:$0xff]
      %v1917 = vld [vmem:[%s467 + $0x3f] sm:$0xff]
      %v1918 = vld [vmem:[%s467 + $0x47] sm:$0xff]
      %v1919 = vld [vmem:[%s467 + $0x4f] sm:$0xff]
      %v1920 = vld [vmem:[%s467 + $0x57] sm:$0xff]
      %v1921 = vld [vmem:[%s467 + $0x5f] sm:$0xff]
      %v1922 = vld [vmem:[%s467 + $0x67] sm:$0xff]
      %v1923 = vld [vmem:[%s467 + $0x6f] sm:$0xff]
      %v1924 = vld [vmem:[%s467 + $0x77] sm:$0xff]
      %v1925 = vld [vmem:[%s467 + $0x7f] sm:$0xff]
      %v1926 = vld [vmem:[%s467 + $0x87] sm:$0xff]
      %v1927 = vld [vmem:[%s467 + $0x8f] sm:$0xff]
      %v1928 = vld [vmem:[%s467 + $0x97] sm:$0xff]
      %v1929 = vld [vmem:[%s467 + $0x9f] sm:$0xff]
      %v1930 = vld [vmem:[%s467 + $0xa7] sm:$0xff]
      %v1931 = vld [vmem:[%s467 + $0xaf] sm:$0xff]
      %v1932 = vld [vmem:[%s467 + $0xb7] sm:$0xff]
      %v1933 = vld [vmem:[%s467 + $0xbf] sm:$0xff]
      %v1934 = vld [vmem:[%s467 + $0xc7] sm:$0xff]
      %v1935 = vld [vmem:[%s467 + $0xcf] sm:$0xff]
      %v1936 = vld [vmem:[%s467 + $0xd7] sm:$0xff]
      %v1937 = vld [vmem:[%s467 + $0xdf] sm:$0xff]
      %v1938 = vld [vmem:[%s467 + $0xe7] sm:$0xff]
      %v1939 = vld [vmem:[%s467 + $0xef] sm:$0xff]
      %v1940 = vld [vmem:[%s467 + $0xf7] sm:$0xff]
      %v1941 = vld [vmem:[%s467 + $0xff] sm:$0xff]
      %v1942 = vld [vmem:[%s467 + $0x107] sm:$0xff]
      %v1943 = vld [vmem:[%s467 + $0x10f] sm:$0xff]
      %v1944 = vld [vmem:[%s467 + $0x117] sm:$0xff]
      %v1945 = vld [vmem:[%s467 + $0x11f] sm:$0xff]
      %v1946 = vld [vmem:[%s467 + $0x127] sm:$0xff]
      %v1947 = vld [vmem:[%s467 + $0x12f] sm:$0xff]
      %v1948 = vld [vmem:[%s467 + $0x137] sm:$0xff]
      %v1949 = vld [vmem:[%s467 + $0x13f] sm:$0xff]
      %v1950 = vld [vmem:[%s467 + $0x147] sm:$0xff]
      %v1951 = vld [vmem:[%s467 + $0x14f] sm:$0xff]
      %v1952 = vld [vmem:[%s467 + $0x157] sm:$0xf]
      %s1953 = scalar_lea.vmem %s3, 12
      %v1954 = vld [vmem:[%s1953] sm:$0x7]
      %v1956 = vsel %vm638, %v1912, 0
      %v1959 = vsel %vm638, %v1913, 0
      %v1962 = vsel %vm638, %v1914, 0
      %v1965 = vsel %vm638, %v1915, 0
      %v1968 = vsel %vm638, %v1916, 0
      %v1971 = vsel %vm638, %v1917, 0
      %v1974 = vsel %vm638, %v1918, 0
      %v1977 = vsel %vm638, %v1919, 0
      %v1980 = vsel %vm638, %v1920, 0
      %v1983 = vsel %vm638, %v1921, 0
      %v1986 = vsel %vm638, %v1922, 0
      %v1989 = vsel %vm638, %v1923, 0
      %v1992 = vsel %vm638, %v1924, 0
      %v1995 = vsel %vm638, %v1925, 0
      %v1998 = vsel %vm638, %v1926, 0
      %v2001 = vsel %vm638, %v1927, 0
      %v2004 = vsel %vm638, %v1928, 0
      %v2007 = vsel %vm638, %v1929, 0
      %v2010 = vsel %vm638, %v1930, 0
      %v2013 = vsel %vm638, %v1931, 0
      %v2016 = vsel %vm638, %v1932, 0
      %v2019 = vsel %vm638, %v1933, 0
      %v2022 = vsel %vm638, %v1934, 0
      %v2025 = vsel %vm638, %v1935, 0
      %v2028 = vsel %vm638, %v1936, 0
      %v2031 = vsel %vm638, %v1937, 0
      %v2034 = vsel %vm638, %v1938, 0
      %v2037 = vsel %vm638, %v1939, 0
      %v2040 = vsel %vm638, %v1940, 0
      %v2043 = vsel %vm638, %v1941, 0
      %v2046 = vsel %vm638, %v1942, 0
      %v2049 = vsel %vm638, %v1943, 0
      %v2052 = vsel %vm638, %v1944, 0
      %v2055 = vsel %vm638, %v1945, 0
      %v2058 = vsel %vm638, %v1946, 0
      %v2061 = vsel %vm638, %v1947, 0
      %v2064 = vsel %vm638, %v1948, 0
      %v2067 = vsel %vm638, %v1949, 0
      %v2070 = vsel %vm638, %v1950, 0
      %v2073 = vsel %vm638, %v1951, 0
      %v2076 = vsel %vm638, %v1952, 0
      %v2079 = vsel %vm762, %v1954, 0
      %2081 = vmatprep.subr.mxu0 0.0
      %2082 = vmatpush1.msra.mxu0 %v2079
      %2083 = vmatprep.subr.mxu0 0.0
      %2084 = vmatpush1.msra.mxu0 0.0
      %2085 = vmatprep.subr.mxu0 0.0
      %2086 = vmatpush1.msra.mxu0 0.0
      %2087 = vmatprep.subr.mxu0 0.0
      %2088 = vmatpush1.msra.mxu0 0.0
      %2089 = vmatprep.subr.mxu0 0.0
      %2090 = vmatpush1.msra.mxu0 0.0
      %2091 = vmatprep.subr.mxu0 0.0
      %2092 = vmatpush1.msra.mxu0 0.0
      %2093 = vmatprep.subr.mxu0 0.0
      %2094 = vmatpush1.msra.mxu0 0.0
      %2095 = vmatprep.subr.mxu0 0.0
      %2096 = vmatpush1.msra.mxu0 0.0
      %2097 = vmatprep.subr.mxu0 0.0
      %2098 = vmatpush1.msra.mxu0 0.0
      %2099 = vmatprep.subr.mxu0 0.0
      %2100 = vmatpush1.msra.mxu0 0.0
      %2101 = vmatprep.subr.mxu0 0.0
      %2102 = vmatpush1.msra.mxu0 0.0
      %2103 = vmatprep.subr.mxu0 0.0
      %2104 = vmatpush1.msra.mxu0 0.0
      %2105 = vmatprep.subr.mxu0 0.0
      %2106 = vmatpush1.msra.mxu0 0.0
      %2107 = vmatprep.subr.mxu0 0.0
      %2108 = vmatpush1.msra.mxu0 0.0
      %2109 = vmatprep.subr.mxu0 0.0
      %2110 = vmatpush1.msra.mxu0 0.0
      %2111 = vmatprep.subr.mxu0 0.0
      %2112 = vmatpush1.msra.mxu0 0.0
      %2113 = vmatprep.subr.mxu0 0.0
      %2114 = vmatpush1.msra.mxu0 0.0
      %2115 = vmatprep.subr.mxu0 0.0
      %2116 = vmatpush1.msra.mxu0 0.0
      %2117 = vmatprep.subr.mxu0 0.0
      %2118 = vmatpush1.msra.mxu0 0.0
      %2119 = vmatprep.subr.mxu0 0.0
      %2120 = vmatpush1.msra.mxu0 0.0
      %2121 = vmatprep.subr.mxu0 0.0
      %2122 = vmatpush1.msra.mxu0 0.0
      %2123 = vmatprep.subr.mxu0 0.0
      %2124 = vmatpush1.msra.mxu0 0.0
      %2125 = vmatprep.subr.mxu0 0.0
      %2126 = vmatpush1.msra.mxu0 0.0
      %2127 = vmatprep.subr.mxu0 0.0
      %2128 = vmatpush1.msra.mxu0 0.0
      %2129 = vmatprep.subr.mxu0 0.0
      %2130 = vmatpush1.msra.mxu0 0.0
      %2131 = vmatprep.subr.mxu0 0.0
      %2132 = vmatpush1.msra.mxu0 0.0
      %2133 = vmatprep.subr.mxu0 0.0
      %2134 = vmatpush1.msra.mxu0 0.0
      %2135 = vmatprep.subr.mxu0 0.0
      %2136 = vmatpush1.msra.mxu0 0.0
      %2137 = vmatprep.subr.mxu0 0.0
      %2138 = vmatpush1.msra.mxu0 0.0
      %2139 = vmatprep.subr.mxu0 0.0
      %2140 = vmatpush1.msra.mxu0 0.0
      %2141 = vmatprep.subr.mxu0 0.0
      %2142 = vmatpush1.msra.mxu0 0.0
      %2143 = vmatprep.subr.mxu0 0.0
      %2144 = vmatpush1.msra.mxu0 0.0
      %2145 = vmatprep.mubr.f32.mxu0 0.0
      %2146 = vmatmul.mubr.f32.gmra.mrb[0].mxu0 %v1956
      %v2147 = vpop.f32.mrb[0].mxu0
      %v2148 = vadd.f32 0.0, %v2147
      %v2149 = vpop.f32.mrb[0].mxu0
      %2150 = vmatprep.mubr.f32.mxu0 0.0
      %2151 = vmatmul.mubr.f32.gmra.mrb[0].mxu0 %v1959
      %v2152 = vpop.f32.mrb[0].mxu0
      %v2153 = vadd.f32 0.0, %v2152
      %v2154 = vpop.f32.mrb[0].mxu0
      %2155 = vmatprep.mubr.f32.mxu0 0.0
      %2156 = vmatmul.mubr.f32.gmra.mrb[0].mxu0 %v1962
      %v2157 = vpop.f32.mrb[0].mxu0
      %v2158 = vadd.f32 0.0, %v2157
      %v2159 = vpop.f32.mrb[0].mxu0
      %2160 = vmatprep.mubr.f32.mxu0 0.0
      %2161 = vmatmul.mubr.f32.gmra.mrb[0].mxu0 %v1965
      %v2162 = vpop.f32.mrb[0].mxu0
      %v2163 = vadd.f32 0.0, %v2162
      %v2164 = vpop.f32.mrb[0].mxu0
      %2165 = vmatprep.mubr.f32.mxu0 0.0
      %2166 = vmatmul.mubr.f32.gmra.mrb[0].mxu0 %v1968
      %v2167 = vpop.f32.mrb[0].mxu0
      %v2168 = vadd.f32 0.0, %v2167
      %v2169 = vpop.f32.mrb[0].mxu0
      %2170 = vmatprep.mubr.f32.mxu0 0.0
      %2171 = vmatmul.mubr.f32.gmra.mrb[0].mxu0 %v1971
      %v2172 = vpop.f32.mrb[0].mxu0
      %v2173 = vadd.f32 0.0, %v2172
      %v2174 = vpop.f32.mrb[0].mxu0
      %2175 = vmatprep.mubr.f32.mxu0 0.0
      %2176 = vmatmul.mubr.f32.gmra.mrb[0].mxu0 %v1974
      %v2177 = vpop.f32.mrb[0].mxu0
      %v2178 = vadd.f32 0.0, %v2177
      %v2179 = vpop.f32.mrb[0].mxu0
      %2180 = vmatprep.mubr.f32.mxu0 0.0
      %2181 = vmatmul.mubr.f32.gmra.mrb[0].mxu0 %v1977
      %v2182 = vpop.f32.mrb[0].mxu0
      %v2183 = vadd.f32 0.0, %v2182
      %v2184 = vpop.f32.mrb[0].mxu0
      %2185 = vmatprep.mubr.f32.mxu0 0.0
      %2186 = vmatmul.mubr.f32.gmra.mrb[0].mxu0 %v1980
      %v2187 = vpop.f32.mrb[0].mxu0
      %v2188 = vadd.f32 0.0, %v2187
      %v2189 = vpop.f32.mrb[0].mxu0
      %2190 = vmatprep.mubr.f32.mxu0 0.0
      %2191 = vmatmul.mubr.f32.gmra.mrb[0].mxu0 %v1983
      %v2192 = vpop.f32.mrb[0].mxu0
      %v2193 = vadd.f32 0.0, %v2192
      %v2194 = vpop.f32.mrb[0].mxu0
      %2195 = vmatprep.mubr.f32.mxu0 0.0
      %2196 = vmatmul.mubr.f32.gmra.mrb[0].mxu0 %v1986
      %v2197 = vpop.f32.mrb[0].mxu0
      %v2198 = vadd.f32 0.0, %v2197
      %v2199 = vpop.f32.mrb[0].mxu0
      %2200 = vmatprep.mubr.f32.mxu0 0.0
      %2201 = vmatmul.mubr.f32.gmra.mrb[0].mxu0 %v1989
      %v2202 = vpop.f32.mrb[0].mxu0
      %v2203 = vadd.f32 0.0, %v2202
      %v2204 = vpop.f32.mrb[0].mxu0
      %2205 = vmatprep.mubr.f32.mxu0 0.0
      %2206 = vmatmul.mubr.f32.gmra.mrb[0].mxu0 %v1992
      %v2207 = vpop.f32.mrb[0].mxu0
      %v2208 = vadd.f32 0.0, %v2207
      %v2209 = vpop.f32.mrb[0].mxu0
      %2210 = vmatprep.mubr.f32.mxu0 0.0
      %2211 = vmatmul.mubr.f32.gmra.mrb[0].mxu0 %v1995
      %v2212 = vpop.f32.mrb[0].mxu0
      %v2213 = vadd.f32 0.0, %v2212
      %v2214 = vpop.f32.mrb[0].mxu0
      %2215 = vmatprep.mubr.f32.mxu0 0.0
      %2216 = vmatmul.mubr.f32.gmra.mrb[0].mxu0 %v1998
      %v2217 = vpop.f32.mrb[0].mxu0
      %v2218 = vadd.f32 0.0, %v2217
      %v2219 = vpop.f32.mrb[0].mxu0
      %2220 = vmatprep.mubr.f32.mxu0 0.0
      %2221 = vmatmul.mubr.f32.gmra.mrb[0].mxu0 %v2001
      %v2222 = vpop.f32.mrb[0].mxu0
      %v2223 = vadd.f32 0.0, %v2222
      %v2224 = vpop.f32.mrb[0].mxu0
      %2225 = vmatprep.mubr.f32.mxu0 0.0
      %2226 = vmatmul.mubr.f32.gmra.mrb[0].mxu0 %v2004
      %v2227 = vpop.f32.mrb[0].mxu0
      %v2228 = vadd.f32 0.0, %v2227
      %v2229 = vpop.f32.mrb[0].mxu0
      %2230 = vmatprep.mubr.f32.mxu0 0.0
      %2231 = vmatmul.mubr.f32.gmra.mrb[0].mxu0 %v2007
      %v2232 = vpop.f32.mrb[0].mxu0
      %v2233 = vadd.f32 0.0, %v2232
      %v2234 = vpop.f32.mrb[0].mxu0
      %2235 = vmatprep.mubr.f32.mxu0 0.0
      %2236 = vmatmul.mubr.f32.gmra.mrb[0].mxu0 %v2010
      %v2237 = vpop.f32.mrb[0].mxu0
      %v2238 = vadd.f32 0.0, %v2237
      %v2239 = vpop.f32.mrb[0].mxu0
      %2240 = vmatprep.mubr.f32.mxu0 0.0
      %2241 = vmatmul.mubr.f32.gmra.mrb[0].mxu0 %v2013
      %v2242 = vpop.f32.mrb[0].mxu0
      %v2243 = vadd.f32 0.0, %v2242
      %v2244 = vpop.f32.mrb[0].mxu0
      %2245 = vmatprep.mubr.f32.mxu0 0.0
      %2246 = vmatmul.mubr.f32.gmra.mrb[0].mxu0 %v2016
      %v2247 = vpop.f32.mrb[0].mxu0
      %v2248 = vadd.f32 0.0, %v2247
      %v2249 = vpop.f32.mrb[0].mxu0
      %2250 = vmatprep.mubr.f32.mxu0 0.0
      %2251 = vmatmul.mubr.f32.gmra.mrb[0].mxu0 %v2019
      %v2252 = vpop.f32.mrb[0].mxu0
      %v2253 = vadd.f32 0.0, %v2252
      %v2254 = vpop.f32.mrb[0].mxu0
      %2255 = vmatprep.mubr.f32.mxu0 0.0
      %2256 = vmatmul.mubr.f32.gmra.mrb[0].mxu0 %v2022
      %v2257 = vpop.f32.mrb[0].mxu0
      %v2258 = vadd.f32 0.0, %v2257
      %v2259 = vpop.f32.mrb[0].mxu0
      %2260 = vmatprep.mubr.f32.mxu0 0.0
      %2261 = vmatmul.mubr.f32.gmra.mrb[0].mxu0 %v2025
      %v2262 = vpop.f32.mrb[0].mxu0
      %v2263 = vadd.f32 0.0, %v2262
      %v2264 = vpop.f32.mrb[0].mxu0
      %2265 = vmatprep.mubr.f32.mxu0 0.0
      %2266 = vmatmul.mubr.f32.gmra.mrb[0].mxu0 %v2028
      %v2267 = vpop.f32.mrb[0].mxu0
      %v2268 = vadd.f32 0.0, %v2267
      %v2269 = vpop.f32.mrb[0].mxu0
      %2270 = vmatprep.mubr.f32.mxu0 0.0
      %2271 = vmatmul.mubr.f32.gmra.mrb[0].mxu0 %v2031
      %v2272 = vpop.f32.mrb[0].mxu0
      %v2273 = vadd.f32 0.0, %v2272
      %v2274 = vpop.f32.mrb[0].mxu0
      %2275 = vmatprep.mubr.f32.mxu0 0.0
      %2276 = vmatmul.mubr.f32.gmra.mrb[0].mxu0 %v2034
      %v2277 = vpop.f32.mrb[0].mxu0
      %v2278 = vadd.f32 0.0, %v2277
      %v2279 = vpop.f32.mrb[0].mxu0
      %2280 = vmatprep.mubr.f32.mxu0 0.0
      %2281 = vmatmul.mubr.f32.gmra.mrb[0].mxu0 %v2037
      %v2282 = vpop.f32.mrb[0].mxu0
      %v2283 = vadd.f32 0.0, %v2282
      %v2284 = vpop.f32.mrb[0].mxu0
      %2285 = vmatprep.mubr.f32.mxu0 0.0
      %2286 = vmatmul.mubr.f32.gmra.mrb[0].mxu0 %v2040
      %v2287 = vpop.f32.mrb[0].mxu0
      %v2288 = vadd.f32 0.0, %v2287
      %v2289 = vpop.f32.mrb[0].mxu0
      %2290 = vmatprep.mubr.f32.mxu0 0.0
      %2291 = vmatmul.mubr.f32.gmra.mrb[0].mxu0 %v2043
      %v2292 = vpop.f32.mrb[0].mxu0
      %v2293 = vadd.f32 0.0, %v2292
      %v2294 = vpop.f32.mrb[0].mxu0
      %2295 = vmatprep.mubr.f32.mxu0 0.0
      %2296 = vmatmul.mubr.f32.gmra.mrb[0].mxu0 %v2046
      %v2297 = vpop.f32.mrb[0].mxu0
      %v2298 = vadd.f32 0.0, %v2297
      %v2299 = vpop.f32.mrb[0].mxu0
      %2300 = vmatprep.mubr.f32.mxu0 0.0
      %2301 = vmatmul.mubr.f32.gmra.mrb[0].mxu0 %v2049
      %v2302 = vpop.f32.mrb[0].mxu0
      %v2303 = vadd.f32 0.0, %v2302
      %v2304 = vpop.f32.mrb[0].mxu0
      %2305 = vmatprep.mubr.f32.mxu0 0.0
      %2306 = vmatmul.mubr.f32.gmra.mrb[0].mxu0 %v2052
      %v2307 = vpop.f32.mrb[0].mxu0
      %v2308 = vadd.f32 0.0, %v2307
      %v2309 = vpop.f32.mrb[0].mxu0
      %2310 = vmatprep.mubr.f32.mxu0 0.0
      %2311 = vmatmul.mubr.f32.gmra.mrb[0].mxu0 %v2055
      %v2312 = vpop.f32.mrb[0].mxu0
      %v2313 = vadd.f32 0.0, %v2312
      %v2314 = vpop.f32.mrb[0].mxu0
      %2315 = vmatprep.mubr.f32.mxu0 0.0
      %2316 = vmatmul.mubr.f32.gmra.mrb[0].mxu0 %v2058
      %v2317 = vpop.f32.mrb[0].mxu0
      %v2318 = vadd.f32 0.0, %v2317
      %v2319 = vpop.f32.mrb[0].mxu0
      %2320 = vmatprep.mubr.f32.mxu0 0.0
      %2321 = vmatmul.mubr.f32.gmra.mrb[0].mxu0 %v2061
      %v2322 = vpop.f32.mrb[0].mxu0
      %v2323 = vadd.f32 0.0, %v2322
      %v2324 = vpop.f32.mrb[0].mxu0
      %2325 = vmatprep.mubr.f32.mxu0 0.0
      %2326 = vmatmul.mubr.f32.gmra.mrb[0].mxu0 %v2064
      %v2327 = vpop.f32.mrb[0].mxu0
      %v2328 = vadd.f32 0.0, %v2327
      %v2329 = vpop.f32.mrb[0].mxu0
      %2330 = vmatprep.mubr.f32.mxu0 0.0
      %2331 = vmatmul.mubr.f32.gmra.mrb[0].mxu0 %v2067
      %v2332 = vpop.f32.mrb[0].mxu0
      %v2333 = vadd.f32 0.0, %v2332
      %v2334 = vpop.f32.mrb[0].mxu0
      %2335 = vmatprep.mubr.f32.mxu0 0.0
      %2336 = vmatmul.mubr.f32.gmra.mrb[0].mxu0 %v2070
      %v2337 = vpop.f32.mrb[0].mxu0
      %v2338 = vadd.f32 0.0, %v2337
      %v2339 = vpop.f32.mrb[0].mxu0
      %2340 = vmatprep.mubr.f32.mxu0 0.0
      %2341 = vmatmul.mubr.f32.gmra.mrb[0].mxu0 %v2073
      %v2342 = vpop.f32.mrb[0].mxu0
      %v2343 = vadd.f32 0.0, %v2342
      %v2344 = vpop.f32.mrb[0].mxu0
      %2345 = vmatprep.mubr.f32.mxu0 0.0
      %2346 = vmatmul.mubr.f32.gmra.mrb[0].mxu0 %v2076
      %v2347 = vpop.f32.mrb[0].mxu0
      %v2348 = vadd.f32 0.0, %v2347
      %v2349 = vpop.f32.mrb[0].mxu0
      %2350 = vdwg.mxu0
      %v2351 = vadd.f32 %v1871, %v2148
      %v2352 = vadd.f32 %v1872, %v2153
      %v2353 = vadd.f32 %v1873, %v2158
      %v2354 = vadd.f32 %v1874, %v2163
      %v2355 = vadd.f32 %v1875, %v2168
      %v2356 = vadd.f32 %v1876, %v2173
      %v2357 = vadd.f32 %v1877, %v2178
      %v2358 = vadd.f32 %v1878, %v2183
      %v2359 = vadd.f32 %v1879, %v2188
      %v2360 = vadd.f32 %v1880, %v2193
      %v2361 = vadd.f32 %v1881, %v2198
      %v2362 = vadd.f32 %v1882, %v2203
      %v2363 = vadd.f32 %v1883, %v2208
      %v2364 = vadd.f32 %v1884, %v2213
      %v2365 = vadd.f32 %v1885, %v2218
      %v2366 = vadd.f32 %v1886, %v2223
      %v2367 = vadd.f32 %v1887, %v2228
      %v2368 = vadd.f32 %v1888, %v2233
      %v2369 = vadd.f32 %v1889, %v2238
      %v2370 = vadd.f32 %v1890, %v2243
      %v2371 = vadd.f32 %v1891, %v2248
      %v2372 = vadd.f32 %v1892, %v2253
      %v2373 = vadd.f32 %v1893, %v2258
      %v2374 = vadd.f32 %v1894, %v2263
      %v2375 = vadd.f32 %v1895, %v2268
      %v2376 = vadd.f32 %v1896, %v2273
      %v2377 = vadd.f32 %v1897, %v2278
      %v2378 = vadd.f32 %v1898, %v2283
      %v2379 = vadd.f32 %v1899, %v2288
      %v2380 = vadd.f32 %v1900, %v2293
      %v2381 = vadd.f32 %v1901, %v2298
      %v2382 = vadd.f32 %v1902, %v2303
      %v2383 = vadd.f32 %v1903, %v2308
      %v2384 = vadd.f32 %v1904, %v2313
      %v2385 = vadd.f32 %v1905, %v2318
      %v2386 = vadd.f32 %v1906, %v2323
      %v2387 = vadd.f32 %v1907, %v2328
      %v2388 = vadd.f32 %v1908, %v2333
      %v2389 = vadd.f32 %v1909, %v2338
      %v2390 = vadd.f32 %v1910, %v2343
      %v2391 = vadd.f32 %v1911, %v2348
      %v2392 = vld [vmem:[%s467 + $0x18] sm:$0xff]
      %v2393 = vld [vmem:[%s467 + $0x20] sm:$0xff]
      %v2394 = vld [vmem:[%s467 + $0x28] sm:$0xff]
      %v2395 = vld [vmem:[%s467 + $0x30] sm:$0xff]
      %v2396 = vld [vmem:[%s467 + $0x38] sm:$0xff]
      %v2397 = vld [vmem:[%s467 + $0x40] sm:$0xff]
      %v2398 = vld [vmem:[%s467 + $0x48] sm:$0xff]
      %v2399 = vld [vmem:[%s467 + $0x50] sm:$0xff]
      %v2400 = vld [vmem:[%s467 + $0x58] sm:$0xff]
      %v2401 = vld [vmem:[%s467 + $0x60] sm:$0xff]
      %v2402 = vld [vmem:[%s467 + $0x68] sm:$0xff]
      %v2403 = vld [vmem:[%s467 + $0x70] sm:$0xff]
      %v2404 = vld [vmem:[%s467 + $0x78] sm:$0xff]
      %v2405 = vld [vmem:[%s467 + $0x80] sm:$0xff]
      %v2406 = vld [vmem:[%s467 + $0x88] sm:$0xff]
      %v2407 = vld [vmem:[%s467 + $0x90] sm:$0xff]
      %v2408 = vld [vmem:[%s467 + $0x98] sm:$0xff]
      %v2409 = vld [vmem:[%s467 + $0xa0] sm:$0xff]
      %v2410 = vld [vmem:[%s467 + $0xa8] sm:$0xff]
      %v2411 = vld [vmem:[%s467 + $0xb0] sm:$0xff]
      %v2412 = vld [vmem:[%s467 + $0xb8] sm:$0xff]
      %v2413 = vld [vmem:[%s467 + $0xc0] sm:$0xff]
      %v2414 = vld [vmem:[%s467 + $0xc8] sm:$0xff]
      %v2415 = vld [vmem:[%s467 + $0xd0] sm:$0xff]
      %v2416 = vld [vmem:[%s467 + $0xd8] sm:$0xff]
      %v2417 = vld [vmem:[%s467 + $0xe0] sm:$0xff]
      %v2418 = vld [vmem:[%s467 + $0xe8] sm:$0xff]
      %v2419 = vld [vmem:[%s467 + $0xf0] sm:$0xff]
      %v2420 = vld [vmem:[%s467 + $0xf8] sm:$0xff]
      %v2421 = vld [vmem:[%s467 + $0x100] sm:$0xff]
      %v2422 = vld [vmem:[%s467 + $0x108] sm:$0xff]
      %v2423 = vld [vmem:[%s467 + $0x110] sm:$0xff]
      %v2424 = vld [vmem:[%s467 + $0x118] sm:$0xff]
      %v2425 = vld [vmem:[%s467 + $0x120] sm:$0xff]
      %v2426 = vld [vmem:[%s467 + $0x128] sm:$0xff]
      %v2427 = vld [vmem:[%s467 + $0x130] sm:$0xff]
      %v2428 = vld [vmem:[%s467 + $0x138] sm:$0xff]
      %v2429 = vld [vmem:[%s467 + $0x140] sm:$0xff]
      %v2430 = vld [vmem:[%s467 + $0x148] sm:$0xff]
      %v2431 = vld [vmem:[%s467 + $0x150] sm:$0xff]
      %v2432 = vld [vmem:[%s467 + $0x158] sm:$0xf]
      %s2433 = scalar_lea.vmem %s3, 16
      %v2434 = vld [vmem:[%s2433] sm:$0x7]
      %v2436 = vsel %vm638, %v2392, 0
      %v2439 = vsel %vm638, %v2393, 0
      %v2442 = vsel %vm638, %v2394, 0
      %v2445 = vsel %vm638, %v2395, 0
      %v2448 = vsel %vm638, %v2396, 0
      %v2451 = vsel %vm638, %v2397, 0
      %v2454 = vsel %vm638, %v2398, 0
      %v2457 = vsel %vm638, %v2399, 0
      %v2460 = vsel %vm638, %v2400, 0
      %v2463 = vsel %vm638, %v2401, 0
      %v2466 = vsel %vm638, %v2402, 0
      %v2469 = vsel %vm638, %v2403, 0
      %v2472 = vsel %vm638, %v2404, 0
      %v2475 = vsel %vm638, %v2405, 0
      %v2478 = vsel %vm638, %v2406, 0
      %v2481 = vsel %vm638, %v2407, 0
      %v2484 = vsel %vm638, %v2408, 0
      %v2487 = vsel %vm638, %v2409, 0
      %v2490 = vsel %vm638, %v2410, 0
      %v2493 = vsel %vm638, %v2411, 0
      %v2496 = vsel %vm638, %v2412, 0
      %v2499 = vsel %vm638, %v2413, 0
      %v2502 = vsel %vm638, %v2414, 0
      %v2505 = vsel %vm638, %v2415, 0
      %v2508 = vsel %vm638, %v2416, 0
      %v2511 = vsel %vm638, %v2417, 0
      %v2514 = vsel %vm638, %v2418, 0
      %v2517 = vsel %vm638, %v2419, 0
      %v2520 = vsel %vm638, %v2420, 0
      %v2523 = vsel %vm638, %v2421, 0
      %v2526 = vsel %vm638, %v2422, 0
      %v2529 = vsel %vm638, %v2423, 0
      %v2532 = vsel %vm638, %v2424, 0
      %v2535 = vsel %vm638, %v2425, 0
      %v2538 = vsel %vm638, %v2426, 0
      %v2541 = vsel %vm638, %v2427, 0
      %v2544 = vsel %vm638, %v2428, 0
      %v2547 = vsel %vm638, %v2429, 0
      %v2550 = vsel %vm638, %v2430, 0
      %v2553 = vsel %vm638, %v2431, 0
      %v2556 = vsel %vm638, %v2432, 0
      %v2559 = vsel %vm762, %v2434, 0
      %2561 = vmatprep.subr.mxu0 0.0
      %2562 = vmatpush1.msra.mxu0 %v2559
      %2563 = vmatprep.subr.mxu0 0.0
      %2564 = vmatpush1.msra.mxu0 0.0
      %2565 = vmatprep.subr.mxu0 0.0
      %2566 = vmatpush1.msra.mxu0 0.0
      %2567 = vmatprep.subr.mxu0 0.0
      %2568 = vmatpush1.msra.mxu0 0.0
      %2569 = vmatprep.subr.mxu0 0.0
      %2570 = vmatpush1.msra.mxu0 0.0
      %2571 = vmatprep.subr.mxu0 0.0
      %2572 = vmatpush1.msra.mxu0 0.0
      %2573 = vmatprep.subr.mxu0 0.0
      %2574 = vmatpush1.msra.mxu0 0.0
      %2575 = vmatprep.subr.mxu0 0.0
      %2576 = vmatpush1.msra.mxu0 0.0
      %2577 = vmatprep.subr.mxu0 0.0
      %2578 = vmatpush1.msra.mxu0 0.0
      %2579 = vmatprep.subr.mxu0 0.0
      %2580 = vmatpush1.msra.mxu0 0.0
      %2581 = vmatprep.subr.mxu0 0.0
      %2582 = vmatpush1.msra.mxu0 0.0
      %2583 = vmatprep.subr.mxu0 0.0
      %2584 = vmatpush1.msra.mxu0 0.0
      %2585 = vmatprep.subr.mxu0 0.0
      %2586 = vmatpush1.msra.mxu0 0.0
      %2587 = vmatprep.subr.mxu0 0.0
      %2588 = vmatpush1.msra.mxu0 0.0
      %2589 = vmatprep.subr.mxu0 0.0
      %2590 = vmatpush1.msra.mxu0 0.0
      %2591 = vmatprep.subr.mxu0 0.0
      %2592 = vmatpush1.msra.mxu0 0.0
      %2593 = vmatprep.subr.mxu0 0.0
      %2594 = vmatpush1.msra.mxu0 0.0
      %2595 = vmatprep.subr.mxu0 0.0
      %2596 = vmatpush1.msra.mxu0 0.0
      %2597 = vmatprep.subr.mxu0 0.0
      %2598 = vmatpush1.msra.mxu0 0.0
      %2599 = vmatprep.subr.mxu0 0.0
      %2600 = vmatpush1.msra.mxu0 0.0
      %2601 = vmatprep.subr.mxu0 0.0
      %2602 = vmatpush1.msra.mxu0 0.0
      %2603 = vmatprep.subr.mxu0 0.0
      %2604 = vmatpush1.msra.mxu0 0.0
      %2605 = vmatprep.subr.mxu0 0.0
      %2606 = vmatpush1.msra.mxu0 0.0
      %2607 = vmatprep.subr.mxu0 0.0
      %2608 = vmatpush1.msra.mxu0 0.0
      %2609 = vmatprep.subr.mxu0 0.0
      %2610 = vmatpush1.msra.mxu0 0.0
      %2611 = vmatprep.subr.mxu0 0.0
      %2612 = vmatpush1.msra.mxu0 0.0
      %2613 = vmatprep.subr.mxu0 0.0
      %2614 = vmatpush1.msra.mxu0 0.0
      %2615 = vmatprep.subr.mxu0 0.0
      %2616 = vmatpush1.msra.mxu0 0.0
      %2617 = vmatprep.subr.mxu0 0.0
      %2618 = vmatpush1.msra.mxu0 0.0
      %2619 = vmatprep.subr.mxu0 0.0
      %2620 = vmatpush1.msra.mxu0 0.0
      %2621 = vmatprep.subr.mxu0 0.0
      %2622 = vmatpush1.msra.mxu0 0.0
      %2623 = vmatprep.subr.mxu0 0.0
      %2624 = vmatpush1.msra.mxu0 0.0
      %2625 = vmatprep.mubr.f32.mxu0 0.0
      %2626 = vmatmul.mubr.f32.gmra.mrb[0].mxu0 %v2436
      %v2627 = vpop.f32.mrb[0].mxu0
      %v2628 = vadd.f32 0.0, %v2627
      %v2629 = vpop.f32.mrb[0].mxu0
      %2630 = vmatprep.mubr.f32.mxu0 0.0
      %2631 = vmatmul.mubr.f32.gmra.mrb[0].mxu0 %v2439
      %v2632 = vpop.f32.mrb[0].mxu0
      %v2633 = vadd.f32 0.0, %v2632
      %v2634 = vpop.f32.mrb[0].mxu0
      %2635 = vmatprep.mubr.f32.mxu0 0.0
      %2636 = vmatmul.mubr.f32.gmra.mrb[0].mxu0 %v2442
      %v2637 = vpop.f32.mrb[0].mxu0
      %v2638 = vadd.f32 0.0, %v2637
      %v2639 = vpop.f32.mrb[0].mxu0
      %2640 = vmatprep.mubr.f32.mxu0 0.0
      %2641 = vmatmul.mubr.f32.gmra.mrb[0].mxu0 %v2445
      %v2642 = vpop.f32.mrb[0].mxu0
      %v2643 = vadd.f32 0.0, %v2642
      %v2644 = vpop.f32.mrb[0].mxu0
      %2645 = vmatprep.mubr.f32.mxu0 0.0
      %2646 = vmatmul.mubr.f32.gmra.mrb[0].mxu0 %v2448
      %v2647 = vpop.f32.mrb[0].mxu0
      %v2648 = vadd.f32 0.0, %v2647
      %v2649 = vpop.f32.mrb[0].mxu0
      %2650 = vmatprep.mubr.f32.mxu0 0.0
      %2651 = vmatmul.mubr.f32.gmra.mrb[0].mxu0 %v2451
      %v2652 = vpop.f32.mrb[0].mxu0
      %v2653 = vadd.f32 0.0, %v2652
      %v2654 = vpop.f32.mrb[0].mxu0
      %2655 = vmatprep.mubr.f32.mxu0 0.0
      %2656 = vmatmul.mubr.f32.gmra.mrb[0].mxu0 %v2454
      %v2657 = vpop.f32.mrb[0].mxu0
      %v2658 = vadd.f32 0.0, %v2657
      %v2659 = vpop.f32.mrb[0].mxu0
      %2660 = vmatprep.mubr.f32.mxu0 0.0
      %2661 = vmatmul.mubr.f32.gmra.mrb[0].mxu0 %v2457
      %v2662 = vpop.f32.mrb[0].mxu0
      %v2663 = vadd.f32 0.0, %v2662
      %v2664 = vpop.f32.mrb[0].mxu0
      %2665 = vmatprep.mubr.f32.mxu0 0.0
      %2666 = vmatmul.mubr.f32.gmra.mrb[0].mxu0 %v2460
      %v2667 = vpop.f32.mrb[0].mxu0
      %v2668 = vadd.f32 0.0, %v2667
      %v2669 = vpop.f32.mrb[0].mxu0
      %2670 = vmatprep.mubr.f32.mxu0 0.0
      %2671 = vmatmul.mubr.f32.gmra.mrb[0].mxu0 %v2463
      %v2672 = vpop.f32.mrb[0].mxu0
      %v2673 = vadd.f32 0.0, %v2672
      %v2674 = vpop.f32.mrb[0].mxu0
      %2675 = vmatprep.mubr.f32.mxu0 0.0
      %2676 = vmatmul.mubr.f32.gmra.mrb[0].mxu0 %v2466
      %v2677 = vpop.f32.mrb[0].mxu0
      %v2678 = vadd.f32 0.0, %v2677
      %v2679 = vpop.f32.mrb[0].mxu0
      %2680 = vmatprep.mubr.f32.mxu0 0.0
      %2681 = vmatmul.mubr.f32.gmra.mrb[0].mxu0 %v2469
      %v2682 = vpop.f32.mrb[0].mxu0
      %v2683 = vadd.f32 0.0, %v2682
      %v2684 = vpop.f32.mrb[0].mxu0
      %2685 = vmatprep.mubr.f32.mxu0 0.0
      %2686 = vmatmul.mubr.f32.gmra.mrb[0].mxu0 %v2472
      %v2687 = vpop.f32.mrb[0].mxu0
      %v2688 = vadd.f32 0.0, %v2687
      %v2689 = vpop.f32.mrb[0].mxu0
      %2690 = vmatprep.mubr.f32.mxu0 0.0
      %2691 = vmatmul.mubr.f32.gmra.mrb[0].mxu0 %v2475
      %v2692 = vpop.f32.mrb[0].mxu0
      %v2693 = vadd.f32 0.0, %v2692
      %v2694 = vpop.f32.mrb[0].mxu0
      %2695 = vmatprep.mubr.f32.mxu0 0.0
      %2696 = vmatmul.mubr.f32.gmra.mrb[0].mxu0 %v2478
      %v2697 = vpop.f32.mrb[0].mxu0
      %v2698 = vadd.f32 0.0, %v2697
      %v2699 = vpop.f32.mrb[0].mxu0
      %2700 = vmatprep.mubr.f32.mxu0 0.0
      %2701 = vmatmul.mubr.f32.gmra.mrb[0].mxu0 %v2481
      %v2702 = vpop.f32.mrb[0].mxu0
      %v2703 = vadd.f32 0.0, %v2702
      %v2704 = vpop.f32.mrb[0].mxu0
      %2705 = vmatprep.mubr.f32.mxu0 0.0
      %2706 = vmatmul.mubr.f32.gmra.mrb[0].mxu0 %v2484
      %v2707 = vpop.f32.mrb[0].mxu0
      %v2708 = vadd.f32 0.0, %v2707
      %v2709 = vpop.f32.mrb[0].mxu0
      %2710 = vmatprep.mubr.f32.mxu0 0.0
      %2711 = vmatmul.mubr.f32.gmra.mrb[0].mxu0 %v2487
      %v2712 = vpop.f32.mrb[0].mxu0
      %v2713 = vadd.f32 0.0, %v2712
      %v2714 = vpop.f32.mrb[0].mxu0
      %2715 = vmatprep.mubr.f32.mxu0 0.0
      %2716 = vmatmul.mubr.f32.gmra.mrb[0].mxu0 %v2490
      %v2717 = vpop.f32.mrb[0].mxu0
      %v2718 = vadd.f32 0.0, %v2717
      %v2719 = vpop.f32.mrb[0].mxu0
      %2720 = vmatprep.mubr.f32.mxu0 0.0
      %2721 = vmatmul.mubr.f32.gmra.mrb[0].mxu0 %v2493
      %v2722 = vpop.f32.mrb[0].mxu0
      %v2723 = vadd.f32 0.0, %v2722
      %v2724 = vpop.f32.mrb[0].mxu0
      %2725 = vmatprep.mubr.f32.mxu0 0.0
      %2726 = vmatmul.mubr.f32.gmra.mrb[0].mxu0 %v2496
      %v2727 = vpop.f32.mrb[0].mxu0
      %v2728 = vadd.f32 0.0, %v2727
      %v2729 = vpop.f32.mrb[0].mxu0
      %2730 = vmatprep.mubr.f32.mxu0 0.0
      %2731 = vmatmul.mubr.f32.gmra.mrb[0].mxu0 %v2499
      %v2732 = vpop.f32.mrb[0].mxu0
      %v2733 = vadd.f32 0.0, %v2732
      %v2734 = vpop.f32.mrb[0].mxu0
      %2735 = vmatprep.mubr.f32.mxu0 0.0
      %2736 = vmatmul.mubr.f32.gmra.mrb[0].mxu0 %v2502
      %v2737 = vpop.f32.mrb[0].mxu0
      %v2738 = vadd.f32 0.0, %v2737
      %v2739 = vpop.f32.mrb[0].mxu0
      %2740 = vmatprep.mubr.f32.mxu0 0.0
      %2741 = vmatmul.mubr.f32.gmra.mrb[0].mxu0 %v2505
      %v2742 = vpop.f32.mrb[0].mxu0
      %v2743 = vadd.f32 0.0, %v2742
      %v2744 = vpop.f32.mrb[0].mxu0
      %2745 = vmatprep.mubr.f32.mxu0 0.0
      %2746 = vmatmul.mubr.f32.gmra.mrb[0].mxu0 %v2508
      %v2747 = vpop.f32.mrb[0].mxu0
      %v2748 = vadd.f32 0.0, %v2747
      %v2749 = vpop.f32.mrb[0].mxu0
      %2750 = vmatprep.mubr.f32.mxu0 0.0
      %2751 = vmatmul.mubr.f32.gmra.mrb[0].mxu0 %v2511
      %v2752 = vpop.f32.mrb[0].mxu0
      %v2753 = vadd.f32 0.0, %v2752
      %v2754 = vpop.f32.mrb[0].mxu0
      %2755 = vmatprep.mubr.f32.mxu0 0.0
      %2756 = vmatmul.mubr.f32.gmra.mrb[0].mxu0 %v2514
      %v2757 = vpop.f32.mrb[0].mxu0
      %v2758 = vadd.f32 0.0, %v2757
      %v2759 = vpop.f32.mrb[0].mxu0
      %2760 = vmatprep.mubr.f32.mxu0 0.0
      %2761 = vmatmul.mubr.f32.gmra.mrb[0].mxu0 %v2517
      %v2762 = vpop.f32.mrb[0].mxu0
      %v2763 = vadd.f32 0.0, %v2762
      %v2764 = vpop.f32.mrb[0].mxu0
      %2765 = vmatprep.mubr.f32.mxu0 0.0
      %2766 = vmatmul.mubr.f32.gmra.mrb[0].mxu0 %v2520
      %v2767 = vpop.f32.mrb[0].mxu0
      %v2768 = vadd.f32 0.0, %v2767
      %v2769 = vpop.f32.mrb[0].mxu0
      %2770 = vmatprep.mubr.f32.mxu0 0.0
      %2771 = vmatmul.mubr.f32.gmra.mrb[0].mxu0 %v2523
      %v2772 = vpop.f32.mrb[0].mxu0
      %v2773 = vadd.f32 0.0, %v2772
      %v2774 = vpop.f32.mrb[0].mxu0
      %2775 = vmatprep.mubr.f32.mxu0 0.0
      %2776 = vmatmul.mubr.f32.gmra.mrb[0].mxu0 %v2526
      %v2777 = vpop.f32.mrb[0].mxu0
      %v2778 = vadd.f32 0.0, %v2777
      %v2779 = vpop.f32.mrb[0].mxu0
      %2780 = vmatprep.mubr.f32.mxu0 0.0
      %2781 = vmatmul.mubr.f32.gmra.mrb[0].mxu0 %v2529
      %v2782 = vpop.f32.mrb[0].mxu0
      %v2783 = vadd.f32 0.0, %v2782
      %v2784 = vpop.f32.mrb[0].mxu0
      %2785 = vmatprep.mubr.f32.mxu0 0.0
      %2786 = vmatmul.mubr.f32.gmra.mrb[0].mxu0 %v2532
      %v2787 = vpop.f32.mrb[0].mxu0
      %v2788 = vadd.f32 0.0, %v2787
      %v2789 = vpop.f32.mrb[0].mxu0
      %2790 = vmatprep.mubr.f32.mxu0 0.0
      %2791 = vmatmul.mubr.f32.gmra.mrb[0].mxu0 %v2535
      %v2792 = vpop.f32.mrb[0].mxu0
      %v2793 = vadd.f32 0.0, %v2792
      %v2794 = vpop.f32.mrb[0].mxu0
      %2795 = vmatprep.mubr.f32.mxu0 0.0
      %2796 = vmatmul.mubr.f32.gmra.mrb[0].mxu0 %v2538
      %v2797 = vpop.f32.mrb[0].mxu0
      %v2798 = vadd.f32 0.0, %v2797
      %v2799 = vpop.f32.mrb[0].mxu0
      %2800 = vmatprep.mubr.f32.mxu0 0.0
      %2801 = vmatmul.mubr.f32.gmra.mrb[0].mxu0 %v2541
      %v2802 = vpop.f32.mrb[0].mxu0
      %v2803 = vadd.f32 0.0, %v2802
      %v2804 = vpop.f32.mrb[0].mxu0
      %2805 = vmatprep.mubr.f32.mxu0 0.0
      %2806 = vmatmul.mubr.f32.gmra.mrb[0].mxu0 %v2544
      %v2807 = vpop.f32.mrb[0].mxu0
      %v2808 = vadd.f32 0.0, %v2807
      %v2809 = vpop.f32.mrb[0].mxu0
      %2810 = vmatprep.mubr.f32.mxu0 0.0
      %2811 = vmatmul.mubr.f32.gmra.mrb[0].mxu0 %v2547
      %v2812 = vpop.f32.mrb[0].mxu0
      %v2813 = vadd.f32 0.0, %v2812
      %v2814 = vpop.f32.mrb[0].mxu0
      %2815 = vmatprep.mubr.f32.mxu0 0.0
      %2816 = vmatmul.mubr.f32.gmra.mrb[0].mxu0 %v2550
      %v2817 = vpop.f32.mrb[0].mxu0
      %v2818 = vadd.f32 0.0, %v2817
      %v2819 = vpop.f32.mrb[0].mxu0
      %2820 = vmatprep.mubr.f32.mxu0 0.0
      %2821 = vmatmul.mubr.f32.gmra.mrb[0].mxu0 %v2553
      %v2822 = vpop.f32.mrb[0].mxu0
      %v2823 = vadd.f32 0.0, %v2822
      %v2824 = vpop.f32.mrb[0].mxu0
      %2825 = vmatprep.mubr.f32.mxu0 0.0
      %2826 = vmatmul.mubr.f32.gmra.mrb[0].mxu0 %v2556
      %v2827 = vpop.f32.mrb[0].mxu0
      %v2828 = vadd.f32 0.0, %v2827
      %v2829 = vpop.f32.mrb[0].mxu0
      %2830 = vdwg.mxu0
      %v2831 = vadd.f32 %v2351, %v2628
      %v2832 = vadd.f32 %v2352, %v2633
      %v2833 = vadd.f32 %v2353, %v2638
      %v2834 = vadd.f32 %v2354, %v2643
      %v2835 = vadd.f32 %v2355, %v2648
      %v2836 = vadd.f32 %v2356, %v2653
      %v2837 = vadd.f32 %v2357, %v2658
      %v2838 = vadd.f32 %v2358, %v2663
      %v2839 = vadd.f32 %v2359, %v2668
      %v2840 = vadd.f32 %v2360, %v2673
      %v2841 = vadd.f32 %v2361, %v2678
      %v2842 = vadd.f32 %v2362, %v2683
      %v2843 = vadd.f32 %v2363, %v2688
      %v2844 = vadd.f32 %v2364, %v2693
      %v2845 = vadd.f32 %v2365, %v2698
      %v2846 = vadd.f32 %v2366, %v2703
      %v2847 = vadd.f32 %v2367, %v2708
      %v2848 = vadd.f32 %v2368, %v2713
      %v2849 = vadd.f32 %v2369, %v2718
      %v2850 = vadd.f32 %v2370, %v2723
      %v2851 = vadd.f32 %v2371, %v2728
      %v2852 = vadd.f32 %v2372, %v2733
      %v2853 = vadd.f32 %v2373, %v2738
      %v2854 = vadd.f32 %v2374, %v2743
      %v2855 = vadd.f32 %v2375, %v2748
      %v2856 = vadd.f32 %v2376, %v2753
      %v2857 = vadd.f32 %v2377, %v2758
      %v2858 = vadd.f32 %v2378, %v2763
      %v2859 = vadd.f32 %v2379, %v2768
      %v2860 = vadd.f32 %v2380, %v2773
      %v2861 = vadd.f32 %v2381, %v2778
      %v2862 = vadd.f32 %v2382, %v2783
      %v2863 = vadd.f32 %v2383, %v2788
      %v2864 = vadd.f32 %v2384, %v2793
      %v2865 = vadd.f32 %v2385, %v2798
      %v2866 = vadd.f32 %v2386, %v2803
      %v2867 = vadd.f32 %v2387, %v2808
      %v2868 = vadd.f32 %v2388, %v2813
      %v2869 = vadd.f32 %v2389, %v2818
      %v2870 = vadd.f32 %v2390, %v2823
      %v2871 = vadd.f32 %v2391, %v2828
      %v2872 = vld [vmem:[%s467 + $0x19] sm:$0xff]
      %v2873 = vld [vmem:[%s467 + $0x21] sm:$0xff]
      %v2874 = vld [vmem:[%s467 + $0x29] sm:$0xff]
      %v2875 = vld [vmem:[%s467 + $0x31] sm:$0xff]
      %v2876 = vld [vmem:[%s467 + $0x39] sm:$0xff]
      %v2877 = vld [vmem:[%s467 + $0x41] sm:$0xff]
      %v2878 = vld [vmem:[%s467 + $0x49] sm:$0xff]
      %v2879 = vld [vmem:[%s467 + $0x51] sm:$0xff]
      %v2880 = vld [vmem:[%s467 + $0x59] sm:$0xff]
      %v2881 = vld [vmem:[%s467 + $0x61] sm:$0xff]
      %v2882 = vld [vmem:[%s467 + $0x69] sm:$0xff]
      %v2883 = vld [vmem:[%s467 + $0x71] sm:$0xff]
      %v2884 = vld [vmem:[%s467 + $0x79] sm:$0xff]
      %v2885 = vld [vmem:[%s467 + $0x81] sm:$0xff]
      %v2886 = vld [vmem:[%s467 + $0x89] sm:$0xff]
      %v2887 = vld [vmem:[%s467 + $0x91] sm:$0xff]
      %v2888 = vld [vmem:[%s467 + $0x99] sm:$0xff]
      %v2889 = vld [vmem:[%s467 + $0xa1] sm:$0xff]
      %v2890 = vld [vmem:[%s467 + $0xa9] sm:$0xff]
      %v2891 = vld [vmem:[%s467 + $0xb1] sm:$0xff]
      %v2892 = vld [vmem:[%s467 + $0xb9] sm:$0xff]
      %v2893 = vld [vmem:[%s467 + $0xc1] sm:$0xff]
      %v2894 = vld [vmem:[%s467 + $0xc9] sm:$0xff]
      %v2895 = vld [vmem:[%s467 + $0xd1] sm:$0xff]
      %v2896 = vld [vmem:[%s467 + $0xd9] sm:$0xff]
      %v2897 = vld [vmem:[%s467 + $0xe1] sm:$0xff]
      %v2898 = vld [vmem:[%s467 + $0xe9] sm:$0xff]
      %v2899 = vld [vmem:[%s467 + $0xf1] sm:$0xff]
      %v2900 = vld [vmem:[%s467 + $0xf9] sm:$0xff]
      %v2901 = vld [vmem:[%s467 + $0x101] sm:$0xff]
      %v2902 = vld [vmem:[%s467 + $0x109] sm:$0xff]
      %v2903 = vld [vmem:[%s467 + $0x111] sm:$0xff]
      %v2904 = vld [vmem:[%s467 + $0x119] sm:$0xff]
      %v2905 = vld [vmem:[%s467 + $0x121] sm:$0xff]
      %v2906 = vld [vmem:[%s467 + $0x129] sm:$0xff]
      %v2907 = vld [vmem:[%s467 + $0x131] sm:$0xff]
      %v2908 = vld [vmem:[%s467 + $0x139] sm:$0xff]
      %v2909 = vld [vmem:[%s467 + $0x141] sm:$0xff]
      %v2910 = vld [vmem:[%s467 + $0x149] sm:$0xff]
      %v2911 = vld [vmem:[%s467 + $0x151] sm:$0xff]
      %v2912 = vld [vmem:[%s467 + $0x159] sm:$0xf]
      %s2913 = scalar_lea.vmem %s3, 20
      %v2914 = vld [vmem:[%s2913] sm:$0x7]
      %v2916 = vsel %vm638, %v2872, 0
      %v2919 = vsel %vm638, %v2873, 0
      %v2922 = vsel %vm638, %v2874, 0
      %v2925 = vsel %vm638, %v2875, 0
      %v2928 = vsel %vm638, %v2876, 0
      %v2931 = vsel %vm638, %v2877, 0
      %v2934 = vsel %vm638, %v2878, 0
      %v2937 = vsel %vm638, %v2879, 0
      %v2940 = vsel %vm638, %v2880, 0
      %v2943 = vsel %vm638, %v2881, 0
      %v2946 = vsel %vm638, %v2882, 0
      %v2949 = vsel %vm638, %v2883, 0
      %v2952 = vsel %vm638, %v2884, 0
      %v2955 = vsel %vm638, %v2885, 0
      %v2958 = vsel %vm638, %v2886, 0
      %v2961 = vsel %vm638, %v2887, 0
      %v2964 = vsel %vm638, %v2888, 0
      %v2967 = vsel %vm638, %v2889, 0
      %v2970 = vsel %vm638, %v2890, 0
      %v2973 = vsel %vm638, %v2891, 0
      %v2976 = vsel %vm638, %v2892, 0
      %v2979 = vsel %vm638, %v2893, 0
      %v2982 = vsel %vm638, %v2894, 0
      %v2985 = vsel %vm638, %v2895, 0
      %v2988 = vsel %vm638, %v2896, 0
      %v2991 = vsel %vm638, %v2897, 0
      %v2994 = vsel %vm638, %v2898, 0
      %v2997 = vsel %vm638, %v2899, 0
      %v3000 = vsel %vm638, %v2900, 0
      %v3003 = vsel %vm638, %v2901, 0
      %v3006 = vsel %vm638, %v2902, 0
      %v3009 = vsel %vm638, %v2903, 0
      %v3012 = vsel %vm638, %v2904, 0
      %v3015 = vsel %vm638, %v2905, 0
      %v3018 = vsel %vm638, %v2906, 0
      %v3021 = vsel %vm638, %v2907, 0
      %v3024 = vsel %vm638, %v2908, 0
      %v3027 = vsel %vm638, %v2909, 0
      %v3030 = vsel %vm638, %v2910, 0
      %v3033 = vsel %vm638, %v2911, 0
      %v3036 = vsel %vm638, %v2912, 0
      %v3039 = vsel %vm762, %v2914, 0
      %3041 = vmatprep.subr.mxu0 0.0
      %3042 = vmatpush1.msra.mxu0 %v3039
      %3043 = vmatprep.subr.mxu0 0.0
      %3044 = vmatpush1.msra.mxu0 0.0
      %3045 = vmatprep.subr.mxu0 0.0
      %3046 = vmatpush1.msra.mxu0 0.0
      %3047 = vmatprep.subr.mxu0 0.0
      %3048 = vmatpush1.msra.mxu0 0.0
      %3049 = vmatprep.subr.mxu0 0.0
      %3050 = vmatpush1.msra.mxu0 0.0
      %3051 = vmatprep.subr.mxu0 0.0
      %3052 = vmatpush1.msra.mxu0 0.0
      %3053 = vmatprep.subr.mxu0 0.0
      %3054 = vmatpush1.msra.mxu0 0.0
      %3055 = vmatprep.subr.mxu0 0.0
      %3056 = vmatpush1.msra.mxu0 0.0
      %3057 = vmatprep.subr.mxu0 0.0
      %3058 = vmatpush1.msra.mxu0 0.0
      %3059 = vmatprep.subr.mxu0 0.0
      %3060 = vmatpush1.msra.mxu0 0.0
      %3061 = vmatprep.subr.mxu0 0.0
      %3062 = vmatpush1.msra.mxu0 0.0
      %3063 = vmatprep.subr.mxu0 0.0
      %3064 = vmatpush1.msra.mxu0 0.0
      %3065 = vmatprep.subr.mxu0 0.0
      %3066 = vmatpush1.msra.mxu0 0.0
      %3067 = vmatprep.subr.mxu0 0.0
      %3068 = vmatpush1.msra.mxu0 0.0
      %3069 = vmatprep.subr.mxu0 0.0
      %3070 = vmatpush1.msra.mxu0 0.0
      %3071 = vmatprep.subr.mxu0 0.0
      %3072 = vmatpush1.msra.mxu0 0.0
      %3073 = vmatprep.subr.mxu0 0.0
      %3074 = vmatpush1.msra.mxu0 0.0
      %3075 = vmatprep.subr.mxu0 0.0
      %3076 = vmatpush1.msra.mxu0 0.0
      %3077 = vmatprep.subr.mxu0 0.0
      %3078 = vmatpush1.msra.mxu0 0.0
      %3079 = vmatprep.subr.mxu0 0.0
      %3080 = vmatpush1.msra.mxu0 0.0
      %3081 = vmatprep.subr.mxu0 0.0
      %3082 = vmatpush1.msra.mxu0 0.0
      %3083 = vmatprep.subr.mxu0 0.0
      %3084 = vmatpush1.msra.mxu0 0.0
      %3085 = vmatprep.subr.mxu0 0.0
      %3086 = vmatpush1.msra.mxu0 0.0
      %3087 = vmatprep.subr.mxu0 0.0
      %3088 = vmatpush1.msra.mxu0 0.0
      %3089 = vmatprep.subr.mxu0 0.0
      %3090 = vmatpush1.msra.mxu0 0.0
      %3091 = vmatprep.subr.mxu0 0.0
      %3092 = vmatpush1.msra.mxu0 0.0
      %3093 = vmatprep.subr.mxu0 0.0
      %3094 = vmatpush1.msra.mxu0 0.0
      %3095 = vmatprep.subr.mxu0 0.0
      %3096 = vmatpush1.msra.mxu0 0.0
      %3097 = vmatprep.subr.mxu0 0.0
      %3098 = vmatpush1.msra.mxu0 0.0
      %3099 = vmatprep.subr.mxu0 0.0
      %3100 = vmatpush1.msra.mxu0 0.0
      %3101 = vmatprep.subr.mxu0 0.0
      %3102 = vmatpush1.msra.mxu0 0.0
      %3103 = vmatprep.subr.mxu0 0.0
      %3104 = vmatpush1.msra.mxu0 0.0
      %3105 = vmatprep.mubr.f32.mxu0 0.0
      %3106 = vmatmul.mubr.f32.gmra.mrb[0].mxu0 %v2916
      %v3107 = vpop.f32.mrb[0].mxu0
      %v3108 = vadd.f32 0.0, %v3107
      %v3109 = vpop.f32.mrb[0].mxu0
      %3110 = vmatprep.mubr.f32.mxu0 0.0
      %3111 = vmatmul.mubr.f32.gmra.mrb[0].mxu0 %v2919
      %v3112 = vpop.f32.mrb[0].mxu0
      %v3113 = vadd.f32 0.0, %v3112
      %v3114 = vpop.f32.mrb[0].mxu0
      %3115 = vmatprep.mubr.f32.mxu0 0.0
      %3116 = vmatmul.mubr.f32.gmra.mrb[0].mxu0 %v2922
      %v3117 = vpop.f32.mrb[0].mxu0
      %v3118 = vadd.f32 0.0, %v3117
      %v3119 = vpop.f32.mrb[0].mxu0
      %3120 = vmatprep.mubr.f32.mxu0 0.0
      %3121 = vmatmul.mubr.f32.gmra.mrb[0].mxu0 %v2925
      %v3122 = vpop.f32.mrb[0].mxu0
      %v3123 = vadd.f32 0.0, %v3122
      %v3124 = vpop.f32.mrb[0].mxu0
      %3125 = vmatprep.mubr.f32.mxu0 0.0
      %3126 = vmatmul.mubr.f32.gmra.mrb[0].mxu0 %v2928
      %v3127 = vpop.f32.mrb[0].mxu0
      %v3128 = vadd.f32 0.0, %v3127
      %v3129 = vpop.f32.mrb[0].mxu0
      %3130 = vmatprep.mubr.f32.mxu0 0.0
      %3131 = vmatmul.mubr.f32.gmra.mrb[0].mxu0 %v2931
      %v3132 = vpop.f32.mrb[0].mxu0
      %v3133 = vadd.f32 0.0, %v3132
      %v3134 = vpop.f32.mrb[0].mxu0
      %3135 = vmatprep.mubr.f32.mxu0 0.0
      %3136 = vmatmul.mubr.f32.gmra.mrb[0].mxu0 %v2934
      %v3137 = vpop.f32.mrb[0].mxu0
      %v3138 = vadd.f32 0.0, %v3137
      %v3139 = vpop.f32.mrb[0].mxu0
      %3140 = vmatprep.mubr.f32.mxu0 0.0
      %3141 = vmatmul.mubr.f32.gmra.mrb[0].mxu0 %v2937
      %v3142 = vpop.f32.mrb[0].mxu0
      %v3143 = vadd.f32 0.0, %v3142
      %v3144 = vpop.f32.mrb[0].mxu0
      %3145 = vmatprep.mubr.f32.mxu0 0.0
      %3146 = vmatmul.mubr.f32.gmra.mrb[0].mxu0 %v2940
      %v3147 = vpop.f32.mrb[0].mxu0
      %v3148 = vadd.f32 0.0, %v3147
      %v3149 = vpop.f32.mrb[0].mxu0
      %3150 = vmatprep.mubr.f32.mxu0 0.0
      %3151 = vmatmul.mubr.f32.gmra.mrb[0].mxu0 %v2943
      %v3152 = vpop.f32.mrb[0].mxu0
      %v3153 = vadd.f32 0.0, %v3152
      %v3154 = vpop.f32.mrb[0].mxu0
      %3155 = vmatprep.mubr.f32.mxu0 0.0
      %3156 = vmatmul.mubr.f32.gmra.mrb[0].mxu0 %v2946
      %v3157 = vpop.f32.mrb[0].mxu0
      %v3158 = vadd.f32 0.0, %v3157
      %v3159 = vpop.f32.mrb[0].mxu0
      %3160 = vmatprep.mubr.f32.mxu0 0.0
      %3161 = vmatmul.mubr.f32.gmra.mrb[0].mxu0 %v2949
      %v3162 = vpop.f32.mrb[0].mxu0
      %v3163 = vadd.f32 0.0, %v3162
      %v3164 = vpop.f32.mrb[0].mxu0
      %3165 = vmatprep.mubr.f32.mxu0 0.0
      %3166 = vmatmul.mubr.f32.gmra.mrb[0].mxu0 %v2952
      %v3167 = vpop.f32.mrb[0].mxu0
      %v3168 = vadd.f32 0.0, %v3167
      %v3169 = vpop.f32.mrb[0].mxu0
      %3170 = vmatprep.mubr.f32.mxu0 0.0
      %3171 = vmatmul.mubr.f32.gmra.mrb[0].mxu0 %v2955
      %v3172 = vpop.f32.mrb[0].mxu0
      %v3173 = vadd.f32 0.0, %v3172
      %v3174 = vpop.f32.mrb[0].mxu0
      %3175 = vmatprep.mubr.f32.mxu0 0.0
      %3176 = vmatmul.mubr.f32.gmra.mrb[0].mxu0 %v2958
      %v3177 = vpop.f32.mrb[0].mxu0
      %v3178 = vadd.f32 0.0, %v3177
      %v3179 = vpop.f32.mrb[0].mxu0
      %3180 = vmatprep.mubr.f32.mxu0 0.0
      %3181 = vmatmul.mubr.f32.gmra.mrb[0].mxu0 %v2961
      %v3182 = vpop.f32.mrb[0].mxu0
      %v3183 = vadd.f32 0.0, %v3182
      %v3184 = vpop.f32.mrb[0].mxu0
      %3185 = vmatprep.mubr.f32.mxu0 0.0
      %3186 = vmatmul.mubr.f32.gmra.mrb[0].mxu0 %v2964
      %v3187 = vpop.f32.mrb[0].mxu0
      %v3188 = vadd.f32 0.0, %v3187
      %v3189 = vpop.f32.mrb[0].mxu0
      %3190 = vmatprep.mubr.f32.mxu0 0.0
      %3191 = vmatmul.mubr.f32.gmra.mrb[0].mxu0 %v2967
      %v3192 = vpop.f32.mrb[0].mxu0
      %v3193 = vadd.f32 0.0, %v3192
      %v3194 = vpop.f32.mrb[0].mxu0
      %3195 = vmatprep.mubr.f32.mxu0 0.0
      %3196 = vmatmul.mubr.f32.gmra.mrb[0].mxu0 %v2970
      %v3197 = vpop.f32.mrb[0].mxu0
      %v3198 = vadd.f32 0.0, %v3197
      %v3199 = vpop.f32.mrb[0].mxu0
      %3200 = vmatprep.mubr.f32.mxu0 0.0
      %3201 = vmatmul.mubr.f32.gmra.mrb[0].mxu0 %v2973
      %v3202 = vpop.f32.mrb[0].mxu0
      %v3203 = vadd.f32 0.0, %v3202
      %v3204 = vpop.f32.mrb[0].mxu0
      %3205 = vmatprep.mubr.f32.mxu0 0.0
      %3206 = vmatmul.mubr.f32.gmra.mrb[0].mxu0 %v2976
      %v3207 = vpop.f32.mrb[0].mxu0
      %v3208 = vadd.f32 0.0, %v3207
      %v3209 = vpop.f32.mrb[0].mxu0
      %3210 = vmatprep.mubr.f32.mxu0 0.0
      %3211 = vmatmul.mubr.f32.gmra.mrb[0].mxu0 %v2979
      %v3212 = vpop.f32.mrb[0].mxu0
      %v3213 = vadd.f32 0.0, %v3212
      %v3214 = vpop.f32.mrb[0].mxu0
      %3215 = vmatprep.mubr.f32.mxu0 0.0
      %3216 = vmatmul.mubr.f32.gmra.mrb[0].mxu0 %v2982
      %v3217 = vpop.f32.mrb[0].mxu0
      %v3218 = vadd.f32 0.0, %v3217
      %v3219 = vpop.f32.mrb[0].mxu0
      %3220 = vmatprep.mubr.f32.mxu0 0.0
      %3221 = vmatmul.mubr.f32.gmra.mrb[0].mxu0 %v2985
      %v3222 = vpop.f32.mrb[0].mxu0
      %v3223 = vadd.f32 0.0, %v3222
      %v3224 = vpop.f32.mrb[0].mxu0
      %3225 = vmatprep.mubr.f32.mxu0 0.0
      %3226 = vmatmul.mubr.f32.gmra.mrb[0].mxu0 %v2988
      %v3227 = vpop.f32.mrb[0].mxu0
      %v3228 = vadd.f32 0.0, %v3227
      %v3229 = vpop.f32.mrb[0].mxu0
      %3230 = vmatprep.mubr.f32.mxu0 0.0
      %3231 = vmatmul.mubr.f32.gmra.mrb[0].mxu0 %v2991
      %v3232 = vpop.f32.mrb[0].mxu0
      %v3233 = vadd.f32 0.0, %v3232
      %v3234 = vpop.f32.mrb[0].mxu0
      %3235 = vmatprep.mubr.f32.mxu0 0.0
      %3236 = vmatmul.mubr.f32.gmra.mrb[0].mxu0 %v2994
      %v3237 = vpop.f32.mrb[0].mxu0
      %v3238 = vadd.f32 0.0, %v3237
      %v3239 = vpop.f32.mrb[0].mxu0
      %3240 = vmatprep.mubr.f32.mxu0 0.0
      %3241 = vmatmul.mubr.f32.gmra.mrb[0].mxu0 %v2997
      %v3242 = vpop.f32.mrb[0].mxu0
      %v3243 = vadd.f32 0.0, %v3242
      %v3244 = vpop.f32.mrb[0].mxu0
      %3245 = vmatprep.mubr.f32.mxu0 0.0
      %3246 = vmatmul.mubr.f32.gmra.mrb[0].mxu0 %v3000
      %v3247 = vpop.f32.mrb[0].mxu0
      %v3248 = vadd.f32 0.0, %v3247
      %v3249 = vpop.f32.mrb[0].mxu0
      %3250 = vmatprep.mubr.f32.mxu0 0.0
      %3251 = vmatmul.mubr.f32.gmra.mrb[0].mxu0 %v3003
      %v3252 = vpop.f32.mrb[0].mxu0
      %v3253 = vadd.f32 0.0, %v3252
      %v3254 = vpop.f32.mrb[0].mxu0
      %3255 = vmatprep.mubr.f32.mxu0 0.0
      %3256 = vmatmul.mubr.f32.gmra.mrb[0].mxu0 %v3006
      %v3257 = vpop.f32.mrb[0].mxu0
      %v3258 = vadd.f32 0.0, %v3257
      %v3259 = vpop.f32.mrb[0].mxu0
      %3260 = vmatprep.mubr.f32.mxu0 0.0
      %3261 = vmatmul.mubr.f32.gmra.mrb[0].mxu0 %v3009
      %v3262 = vpop.f32.mrb[0].mxu0
      %v3263 = vadd.f32 0.0, %v3262
      %v3264 = vpop.f32.mrb[0].mxu0
      %3265 = vmatprep.mubr.f32.mxu0 0.0
      %3266 = vmatmul.mubr.f32.gmra.mrb[0].mxu0 %v3012
      %v3267 = vpop.f32.mrb[0].mxu0
      %v3268 = vadd.f32 0.0, %v3267
      %v3269 = vpop.f32.mrb[0].mxu0
      %3270 = vmatprep.mubr.f32.mxu0 0.0
      %3271 = vmatmul.mubr.f32.gmra.mrb[0].mxu0 %v3015
      %v3272 = vpop.f32.mrb[0].mxu0
      %v3273 = vadd.f32 0.0, %v3272
      %v3274 = vpop.f32.mrb[0].mxu0
      %3275 = vmatprep.mubr.f32.mxu0 0.0
      %3276 = vmatmul.mubr.f32.gmra.mrb[0].mxu0 %v3018
      %v3277 = vpop.f32.mrb[0].mxu0
      %v3278 = vadd.f32 0.0, %v3277
      %v3279 = vpop.f32.mrb[0].mxu0
      %3280 = vmatprep.mubr.f32.mxu0 0.0
      %3281 = vmatmul.mubr.f32.gmra.mrb[0].mxu0 %v3021
      %v3282 = vpop.f32.mrb[0].mxu0
      %v3283 = vadd.f32 0.0, %v3282
      %v3284 = vpop.f32.mrb[0].mxu0
      %3285 = vmatprep.mubr.f32.mxu0 0.0
      %3286 = vmatmul.mubr.f32.gmra.mrb[0].mxu0 %v3024
      %v3287 = vpop.f32.mrb[0].mxu0
      %v3288 = vadd.f32 0.0, %v3287
      %v3289 = vpop.f32.mrb[0].mxu0
      %3290 = vmatprep.mubr.f32.mxu0 0.0
      %3291 = vmatmul.mubr.f32.gmra.mrb[0].mxu0 %v3027
      %v3292 = vpop.f32.mrb[0].mxu0
      %v3293 = vadd.f32 0.0, %v3292
      %v3294 = vpop.f32.mrb[0].mxu0
      %3295 = vmatprep.mubr.f32.mxu0 0.0
      %3296 = vmatmul.mubr.f32.gmra.mrb[0].mxu0 %v3030
      %v3297 = vpop.f32.mrb[0].mxu0
      %v3298 = vadd.f32 0.0, %v3297
      %v3299 = vpop.f32.mrb[0].mxu0
      %3300 = vmatprep.mubr.f32.mxu0 0.0
      %3301 = vmatmul.mubr.f32.gmra.mrb[0].mxu0 %v3033
      %v3302 = vpop.f32.mrb[0].mxu0
      %v3303 = vadd.f32 0.0, %v3302
      %v3304 = vpop.f32.mrb[0].mxu0
      %3305 = vmatprep.mubr.f32.mxu0 0.0
      %3306 = vmatmul.mubr.f32.gmra.mrb[0].mxu0 %v3036
      %v3307 = vpop.f32.mrb[0].mxu0
      %v3308 = vadd.f32 0.0, %v3307
      %v3309 = vpop.f32.mrb[0].mxu0
      %3310 = vdwg.mxu0
      %v3311 = vadd.f32 %v2831, %v3108
      %v3312 = vadd.f32 %v2832, %v3113
      %v3313 = vadd.f32 %v2833, %v3118
      %v3314 = vadd.f32 %v2834, %v3123
      %v3315 = vadd.f32 %v2835, %v3128
      %v3316 = vadd.f32 %v2836, %v3133
      %v3317 = vadd.f32 %v2837, %v3138
      %v3318 = vadd.f32 %v2838, %v3143
      %v3319 = vadd.f32 %v2839, %v3148
      %v3320 = vadd.f32 %v2840, %v3153
      %v3321 = vadd.f32 %v2841, %v3158
      %v3322 = vadd.f32 %v2842, %v3163
      %v3323 = vadd.f32 %v2843, %v3168
      %v3324 = vadd.f32 %v2844, %v3173
      %v3325 = vadd.f32 %v2845, %v3178
      %v3326 = vadd.f32 %v2846, %v3183
      %v3327 = vadd.f32 %v2847, %v3188
      %v3328 = vadd.f32 %v2848, %v3193
      %v3329 = vadd.f32 %v2849, %v3198
      %v3330 = vadd.f32 %v2850, %v3203
      %v3331 = vadd.f32 %v2851, %v3208
      %v3332 = vadd.f32 %v2852, %v3213
      %v3333 = vadd.f32 %v2853, %v3218
      %v3334 = vadd.f32 %v2854, %v3223
      %v3335 = vadd.f32 %v2855, %v3228
      %v3336 = vadd.f32 %v2856, %v3233
      %v3337 = vadd.f32 %v2857, %v3238
      %v3338 = vadd.f32 %v2858, %v3243
      %v3339 = vadd.f32 %v2859, %v3248
      %v3340 = vadd.f32 %v2860, %v3253
      %v3341 = vadd.f32 %v2861, %v3258
      %v3342 = vadd.f32 %v2862, %v3263
      %v3343 = vadd.f32 %v2863, %v3268
      %v3344 = vadd.f32 %v2864, %v3273
      %v3345 = vadd.f32 %v2865, %v3278
      %v3346 = vadd.f32 %v2866, %v3283
      %v3347 = vadd.f32 %v2867, %v3288
      %v3348 = vadd.f32 %v2868, %v3293
      %v3349 = vadd.f32 %v2869, %v3298
      %v3350 = vadd.f32 %v2870, %v3303
      %v3351 = vadd.f32 %v2871, %v3308
      %v3352 = vld [vmem:[%s467 + $0x29] sm:$0xff]
      %v3353 = vld [vmem:[%s467 + $0x31] sm:$0xff]
      %v3354 = vld [vmem:[%s467 + $0x39] sm:$0xff]
      %v3355 = vld [vmem:[%s467 + $0x41] sm:$0xff]
      %v3356 = vld [vmem:[%s467 + $0x49] sm:$0xff]
      %v3357 = vld [vmem:[%s467 + $0x51] sm:$0xff]
      %v3358 = vld [vmem:[%s467 + $0x59] sm:$0xff]
      %v3359 = vld [vmem:[%s467 + $0x61] sm:$0xff]
      %v3360 = vld [vmem:[%s467 + $0x69] sm:$0xff]
      %v3361 = vld [vmem:[%s467 + $0x71] sm:$0xff]
      %v3362 = vld [vmem:[%s467 + $0x79] sm:$0xff]
      %v3363 = vld [vmem:[%s467 + $0x81] sm:$0xff]
      %v3364 = vld [vmem:[%s467 + $0x89] sm:$0xff]
      %v3365 = vld [vmem:[%s467 + $0x91] sm:$0xff]
      %v3366 = vld [vmem:[%s467 + $0x99] sm:$0xff]
      %v3367 = vld [vmem:[%s467 + $0xa1] sm:$0xff]
      %v3368 = vld [vmem:[%s467 + $0xa9] sm:$0xff]
      %v3369 = vld [vmem:[%s467 + $0xb1] sm:$0xff]
      %v3370 = vld [vmem:[%s467 + $0xb9] sm:$0xff]
      %v3371 = vld [vmem:[%s467 + $0xc1] sm:$0xff]
      %v3372 = vld [vmem:[%s467 + $0xc9] sm:$0xff]
      %v3373 = vld [vmem:[%s467 + $0xd1] sm:$0xff]
      %v3374 = vld [vmem:[%s467 + $0xd9] sm:$0xff]
      %v3375 = vld [vmem:[%s467 + $0xe1] sm:$0xff]
      %v3376 = vld [vmem:[%s467 + $0xe9] sm:$0xff]
      %v3377 = vld [vmem:[%s467 + $0xf1] sm:$0xff]
      %v3378 = vld [vmem:[%s467 + $0xf9] sm:$0xff]
      %v3379 = vld [vmem:[%s467 + $0x101] sm:$0xff]
      %v3380 = vld [vmem:[%s467 + $0x109] sm:$0xff]
      %v3381 = vld [vmem:[%s467 + $0x111] sm:$0xff]
      %v3382 = vld [vmem:[%s467 + $0x119] sm:$0xff]
      %v3383 = vld [vmem:[%s467 + $0x121] sm:$0xff]
      %v3384 = vld [vmem:[%s467 + $0x129] sm:$0xff]
      %v3385 = vld [vmem:[%s467 + $0x131] sm:$0xff]
      %v3386 = vld [vmem:[%s467 + $0x139] sm:$0xff]
      %v3387 = vld [vmem:[%s467 + $0x141] sm:$0xff]
      %v3388 = vld [vmem:[%s467 + $0x149] sm:$0xff]
      %v3389 = vld [vmem:[%s467 + $0x151] sm:$0xff]
      %v3390 = vld [vmem:[%s467 + $0x159] sm:$0xff]
      %v3391 = vld [vmem:[%s467 + $0x161] sm:$0xff]
      %v3392 = vld [vmem:[%s467 + $0x169] sm:$0xf]
      %s3393 = scalar_lea.vmem %s3, 24
      %v3394 = vld [vmem:[%s3393] sm:$0x7]
      %v3396 = vsel %vm638, %v3352, 0
      %v3399 = vsel %vm638, %v3353, 0
      %v3402 = vsel %vm638, %v3354, 0
      %v3405 = vsel %vm638, %v3355, 0
      %v3408 = vsel %vm638, %v3356, 0
      %v3411 = vsel %vm638, %v3357, 0
      %v3414 = vsel %vm638, %v3358, 0
      %v3417 = vsel %vm638, %v3359, 0
      %v3420 = vsel %vm638, %v3360, 0
      %v3423 = vsel %vm638, %v3361, 0
      %v3426 = vsel %vm638, %v3362, 0
      %v3429 = vsel %vm638, %v3363, 0
      %v3432 = vsel %vm638, %v3364, 0
      %v3435 = vsel %vm638, %v3365, 0
      %v3438 = vsel %vm638, %v3366, 0
      %v3441 = vsel %vm638, %v3367, 0
      %v3444 = vsel %vm638, %v3368, 0
      %v3447 = vsel %vm638, %v3369, 0
      %v3450 = vsel %vm638, %v3370, 0
      %v3453 = vsel %vm638, %v3371, 0
      %v3456 = vsel %vm638, %v3372, 0
      %v3459 = vsel %vm638, %v3373, 0
      %v3462 = vsel %vm638, %v3374, 0
      %v3465 = vsel %vm638, %v3375, 0
      %v3468 = vsel %vm638, %v3376, 0
      %v3471 = vsel %vm638, %v3377, 0
      %v3474 = vsel %vm638, %v3378, 0
      %v3477 = vsel %vm638, %v3379, 0
      %v3480 = vsel %vm638, %v3380, 0
      %v3483 = vsel %vm638, %v3381, 0
      %v3486 = vsel %vm638, %v3382, 0
      %v3489 = vsel %vm638, %v3383, 0
      %v3492 = vsel %vm638, %v3384, 0
      %v3495 = vsel %vm638, %v3385, 0
      %v3498 = vsel %vm638, %v3386, 0
      %v3501 = vsel %vm638, %v3387, 0
      %v3504 = vsel %vm638, %v3388, 0
      %v3507 = vsel %vm638, %v3389, 0
      %v3510 = vsel %vm638, %v3390, 0
      %v3513 = vsel %vm638, %v3391, 0
      %v3516 = vsel %vm638, %v3392, 0
      %v3519 = vsel %vm762, %v3394, 0
      %3521 = vmatprep.subr.mxu0 0.0
      %3522 = vmatpush1.msra.mxu0 %v3519
      %3523 = vmatprep.subr.mxu0 0.0
      %3524 = vmatpush1.msra.mxu0 0.0
      %3525 = vmatprep.subr.mxu0 0.0
      %3526 = vmatpush1.msra.mxu0 0.0
      %3527 = vmatprep.subr.mxu0 0.0
      %3528 = vmatpush1.msra.mxu0 0.0
      %3529 = vmatprep.subr.mxu0 0.0
      %3530 = vmatpush1.msra.mxu0 0.0
      %3531 = vmatprep.subr.mxu0 0.0
      %3532 = vmatpush1.msra.mxu0 0.0
      %3533 = vmatprep.subr.mxu0 0.0
      %3534 = vmatpush1.msra.mxu0 0.0
      %3535 = vmatprep.subr.mxu0 0.0
      %3536 = vmatpush1.msra.mxu0 0.0
      %3537 = vmatprep.subr.mxu0 0.0
      %3538 = vmatpush1.msra.mxu0 0.0
      %3539 = vmatprep.subr.mxu0 0.0
      %3540 = vmatpush1.msra.mxu0 0.0
      %3541 = vmatprep.subr.mxu0 0.0
      %3542 = vmatpush1.msra.mxu0 0.0
      %3543 = vmatprep.subr.mxu0 0.0
      %3544 = vmatpush1.msra.mxu0 0.0
      %3545 = vmatprep.subr.mxu0 0.0
      %3546 = vmatpush1.msra.mxu0 0.0
      %3547 = vmatprep.subr.mxu0 0.0
      %3548 = vmatpush1.msra.mxu0 0.0
      %3549 = vmatprep.subr.mxu0 0.0
      %3550 = vmatpush1.msra.mxu0 0.0
      %3551 = vmatprep.subr.mxu0 0.0
      %3552 = vmatpush1.msra.mxu0 0.0
      %3553 = vmatprep.subr.mxu0 0.0
      %3554 = vmatpush1.msra.mxu0 0.0
      %3555 = vmatprep.subr.mxu0 0.0
      %3556 = vmatpush1.msra.mxu0 0.0
      %3557 = vmatprep.subr.mxu0 0.0
      %3558 = vmatpush1.msra.mxu0 0.0
      %3559 = vmatprep.subr.mxu0 0.0
      %3560 = vmatpush1.msra.mxu0 0.0
      %3561 = vmatprep.subr.mxu0 0.0
      %3562 = vmatpush1.msra.mxu0 0.0
      %3563 = vmatprep.subr.mxu0 0.0
      %3564 = vmatpush1.msra.mxu0 0.0
      %3565 = vmatprep.subr.mxu0 0.0
      %3566 = vmatpush1.msra.mxu0 0.0
      %3567 = vmatprep.subr.mxu0 0.0
      %3568 = vmatpush1.msra.mxu0 0.0
      %3569 = vmatprep.subr.mxu0 0.0
      %3570 = vmatpush1.msra.mxu0 0.0
      %3571 = vmatprep.subr.mxu0 0.0
      %3572 = vmatpush1.msra.mxu0 0.0
      %3573 = vmatprep.subr.mxu0 0.0
      %3574 = vmatpush1.msra.mxu0 0.0
      %3575 = vmatprep.subr.mxu0 0.0
      %3576 = vmatpush1.msra.mxu0 0.0
      %3577 = vmatprep.subr.mxu0 0.0
      %3578 = vmatpush1.msra.mxu0 0.0
      %3579 = vmatprep.subr.mxu0 0.0
      %3580 = vmatpush1.msra.mxu0 0.0
      %3581 = vmatprep.subr.mxu0 0.0
      %3582 = vmatpush1.msra.mxu0 0.0
      %3583 = vmatprep.subr.mxu0 0.0
      %3584 = vmatpush1.msra.mxu0 0.0
      %3585 = vmatprep.mubr.f32.mxu0 0.0
      %3586 = vmatmul.mubr.f32.gmra.mrb[0].mxu0 %v3396
      %v3587 = vpop.f32.mrb[0].mxu0
      %v3588 = vadd.f32 0.0, %v3587
      %v3589 = vpop.f32.mrb[0].mxu0
      %3590 = vmatprep.mubr.f32.mxu0 0.0
      %3591 = vmatmul.mubr.f32.gmra.mrb[0].mxu0 %v3399
      %v3592 = vpop.f32.mrb[0].mxu0
      %v3593 = vadd.f32 0.0, %v3592
      %v3594 = vpop.f32.mrb[0].mxu0
      %3595 = vmatprep.mubr.f32.mxu0 0.0
      %3596 = vmatmul.mubr.f32.gmra.mrb[0].mxu0 %v3402
      %v3597 = vpop.f32.mrb[0].mxu0
      %v3598 = vadd.f32 0.0, %v3597
      %v3599 = vpop.f32.mrb[0].mxu0
      %3600 = vmatprep.mubr.f32.mxu0 0.0
      %3601 = vmatmul.mubr.f32.gmra.mrb[0].mxu0 %v3405
      %v3602 = vpop.f32.mrb[0].mxu0
      %v3603 = vadd.f32 0.0, %v3602
      %v3604 = vpop.f32.mrb[0].mxu0
      %3605 = vmatprep.mubr.f32.mxu0 0.0
      %3606 = vmatmul.mubr.f32.gmra.mrb[0].mxu0 %v3408
      %v3607 = vpop.f32.mrb[0].mxu0
      %v3608 = vadd.f32 0.0, %v3607
      %v3609 = vpop.f32.mrb[0].mxu0
      %3610 = vmatprep.mubr.f32.mxu0 0.0
      %3611 = vmatmul.mubr.f32.gmra.mrb[0].mxu0 %v3411
      %v3612 = vpop.f32.mrb[0].mxu0
      %v3613 = vadd.f32 0.0, %v3612
      %v3614 = vpop.f32.mrb[0].mxu0
      %3615 = vmatprep.mubr.f32.mxu0 0.0
      %3616 = vmatmul.mubr.f32.gmra.mrb[0].mxu0 %v3414
      %v3617 = vpop.f32.mrb[0].mxu0
      %v3618 = vadd.f32 0.0, %v3617
      %v3619 = vpop.f32.mrb[0].mxu0
      %3620 = vmatprep.mubr.f32.mxu0 0.0
      %3621 = vmatmul.mubr.f32.gmra.mrb[0].mxu0 %v3417
      %v3622 = vpop.f32.mrb[0].mxu0
      %v3623 = vadd.f32 0.0, %v3622
      %v3624 = vpop.f32.mrb[0].mxu0
      %3625 = vmatprep.mubr.f32.mxu0 0.0
      %3626 = vmatmul.mubr.f32.gmra.mrb[0].mxu0 %v3420
      %v3627 = vpop.f32.mrb[0].mxu0
      %v3628 = vadd.f32 0.0, %v3627
      %v3629 = vpop.f32.mrb[0].mxu0
      %3630 = vmatprep.mubr.f32.mxu0 0.0
      %3631 = vmatmul.mubr.f32.gmra.mrb[0].mxu0 %v3423
      %v3632 = vpop.f32.mrb[0].mxu0
      %v3633 = vadd.f32 0.0, %v3632
      %v3634 = vpop.f32.mrb[0].mxu0
      %3635 = vmatprep.mubr.f32.mxu0 0.0
      %3636 = vmatmul.mubr.f32.gmra.mrb[0].mxu0 %v3426
      %v3637 = vpop.f32.mrb[0].mxu0
      %v3638 = vadd.f32 0.0, %v3637
      %v3639 = vpop.f32.mrb[0].mxu0
      %3640 = vmatprep.mubr.f32.mxu0 0.0
      %3641 = vmatmul.mubr.f32.gmra.mrb[0].mxu0 %v3429
      %v3642 = vpop.f32.mrb[0].mxu0
      %v3643 = vadd.f32 0.0, %v3642
      %v3644 = vpop.f32.mrb[0].mxu0
      %3645 = vmatprep.mubr.f32.mxu0 0.0
      %3646 = vmatmul.mubr.f32.gmra.mrb[0].mxu0 %v3432
      %v3647 = vpop.f32.mrb[0].mxu0
      %v3648 = vadd.f32 0.0, %v3647
      %v3649 = vpop.f32.mrb[0].mxu0
      %3650 = vmatprep.mubr.f32.mxu0 0.0
      %3651 = vmatmul.mubr.f32.gmra.mrb[0].mxu0 %v3435
      %v3652 = vpop.f32.mrb[0].mxu0
      %v3653 = vadd.f32 0.0, %v3652
      %v3654 = vpop.f32.mrb[0].mxu0
      %3655 = vmatprep.mubr.f32.mxu0 0.0
      %3656 = vmatmul.mubr.f32.gmra.mrb[0].mxu0 %v3438
      %v3657 = vpop.f32.mrb[0].mxu0
      %v3658 = vadd.f32 0.0, %v3657
      %v3659 = vpop.f32.mrb[0].mxu0
      %3660 = vmatprep.mubr.f32.mxu0 0.0
      %3661 = vmatmul.mubr.f32.gmra.mrb[0].mxu0 %v3441
      %v3662 = vpop.f32.mrb[0].mxu0
      %v3663 = vadd.f32 0.0, %v3662
      %v3664 = vpop.f32.mrb[0].mxu0
      %3665 = vmatprep.mubr.f32.mxu0 0.0
      %3666 = vmatmul.mubr.f32.gmra.mrb[0].mxu0 %v3444
      %v3667 = vpop.f32.mrb[0].mxu0
      %v3668 = vadd.f32 0.0, %v3667
      %v3669 = vpop.f32.mrb[0].mxu0
      %3670 = vmatprep.mubr.f32.mxu0 0.0
      %3671 = vmatmul.mubr.f32.gmra.mrb[0].mxu0 %v3447
      %v3672 = vpop.f32.mrb[0].mxu0
      %v3673 = vadd.f32 0.0, %v3672
      %v3674 = vpop.f32.mrb[0].mxu0
      %3675 = vmatprep.mubr.f32.mxu0 0.0
      %3676 = vmatmul.mubr.f32.gmra.mrb[0].mxu0 %v3450
      %v3677 = vpop.f32.mrb[0].mxu0
      %v3678 = vadd.f32 0.0, %v3677
      %v3679 = vpop.f32.mrb[0].mxu0
      %3680 = vmatprep.mubr.f32.mxu0 0.0
      %3681 = vmatmul.mubr.f32.gmra.mrb[0].mxu0 %v3453
      %v3682 = vpop.f32.mrb[0].mxu0
      %v3683 = vadd.f32 0.0, %v3682
      %v3684 = vpop.f32.mrb[0].mxu0
      %3685 = vmatprep.mubr.f32.mxu0 0.0
      %3686 = vmatmul.mubr.f32.gmra.mrb[0].mxu0 %v3456
      %v3687 = vpop.f32.mrb[0].mxu0
      %v3688 = vadd.f32 0.0, %v3687
      %v3689 = vpop.f32.mrb[0].mxu0
      %3690 = vmatprep.mubr.f32.mxu0 0.0
      %3691 = vmatmul.mubr.f32.gmra.mrb[0].mxu0 %v3459
      %v3692 = vpop.f32.mrb[0].mxu0
      %v3693 = vadd.f32 0.0, %v3692
      %v3694 = vpop.f32.mrb[0].mxu0
      %3695 = vmatprep.mubr.f32.mxu0 0.0
      %3696 = vmatmul.mubr.f32.gmra.mrb[0].mxu0 %v3462
      %v3697 = vpop.f32.mrb[0].mxu0
      %v3698 = vadd.f32 0.0, %v3697
      %v3699 = vpop.f32.mrb[0].mxu0
      %3700 = vmatprep.mubr.f32.mxu0 0.0
      %3701 = vmatmul.mubr.f32.gmra.mrb[0].mxu0 %v3465
      %v3702 = vpop.f32.mrb[0].mxu0
      %v3703 = vadd.f32 0.0, %v3702
      %v3704 = vpop.f32.mrb[0].mxu0
      %3705 = vmatprep.mubr.f32.mxu0 0.0
      %3706 = vmatmul.mubr.f32.gmra.mrb[0].mxu0 %v3468
      %v3707 = vpop.f32.mrb[0].mxu0
      %v3708 = vadd.f32 0.0, %v3707
      %v3709 = vpop.f32.mrb[0].mxu0
      %3710 = vmatprep.mubr.f32.mxu0 0.0
      %3711 = vmatmul.mubr.f32.gmra.mrb[0].mxu0 %v3471
      %v3712 = vpop.f32.mrb[0].mxu0
      %v3713 = vadd.f32 0.0, %v3712
      %v3714 = vpop.f32.mrb[0].mxu0
      %3715 = vmatprep.mubr.f32.mxu0 0.0
      %3716 = vmatmul.mubr.f32.gmra.mrb[0].mxu0 %v3474
      %v3717 = vpop.f32.mrb[0].mxu0
      %v3718 = vadd.f32 0.0, %v3717
      %v3719 = vpop.f32.mrb[0].mxu0
      %3720 = vmatprep.mubr.f32.mxu0 0.0
      %3721 = vmatmul.mubr.f32.gmra.mrb[0].mxu0 %v3477
      %v3722 = vpop.f32.mrb[0].mxu0
      %v3723 = vadd.f32 0.0, %v3722
      %v3724 = vpop.f32.mrb[0].mxu0
      %3725 = vmatprep.mubr.f32.mxu0 0.0
      %3726 = vmatmul.mubr.f32.gmra.mrb[0].mxu0 %v3480
      %v3727 = vpop.f32.mrb[0].mxu0
      %v3728 = vadd.f32 0.0, %v3727
      %v3729 = vpop.f32.mrb[0].mxu0
      %3730 = vmatprep.mubr.f32.mxu0 0.0
      %3731 = vmatmul.mubr.f32.gmra.mrb[0].mxu0 %v3483
      %v3732 = vpop.f32.mrb[0].mxu0
      %v3733 = vadd.f32 0.0, %v3732
      %v3734 = vpop.f32.mrb[0].mxu0
      %3735 = vmatprep.mubr.f32.mxu0 0.0
      %3736 = vmatmul.mubr.f32.gmra.mrb[0].mxu0 %v3486
      %v3737 = vpop.f32.mrb[0].mxu0
      %v3738 = vadd.f32 0.0, %v3737
      %v3739 = vpop.f32.mrb[0].mxu0
      %3740 = vmatprep.mubr.f32.mxu0 0.0
      %3741 = vmatmul.mubr.f32.gmra.mrb[0].mxu0 %v3489
      %v3742 = vpop.f32.mrb[0].mxu0
      %v3743 = vadd.f32 0.0, %v3742
      %v3744 = vpop.f32.mrb[0].mxu0
      %3745 = vmatprep.mubr.f32.mxu0 0.0
      %3746 = vmatmul.mubr.f32.gmra.mrb[0].mxu0 %v3492
      %v3747 = vpop.f32.mrb[0].mxu0
      %v3748 = vadd.f32 0.0, %v3747
      %v3749 = vpop.f32.mrb[0].mxu0
      %3750 = vmatprep.mubr.f32.mxu0 0.0
      %3751 = vmatmul.mubr.f32.gmra.mrb[0].mxu0 %v3495
      %v3752 = vpop.f32.mrb[0].mxu0
      %v3753 = vadd.f32 0.0, %v3752
      %v3754 = vpop.f32.mrb[0].mxu0
      %3755 = vmatprep.mubr.f32.mxu0 0.0
      %3756 = vmatmul.mubr.f32.gmra.mrb[0].mxu0 %v3498
      %v3757 = vpop.f32.mrb[0].mxu0
      %v3758 = vadd.f32 0.0, %v3757
      %v3759 = vpop.f32.mrb[0].mxu0
      %3760 = vmatprep.mubr.f32.mxu0 0.0
      %3761 = vmatmul.mubr.f32.gmra.mrb[0].mxu0 %v3501
      %v3762 = vpop.f32.mrb[0].mxu0
      %v3763 = vadd.f32 0.0, %v3762
      %v3764 = vpop.f32.mrb[0].mxu0
      %3765 = vmatprep.mubr.f32.mxu0 0.0
      %3766 = vmatmul.mubr.f32.gmra.mrb[0].mxu0 %v3504
      %v3767 = vpop.f32.mrb[0].mxu0
      %v3768 = vadd.f32 0.0, %v3767
      %v3769 = vpop.f32.mrb[0].mxu0
      %3770 = vmatprep.mubr.f32.mxu0 0.0
      %3771 = vmatmul.mubr.f32.gmra.mrb[0].mxu0 %v3507
      %v3772 = vpop.f32.mrb[0].mxu0
      %v3773 = vadd.f32 0.0, %v3772
      %v3774 = vpop.f32.mrb[0].mxu0
      %3775 = vmatprep.mubr.f32.mxu0 0.0
      %3776 = vmatmul.mubr.f32.gmra.mrb[0].mxu0 %v3510
      %v3777 = vpop.f32.mrb[0].mxu0
      %v3778 = vadd.f32 0.0, %v3777
      %v3779 = vpop.f32.mrb[0].mxu0
      %3780 = vmatprep.mubr.f32.mxu0 0.0
      %3781 = vmatmul.mubr.f32.gmra.mrb[0].mxu0 %v3513
      %v3782 = vpop.f32.mrb[0].mxu0
      %v3783 = vadd.f32 0.0, %v3782
      %v3784 = vpop.f32.mrb[0].mxu0
      %3785 = vmatprep.mubr.f32.mxu0 0.0
      %3786 = vmatmul.mubr.f32.gmra.mrb[0].mxu0 %v3516
      %v3787 = vpop.f32.mrb[0].mxu0
      %v3788 = vadd.f32 0.0, %v3787
      %v3789 = vpop.f32.mrb[0].mxu0
      %3790 = vdwg.mxu0
      %v3791 = vadd.f32 %v3311, %v3588
      %v3792 = vadd.f32 %v3312, %v3593
      %v3793 = vadd.f32 %v3313, %v3598
      %v3794 = vadd.f32 %v3314, %v3603
      %v3795 = vadd.f32 %v3315, %v3608
      %v3796 = vadd.f32 %v3316, %v3613
      %v3797 = vadd.f32 %v3317, %v3618
      %v3798 = vadd.f32 %v3318, %v3623
      %v3799 = vadd.f32 %v3319, %v3628
      %v3800 = vadd.f32 %v3320, %v3633
      %v3801 = vadd.f32 %v3321, %v3638
      %v3802 = vadd.f32 %v3322, %v3643
      %v3803 = vadd.f32 %v3323, %v3648
      %v3804 = vadd.f32 %v3324, %v3653
      %v3805 = vadd.f32 %v3325, %v3658
      %v3806 = vadd.f32 %v3326, %v3663
      %v3807 = vadd.f32 %v3327, %v3668
      %v3808 = vadd.f32 %v3328, %v3673
      %v3809 = vadd.f32 %v3329, %v3678
      %v3810 = vadd.f32 %v3330, %v3683
      %v3811 = vadd.f32 %v3331, %v3688
      %v3812 = vadd.f32 %v3332, %v3693
      %v3813 = vadd.f32 %v3333, %v3698
      %v3814 = vadd.f32 %v3334, %v3703
      %v3815 = vadd.f32 %v3335, %v3708
      %v3816 = vadd.f32 %v3336, %v3713
      %v3817 = vadd.f32 %v3337, %v3718
      %v3818 = vadd.f32 %v3338, %v3723
      %v3819 = vadd.f32 %v3339, %v3728
      %v3820 = vadd.f32 %v3340, %v3733
      %v3821 = vadd.f32 %v3341, %v3738
      %v3822 = vadd.f32 %v3342, %v3743
      %v3823 = vadd.f32 %v3343, %v3748
      %v3824 = vadd.f32 %v3344, %v3753
      %v3825 = vadd.f32 %v3345, %v3758
      %v3826 = vadd.f32 %v3346, %v3763
      %v3827 = vadd.f32 %v3347, %v3768
      %v3828 = vadd.f32 %v3348, %v3773
      %v3829 = vadd.f32 %v3349, %v3778
      %v3830 = vadd.f32 %v3350, %v3783
      %v3831 = vadd.f32 %v3351, %v3788
      %v3832 = vld [vmem:[%s467 + $0x2a] sm:$0xff]
      %v3833 = vld [vmem:[%s467 + $0x32] sm:$0xff]
      %v3834 = vld [vmem:[%s467 + $0x3a] sm:$0xff]
      %v3835 = vld [vmem:[%s467 + $0x42] sm:$0xff]
      %v3836 = vld [vmem:[%s467 + $0x4a] sm:$0xff]
      %v3837 = vld [vmem:[%s467 + $0x52] sm:$0xff]
      %v3838 = vld [vmem:[%s467 + $0x5a] sm:$0xff]
      %v3839 = vld [vmem:[%s467 + $0x62] sm:$0xff]
      %v3840 = vld [vmem:[%s467 + $0x6a] sm:$0xff]
      %v3841 = vld [vmem:[%s467 + $0x72] sm:$0xff]
      %v3842 = vld [vmem:[%s467 + $0x7a] sm:$0xff]
      %v3843 = vld [vmem:[%s467 + $0x82] sm:$0xff]
      %v3844 = vld [vmem:[%s467 + $0x8a] sm:$0xff]
      %v3845 = vld [vmem:[%s467 + $0x92] sm:$0xff]
      %v3846 = vld [vmem:[%s467 + $0x9a] sm:$0xff]
      %v3847 = vld [vmem:[%s467 + $0xa2] sm:$0xff]
      %v3848 = vld [vmem:[%s467 + $0xaa] sm:$0xff]
      %v3849 = vld [vmem:[%s467 + $0xb2] sm:$0xff]
      %v3850 = vld [vmem:[%s467 + $0xba] sm:$0xff]
      %v3851 = vld [vmem:[%s467 + $0xc2] sm:$0xff]
      %v3852 = vld [vmem:[%s467 + $0xca] sm:$0xff]
      %v3853 = vld [vmem:[%s467 + $0xd2] sm:$0xff]
      %v3854 = vld [vmem:[%s467 + $0xda] sm:$0xff]
      %v3855 = vld [vmem:[%s467 + $0xe2] sm:$0xff]
      %v3856 = vld [vmem:[%s467 + $0xea] sm:$0xff]
      %v3857 = vld [vmem:[%s467 + $0xf2] sm:$0xff]
      %v3858 = vld [vmem:[%s467 + $0xfa] sm:$0xff]
      %v3859 = vld [vmem:[%s467 + $0x102] sm:$0xff]
      %v3860 = vld [vmem:[%s467 + $0x10a] sm:$0xff]
      %v3861 = vld [vmem:[%s467 + $0x112] sm:$0xff]
      %v3862 = vld [vmem:[%s467 + $0x11a] sm:$0xff]
      %v3863 = vld [vmem:[%s467 + $0x122] sm:$0xff]
      %v3864 = vld [vmem:[%s467 + $0x12a] sm:$0xff]
      %v3865 = vld [vmem:[%s467 + $0x132] sm:$0xff]
      %v3866 = vld [vmem:[%s467 + $0x13a] sm:$0xff]
      %v3867 = vld [vmem:[%s467 + $0x142] sm:$0xff]
      %v3868 = vld [vmem:[%s467 + $0x14a] sm:$0xff]
      %v3869 = vld [vmem:[%s467 + $0x152] sm:$0xff]
      %v3870 = vld [vmem:[%s467 + $0x15a] sm:$0xff]
      %v3871 = vld [vmem:[%s467 + $0x162] sm:$0xff]
      %v3872 = vld [vmem:[%s467 + $0x16a] sm:$0xf]
      %s3873 = scalar_lea.vmem %s3, 28
      %v3874 = vld [vmem:[%s3873] sm:$0x7]
      %v3876 = vsel %vm638, %v3832, 0
      %v3879 = vsel %vm638, %v3833, 0
      %v3882 = vsel %vm638, %v3834, 0
      %v3885 = vsel %vm638, %v3835, 0
      %v3888 = vsel %vm638, %v3836, 0
      %v3891 = vsel %vm638, %v3837, 0
      %v3894 = vsel %vm638, %v3838, 0
      %v3897 = vsel %vm638, %v3839, 0
      %v3900 = vsel %vm638, %v3840, 0
      %v3903 = vsel %vm638, %v3841, 0
      %v3906 = vsel %vm638, %v3842, 0
      %v3909 = vsel %vm638, %v3843, 0
      %v3912 = vsel %vm638, %v3844, 0
      %v3915 = vsel %vm638, %v3845, 0
      %v3918 = vsel %vm638, %v3846, 0
      %v3921 = vsel %vm638, %v3847, 0
      %v3924 = vsel %vm638, %v3848, 0
      %v3927 = vsel %vm638, %v3849, 0
      %v3930 = vsel %vm638, %v3850, 0
      %v3933 = vsel %vm638, %v3851, 0
      %v3936 = vsel %vm638, %v3852, 0
      %v3939 = vsel %vm638, %v3853, 0
      %v3942 = vsel %vm638, %v3854, 0
      %v3945 = vsel %vm638, %v3855, 0
      %v3948 = vsel %vm638, %v3856, 0
      %v3951 = vsel %vm638, %v3857, 0
      %v3954 = vsel %vm638, %v3858, 0
      %v3957 = vsel %vm638, %v3859, 0
      %v3960 = vsel %vm638, %v3860, 0
      %v3963 = vsel %vm638, %v3861, 0
      %v3966 = vsel %vm638, %v3862, 0
      %v3969 = vsel %vm638, %v3863, 0
      %v3972 = vsel %vm638, %v3864, 0
      %v3975 = vsel %vm638, %v3865, 0
      %v3978 = vsel %vm638, %v3866, 0
      %v3981 = vsel %vm638, %v3867, 0
      %v3984 = vsel %vm638, %v3868, 0
      %v3987 = vsel %vm638, %v3869, 0
      %v3990 = vsel %vm638, %v3870, 0
      %v3993 = vsel %vm638, %v3871, 0
      %v3996 = vsel %vm638, %v3872, 0
      %v3999 = vsel %vm762, %v3874, 0
      %4001 = vmatprep.subr.mxu0 0.0
      %4002 = vmatpush1.msra.mxu0 %v3999
      %4003 = vmatprep.subr.mxu0 0.0
      %4004 = vmatpush1.msra.mxu0 0.0
      %4005 = vmatprep.subr.mxu0 0.0
      %4006 = vmatpush1.msra.mxu0 0.0
      %4007 = vmatprep.subr.mxu0 0.0
      %4008 = vmatpush1.msra.mxu0 0.0
      %4009 = vmatprep.subr.mxu0 0.0
      %4010 = vmatpush1.msra.mxu0 0.0
      %4011 = vmatprep.subr.mxu0 0.0
      %4012 = vmatpush1.msra.mxu0 0.0
      %4013 = vmatprep.subr.mxu0 0.0
      %4014 = vmatpush1.msra.mxu0 0.0
      %4015 = vmatprep.subr.mxu0 0.0
      %4016 = vmatpush1.msra.mxu0 0.0
      %4017 = vmatprep.subr.mxu0 0.0
      %4018 = vmatpush1.msra.mxu0 0.0
      %4019 = vmatprep.subr.mxu0 0.0
      %4020 = vmatpush1.msra.mxu0 0.0
      %4021 = vmatprep.subr.mxu0 0.0
      %4022 = vmatpush1.msra.mxu0 0.0
      %4023 = vmatprep.subr.mxu0 0.0
      %4024 = vmatpush1.msra.mxu0 0.0
      %4025 = vmatprep.subr.mxu0 0.0
      %4026 = vmatpush1.msra.mxu0 0.0
      %4027 = vmatprep.subr.mxu0 0.0
      %4028 = vmatpush1.msra.mxu0 0.0
      %4029 = vmatprep.subr.mxu0 0.0
      %4030 = vmatpush1.msra.mxu0 0.0
      %4031 = vmatprep.subr.mxu0 0.0
      %4032 = vmatpush1.msra.mxu0 0.0
      %4033 = vmatprep.subr.mxu0 0.0
      %4034 = vmatpush1.msra.mxu0 0.0
      %4035 = vmatprep.subr.mxu0 0.0
      %4036 = vmatpush1.msra.mxu0 0.0
      %4037 = vmatprep.subr.mxu0 0.0
      %4038 = vmatpush1.msra.mxu0 0.0
      %4039 = vmatprep.subr.mxu0 0.0
      %4040 = vmatpush1.msra.mxu0 0.0
      %4041 = vmatprep.subr.mxu0 0.0
      %4042 = vmatpush1.msra.mxu0 0.0
      %4043 = vmatprep.subr.mxu0 0.0
      %4044 = vmatpush1.msra.mxu0 0.0
      %4045 = vmatprep.subr.mxu0 0.0
      %4046 = vmatpush1.msra.mxu0 0.0
      %4047 = vmatprep.subr.mxu0 0.0
      %4048 = vmatpush1.msra.mxu0 0.0
      %4049 = vmatprep.subr.mxu0 0.0
      %4050 = vmatpush1.msra.mxu0 0.0
      %4051 = vmatprep.subr.mxu0 0.0
      %4052 = vmatpush1.msra.mxu0 0.0
      %4053 = vmatprep.subr.mxu0 0.0
      %4054 = vmatpush1.msra.mxu0 0.0
      %4055 = vmatprep.subr.mxu0 0.0
      %4056 = vmatpush1.msra.mxu0 0.0
      %4057 = vmatprep.subr.mxu0 0.0
      %4058 = vmatpush1.msra.mxu0 0.0
      %4059 = vmatprep.subr.mxu0 0.0
      %4060 = vmatpush1.msra.mxu0 0.0
      %4061 = vmatprep.subr.mxu0 0.0
      %4062 = vmatpush1.msra.mxu0 0.0
      %4063 = vmatprep.subr.mxu0 0.0
      %4064 = vmatpush1.msra.mxu0 0.0
      %4065 = vmatprep.mubr.f32.mxu0 0.0
      %4066 = vmatmul.mubr.f32.gmra.mrb[0].mxu0 %v3876
      %v4067 = vpop.f32.mrb[0].mxu0
      %v4068 = vadd.f32 0.0, %v4067
      %v4069 = vpop.f32.mrb[0].mxu0
      %4070 = vmatprep.mubr.f32.mxu0 0.0
      %4071 = vmatmul.mubr.f32.gmra.mrb[0].mxu0 %v3879
      %v4072 = vpop.f32.mrb[0].mxu0
      %v4073 = vadd.f32 0.0, %v4072
      %v4074 = vpop.f32.mrb[0].mxu0
      %4075 = vmatprep.mubr.f32.mxu0 0.0
      %4076 = vmatmul.mubr.f32.gmra.mrb[0].mxu0 %v3882
      %v4077 = vpop.f32.mrb[0].mxu0
      %v4078 = vadd.f32 0.0, %v4077
      %v4079 = vpop.f32.mrb[0].mxu0
      %4080 = vmatprep.mubr.f32.mxu0 0.0
      %4081 = vmatmul.mubr.f32.gmra.mrb[0].mxu0 %v3885
      %v4082 = vpop.f32.mrb[0].mxu0
      %v4083 = vadd.f32 0.0, %v4082
      %v4084 = vpop.f32.mrb[0].mxu0
      %4085 = vmatprep.mubr.f32.mxu0 0.0
      %4086 = vmatmul.mubr.f32.gmra.mrb[0].mxu0 %v3888
      %v4087 = vpop.f32.mrb[0].mxu0
      %v4088 = vadd.f32 0.0, %v4087
      %v4089 = vpop.f32.mrb[0].mxu0
      %4090 = vmatprep.mubr.f32.mxu0 0.0
      %4091 = vmatmul.mubr.f32.gmra.mrb[0].mxu0 %v3891
      %v4092 = vpop.f32.mrb[0].mxu0
      %v4093 = vadd.f32 0.0, %v4092
      %v4094 = vpop.f32.mrb[0].mxu0
      %4095 = vmatprep.mubr.f32.mxu0 0.0
      %4096 = vmatmul.mubr.f32.gmra.mrb[0].mxu0 %v3894
      %v4097 = vpop.f32.mrb[0].mxu0
      %v4098 = vadd.f32 0.0, %v4097
      %v4099 = vpop.f32.mrb[0].mxu0
      %4100 = vmatprep.mubr.f32.mxu0 0.0
      %4101 = vmatmul.mubr.f32.gmra.mrb[0].mxu0 %v3897
      %v4102 = vpop.f32.mrb[0].mxu0
      %v4103 = vadd.f32 0.0, %v4102
      %v4104 = vpop.f32.mrb[0].mxu0
      %4105 = vmatprep.mubr.f32.mxu0 0.0
      %4106 = vmatmul.mubr.f32.gmra.mrb[0].mxu0 %v3900
      %v4107 = vpop.f32.mrb[0].mxu0
      %v4108 = vadd.f32 0.0, %v4107
      %v4109 = vpop.f32.mrb[0].mxu0
      %4110 = vmatprep.mubr.f32.mxu0 0.0
      %4111 = vmatmul.mubr.f32.gmra.mrb[0].mxu0 %v3903
      %v4112 = vpop.f32.mrb[0].mxu0
      %v4113 = vadd.f32 0.0, %v4112
      %v4114 = vpop.f32.mrb[0].mxu0
      %4115 = vmatprep.mubr.f32.mxu0 0.0
      %4116 = vmatmul.mubr.f32.gmra.mrb[0].mxu0 %v3906
      %v4117 = vpop.f32.mrb[0].mxu0
      %v4118 = vadd.f32 0.0, %v4117
      %v4119 = vpop.f32.mrb[0].mxu0
      %4120 = vmatprep.mubr.f32.mxu0 0.0
      %4121 = vmatmul.mubr.f32.gmra.mrb[0].mxu0 %v3909
      %v4122 = vpop.f32.mrb[0].mxu0
      %v4123 = vadd.f32 0.0, %v4122
      %v4124 = vpop.f32.mrb[0].mxu0
      %4125 = vmatprep.mubr.f32.mxu0 0.0
      %4126 = vmatmul.mubr.f32.gmra.mrb[0].mxu0 %v3912
      %v4127 = vpop.f32.mrb[0].mxu0
      %v4128 = vadd.f32 0.0, %v4127
      %v4129 = vpop.f32.mrb[0].mxu0
      %4130 = vmatprep.mubr.f32.mxu0 0.0
      %4131 = vmatmul.mubr.f32.gmra.mrb[0].mxu0 %v3915
      %v4132 = vpop.f32.mrb[0].mxu0
      %v4133 = vadd.f32 0.0, %v4132
      %v4134 = vpop.f32.mrb[0].mxu0
      %4135 = vmatprep.mubr.f32.mxu0 0.0
      %4136 = vmatmul.mubr.f32.gmra.mrb[0].mxu0 %v3918
      %v4137 = vpop.f32.mrb[0].mxu0
      %v4138 = vadd.f32 0.0, %v4137
      %v4139 = vpop.f32.mrb[0].mxu0
      %4140 = vmatprep.mubr.f32.mxu0 0.0
      %4141 = vmatmul.mubr.f32.gmra.mrb[0].mxu0 %v3921
      %v4142 = vpop.f32.mrb[0].mxu0
      %v4143 = vadd.f32 0.0, %v4142
      %v4144 = vpop.f32.mrb[0].mxu0
      %4145 = vmatprep.mubr.f32.mxu0 0.0
      %4146 = vmatmul.mubr.f32.gmra.mrb[0].mxu0 %v3924
      %v4147 = vpop.f32.mrb[0].mxu0
      %v4148 = vadd.f32 0.0, %v4147
      %v4149 = vpop.f32.mrb[0].mxu0
      %4150 = vmatprep.mubr.f32.mxu0 0.0
      %4151 = vmatmul.mubr.f32.gmra.mrb[0].mxu0 %v3927
      %v4152 = vpop.f32.mrb[0].mxu0
      %v4153 = vadd.f32 0.0, %v4152
      %v4154 = vpop.f32.mrb[0].mxu0
      %4155 = vmatprep.mubr.f32.mxu0 0.0
      %4156 = vmatmul.mubr.f32.gmra.mrb[0].mxu0 %v3930
      %v4157 = vpop.f32.mrb[0].mxu0
      %v4158 = vadd.f32 0.0, %v4157
      %v4159 = vpop.f32.mrb[0].mxu0
      %4160 = vmatprep.mubr.f32.mxu0 0.0
      %4161 = vmatmul.mubr.f32.gmra.mrb[0].mxu0 %v3933
      %v4162 = vpop.f32.mrb[0].mxu0
      %v4163 = vadd.f32 0.0, %v4162
      %v4164 = vpop.f32.mrb[0].mxu0
      %4165 = vmatprep.mubr.f32.mxu0 0.0
      %4166 = vmatmul.mubr.f32.gmra.mrb[0].mxu0 %v3936
      %v4167 = vpop.f32.mrb[0].mxu0
      %v4168 = vadd.f32 0.0, %v4167
      %v4169 = vpop.f32.mrb[0].mxu0
      %4170 = vmatprep.mubr.f32.mxu0 0.0
      %4171 = vmatmul.mubr.f32.gmra.mrb[0].mxu0 %v3939
      %v4172 = vpop.f32.mrb[0].mxu0
      %v4173 = vadd.f32 0.0, %v4172
      %v4174 = vpop.f32.mrb[0].mxu0
      %4175 = vmatprep.mubr.f32.mxu0 0.0
      %4176 = vmatmul.mubr.f32.gmra.mrb[0].mxu0 %v3942
      %v4177 = vpop.f32.mrb[0].mxu0
      %v4178 = vadd.f32 0.0, %v4177
      %v4179 = vpop.f32.mrb[0].mxu0
      %4180 = vmatprep.mubr.f32.mxu0 0.0
      %4181 = vmatmul.mubr.f32.gmra.mrb[0].mxu0 %v3945
      %v4182 = vpop.f32.mrb[0].mxu0
      %v4183 = vadd.f32 0.0, %v4182
      %v4184 = vpop.f32.mrb[0].mxu0
      %4185 = vmatprep.mubr.f32.mxu0 0.0
      %4186 = vmatmul.mubr.f32.gmra.mrb[0].mxu0 %v3948
      %v4187 = vpop.f32.mrb[0].mxu0
      %v4188 = vadd.f32 0.0, %v4187
      %v4189 = vpop.f32.mrb[0].mxu0
      %4190 = vmatprep.mubr.f32.mxu0 0.0
      %4191 = vmatmul.mubr.f32.gmra.mrb[0].mxu0 %v3951
      %v4192 = vpop.f32.mrb[0].mxu0
      %v4193 = vadd.f32 0.0, %v4192
      %v4194 = vpop.f32.mrb[0].mxu0
      %4195 = vmatprep.mubr.f32.mxu0 0.0
      %4196 = vmatmul.mubr.f32.gmra.mrb[0].mxu0 %v3954
      %v4197 = vpop.f32.mrb[0].mxu0
      %v4198 = vadd.f32 0.0, %v4197
      %v4199 = vpop.f32.mrb[0].mxu0
      %4200 = vmatprep.mubr.f32.mxu0 0.0
      %4201 = vmatmul.mubr.f32.gmra.mrb[0].mxu0 %v3957
      %v4202 = vpop.f32.mrb[0].mxu0
      %v4203 = vadd.f32 0.0, %v4202
      %v4204 = vpop.f32.mrb[0].mxu0
      %4205 = vmatprep.mubr.f32.mxu0 0.0
      %4206 = vmatmul.mubr.f32.gmra.mrb[0].mxu0 %v3960
      %v4207 = vpop.f32.mrb[0].mxu0
      %v4208 = vadd.f32 0.0, %v4207
      %v4209 = vpop.f32.mrb[0].mxu0
      %4210 = vmatprep.mubr.f32.mxu0 0.0
      %4211 = vmatmul.mubr.f32.gmra.mrb[0].mxu0 %v3963
      %v4212 = vpop.f32.mrb[0].mxu0
      %v4213 = vadd.f32 0.0, %v4212
      %v4214 = vpop.f32.mrb[0].mxu0
      %4215 = vmatprep.mubr.f32.mxu0 0.0
      %4216 = vmatmul.mubr.f32.gmra.mrb[0].mxu0 %v3966
      %v4217 = vpop.f32.mrb[0].mxu0
      %v4218 = vadd.f32 0.0, %v4217
      %v4219 = vpop.f32.mrb[0].mxu0
      %4220 = vmatprep.mubr.f32.mxu0 0.0
      %4221 = vmatmul.mubr.f32.gmra.mrb[0].mxu0 %v3969
      %v4222 = vpop.f32.mrb[0].mxu0
      %v4223 = vadd.f32 0.0, %v4222
      %v4224 = vpop.f32.mrb[0].mxu0
      %4225 = vmatprep.mubr.f32.mxu0 0.0
      %4226 = vmatmul.mubr.f32.gmra.mrb[0].mxu0 %v3972
      %v4227 = vpop.f32.mrb[0].mxu0
      %v4228 = vadd.f32 0.0, %v4227
      %v4229 = vpop.f32.mrb[0].mxu0
      %4230 = vmatprep.mubr.f32.mxu0 0.0
      %4231 = vmatmul.mubr.f32.gmra.mrb[0].mxu0 %v3975
      %v4232 = vpop.f32.mrb[0].mxu0
      %v4233 = vadd.f32 0.0, %v4232
      %v4234 = vpop.f32.mrb[0].mxu0
      %4235 = vmatprep.mubr.f32.mxu0 0.0
      %4236 = vmatmul.mubr.f32.gmra.mrb[0].mxu0 %v3978
      %v4237 = vpop.f32.mrb[0].mxu0
      %v4238 = vadd.f32 0.0, %v4237
      %v4239 = vpop.f32.mrb[0].mxu0
      %4240 = vmatprep.mubr.f32.mxu0 0.0
      %4241 = vmatmul.mubr.f32.gmra.mrb[0].mxu0 %v3981
      %v4242 = vpop.f32.mrb[0].mxu0
      %v4243 = vadd.f32 0.0, %v4242
      %v4244 = vpop.f32.mrb[0].mxu0
      %4245 = vmatprep.mubr.f32.mxu0 0.0
      %4246 = vmatmul.mubr.f32.gmra.mrb[0].mxu0 %v3984
      %v4247 = vpop.f32.mrb[0].mxu0
      %v4248 = vadd.f32 0.0, %v4247
      %v4249 = vpop.f32.mrb[0].mxu0
      %4250 = vmatprep.mubr.f32.mxu0 0.0
      %4251 = vmatmul.mubr.f32.gmra.mrb[0].mxu0 %v3987
      %v4252 = vpop.f32.mrb[0].mxu0
      %v4253 = vadd.f32 0.0, %v4252
      %v4254 = vpop.f32.mrb[0].mxu0
      %4255 = vmatprep.mubr.f32.mxu0 0.0
      %4256 = vmatmul.mubr.f32.gmra.mrb[0].mxu0 %v3990
      %v4257 = vpop.f32.mrb[0].mxu0
      %v4258 = vadd.f32 0.0, %v4257
      %v4259 = vpop.f32.mrb[0].mxu0
      %4260 = vmatprep.mubr.f32.mxu0 0.0
      %4261 = vmatmul.mubr.f32.gmra.mrb[0].mxu0 %v3993
      %v4262 = vpop.f32.mrb[0].mxu0
      %v4263 = vadd.f32 0.0, %v4262
      %v4264 = vpop.f32.mrb[0].mxu0
      %4265 = vmatprep.mubr.f32.mxu0 0.0
      %4266 = vmatmul.mubr.f32.gmra.mrb[0].mxu0 %v3996
      %v4267 = vpop.f32.mrb[0].mxu0
      %v4268 = vadd.f32 0.0, %v4267
      %v4269 = vpop.f32.mrb[0].mxu0
      %4270 = vdwg.mxu0
      %v4271 = vadd.f32 %v3791, %v4068
      %v4272 = vadd.f32 %v3792, %v4073
      %v4273 = vadd.f32 %v3793, %v4078
      %v4274 = vadd.f32 %v3794, %v4083
      %v4275 = vadd.f32 %v3795, %v4088
      %v4276 = vadd.f32 %v3796, %v4093
      %v4277 = vadd.f32 %v3797, %v4098
      %v4278 = vadd.f32 %v3798, %v4103
      %v4279 = vadd.f32 %v3799, %v4108
      %v4280 = vadd.f32 %v3800, %v4113
      %v4281 = vadd.f32 %v3801, %v4118
      %v4282 = vadd.f32 %v3802, %v4123
      %v4283 = vadd.f32 %v3803, %v4128
      %v4284 = vadd.f32 %v3804, %v4133
      %v4285 = vadd.f32 %v3805, %v4138
      %v4286 = vadd.f32 %v3806, %v4143
      %v4287 = vadd.f32 %v3807, %v4148
      %v4288 = vadd.f32 %v3808, %v4153
      %v4289 = vadd.f32 %v3809, %v4158
      %v4290 = vadd.f32 %v3810, %v4163
      %v4291 = vadd.f32 %v3811, %v4168
      %v4292 = vadd.f32 %v3812, %v4173
      %v4293 = vadd.f32 %v3813, %v4178
      %v4294 = vadd.f32 %v3814, %v4183
      %v4295 = vadd.f32 %v3815, %v4188
      %v4296 = vadd.f32 %v3816, %v4193
      %v4297 = vadd.f32 %v3817, %v4198
      %v4298 = vadd.f32 %v3818, %v4203
      %v4299 = vadd.f32 %v3819, %v4208
      %v4300 = vadd.f32 %v3820, %v4213
      %v4301 = vadd.f32 %v3821, %v4218
      %v4302 = vadd.f32 %v3822, %v4223
      %v4303 = vadd.f32 %v3823, %v4228
      %v4304 = vadd.f32 %v3824, %v4233
      %v4305 = vadd.f32 %v3825, %v4238
      %v4306 = vadd.f32 %v3826, %v4243
      %v4307 = vadd.f32 %v3827, %v4248
      %v4308 = vadd.f32 %v3828, %v4253
      %v4309 = vadd.f32 %v3829, %v4258
      %v4310 = vadd.f32 %v3830, %v4263
      %v4311 = vadd.f32 %v3831, %v4268
      %v4312 = vld [vmem:[%s467 + $0x2b] sm:$0xff]
      %v4313 = vld [vmem:[%s467 + $0x33] sm:$0xff]
      %v4314 = vld [vmem:[%s467 + $0x3b] sm:$0xff]
      %v4315 = vld [vmem:[%s467 + $0x43] sm:$0xff]
      %v4316 = vld [vmem:[%s467 + $0x4b] sm:$0xff]
      %v4317 = vld [vmem:[%s467 + $0x53] sm:$0xff]
      %v4318 = vld [vmem:[%s467 + $0x5b] sm:$0xff]
      %v4319 = vld [vmem:[%s467 + $0x63] sm:$0xff]
      %v4320 = vld [vmem:[%s467 + $0x6b] sm:$0xff]
      %v4321 = vld [vmem:[%s467 + $0x73] sm:$0xff]
      %v4322 = vld [vmem:[%s467 + $0x7b] sm:$0xff]
      %v4323 = vld [vmem:[%s467 + $0x83] sm:$0xff]
      %v4324 = vld [vmem:[%s467 + $0x8b] sm:$0xff]
      %v4325 = vld [vmem:[%s467 + $0x93] sm:$0xff]
      %v4326 = vld [vmem:[%s467 + $0x9b] sm:$0xff]
      %v4327 = vld [vmem:[%s467 + $0xa3] sm:$0xff]
      %v4328 = vld [vmem:[%s467 + $0xab] sm:$0xff]
      %v4329 = vld [vmem:[%s467 + $0xb3] sm:$0xff]
      %v4330 = vld [vmem:[%s467 + $0xbb] sm:$0xff]
      %v4331 = vld [vmem:[%s467 + $0xc3] sm:$0xff]
      %v4332 = vld [vmem:[%s467 + $0xcb] sm:$0xff]
      %v4333 = vld [vmem:[%s467 + $0xd3] sm:$0xff]
      %v4334 = vld [vmem:[%s467 + $0xdb] sm:$0xff]
      %v4335 = vld [vmem:[%s467 + $0xe3] sm:$0xff]
      %v4336 = vld [vmem:[%s467 + $0xeb] sm:$0xff]
      %v4337 = vld [vmem:[%s467 + $0xf3] sm:$0xff]
      %v4338 = vld [vmem:[%s467 + $0xfb] sm:$0xff]
      %v4339 = vld [vmem:[%s467 + $0x103] sm:$0xff]
      %v4340 = vld [vmem:[%s467 + $0x10b] sm:$0xff]
      %v4341 = vld [vmem:[%s467 + $0x113] sm:$0xff]
      %v4342 = vld [vmem:[%s467 + $0x11b] sm:$0xff]
      %v4343 = vld [vmem:[%s467 + $0x123] sm:$0xff]
      %v4344 = vld [vmem:[%s467 + $0x12b] sm:$0xff]
      %v4345 = vld [vmem:[%s467 + $0x133] sm:$0xff]
      %v4346 = vld [vmem:[%s467 + $0x13b] sm:$0xff]
      %v4347 = vld [vmem:[%s467 + $0x143] sm:$0xff]
      %v4348 = vld [vmem:[%s467 + $0x14b] sm:$0xff]
      %v4349 = vld [vmem:[%s467 + $0x153] sm:$0xff]
      %v4350 = vld [vmem:[%s467 + $0x15b] sm:$0xff]
      %v4351 = vld [vmem:[%s467 + $0x163] sm:$0xff]
      %v4352 = vld [vmem:[%s467 + $0x16b] sm:$0xf]
      %s4353 = scalar_lea.vmem %s3, 32
      %v4354 = vld [vmem:[%s4353] sm:$0x7]
      %v4356 = vsel %vm638, %v4312, 0
      %v4359 = vsel %vm638, %v4313, 0
      %v4362 = vsel %vm638, %v4314, 0
      %v4365 = vsel %vm638, %v4315, 0
      %v4368 = vsel %vm638, %v4316, 0
      %v4371 = vsel %vm638, %v4317, 0
      %v4374 = vsel %vm638, %v4318, 0
      %v4377 = vsel %vm638, %v4319, 0
      %v4380 = vsel %vm638, %v4320, 0
      %v4383 = vsel %vm638, %v4321, 0
      %v4386 = vsel %vm638, %v4322, 0
      %v4389 = vsel %vm638, %v4323, 0
      %v4392 = vsel %vm638, %v4324, 0
      %v4395 = vsel %vm638, %v4325, 0
      %v4398 = vsel %vm638, %v4326, 0
      %v4401 = vsel %vm638, %v4327, 0
      %v4404 = vsel %vm638, %v4328, 0
      %v4407 = vsel %vm638, %v4329, 0
      %v4410 = vsel %vm638, %v4330, 0
      %v4413 = vsel %vm638, %v4331, 0
      %v4416 = vsel %vm638, %v4332, 0
      %v4419 = vsel %vm638, %v4333, 0
      %v4422 = vsel %vm638, %v4334, 0
      %v4425 = vsel %vm638, %v4335, 0
      %v4428 = vsel %vm638, %v4336, 0
      %v4431 = vsel %vm638, %v4337, 0
      %v4434 = vsel %vm638, %v4338, 0
      %v4437 = vsel %vm638, %v4339, 0
      %v4440 = vsel %vm638, %v4340, 0
      %v4443 = vsel %vm638, %v4341, 0
      %v4446 = vsel %vm638, %v4342, 0
      %v4449 = vsel %vm638, %v4343, 0
      %v4452 = vsel %vm638, %v4344, 0
      %v4455 = vsel %vm638, %v4345, 0
      %v4458 = vsel %vm638, %v4346, 0
      %v4461 = vsel %vm638, %v4347, 0
      %v4464 = vsel %vm638, %v4348, 0
      %v4467 = vsel %vm638, %v4349, 0
      %v4470 = vsel %vm638, %v4350, 0
      %v4473 = vsel %vm638, %v4351, 0
      %v4476 = vsel %vm638, %v4352, 0
      %v4479 = vsel %vm762, %v4354, 0
      %4481 = vmatprep.subr.mxu0 0.0
      %4482 = vmatpush1.msra.mxu0 %v4479
      %4483 = vmatprep.subr.mxu0 0.0
      %4484 = vmatpush1.msra.mxu0 0.0
      %4485 = vmatprep.subr.mxu0 0.0
      %4486 = vmatpush1.msra.mxu0 0.0
      %4487 = vmatprep.subr.mxu0 0.0
      %4488 = vmatpush1.msra.mxu0 0.0
      %4489 = vmatprep.subr.mxu0 0.0
      %4490 = vmatpush1.msra.mxu0 0.0
      %4491 = vmatprep.subr.mxu0 0.0
      %4492 = vmatpush1.msra.mxu0 0.0
      %4493 = vmatprep.subr.mxu0 0.0
      %4494 = vmatpush1.msra.mxu0 0.0
      %4495 = vmatprep.subr.mxu0 0.0
      %4496 = vmatpush1.msra.mxu0 0.0
      %4497 = vmatprep.subr.mxu0 0.0
      %4498 = vmatpush1.msra.mxu0 0.0
      %4499 = vmatprep.subr.mxu0 0.0
      %4500 = vmatpush1.msra.mxu0 0.0
      %4501 = vmatprep.subr.mxu0 0.0
      %4502 = vmatpush1.msra.mxu0 0.0
      %4503 = vmatprep.subr.mxu0 0.0
      %4504 = vmatpush1.msra.mxu0 0.0
      %4505 = vmatprep.subr.mxu0 0.0
      %4506 = vmatpush1.msra.mxu0 0.0
      %4507 = vmatprep.subr.mxu0 0.0
      %4508 = vmatpush1.msra.mxu0 0.0
      %4509 = vmatprep.subr.mxu0 0.0
      %4510 = vmatpush1.msra.mxu0 0.0
      %4511 = vmatprep.subr.mxu0 0.0
      %4512 = vmatpush1.msra.mxu0 0.0
      %4513 = vmatprep.subr.mxu0 0.0
      %4514 = vmatpush1.msra.mxu0 0.0
      %4515 = vmatprep.subr.mxu0 0.0
      %4516 = vmatpush1.msra.mxu0 0.0
      %4517 = vmatprep.subr.mxu0 0.0
      %4518 = vmatpush1.msra.mxu0 0.0
      %4519 = vmatprep.subr.mxu0 0.0
      %4520 = vmatpush1.msra.mxu0 0.0
      %4521 = vmatprep.subr.mxu0 0.0
      %4522 = vmatpush1.msra.mxu0 0.0
      %4523 = vmatprep.subr.mxu0 0.0
      %4524 = vmatpush1.msra.mxu0 0.0
      %4525 = vmatprep.subr.mxu0 0.0
      %4526 = vmatpush1.msra.mxu0 0.0
      %4527 = vmatprep.subr.mxu0 0.0
      %4528 = vmatpush1.msra.mxu0 0.0
      %4529 = vmatprep.subr.mxu0 0.0
      %4530 = vmatpush1.msra.mxu0 0.0
      %4531 = vmatprep.subr.mxu0 0.0
      %4532 = vmatpush1.msra.mxu0 0.0
      %4533 = vmatprep.subr.mxu0 0.0
      %4534 = vmatpush1.msra.mxu0 0.0
      %4535 = vmatprep.subr.mxu0 0.0
      %4536 = vmatpush1.msra.mxu0 0.0
      %4537 = vmatprep.subr.mxu0 0.0
      %4538 = vmatpush1.msra.mxu0 0.0
      %4539 = vmatprep.subr.mxu0 0.0
      %4540 = vmatpush1.msra.mxu0 0.0
      %4541 = vmatprep.subr.mxu0 0.0
      %4542 = vmatpush1.msra.mxu0 0.0
      %4543 = vmatprep.subr.mxu0 0.0
      %4544 = vmatpush1.msra.mxu0 0.0
      %4545 = vmatprep.mubr.f32.mxu0 0.0
      %4546 = vmatmul.mubr.f32.gmra.mrb[0].mxu0 %v4356
      %v4547 = vpop.f32.mrb[0].mxu0
      %v4548 = vadd.f32 0.0, %v4547
      %v4549 = vpop.f32.mrb[0].mxu0
      %4550 = vmatprep.mubr.f32.mxu0 0.0
      %4551 = vmatmul.mubr.f32.gmra.mrb[0].mxu0 %v4359
      %v4552 = vpop.f32.mrb[0].mxu0
      %v4553 = vadd.f32 0.0, %v4552
      %v4554 = vpop.f32.mrb[0].mxu0
      %4555 = vmatprep.mubr.f32.mxu0 0.0
      %4556 = vmatmul.mubr.f32.gmra.mrb[0].mxu0 %v4362
      %v4557 = vpop.f32.mrb[0].mxu0
      %v4558 = vadd.f32 0.0, %v4557
      %v4559 = vpop.f32.mrb[0].mxu0
      %4560 = vmatprep.mubr.f32.mxu0 0.0
      %4561 = vmatmul.mubr.f32.gmra.mrb[0].mxu0 %v4365
      %v4562 = vpop.f32.mrb[0].mxu0
      %v4563 = vadd.f32 0.0, %v4562
      %v4564 = vpop.f32.mrb[0].mxu0
      %4565 = vmatprep.mubr.f32.mxu0 0.0
      %4566 = vmatmul.mubr.f32.gmra.mrb[0].mxu0 %v4368
      %v4567 = vpop.f32.mrb[0].mxu0
      %v4568 = vadd.f32 0.0, %v4567
      %v4569 = vpop.f32.mrb[0].mxu0
      %4570 = vmatprep.mubr.f32.mxu0 0.0
      %4571 = vmatmul.mubr.f32.gmra.mrb[0].mxu0 %v4371
      %v4572 = vpop.f32.mrb[0].mxu0
      %v4573 = vadd.f32 0.0, %v4572
      %v4574 = vpop.f32.mrb[0].mxu0
      %4575 = vmatprep.mubr.f32.mxu0 0.0
      %4576 = vmatmul.mubr.f32.gmra.mrb[0].mxu0 %v4374
      %v4577 = vpop.f32.mrb[0].mxu0
      %v4578 = vadd.f32 0.0, %v4577
      %v4579 = vpop.f32.mrb[0].mxu0
      %4580 = vmatprep.mubr.f32.mxu0 0.0
      %4581 = vmatmul.mubr.f32.gmra.mrb[0].mxu0 %v4377
      %v4582 = vpop.f32.mrb[0].mxu0
      %v4583 = vadd.f32 0.0, %v4582
      %v4584 = vpop.f32.mrb[0].mxu0
      %4585 = vmatprep.mubr.f32.mxu0 0.0
      %4586 = vmatmul.mubr.f32.gmra.mrb[0].mxu0 %v4380
      %v4587 = vpop.f32.mrb[0].mxu0
      %v4588 = vadd.f32 0.0, %v4587
      %v4589 = vpop.f32.mrb[0].mxu0
      %4590 = vmatprep.mubr.f32.mxu0 0.0
      %4591 = vmatmul.mubr.f32.gmra.mrb[0].mxu0 %v4383
      %v4592 = vpop.f32.mrb[0].mxu0
      %v4593 = vadd.f32 0.0, %v4592
      %v4594 = vpop.f32.mrb[0].mxu0
      %4595 = vmatprep.mubr.f32.mxu0 0.0
      %4596 = vmatmul.mubr.f32.gmra.mrb[0].mxu0 %v4386
      %v4597 = vpop.f32.mrb[0].mxu0
      %v4598 = vadd.f32 0.0, %v4597
      %v4599 = vpop.f32.mrb[0].mxu0
      %4600 = vmatprep.mubr.f32.mxu0 0.0
      %4601 = vmatmul.mubr.f32.gmra.mrb[0].mxu0 %v4389
      %v4602 = vpop.f32.mrb[0].mxu0
      %v4603 = vadd.f32 0.0, %v4602
      %v4604 = vpop.f32.mrb[0].mxu0
      %4605 = vmatprep.mubr.f32.mxu0 0.0
      %4606 = vmatmul.mubr.f32.gmra.mrb[0].mxu0 %v4392
      %v4607 = vpop.f32.mrb[0].mxu0
      %v4608 = vadd.f32 0.0, %v4607
      %v4609 = vpop.f32.mrb[0].mxu0
      %4610 = vmatprep.mubr.f32.mxu0 0.0
      %4611 = vmatmul.mubr.f32.gmra.mrb[0].mxu0 %v4395
      %v4612 = vpop.f32.mrb[0].mxu0
      %v4613 = vadd.f32 0.0, %v4612
      %v4614 = vpop.f32.mrb[0].mxu0
      %4615 = vmatprep.mubr.f32.mxu0 0.0
      %4616 = vmatmul.mubr.f32.gmra.mrb[0].mxu0 %v4398
      %v4617 = vpop.f32.mrb[0].mxu0
      %v4618 = vadd.f32 0.0, %v4617
      %v4619 = vpop.f32.mrb[0].mxu0
      %4620 = vmatprep.mubr.f32.mxu0 0.0
      %4621 = vmatmul.mubr.f32.gmra.mrb[0].mxu0 %v4401
      %v4622 = vpop.f32.mrb[0].mxu0
      %v4623 = vadd.f32 0.0, %v4622
      %v4624 = vpop.f32.mrb[0].mxu0
      %4625 = vmatprep.mubr.f32.mxu0 0.0
      %4626 = vmatmul.mubr.f32.gmra.mrb[0].mxu0 %v4404
      %v4627 = vpop.f32.mrb[0].mxu0
      %v4628 = vadd.f32 0.0, %v4627
      %v4629 = vpop.f32.mrb[0].mxu0
      %4630 = vmatprep.mubr.f32.mxu0 0.0
      %4631 = vmatmul.mubr.f32.gmra.mrb[0].mxu0 %v4407
      %v4632 = vpop.f32.mrb[0].mxu0
      %v4633 = vadd.f32 0.0, %v4632
      %v4634 = vpop.f32.mrb[0].mxu0
      %4635 = vmatprep.mubr.f32.mxu0 0.0
      %4636 = vmatmul.mubr.f32.gmra.mrb[0].mxu0 %v4410
      %v4637 = vpop.f32.mrb[0].mxu0
      %v4638 = vadd.f32 0.0, %v4637
      %v4639 = vpop.f32.mrb[0].mxu0
      %4640 = vmatprep.mubr.f32.mxu0 0.0
      %4641 = vmatmul.mubr.f32.gmra.mrb[0].mxu0 %v4413
      %v4642 = vpop.f32.mrb[0].mxu0
      %v4643 = vadd.f32 0.0, %v4642
      %v4644 = vpop.f32.mrb[0].mxu0
      %4645 = vmatprep.mubr.f32.mxu0 0.0
      %4646 = vmatmul.mubr.f32.gmra.mrb[0].mxu0 %v4416
      %v4647 = vpop.f32.mrb[0].mxu0
      %v4648 = vadd.f32 0.0, %v4647
      %v4649 = vpop.f32.mrb[0].mxu0
      %4650 = vmatprep.mubr.f32.mxu0 0.0
      %4651 = vmatmul.mubr.f32.gmra.mrb[0].mxu0 %v4419
      %v4652 = vpop.f32.mrb[0].mxu0
      %v4653 = vadd.f32 0.0, %v4652
      %v4654 = vpop.f32.mrb[0].mxu0
      %4655 = vmatprep.mubr.f32.mxu0 0.0
      %4656 = vmatmul.mubr.f32.gmra.mrb[0].mxu0 %v4422
      %v4657 = vpop.f32.mrb[0].mxu0
      %v4658 = vadd.f32 0.0, %v4657
      %v4659 = vpop.f32.mrb[0].mxu0
      %4660 = vmatprep.mubr.f32.mxu0 0.0
      %4661 = vmatmul.mubr.f32.gmra.mrb[0].mxu0 %v4425
      %v4662 = vpop.f32.mrb[0].mxu0
      %v4663 = vadd.f32 0.0, %v4662
      %v4664 = vpop.f32.mrb[0].mxu0
      %4665 = vmatprep.mubr.f32.mxu0 0.0
      %4666 = vmatmul.mubr.f32.gmra.mrb[0].mxu0 %v4428
      %v4667 = vpop.f32.mrb[0].mxu0
      %v4668 = vadd.f32 0.0, %v4667
      %v4669 = vpop.f32.mrb[0].mxu0
      %4670 = vmatprep.mubr.f32.mxu0 0.0
      %4671 = vmatmul.mubr.f32.gmra.mrb[0].mxu0 %v4431
      %v4672 = vpop.f32.mrb[0].mxu0
      %v4673 = vadd.f32 0.0, %v4672
      %v4674 = vpop.f32.mrb[0].mxu0
      %4675 = vmatprep.mubr.f32.mxu0 0.0
      %4676 = vmatmul.mubr.f32.gmra.mrb[0].mxu0 %v4434
      %v4677 = vpop.f32.mrb[0].mxu0
      %v4678 = vadd.f32 0.0, %v4677
      %v4679 = vpop.f32.mrb[0].mxu0
      %4680 = vmatprep.mubr.f32.mxu0 0.0
      %4681 = vmatmul.mubr.f32.gmra.mrb[0].mxu0 %v4437
      %v4682 = vpop.f32.mrb[0].mxu0
      %v4683 = vadd.f32 0.0, %v4682
      %v4684 = vpop.f32.mrb[0].mxu0
      %4685 = vmatprep.mubr.f32.mxu0 0.0
      %4686 = vmatmul.mubr.f32.gmra.mrb[0].mxu0 %v4440
      %v4687 = vpop.f32.mrb[0].mxu0
      %v4688 = vadd.f32 0.0, %v4687
      %v4689 = vpop.f32.mrb[0].mxu0
      %4690 = vmatprep.mubr.f32.mxu0 0.0
      %4691 = vmatmul.mubr.f32.gmra.mrb[0].mxu0 %v4443
      %v4692 = vpop.f32.mrb[0].mxu0
      %v4693 = vadd.f32 0.0, %v4692
      %v4694 = vpop.f32.mrb[0].mxu0
      %4695 = vmatprep.mubr.f32.mxu0 0.0
      %4696 = vmatmul.mubr.f32.gmra.mrb[0].mxu0 %v4446
      %v4697 = vpop.f32.mrb[0].mxu0
      %v4698 = vadd.f32 0.0, %v4697
      %v4699 = vpop.f32.mrb[0].mxu0
      %4700 = vmatprep.mubr.f32.mxu0 0.0
      %4701 = vmatmul.mubr.f32.gmra.mrb[0].mxu0 %v4449
      %v4702 = vpop.f32.mrb[0].mxu0
      %v4703 = vadd.f32 0.0, %v4702
      %v4704 = vpop.f32.mrb[0].mxu0
      %4705 = vmatprep.mubr.f32.mxu0 0.0
      %4706 = vmatmul.mubr.f32.gmra.mrb[0].mxu0 %v4452
      %v4707 = vpop.f32.mrb[0].mxu0
      %v4708 = vadd.f32 0.0, %v4707
      %v4709 = vpop.f32.mrb[0].mxu0
      %4710 = vmatprep.mubr.f32.mxu0 0.0
      %4711 = vmatmul.mubr.f32.gmra.mrb[0].mxu0 %v4455
      %v4712 = vpop.f32.mrb[0].mxu0
      %v4713 = vadd.f32 0.0, %v4712
      %v4714 = vpop.f32.mrb[0].mxu0
      %4715 = vmatprep.mubr.f32.mxu0 0.0
      %4716 = vmatmul.mubr.f32.gmra.mrb[0].mxu0 %v4458
      %v4717 = vpop.f32.mrb[0].mxu0
      %v4718 = vadd.f32 0.0, %v4717
      %v4719 = vpop.f32.mrb[0].mxu0
      %4720 = vmatprep.mubr.f32.mxu0 0.0
      %4721 = vmatmul.mubr.f32.gmra.mrb[0].mxu0 %v4461
      %v4722 = vpop.f32.mrb[0].mxu0
      %v4723 = vadd.f32 0.0, %v4722
      %v4724 = vpop.f32.mrb[0].mxu0
      %4725 = vmatprep.mubr.f32.mxu0 0.0
      %4726 = vmatmul.mubr.f32.gmra.mrb[0].mxu0 %v4464
      %v4727 = vpop.f32.mrb[0].mxu0
      %v4728 = vadd.f32 0.0, %v4727
      %v4729 = vpop.f32.mrb[0].mxu0
      %4730 = vmatprep.mubr.f32.mxu0 0.0
      %4731 = vmatmul.mubr.f32.gmra.mrb[0].mxu0 %v4467
      %v4732 = vpop.f32.mrb[0].mxu0
      %v4733 = vadd.f32 0.0, %v4732
      %v4734 = vpop.f32.mrb[0].mxu0
      %4735 = vmatprep.mubr.f32.mxu0 0.0
      %4736 = vmatmul.mubr.f32.gmra.mrb[0].mxu0 %v4470
      %v4737 = vpop.f32.mrb[0].mxu0
      %v4738 = vadd.f32 0.0, %v4737
      %v4739 = vpop.f32.mrb[0].mxu0
      %4740 = vmatprep.mubr.f32.mxu0 0.0
      %4741 = vmatmul.mubr.f32.gmra.mrb[0].mxu0 %v4473
      %v4742 = vpop.f32.mrb[0].mxu0
      %v4743 = vadd.f32 0.0, %v4742
      %v4744 = vpop.f32.mrb[0].mxu0
      %4745 = vmatprep.mubr.f32.mxu0 0.0
      %4746 = vmatmul.mubr.f32.gmra.mrb[0].mxu0 %v4476
      %v4747 = vpop.f32.mrb[0].mxu0
      %v4748 = vadd.f32 0.0, %v4747
      %v4749 = vpop.f32.mrb[0].mxu0
      %4750 = vdwg.mxu0
      %v4751 = vadd.f32 %v4271, %v4548
      %v4752 = vadd.f32 %v4272, %v4553
      %v4753 = vadd.f32 %v4273, %v4558
      %v4754 = vadd.f32 %v4274, %v4563
      %v4755 = vadd.f32 %v4275, %v4568
      %v4756 = vadd.f32 %v4276, %v4573
      %v4757 = vadd.f32 %v4277, %v4578
      %v4758 = vadd.f32 %v4278, %v4583
      %v4759 = vadd.f32 %v4279, %v4588
      %v4760 = vadd.f32 %v4280, %v4593
      %v4761 = vadd.f32 %v4281, %v4598
      %v4762 = vadd.f32 %v4282, %v4603
      %v4763 = vadd.f32 %v4283, %v4608
      %v4764 = vadd.f32 %v4284, %v4613
      %v4765 = vadd.f32 %v4285, %v4618
      %v4766 = vadd.f32 %v4286, %v4623
      %v4767 = vadd.f32 %v4287, %v4628
      %v4768 = vadd.f32 %v4288, %v4633
      %v4769 = vadd.f32 %v4289, %v4638
      %v4770 = vadd.f32 %v4290, %v4643
      %v4771 = vadd.f32 %v4291, %v4648
      %v4772 = vadd.f32 %v4292, %v4653
      %v4773 = vadd.f32 %v4293, %v4658
      %v4774 = vadd.f32 %v4294, %v4663
      %v4775 = vadd.f32 %v4295, %v4668
      %v4776 = vadd.f32 %v4296, %v4673
      %v4777 = vadd.f32 %v4297, %v4678
      %v4778 = vadd.f32 %v4298, %v4683
      %v4779 = vadd.f32 %v4299, %v4688
      %v4780 = vadd.f32 %v4300, %v4693
      %v4781 = vadd.f32 %v4301, %v4698
      %v4782 = vadd.f32 %v4302, %v4703
      %v4783 = vadd.f32 %v4303, %v4708
      %v4784 = vadd.f32 %v4304, %v4713
      %v4785 = vadd.f32 %v4305, %v4718
      %v4786 = vadd.f32 %v4306, %v4723
      %v4787 = vadd.f32 %v4307, %v4728
      %v4788 = vadd.f32 %v4308, %v4733
      %v4789 = vadd.f32 %v4309, %v4738
      %v4790 = vadd.f32 %v4310, %v4743
      %v4791 = vadd.f32 %v4311, %v4748
      %v4792 = vld [vmem:[%s4] sm:$0x1]
      %v4794 = vlaneseq
      %v4795 = vshrl.u32 %v4794, 7
      %v4796 = vsub.s32 0, %v4795
      %v4797 = vrot.slane %v4792, %v4796
      %v4799 = vadd.f32 %v4751, %v4797
      %v4800 = vadd.f32 %v4752, %v4797
      %v4801 = vadd.f32 %v4753, %v4797
      %v4802 = vadd.f32 %v4754, %v4797
      %v4803 = vadd.f32 %v4755, %v4797
      %v4804 = vadd.f32 %v4756, %v4797
      %v4805 = vadd.f32 %v4757, %v4797
      %v4806 = vadd.f32 %v4758, %v4797
      %v4807 = vadd.f32 %v4759, %v4797
      %v4808 = vadd.f32 %v4760, %v4797
      %v4809 = vadd.f32 %v4761, %v4797
      %v4810 = vadd.f32 %v4762, %v4797
      %v4811 = vadd.f32 %v4763, %v4797
      %v4812 = vadd.f32 %v4764, %v4797
      %v4813 = vadd.f32 %v4765, %v4797
      %v4814 = vadd.f32 %v4766, %v4797
      %v4815 = vadd.f32 %v4767, %v4797
      %v4816 = vadd.f32 %v4768, %v4797
      %v4817 = vadd.f32 %v4769, %v4797
      %v4818 = vadd.f32 %v4770, %v4797
      %v4819 = vadd.f32 %v4771, %v4797
      %v4820 = vadd.f32 %v4772, %v4797
      %v4821 = vadd.f32 %v4773, %v4797
      %v4822 = vadd.f32 %v4774, %v4797
      %v4823 = vadd.f32 %v4775, %v4797
      %v4824 = vadd.f32 %v4776, %v4797
      %v4825 = vadd.f32 %v4777, %v4797
      %v4826 = vadd.f32 %v4778, %v4797
      %v4827 = vadd.f32 %v4779, %v4797
      %v4828 = vadd.f32 %v4780, %v4797
      %v4829 = vadd.f32 %v4781, %v4797
      %v4830 = vadd.f32 %v4782, %v4797
      %v4831 = vadd.f32 %v4783, %v4797
      %v4832 = vadd.f32 %v4784, %v4797
      %v4833 = vadd.f32 %v4785, %v4797
      %v4834 = vadd.f32 %v4786, %v4797
      %v4835 = vadd.f32 %v4787, %v4797
      %v4836 = vadd.f32 %v4788, %v4797
      %v4837 = vadd.f32 %v4789, %v4797
      %v4838 = vadd.f32 %v4790, %v4797
      %v4839 = vadd.f32 %v4791, %v4797
      %v4840 = vmax.f32 %v4799, 0.0
      %v4841 = vmax.f32 %v4800, 0.0
      %v4842 = vmax.f32 %v4801, 0.0
      %v4843 = vmax.f32 %v4802, 0.0
      %v4844 = vmax.f32 %v4803, 0.0
      %v4845 = vmax.f32 %v4804, 0.0
      %v4846 = vmax.f32 %v4805, 0.0
      %v4847 = vmax.f32 %v4806, 0.0
      %v4848 = vmax.f32 %v4807, 0.0
      %v4849 = vmax.f32 %v4808, 0.0
      %v4850 = vmax.f32 %v4809, 0.0
      %v4851 = vmax.f32 %v4810, 0.0
      %v4852 = vmax.f32 %v4811, 0.0
      %v4853 = vmax.f32 %v4812, 0.0
      %v4854 = vmax.f32 %v4813, 0.0
      %v4855 = vmax.f32 %v4814, 0.0
      %v4856 = vmax.f32 %v4815, 0.0
      %v4857 = vmax.f32 %v4816, 0.0
      %v4858 = vmax.f32 %v4817, 0.0
      %v4859 = vmax.f32 %v4818, 0.0
      %v4860 = vmax.f32 %v4819, 0.0
      %v4861 = vmax.f32 %v4820, 0.0
      %v4862 = vmax.f32 %v4821, 0.0
      %v4863 = vmax.f32 %v4822, 0.0
      %v4864 = vmax.f32 %v4823, 0.0
      %v4865 = vmax.f32 %v4824, 0.0
      %v4866 = vmax.f32 %v4825, 0.0
      %v4867 = vmax.f32 %v4826, 0.0
      %v4868 = vmax.f32 %v4827, 0.0
      %v4869 = vmax.f32 %v4828, 0.0
      %v4870 = vmax.f32 %v4829, 0.0
      %v4871 = vmax.f32 %v4830, 0.0
      %v4872 = vmax.f32 %v4831, 0.0
      %v4873 = vmax.f32 %v4832, 0.0
      %v4874 = vmax.f32 %v4833, 0.0
      %v4875 = vmax.f32 %v4834, 0.0
      %v4876 = vmax.f32 %v4835, 0.0
      %v4877 = vmax.f32 %v4836, 0.0
      %v4878 = vmax.f32 %v4837, 0.0
      %v4879 = vmax.f32 %v4838, 0.0
      %v4880 = vmax.f32 %v4839, 0.0
      %v4881 = vsel %vm512, 1, 0
      %v4882 = vsel %vm513, 1, 0
      %v4883 = vsel %vm514, 1, 0
      %v4884 = vsel %vm515, 1, 0
      %v4885 = vsel %vm516, 1, 0
      %v4886 = vsel %vm517, 1, 0
      %v4887 = vsel %vm518, 1, 0
      %v4888 = vsel %vm519, 1, 0
      %v4889 = vsel %vm520, 1, 0
      %v4890 = vsel %vm521, 1, 0
      %v4891 = vsel %vm522, 1, 0
      %v4892 = vsel %vm523, 1, 0
      %v4893 = vsel %vm524, 1, 0
      %v4894 = vsel %vm525, 1, 0
      %v4895 = vsel %vm526, 1, 0
      %v4896 = vsel %vm527, 1, 0
      %v4897 = vsel %vm528, 1, 0
      %v4898 = vsel %vm529, 1, 0
      %v4899 = vsel %vm530, 1, 0
      %v4900 = vsel %vm531, 1, 0
      %v4901 = vsel %vm532, 1, 0
      %v4902 = vsel %vm533, 1, 0
      %v4903 = vsel %vm534, 1, 0
      %v4904 = vsel %vm535, 1, 0
      %v4905 = vsel %vm536, 1, 0
      %v4906 = vsel %vm537, 1, 0
      %v4907 = vsel %vm538, 1, 0
      %v4908 = vsel %vm539, 1, 0
      %v4909 = vsel %vm540, 1, 0
      %v4910 = vsel %vm541, 1, 0
      %v4911 = vsel %vm542, 1, 0
      %v4912 = vsel %vm543, 1, 0
      %v4913 = vsel %vm544, 1, 0
      %v4914 = vsel %vm545, 1, 0
      %v4915 = vsel %vm546, 1, 0
      %v4916 = vsel %vm547, 1, 0
      %v4917 = vsel %vm548, 1, 0
      %v4918 = vsel %vm549, 1, 0
      %v4919 = vsel %vm550, 1, 0
      %v4920 = vsel %vm551, 1, 0
      %v4921 = vsel %vm552, 1, 0
      %4922 = vset.pattern.permute.xlu0 0
      %4923 = vperm.xlu0 %4922, %v4881
      %v4924 = vpop.permute.xlu0 %4923
      %4925 = vset.pattern.permute.xlu0 0
      %4926 = vperm.xlu0 %4925, %v4882
      %v4927 = vpop.permute.xlu0 %4926
      %4928 = vset.pattern.permute.xlu0 0
      %4929 = vperm.xlu0 %4928, %v4883
      %v4930 = vpop.permute.xlu0 %4929
      %4931 = vset.pattern.permute.xlu0 0
      %4932 = vperm.xlu0 %4931, %v4884
      %v4933 = vpop.permute.xlu0 %4932
      %4934 = vset.pattern.permute.xlu0 0
      %4935 = vperm.xlu0 %4934, %v4885
      %v4936 = vpop.permute.xlu0 %4935
      %4937 = vset.pattern.permute.xlu0 0
      %4938 = vperm.xlu0 %4937, %v4886
      %v4939 = vpop.permute.xlu0 %4938
      %4940 = vset.pattern.permute.xlu0 0
      %4941 = vperm.xlu0 %4940, %v4887
      %v4942 = vpop.permute.xlu0 %4941
      %4943 = vset.pattern.permute.xlu0 0
      %4944 = vperm.xlu0 %4943, %v4888
      %v4945 = vpop.permute.xlu0 %4944
      %4946 = vset.pattern.permute.xlu0 0
      %4947 = vperm.xlu0 %4946, %v4889
      %v4948 = vpop.permute.xlu0 %4947
      %4949 = vset.pattern.permute.xlu0 0
      %4950 = vperm.xlu0 %4949, %v4890
      %v4951 = vpop.permute.xlu0 %4950
      %4952 = vset.pattern.permute.xlu0 0
      %4953 = vperm.xlu0 %4952, %v4891
      %v4954 = vpop.permute.xlu0 %4953
      %4955 = vset.pattern.permute.xlu0 0
      %4956 = vperm.xlu0 %4955, %v4892
      %v4957 = vpop.permute.xlu0 %4956
      %4958 = vset.pattern.permute.xlu0 0
      %4959 = vperm.xlu0 %4958, %v4893
      %v4960 = vpop.permute.xlu0 %4959
      %4961 = vset.pattern.permute.xlu0 0
      %4962 = vperm.xlu0 %4961, %v4894
      %v4963 = vpop.permute.xlu0 %4962
      %4964 = vset.pattern.permute.xlu0 0
      %4965 = vperm.xlu0 %4964, %v4895
      %v4966 = vpop.permute.xlu0 %4965
      %4967 = vset.pattern.permute.xlu0 0
      %4968 = vperm.xlu0 %4967, %v4896
      %v4969 = vpop.permute.xlu0 %4968
      %4970 = vset.pattern.permute.xlu0 0
      %4971 = vperm.xlu0 %4970, %v4897
      %v4972 = vpop.permute.xlu0 %4971
      %4973 = vset.pattern.permute.xlu0 0
      %4974 = vperm.xlu0 %4973, %v4898
      %v4975 = vpop.permute.xlu0 %4974
      %4976 = vset.pattern.permute.xlu0 0
      %4977 = vperm.xlu0 %4976, %v4899
      %v4978 = vpop.permute.xlu0 %4977
      %4979 = vset.pattern.permute.xlu0 0
      %4980 = vperm.xlu0 %4979, %v4900
      %v4981 = vpop.permute.xlu0 %4980
      %4982 = vset.pattern.permute.xlu0 0
      %4983 = vperm.xlu0 %4982, %v4901
      %v4984 = vpop.permute.xlu0 %4983
      %4985 = vset.pattern.permute.xlu0 0
      %4986 = vperm.xlu0 %4985, %v4902
      %v4987 = vpop.permute.xlu0 %4986
      %4988 = vset.pattern.permute.xlu0 0
      %4989 = vperm.xlu0 %4988, %v4903
      %v4990 = vpop.permute.xlu0 %4989
      %4991 = vset.pattern.permute.xlu0 0
      %4992 = vperm.xlu0 %4991, %v4904
      %v4993 = vpop.permute.xlu0 %4992
      %4994 = vset.pattern.permute.xlu0 0
      %4995 = vperm.xlu0 %4994, %v4905
      %v4996 = vpop.permute.xlu0 %4995
      %4997 = vset.pattern.permute.xlu0 0
      %4998 = vperm.xlu0 %4997, %v4906
      %v4999 = vpop.permute.xlu0 %4998
      %5000 = vset.pattern.permute.xlu0 0
      %5001 = vperm.xlu0 %5000, %v4907
      %v5002 = vpop.permute.xlu0 %5001
      %5003 = vset.pattern.permute.xlu0 0
      %5004 = vperm.xlu0 %5003, %v4908
      %v5005 = vpop.permute.xlu0 %5004
      %5006 = vset.pattern.permute.xlu0 0
      %5007 = vperm.xlu0 %5006, %v4909
      %v5008 = vpop.permute.xlu0 %5007
      %5009 = vset.pattern.permute.xlu0 0
      %5010 = vperm.xlu0 %5009, %v4910
      %v5011 = vpop.permute.xlu0 %5010
      %5012 = vset.pattern.permute.xlu0 0
      %5013 = vperm.xlu0 %5012, %v4911
      %v5014 = vpop.permute.xlu0 %5013
      %5015 = vset.pattern.permute.xlu0 0
      %5016 = vperm.xlu0 %5015, %v4912
      %v5017 = vpop.permute.xlu0 %5016
      %5018 = vset.pattern.permute.xlu0 0
      %5019 = vperm.xlu0 %5018, %v4913
      %v5020 = vpop.permute.xlu0 %5019
      %5021 = vset.pattern.permute.xlu0 0
      %5022 = vperm.xlu0 %5021, %v4914
      %v5023 = vpop.permute.xlu0 %5022
      %5024 = vset.pattern.permute.xlu0 0
      %5025 = vperm.xlu0 %5024, %v4915
      %v5026 = vpop.permute.xlu0 %5025
      %5027 = vset.pattern.permute.xlu0 0
      %5028 = vperm.xlu0 %5027, %v4916
      %v5029 = vpop.permute.xlu0 %5028
      %5030 = vset.pattern.permute.xlu0 0
      %5031 = vperm.xlu0 %5030, %v4917
      %v5032 = vpop.permute.xlu0 %5031
      %5033 = vset.pattern.permute.xlu0 0
      %5034 = vperm.xlu0 %5033, %v4918
      %v5035 = vpop.permute.xlu0 %5034
      %5036 = vset.pattern.permute.xlu0 0
      %5037 = vperm.xlu0 %5036, %v4919
      %v5038 = vpop.permute.xlu0 %5037
      %5039 = vset.pattern.permute.xlu0 0
      %5040 = vperm.xlu0 %5039, %v4920
      %v5041 = vpop.permute.xlu0 %5040
      %5042 = vset.pattern.permute.xlu0 0
      %5043 = vperm.xlu0 %5042, %v4921
      %v5044 = vpop.permute.xlu0 %5043
      %vm5045 = vcmp.eq.s32.totalorder %v4924, 1
      %vm5046 = vcmp.eq.s32.totalorder %v4927, 1
      %vm5047 = vcmp.eq.s32.totalorder %v4930, 1
      %vm5048 = vcmp.eq.s32.totalorder %v4933, 1
      %vm5049 = vcmp.eq.s32.totalorder %v4936, 1
      %vm5050 = vcmp.eq.s32.totalorder %v4939, 1
      %vm5051 = vcmp.eq.s32.totalorder %v4942, 1
      %vm5052 = vcmp.eq.s32.totalorder %v4945, 1
      %vm5053 = vcmp.eq.s32.totalorder %v4948, 1
      %vm5054 = vcmp.eq.s32.totalorder %v4951, 1
      %vm5055 = vcmp.eq.s32.totalorder %v4954, 1
      %vm5056 = vcmp.eq.s32.totalorder %v4957, 1
      %vm5057 = vcmp.eq.s32.totalorder %v4960, 1
      %vm5058 = vcmp.eq.s32.totalorder %v4963, 1
      %vm5059 = vcmp.eq.s32.totalorder %v4966, 1
      %vm5060 = vcmp.eq.s32.totalorder %v4969, 1
      %vm5061 = vcmp.eq.s32.totalorder %v4972, 1
      %vm5062 = vcmp.eq.s32.totalorder %v4975, 1
      %vm5063 = vcmp.eq.s32.totalorder %v4978, 1
      %vm5064 = vcmp.eq.s32.totalorder %v4981, 1
      %vm5065 = vcmp.eq.s32.totalorder %v4984, 1
      %vm5066 = vcmp.eq.s32.totalorder %v4987, 1
      %vm5067 = vcmp.eq.s32.totalorder %v4990, 1
      %vm5068 = vcmp.eq.s32.totalorder %v4993, 1
      %vm5069 = vcmp.eq.s32.totalorder %v4996, 1
      %vm5070 = vcmp.eq.s32.totalorder %v4999, 1
      %vm5071 = vcmp.eq.s32.totalorder %v5002, 1
      %vm5072 = vcmp.eq.s32.totalorder %v5005, 1
      %vm5073 = vcmp.eq.s32.totalorder %v5008, 1
      %vm5074 = vcmp.eq.s32.totalorder %v5011, 1
      %vm5075 = vcmp.eq.s32.totalorder %v5014, 1
      %vm5076 = vcmp.eq.s32.totalorder %v5017, 1
      %vm5077 = vcmp.eq.s32.totalorder %v5020, 1
      %vm5078 = vcmp.eq.s32.totalorder %v5023, 1
      %vm5079 = vcmp.eq.s32.totalorder %v5026, 1
      %vm5080 = vcmp.eq.s32.totalorder %v5029, 1
      %vm5081 = vcmp.eq.s32.totalorder %v5032, 1
      %vm5082 = vcmp.eq.s32.totalorder %v5035, 1
      %vm5083 = vcmp.eq.s32.totalorder %v5038, 1
      %vm5084 = vcmp.eq.s32.totalorder %v5041, 1
      %vm5085 = vcmp.eq.s32.totalorder %v5044, 1
      %v5086 = vsel %vm5045, %v4840, 0.0
      %v5087 = vsel %vm5046, %v4841, 0.0
      %v5088 = vsel %vm5047, %v4842, 0.0
      %v5089 = vsel %vm5048, %v4843, 0.0
      %v5090 = vsel %vm5049, %v4844, 0.0
      %v5091 = vsel %vm5050, %v4845, 0.0
      %v5092 = vsel %vm5051, %v4846, 0.0
      %v5093 = vsel %vm5052, %v4847, 0.0
      %v5094 = vsel %vm5053, %v4848, 0.0
      %v5095 = vsel %vm5054, %v4849, 0.0
      %v5096 = vsel %vm5055, %v4850, 0.0
      %v5097 = vsel %vm5056, %v4851, 0.0
      %v5098 = vsel %vm5057, %v4852, 0.0
      %v5099 = vsel %vm5058, %v4853, 0.0
      %v5100 = vsel %vm5059, %v4854, 0.0
      %v5101 = vsel %vm5060, %v4855, 0.0
      %v5102 = vsel %vm5061, %v4856, 0.0
      %v5103 = vsel %vm5062, %v4857, 0.0
      %v5104 = vsel %vm5063, %v4858, 0.0
      %v5105 = vsel %vm5064, %v4859, 0.0
      %v5106 = vsel %vm5065, %v4860, 0.0
      %v5107 = vsel %vm5066, %v4861, 0.0
      %v5108 = vsel %vm5067, %v4862, 0.0
      %v5109 = vsel %vm5068, %v4863, 0.0
      %v5110 = vsel %vm5069, %v4864, 0.0
      %v5111 = vsel %vm5070, %v4865, 0.0
      %v5112 = vsel %vm5071, %v4866, 0.0
      %v5113 = vsel %vm5072, %v4867, 0.0
      %v5114 = vsel %vm5073, %v4868, 0.0
      %v5115 = vsel %vm5074, %v4869, 0.0
      %v5116 = vsel %vm5075, %v4870, 0.0
      %v5117 = vsel %vm5076, %v4871, 0.0
      %v5118 = vsel %vm5077, %v4872, 0.0
      %v5119 = vsel %vm5078, %v4873, 0.0
      %v5120 = vsel %vm5079, %v4874, 0.0
      %v5121 = vsel %vm5080, %v4875, 0.0
      %v5122 = vsel %vm5081, %v4876, 0.0
      %v5123 = vsel %vm5082, %v4877, 0.0
      %v5124 = vsel %vm5083, %v4878, 0.0
      %v5125 = vsel %vm5084, %v4879, 0.0
      %v5126 = vsel %vm5085, %v4880, 0.0
      %vm5127 = vcmask 130048
      %5128 = vst.msk [vmem:[#allocation2] sm:$0xff] %vm5127, 0.0
      %5129 = vst.msk [vmem:[#allocation2 + $0x8] sm:$0xff] %vm5127, 0.0
      %5130 = vst.msk [vmem:[#allocation2 + $0x10] sm:$0xff] %vm5127, 0.0
      %5131 = vst.msk [vmem:[#allocation2 + $0x15c] sm:$0xff] %vm5127, 0.0
      %5132 = vst.msk [vmem:[#allocation2 + $0x164] sm:$0xff] %vm5127, 0.0
      %5133 = vst.msk [vmem:[#allocation2 + $0x16c] sm:$0xff] %vm5127, 0.0
      %5134 = vst.msk [vmem:[#allocation2 + $0x18] sm:$0xff] %vm5127, %v5086
      %5135 = vst.msk [vmem:[#allocation2 + $0x20] sm:$0xff] %vm5127, %v5087
      %5136 = vst.msk [vmem:[#allocation2 + $0x28] sm:$0xff] %vm5127, %v5088
      %5137 = vst.msk [vmem:[#allocation2 + $0x30] sm:$0xff] %vm5127, %v5089
      %5138 = vst.msk [vmem:[#allocation2 + $0x38] sm:$0xff] %vm5127, %v5090
      %5139 = vst.msk [vmem:[#allocation2 + $0x40] sm:$0xff] %vm5127, %v5091
      %5140 = vst.msk [vmem:[#allocation2 + $0x48] sm:$0xff] %vm5127, %v5092
      %5141 = vst.msk [vmem:[#allocation2 + $0x50] sm:$0xff] %vm5127, %v5093
      %5142 = vst.msk [vmem:[#allocation2 + $0x58] sm:$0xff] %vm5127, %v5094
      %5143 = vst.msk [vmem:[#allocation2 + $0x60] sm:$0xff] %vm5127, %v5095
      %5144 = vst.msk [vmem:[#allocation2 + $0x68] sm:$0xff] %vm5127, %v5096
      %5145 = vst.msk [vmem:[#allocation2 + $0x70] sm:$0xff] %vm5127, %v5097
      %5146 = vst.msk [vmem:[#allocation2 + $0x78] sm:$0xff] %vm5127, %v5098
      %5147 = vst.msk [vmem:[#allocation2 + $0x80] sm:$0xff] %vm5127, %v5099
      %5148 = vst.msk [vmem:[#allocation2 + $0x88] sm:$0xff] %vm5127, %v5100
      %5149 = vst.msk [vmem:[#allocation2 + $0x90] sm:$0xff] %vm5127, %v5101
      %5150 = vst.msk [vmem:[#allocation2 + $0x98] sm:$0xff] %vm5127, %v5102
      %5151 = vst.msk [vmem:[#allocation2 + $0xa0] sm:$0xff] %vm5127, %v5103
      %5152 = vst.msk [vmem:[#allocation2 + $0xa8] sm:$0xff] %vm5127, %v5104
      %5153 = vst.msk [vmem:[#allocation2 + $0xb0] sm:$0xff] %vm5127, %v5105
      %5154 = vst.msk [vmem:[#allocation2 + $0xb8] sm:$0xff] %vm5127, %v5106
      %5155 = vst.msk [vmem:[#allocation2 + $0xc0] sm:$0xff] %vm5127, %v5107
      %5156 = vst.msk [vmem:[#allocation2 + $0xc8] sm:$0xff] %vm5127, %v5108
      %5157 = vst.msk [vmem:[#allocation2 + $0xd0] sm:$0xff] %vm5127, %v5109
      %5158 = vst.msk [vmem:[#allocation2 + $0xd8] sm:$0xff] %vm5127, %v5110
      %5159 = vst.msk [vmem:[#allocation2 + $0xe0] sm:$0xff] %vm5127, %v5111
      %5160 = vst.msk [vmem:[#allocation2 + $0xe8] sm:$0xff] %vm5127, %v5112
      %5161 = vst.msk [vmem:[#allocation2 + $0xf0] sm:$0xff] %vm5127, %v5113
      %5162 = vst.msk [vmem:[#allocation2 + $0xf8] sm:$0xff] %vm5127, %v5114
      %5163 = vst.msk [vmem:[#allocation2 + $0x100] sm:$0xff] %vm5127, %v5115
      %5164 = vst.msk [vmem:[#allocation2 + $0x108] sm:$0xff] %vm5127, %v5116
      %5165 = vst.msk [vmem:[#allocation2 + $0x110] sm:$0xff] %vm5127, %v5117
      %5166 = vst.msk [vmem:[#allocation2 + $0x118] sm:$0xff] %vm5127, %v5118
      %5167 = vst.msk [vmem:[#allocation2 + $0x120] sm:$0xff] %vm5127, %v5119
      %5168 = vst.msk [vmem:[#allocation2 + $0x128] sm:$0xff] %vm5127, %v5120
      %5169 = vst.msk [vmem:[#allocation2 + $0x130] sm:$0xff] %vm5127, %v5121
      %5170 = vst.msk [vmem:[#allocation2 + $0x138] sm:$0xff] %vm5127, %v5122
      %5171 = vst.msk [vmem:[#allocation2 + $0x140] sm:$0xff] %vm5127, %v5123
      %5172 = vst.msk [vmem:[#allocation2 + $0x148] sm:$0xff] %vm5127, %v5124
      %5173 = vst.msk [vmem:[#allocation2 + $0x150] sm:$0xff] %vm5127, %v5125
      %vm5174 = vcmask 125952
      %5175 = vst.msk [vmem:[#allocation2 + $0x158] sm:$0xf] %vm5174, %v5126
      %v5176 = vld [vmem:[#allocation2 + $0x5] sm:$0xff]
      %v5177 = vld [vmem:[#allocation2 + $0xd] sm:$0xff]
      %v5178 = vld [vmem:[#allocation2 + $0x15] sm:$0xff]
      %v5179 = vld [vmem:[#allocation2 + $0x1d] sm:$0xff]
      %v5180 = vld [vmem:[#allocation2 + $0x25] sm:$0xff]
      %v5181 = vld [vmem:[#allocation2 + $0x2d] sm:$0xff]
      %v5182 = vld [vmem:[#allocation2 + $0x35] sm:$0xff]
      %v5183 = vld [vmem:[#allocation2 + $0x3d] sm:$0xff]
      %v5184 = vld [vmem:[#allocation2 + $0x45] sm:$0xff]
      %v5185 = vld [vmem:[#allocation2 + $0x4d] sm:$0xff]
      %v5186 = vld [vmem:[#allocation2 + $0x55] sm:$0xff]
      %v5187 = vld [vmem:[#allocation2 + $0x5d] sm:$0xff]
      %v5188 = vld [vmem:[#allocation2 + $0x65] sm:$0xff]
      %v5189 = vld [vmem:[#allocation2 + $0x6d] sm:$0xff]
      %v5190 = vld [vmem:[#allocation2 + $0x75] sm:$0xff]
      %v5191 = vld [vmem:[#allocation2 + $0x7d] sm:$0xff]
      %v5192 = vld [vmem:[#allocation2 + $0x85] sm:$0xff]
      %v5193 = vld [vmem:[#allocation2 + $0x8d] sm:$0xff]
      %v5194 = vld [vmem:[#allocation2 + $0x95] sm:$0xff]
      %v5195 = vld [vmem:[#allocation2 + $0x9d] sm:$0xff]
      %v5196 = vld [vmem:[#allocation2 + $0xa5] sm:$0xff]
      %v5197 = vld [vmem:[#allocation2 + $0xad] sm:$0xff]
      %v5198 = vld [vmem:[#allocation2 + $0xb5] sm:$0xff]
      %v5199 = vld [vmem:[#allocation2 + $0xbd] sm:$0xff]
      %v5200 = vld [vmem:[#allocation2 + $0xc5] sm:$0xff]
      %v5201 = vld [vmem:[#allocation2 + $0xcd] sm:$0xff]
      %v5202 = vld [vmem:[#allocation2 + $0xd5] sm:$0xff]
      %v5203 = vld [vmem:[#allocation2 + $0xdd] sm:$0xff]
      %v5204 = vld [vmem:[#allocation2 + $0xe5] sm:$0xff]
      %v5205 = vld [vmem:[#allocation2 + $0xed] sm:$0xff]
      %v5206 = vld [vmem:[#allocation2 + $0xf5] sm:$0xff]
      %v5207 = vld [vmem:[#allocation2 + $0xfd] sm:$0xff]
      %v5208 = vld [vmem:[#allocation2 + $0x105] sm:$0xff]
      %v5209 = vld [vmem:[#allocation2 + $0x10d] sm:$0xff]
      %v5210 = vld [vmem:[#allocation2 + $0x115] sm:$0xff]
      %v5211 = vld [vmem:[#allocation2 + $0x11d] sm:$0xff]
      %v5212 = vld [vmem:[#allocation2 + $0x125] sm:$0xff]
      %v5213 = vld [vmem:[#allocation2 + $0x12d] sm:$0xff]
      %v5214 = vld [vmem:[#allocation2 + $0x135] sm:$0xff]
      %v5215 = vld [vmem:[#allocation2 + $0x13d] sm:$0xff]
      %v5216 = vld [vmem:[#allocation2 + $0x145] sm:$0xf]
      %v5217 = vld [vmem:[%s5] sm:$0xff]
      %v5218 = vld [vmem:[%s5 + $0x8] sm:$0xff]
      %v5219 = vld [vmem:[#allocation2 + $0x6] sm:$0xff]
      %v5220 = vld [vmem:[#allocation2 + $0xe] sm:$0xff]
      %v5221 = vld [vmem:[#allocation2 + $0x16] sm:$0xff]
      %v5222 = vld [vmem:[#allocation2 + $0x1e] sm:$0xff]
      %v5223 = vld [vmem:[#allocation2 + $0x26] sm:$0xff]
      %v5224 = vld [vmem:[#allocation2 + $0x2e] sm:$0xff]
      %v5225 = vld [vmem:[#allocation2 + $0x36] sm:$0xff]
      %v5226 = vld [vmem:[#allocation2 + $0x3e] sm:$0xff]
      %v5227 = vld [vmem:[#allocation2 + $0x46] sm:$0xff]
      %v5228 = vld [vmem:[#allocation2 + $0x4e] sm:$0xff]
      %v5229 = vld [vmem:[#allocation2 + $0x56] sm:$0xff]
      %v5230 = vld [vmem:[#allocation2 + $0x5e] sm:$0xff]
      %v5231 = vld [vmem:[#allocation2 + $0x66] sm:$0xff]
      %v5232 = vld [vmem:[#allocation2 + $0x6e] sm:$0xff]
      %v5233 = vld [vmem:[#allocation2 + $0x76] sm:$0xff]
      %v5234 = vld [vmem:[#allocation2 + $0x7e] sm:$0xff]
      %v5235 = vld [vmem:[#allocation2 + $0x86] sm:$0xff]
      %v5236 = vld [vmem:[#allocation2 + $0x8e] sm:$0xff]
      %v5237 = vld [vmem:[#allocation2 + $0x96] sm:$0xff]
      %v5238 = vld [vmem:[#allocation2 + $0x9e] sm:$0xff]
      %v5239 = vld [vmem:[#allocation2 + $0xa6] sm:$0xff]
      %v5240 = vld [vmem:[#allocation2 + $0xae] sm:$0xff]
      %v5241 = vld [vmem:[#allocation2 + $0xb6] sm:$0xff]
      %v5242 = vld [vmem:[#allocation2 + $0xbe] sm:$0xff]
      %v5243 = vld [vmem:[#allocation2 + $0xc6] sm:$0xff]
      %v5244 = vld [vmem:[#allocation2 + $0xce] sm:$0xff]
      %v5245 = vld [vmem:[#allocation2 + $0xd6] sm:$0xff]
      %v5246 = vld [vmem:[#allocation2 + $0xde] sm:$0xff]
      %v5247 = vld [vmem:[#allocation2 + $0xe6] sm:$0xff]
      %v5248 = vld [vmem:[#allocation2 + $0xee] sm:$0xff]
      %v5249 = vld [vmem:[#allocation2 + $0xf6] sm:$0xff]
      %v5250 = vld [vmem:[#allocation2 + $0xfe] sm:$0xff]
      %v5251 = vld [vmem:[#allocation2 + $0x106] sm:$0xff]
      %v5252 = vld [vmem:[#allocation2 + $0x10e] sm:$0xff]
      %v5253 = vld [vmem:[#allocation2 + $0x116] sm:$0xff]
      %v5254 = vld [vmem:[#allocation2 + $0x11e] sm:$0xff]
      %v5255 = vld [vmem:[#allocation2 + $0x126] sm:$0xff]
      %v5256 = vld [vmem:[#allocation2 + $0x12e] sm:$0xff]
      %v5257 = vld [vmem:[#allocation2 + $0x136] sm:$0xff]
      %v5258 = vld [vmem:[#allocation2 + $0x13e] sm:$0xff]
      %v5259 = vld [vmem:[#allocation2 + $0x146] sm:$0xf]
      %s5260 = scalar_lea.vmem %s5, 16
      %v5261 = vld [vmem:[%s5260] sm:$0xff]
      %v5262 = vld [vmem:[%s5260 + $0x8] sm:$0xff]
      %v5264 = vsel %vm5127, %v5219, 0
      %v5267 = vsel %vm5127, %v5220, 0
      %v5270 = vsel %vm5127, %v5221, 0
      %v5273 = vsel %vm5127, %v5222, 0
      %v5276 = vsel %vm5127, %v5223, 0
      %v5279 = vsel %vm5127, %v5224, 0
      %v5282 = vsel %vm5127, %v5225, 0
      %v5285 = vsel %vm5127, %v5226, 0
      %v5288 = vsel %vm5127, %v5227, 0
      %v5291 = vsel %vm5127, %v5228, 0
      %v5294 = vsel %vm5127, %v5229, 0
      %v5297 = vsel %vm5127, %v5230, 0
      %v5300 = vsel %vm5127, %v5231, 0
      %v5303 = vsel %vm5127, %v5232, 0
      %v5306 = vsel %vm5127, %v5233, 0
      %v5309 = vsel %vm5127, %v5234, 0
      %v5312 = vsel %vm5127, %v5235, 0
      %v5315 = vsel %vm5127, %v5236, 0
      %v5318 = vsel %vm5127, %v5237, 0
      %v5321 = vsel %vm5127, %v5238, 0
      %v5324 = vsel %vm5127, %v5239, 0
      %v5327 = vsel %vm5127, %v5240, 0
      %v5330 = vsel %vm5127, %v5241, 0
      %v5333 = vsel %vm5127, %v5242, 0
      %v5336 = vsel %vm5127, %v5243, 0
      %v5339 = vsel %vm5127, %v5244, 0
      %v5342 = vsel %vm5127, %v5245, 0
      %v5345 = vsel %vm5127, %v5246, 0
      %v5348 = vsel %vm5127, %v5247, 0
      %v5351 = vsel %vm5127, %v5248, 0
      %v5354 = vsel %vm5127, %v5249, 0
      %v5357 = vsel %vm5127, %v5250, 0
      %v5360 = vsel %vm5127, %v5251, 0
      %v5363 = vsel %vm5127, %v5252, 0
      %v5366 = vsel %vm5127, %v5253, 0
      %v5369 = vsel %vm5127, %v5254, 0
      %v5372 = vsel %vm5127, %v5255, 0
      %v5375 = vsel %vm5127, %v5256, 0
      %v5378 = vsel %vm5127, %v5257, 0
      %v5381 = vsel %vm5127, %v5258, 0
      %v5384 = vsel %vm5127, %v5259, 0
      %5386 = vmatprep.subr.mxu0 0.0
      %5387 = vmatpush1.msra.mxu0 %v5261
      %5388 = vmatprep.subr.mxu0 0.0
      %5389 = vmatpush1.msra.mxu0 %v5262
      %5390 = vmatprep.subr.mxu0 0.0
      %5391 = vmatpush1.msra.mxu0 0.0
      %5392 = vmatprep.subr.mxu0 0.0
      %5393 = vmatpush1.msra.mxu0 0.0
      %5394 = vmatprep.subr.mxu0 0.0
      %5395 = vmatpush1.msra.mxu0 0.0
      %5396 = vmatprep.subr.mxu0 0.0
      %5397 = vmatpush1.msra.mxu0 0.0
      %5398 = vmatprep.subr.mxu0 0.0
      %5399 = vmatpush1.msra.mxu0 0.0
      %5400 = vmatprep.subr.mxu0 0.0
      %5401 = vmatpush1.msra.mxu0 0.0
      %5402 = vmatprep.subr.mxu0 0.0
      %5403 = vmatpush1.msra.mxu0 0.0
      %5404 = vmatprep.subr.mxu0 0.0
      %5405 = vmatpush1.msra.mxu0 0.0
      %5406 = vmatprep.subr.mxu0 0.0
      %5407 = vmatpush1.msra.mxu0 0.0
      %5408 = vmatprep.subr.mxu0 0.0
      %5409 = vmatpush1.msra.mxu0 0.0
      %5410 = vmatprep.subr.mxu0 0.0
      %5411 = vmatpush1.msra.mxu0 0.0
      %5412 = vmatprep.subr.mxu0 0.0
      %5413 = vmatpush1.msra.mxu0 0.0
      %5414 = vmatprep.subr.mxu0 0.0
      %5415 = vmatpush1.msra.mxu0 0.0
      %5416 = vmatprep.subr.mxu0 0.0
      %5417 = vmatpush1.msra.mxu0 0.0
      %5418 = vmatprep.subr.mxu0 0.0
      %5419 = vmatpush1.msra.mxu0 0.0
      %5420 = vmatprep.subr.mxu0 0.0
      %5421 = vmatpush1.msra.mxu0 0.0
      %5422 = vmatprep.subr.mxu0 0.0
      %5423 = vmatpush1.msra.mxu0 0.0
      %5424 = vmatprep.subr.mxu0 0.0
      %5425 = vmatpush1.msra.mxu0 0.0
      %5426 = vmatprep.subr.mxu0 0.0
      %5427 = vmatpush1.msra.mxu0 0.0
      %5428 = vmatprep.subr.mxu0 0.0
      %5429 = vmatpush1.msra.mxu0 0.0
      %5430 = vmatprep.subr.mxu0 0.0
      %5431 = vmatpush1.msra.mxu0 0.0
      %5432 = vmatprep.subr.mxu0 0.0
      %5433 = vmatpush1.msra.mxu0 0.0
      %5434 = vmatprep.subr.mxu0 0.0
      %5435 = vmatpush1.msra.mxu0 0.0
      %5436 = vmatprep.subr.mxu0 0.0
      %5437 = vmatpush1.msra.mxu0 0.0
      %5438 = vmatprep.subr.mxu0 0.0
      %5439 = vmatpush1.msra.mxu0 0.0
      %5440 = vmatprep.subr.mxu0 0.0
      %5441 = vmatpush1.msra.mxu0 0.0
      %5442 = vmatprep.subr.mxu0 0.0
      %5443 = vmatpush1.msra.mxu0 0.0
      %5444 = vmatprep.subr.mxu0 0.0
      %5445 = vmatpush1.msra.mxu0 0.0
      %5446 = vmatprep.subr.mxu0 0.0
      %5447 = vmatpush1.msra.mxu0 0.0
      %5448 = vmatprep.subr.mxu0 0.0
      %5449 = vmatpush1.msra.mxu0 0.0
      %5450 = vmatprep.mubr.f32.mxu0 0.0
      %5451 = vmatmul.mubr.f32.gmra.mrb[0].mxu0 %v5264
      %v5452 = vpop.f32.mrb[0].mxu0
      %v5453 = vadd.f32 0.0, %v5452
      %v5454 = vpop.f32.mrb[0].mxu0
      %5455 = vmatprep.mubr.f32.mxu0 0.0
      %5456 = vmatmul.mubr.f32.gmra.mrb[0].mxu0 %v5267
      %v5457 = vpop.f32.mrb[0].mxu0
      %v5458 = vadd.f32 0.0, %v5457
      %v5459 = vpop.f32.mrb[0].mxu0
      %5460 = vmatprep.mubr.f32.mxu0 0.0
      %5461 = vmatmul.mubr.f32.gmra.mrb[0].mxu0 %v5270
      %v5462 = vpop.f32.mrb[0].mxu0
      %v5463 = vadd.f32 0.0, %v5462
      %v5464 = vpop.f32.mrb[0].mxu0
      %5465 = vmatprep.mubr.f32.mxu0 0.0
      %5466 = vmatmul.mubr.f32.gmra.mrb[0].mxu0 %v5273
      %v5467 = vpop.f32.mrb[0].mxu0
      %v5468 = vadd.f32 0.0, %v5467
      %v5469 = vpop.f32.mrb[0].mxu0
      %5470 = vmatprep.mubr.f32.mxu0 0.0
      %5471 = vmatmul.mubr.f32.gmra.mrb[0].mxu0 %v5276
      %v5472 = vpop.f32.mrb[0].mxu0
      %v5473 = vadd.f32 0.0, %v5472
      %v5474 = vpop.f32.mrb[0].mxu0
      %5475 = vmatprep.mubr.f32.mxu0 0.0
      %5476 = vmatmul.mubr.f32.gmra.mrb[0].mxu0 %v5279
      %v5477 = vpop.f32.mrb[0].mxu0
      %v5478 = vadd.f32 0.0, %v5477
      %v5479 = vpop.f32.mrb[0].mxu0
      %5480 = vmatprep.mubr.f32.mxu0 0.0
      %5481 = vmatmul.mubr.f32.gmra.mrb[0].mxu0 %v5282
      %v5482 = vpop.f32.mrb[0].mxu0
      %v5483 = vadd.f32 0.0, %v5482
      %v5484 = vpop.f32.mrb[0].mxu0
      %5485 = vmatprep.mubr.f32.mxu0 0.0
      %5486 = vmatmul.mubr.f32.gmra.mrb[0].mxu0 %v5285
      %v5487 = vpop.f32.mrb[0].mxu0
      %v5488 = vadd.f32 0.0, %v5487
      %v5489 = vpop.f32.mrb[0].mxu0
      %5490 = vmatprep.mubr.f32.mxu0 0.0
      %5491 = vmatmul.mubr.f32.gmra.mrb[0].mxu0 %v5288
      %v5492 = vpop.f32.mrb[0].mxu0
      %v5493 = vadd.f32 0.0, %v5492
      %v5494 = vpop.f32.mrb[0].mxu0
      %5495 = vmatprep.mubr.f32.mxu0 0.0
      %5496 = vmatmul.mubr.f32.gmra.mrb[0].mxu0 %v5291
      %v5497 = vpop.f32.mrb[0].mxu0
      %v5498 = vadd.f32 0.0, %v5497
      %v5499 = vpop.f32.mrb[0].mxu0
      %5500 = vmatprep.mubr.f32.mxu0 0.0
      %5501 = vmatmul.mubr.f32.gmra.mrb[0].mxu0 %v5294
      %v5502 = vpop.f32.mrb[0].mxu0
      %v5503 = vadd.f32 0.0, %v5502
      %v5504 = vpop.f32.mrb[0].mxu0
      %5505 = vmatprep.mubr.f32.mxu0 0.0
      %5506 = vmatmul.mubr.f32.gmra.mrb[0].mxu0 %v5297
      %v5507 = vpop.f32.mrb[0].mxu0
      %v5508 = vadd.f32 0.0, %v5507
      %v5509 = vpop.f32.mrb[0].mxu0
      %5510 = vmatprep.mubr.f32.mxu0 0.0
      %5511 = vmatmul.mubr.f32.gmra.mrb[0].mxu0 %v5300
      %v5512 = vpop.f32.mrb[0].mxu0
      %v5513 = vadd.f32 0.0, %v5512
      %v5514 = vpop.f32.mrb[0].mxu0
      %5515 = vmatprep.mubr.f32.mxu0 0.0
      %5516 = vmatmul.mubr.f32.gmra.mrb[0].mxu0 %v5303
      %v5517 = vpop.f32.mrb[0].mxu0
      %v5518 = vadd.f32 0.0, %v5517
      %v5519 = vpop.f32.mrb[0].mxu0
      %5520 = vmatprep.mubr.f32.mxu0 0.0
      %5521 = vmatmul.mubr.f32.gmra.mrb[0].mxu0 %v5306
      %v5522 = vpop.f32.mrb[0].mxu0
      %v5523 = vadd.f32 0.0, %v5522
      %v5524 = vpop.f32.mrb[0].mxu0
      %5525 = vmatprep.mubr.f32.mxu0 0.0
      %5526 = vmatmul.mubr.f32.gmra.mrb[0].mxu0 %v5309
      %v5527 = vpop.f32.mrb[0].mxu0
      %v5528 = vadd.f32 0.0, %v5527
      %v5529 = vpop.f32.mrb[0].mxu0
      %5530 = vmatprep.mubr.f32.mxu0 0.0
      %5531 = vmatmul.mubr.f32.gmra.mrb[0].mxu0 %v5312
      %v5532 = vpop.f32.mrb[0].mxu0
      %v5533 = vadd.f32 0.0, %v5532
      %v5534 = vpop.f32.mrb[0].mxu0
      %5535 = vmatprep.mubr.f32.mxu0 0.0
      %5536 = vmatmul.mubr.f32.gmra.mrb[0].mxu0 %v5315
      %v5537 = vpop.f32.mrb[0].mxu0
      %v5538 = vadd.f32 0.0, %v5537
      %v5539 = vpop.f32.mrb[0].mxu0
      %5540 = vmatprep.mubr.f32.mxu0 0.0
      %5541 = vmatmul.mubr.f32.gmra.mrb[0].mxu0 %v5318
      %v5542 = vpop.f32.mrb[0].mxu0
      %v5543 = vadd.f32 0.0, %v5542
      %v5544 = vpop.f32.mrb[0].mxu0
      %5545 = vmatprep.mubr.f32.mxu0 0.0
      %5546 = vmatmul.mubr.f32.gmra.mrb[0].mxu0 %v5321
      %v5547 = vpop.f32.mrb[0].mxu0
      %v5548 = vadd.f32 0.0, %v5547
      %v5549 = vpop.f32.mrb[0].mxu0
      %5550 = vmatprep.mubr.f32.mxu0 0.0
      %5551 = vmatmul.mubr.f32.gmra.mrb[0].mxu0 %v5324
      %v5552 = vpop.f32.mrb[0].mxu0
      %v5553 = vadd.f32 0.0, %v5552
      %v5554 = vpop.f32.mrb[0].mxu0
      %5555 = vmatprep.mubr.f32.mxu0 0.0
      %5556 = vmatmul.mubr.f32.gmra.mrb[0].mxu0 %v5327
      %v5557 = vpop.f32.mrb[0].mxu0
      %v5558 = vadd.f32 0.0, %v5557
      %v5559 = vpop.f32.mrb[0].mxu0
      %5560 = vmatprep.mubr.f32.mxu0 0.0
      %5561 = vmatmul.mubr.f32.gmra.mrb[0].mxu0 %v5330
      %v5562 = vpop.f32.mrb[0].mxu0
      %v5563 = vadd.f32 0.0, %v5562
      %v5564 = vpop.f32.mrb[0].mxu0
      %5565 = vmatprep.mubr.f32.mxu0 0.0
      %5566 = vmatmul.mubr.f32.gmra.mrb[0].mxu0 %v5333
      %v5567 = vpop.f32.mrb[0].mxu0
      %v5568 = vadd.f32 0.0, %v5567
      %v5569 = vpop.f32.mrb[0].mxu0
      %5570 = vmatprep.mubr.f32.mxu0 0.0
      %5571 = vmatmul.mubr.f32.gmra.mrb[0].mxu0 %v5336
      %v5572 = vpop.f32.mrb[0].mxu0
      %v5573 = vadd.f32 0.0, %v5572
      %v5574 = vpop.f32.mrb[0].mxu0
      %5575 = vmatprep.mubr.f32.mxu0 0.0
      %5576 = vmatmul.mubr.f32.gmra.mrb[0].mxu0 %v5339
      %v5577 = vpop.f32.mrb[0].mxu0
      %v5578 = vadd.f32 0.0, %v5577
      %v5579 = vpop.f32.mrb[0].mxu0
      %5580 = vmatprep.mubr.f32.mxu0 0.0
      %5581 = vmatmul.mubr.f32.gmra.mrb[0].mxu0 %v5342
      %v5582 = vpop.f32.mrb[0].mxu0
      %v5583 = vadd.f32 0.0, %v5582
      %v5584 = vpop.f32.mrb[0].mxu0
      %5585 = vmatprep.mubr.f32.mxu0 0.0
      %5586 = vmatmul.mubr.f32.gmra.mrb[0].mxu0 %v5345
      %v5587 = vpop.f32.mrb[0].mxu0
      %v5588 = vadd.f32 0.0, %v5587
      %v5589 = vpop.f32.mrb[0].mxu0
      %5590 = vmatprep.mubr.f32.mxu0 0.0
      %5591 = vmatmul.mubr.f32.gmra.mrb[0].mxu0 %v5348
      %v5592 = vpop.f32.mrb[0].mxu0
      %v5593 = vadd.f32 0.0, %v5592
      %v5594 = vpop.f32.mrb[0].mxu0
      %5595 = vmatprep.mubr.f32.mxu0 0.0
      %5596 = vmatmul.mubr.f32.gmra.mrb[0].mxu0 %v5351
      %v5597 = vpop.f32.mrb[0].mxu0
      %v5598 = vadd.f32 0.0, %v5597
      %v5599 = vpop.f32.mrb[0].mxu0
      %5600 = vmatprep.mubr.f32.mxu0 0.0
      %5601 = vmatmul.mubr.f32.gmra.mrb[0].mxu0 %v5354
      %v5602 = vpop.f32.mrb[0].mxu0
      %v5603 = vadd.f32 0.0, %v5602
      %v5604 = vpop.f32.mrb[0].mxu0
      %5605 = vmatprep.mubr.f32.mxu0 0.0
      %5606 = vmatmul.mubr.f32.gmra.mrb[0].mxu0 %v5357
      %v5607 = vpop.f32.mrb[0].mxu0
      %v5608 = vadd.f32 0.0, %v5607
      %v5609 = vpop.f32.mrb[0].mxu0
      %5610 = vmatprep.mubr.f32.mxu0 0.0
      %5611 = vmatmul.mubr.f32.gmra.mrb[0].mxu0 %v5360
      %v5612 = vpop.f32.mrb[0].mxu0
      %v5613 = vadd.f32 0.0, %v5612
      %v5614 = vpop.f32.mrb[0].mxu0
      %5615 = vmatprep.mubr.f32.mxu0 0.0
      %5616 = vmatmul.mubr.f32.gmra.mrb[0].mxu0 %v5363
      %v5617 = vpop.f32.mrb[0].mxu0
      %v5618 = vadd.f32 0.0, %v5617
      %v5619 = vpop.f32.mrb[0].mxu0
      %5620 = vmatprep.mubr.f32.mxu0 0.0
      %5621 = vmatmul.mubr.f32.gmra.mrb[0].mxu0 %v5366
      %v5622 = vpop.f32.mrb[0].mxu0
      %v5623 = vadd.f32 0.0, %v5622
      %v5624 = vpop.f32.mrb[0].mxu0
      %5625 = vmatprep.mubr.f32.mxu0 0.0
      %5626 = vmatmul.mubr.f32.gmra.mrb[0].mxu0 %v5369
      %v5627 = vpop.f32.mrb[0].mxu0
      %v5628 = vadd.f32 0.0, %v5627
      %v5629 = vpop.f32.mrb[0].mxu0
      %5630 = vmatprep.mubr.f32.mxu0 0.0
      %5631 = vmatmul.mubr.f32.gmra.mrb[0].mxu0 %v5372
      %v5632 = vpop.f32.mrb[0].mxu0
      %v5633 = vadd.f32 0.0, %v5632
      %v5634 = vpop.f32.mrb[0].mxu0
      %5635 = vmatprep.mubr.f32.mxu0 0.0
      %5636 = vmatmul.mubr.f32.gmra.mrb[0].mxu0 %v5375
      %v5637 = vpop.f32.mrb[0].mxu0
      %v5638 = vadd.f32 0.0, %v5637
      %v5639 = vpop.f32.mrb[0].mxu0
      %5640 = vmatprep.mubr.f32.mxu0 0.0
      %5641 = vmatmul.mubr.f32.gmra.mrb[0].mxu0 %v5378
      %v5642 = vpop.f32.mrb[0].mxu0
      %v5643 = vadd.f32 0.0, %v5642
      %v5644 = vpop.f32.mrb[0].mxu0
      %5645 = vmatprep.mubr.f32.mxu0 0.0
      %5646 = vmatmul.mubr.f32.gmra.mrb[0].mxu0 %v5381
      %v5647 = vpop.f32.mrb[0].mxu0
      %v5648 = vadd.f32 0.0, %v5647
      %v5649 = vpop.f32.mrb[0].mxu0
      %5650 = vmatprep.mubr.f32.mxu0 0.0
      %5651 = vmatmul.mubr.f32.gmra.mrb[0].mxu0 %v5384
      %v5652 = vpop.f32.mrb[0].mxu0
      %v5653 = vadd.f32 0.0, %v5652
      %v5654 = vpop.f32.mrb[0].mxu0
      %5655 = vdwg.mxu0
      %v5657 = vsel %vm5127, %v5176, 0
      %v5660 = vsel %vm5127, %v5177, 0
      %v5663 = vsel %vm5127, %v5178, 0
      %v5666 = vsel %vm5127, %v5179, 0
      %v5669 = vsel %vm5127, %v5180, 0
      %v5672 = vsel %vm5127, %v5181, 0
      %v5675 = vsel %vm5127, %v5182, 0
      %v5678 = vsel %vm5127, %v5183, 0
      %v5681 = vsel %vm5127, %v5184, 0
      %v5684 = vsel %vm5127, %v5185, 0
      %v5687 = vsel %vm5127, %v5186, 0
      %v5690 = vsel %vm5127, %v5187, 0
      %v5693 = vsel %vm5127, %v5188, 0
      %v5696 = vsel %vm5127, %v5189, 0
      %v5699 = vsel %vm5127, %v5190, 0
      %v5702 = vsel %vm5127, %v5191, 0
      %v5705 = vsel %vm5127, %v5192, 0
      %v5708 = vsel %vm5127, %v5193, 0
      %v5711 = vsel %vm5127, %v5194, 0
      %v5714 = vsel %vm5127, %v5195, 0
      %v5717 = vsel %vm5127, %v5196, 0
      %v5720 = vsel %vm5127, %v5197, 0
      %v5723 = vsel %vm5127, %v5198, 0
      %v5726 = vsel %vm5127, %v5199, 0
      %v5729 = vsel %vm5127, %v5200, 0
      %v5732 = vsel %vm5127, %v5201, 0
      %v5735 = vsel %vm5127, %v5202, 0
      %v5738 = vsel %vm5127, %v5203, 0
      %v5741 = vsel %vm5127, %v5204, 0
      %v5744 = vsel %vm5127, %v5205, 0
      %v5747 = vsel %vm5127, %v5206, 0
      %v5750 = vsel %vm5127, %v5207, 0
      %v5753 = vsel %vm5127, %v5208, 0
      %v5756 = vsel %vm5127, %v5209, 0
      %v5759 = vsel %vm5127, %v5210, 0
      %v5762 = vsel %vm5127, %v5211, 0
      %v5765 = vsel %vm5127, %v5212, 0
      %v5768 = vsel %vm5127, %v5213, 0
      %v5771 = vsel %vm5127, %v5214, 0
      %v5774 = vsel %vm5127, %v5215, 0
      %v5777 = vsel %vm5127, %v5216, 0
      %5779 = vmatprep.subr.mxu0 0.0
      %5780 = vmatpush1.msra.mxu0 %v5217
      %5781 = vmatprep.subr.mxu0 0.0
      %5782 = vmatpush1.msra.mxu0 %v5218
      %5783 = vmatprep.subr.mxu0 0.0
      %5784 = vmatpush1.msra.mxu0 0.0
      %5785 = vmatprep.subr.mxu0 0.0
      %5786 = vmatpush1.msra.mxu0 0.0
      %5787 = vmatprep.subr.mxu0 0.0
      %5788 = vmatpush1.msra.mxu0 0.0
      %5789 = vmatprep.subr.mxu0 0.0
      %5790 = vmatpush1.msra.mxu0 0.0
      %5791 = vmatprep.subr.mxu0 0.0
      %5792 = vmatpush1.msra.mxu0 0.0
      %5793 = vmatprep.subr.mxu0 0.0
      %5794 = vmatpush1.msra.mxu0 0.0
      %5795 = vmatprep.subr.mxu0 0.0
      %5796 = vmatpush1.msra.mxu0 0.0
      %5797 = vmatprep.subr.mxu0 0.0
      %5798 = vmatpush1.msra.mxu0 0.0
      %5799 = vmatprep.subr.mxu0 0.0
      %5800 = vmatpush1.msra.mxu0 0.0
      %5801 = vmatprep.subr.mxu0 0.0
      %5802 = vmatpush1.msra.mxu0 0.0
      %5803 = vmatprep.subr.mxu0 0.0
      %5804 = vmatpush1.msra.mxu0 0.0
      %5805 = vmatprep.subr.mxu0 0.0
      %5806 = vmatpush1.msra.mxu0 0.0
      %5807 = vmatprep.subr.mxu0 0.0
      %5808 = vmatpush1.msra.mxu0 0.0
      %5809 = vmatprep.subr.mxu0 0.0
      %5810 = vmatpush1.msra.mxu0 0.0
      %5811 = vmatprep.subr.mxu0 0.0
      %5812 = vmatpush1.msra.mxu0 0.0
      %5813 = vmatprep.subr.mxu0 0.0
      %5814 = vmatpush1.msra.mxu0 0.0
      %5815 = vmatprep.subr.mxu0 0.0
      %5816 = vmatpush1.msra.mxu0 0.0
      %5817 = vmatprep.subr.mxu0 0.0
      %5818 = vmatpush1.msra.mxu0 0.0
      %5819 = vmatprep.subr.mxu0 0.0
      %5820 = vmatpush1.msra.mxu0 0.0
      %5821 = vmatprep.subr.mxu0 0.0
      %5822 = vmatpush1.msra.mxu0 0.0
      %5823 = vmatprep.subr.mxu0 0.0
      %5824 = vmatpush1.msra.mxu0 0.0
      %5825 = vmatprep.subr.mxu0 0.0
      %5826 = vmatpush1.msra.mxu0 0.0
      %5827 = vmatprep.subr.mxu0 0.0
      %5828 = vmatpush1.msra.mxu0 0.0
      %5829 = vmatprep.subr.mxu0 0.0
      %5830 = vmatpush1.msra.mxu0 0.0
      %5831 = vmatprep.subr.mxu0 0.0
      %5832 = vmatpush1.msra.mxu0 0.0
      %5833 = vmatprep.subr.mxu0 0.0
      %5834 = vmatpush1.msra.mxu0 0.0
      %5835 = vmatprep.subr.mxu0 0.0
      %5836 = vmatpush1.msra.mxu0 0.0
      %5837 = vmatprep.subr.mxu0 0.0
      %5838 = vmatpush1.msra.mxu0 0.0
      %5839 = vmatprep.subr.mxu0 0.0
      %5840 = vmatpush1.msra.mxu0 0.0
      %5841 = vmatprep.subr.mxu0 0.0
      %5842 = vmatpush1.msra.mxu0 0.0
      %5843 = vmatprep.mubr.f32.mxu0 0.0
      %5844 = vmatmul.mubr.f32.gmra.mrb[0].mxu0 %v5657
      %v5845 = vpop.f32.mrb[0].mxu0
      %v5846 = vadd.f32 %v5453, %v5845
      %v5847 = vpop.f32.mrb[0].mxu0
      %5848 = vmatprep.mubr.f32.mxu0 0.0
      %5849 = vmatmul.mubr.f32.gmra.mrb[0].mxu0 %v5660
      %v5850 = vpop.f32.mrb[0].mxu0
      %v5851 = vadd.f32 %v5458, %v5850
      %v5852 = vpop.f32.mrb[0].mxu0
      %5853 = vmatprep.mubr.f32.mxu0 0.0
      %5854 = vmatmul.mubr.f32.gmra.mrb[0].mxu0 %v5663
      %v5855 = vpop.f32.mrb[0].mxu0
      %v5856 = vadd.f32 %v5463, %v5855
      %v5857 = vpop.f32.mrb[0].mxu0
      %5858 = vmatprep.mubr.f32.mxu0 0.0
      %5859 = vmatmul.mubr.f32.gmra.mrb[0].mxu0 %v5666
      %v5860 = vpop.f32.mrb[0].mxu0
      %v5861 = vadd.f32 %v5468, %v5860
      %v5862 = vpop.f32.mrb[0].mxu0
      %5863 = vmatprep.mubr.f32.mxu0 0.0
      %5864 = vmatmul.mubr.f32.gmra.mrb[0].mxu0 %v5669
      %v5865 = vpop.f32.mrb[0].mxu0
      %v5866 = vadd.f32 %v5473, %v5865
      %v5867 = vpop.f32.mrb[0].mxu0
      %5868 = vmatprep.mubr.f32.mxu0 0.0
      %5869 = vmatmul.mubr.f32.gmra.mrb[0].mxu0 %v5672
      %v5870 = vpop.f32.mrb[0].mxu0
      %v5871 = vadd.f32 %v5478, %v5870
      %v5872 = vpop.f32.mrb[0].mxu0
      %5873 = vmatprep.mubr.f32.mxu0 0.0
      %5874 = vmatmul.mubr.f32.gmra.mrb[0].mxu0 %v5675
      %v5875 = vpop.f32.mrb[0].mxu0
      %v5876 = vadd.f32 %v5483, %v5875
      %v5877 = vpop.f32.mrb[0].mxu0
      %5878 = vmatprep.mubr.f32.mxu0 0.0
      %5879 = vmatmul.mubr.f32.gmra.mrb[0].mxu0 %v5678
      %v5880 = vpop.f32.mrb[0].mxu0
      %v5881 = vadd.f32 %v5488, %v5880
      %v5882 = vpop.f32.mrb[0].mxu0
      %5883 = vmatprep.mubr.f32.mxu0 0.0
      %5884 = vmatmul.mubr.f32.gmra.mrb[0].mxu0 %v5681
      %v5885 = vpop.f32.mrb[0].mxu0
      %v5886 = vadd.f32 %v5493, %v5885
      %v5887 = vpop.f32.mrb[0].mxu0
      %5888 = vmatprep.mubr.f32.mxu0 0.0
      %5889 = vmatmul.mubr.f32.gmra.mrb[0].mxu0 %v5684
      %v5890 = vpop.f32.mrb[0].mxu0
      %v5891 = vadd.f32 %v5498, %v5890
      %v5892 = vpop.f32.mrb[0].mxu0
      %5893 = vmatprep.mubr.f32.mxu0 0.0
      %5894 = vmatmul.mubr.f32.gmra.mrb[0].mxu0 %v5687
      %v5895 = vpop.f32.mrb[0].mxu0
      %v5896 = vadd.f32 %v5503, %v5895
      %v5897 = vpop.f32.mrb[0].mxu0
      %5898 = vmatprep.mubr.f32.mxu0 0.0
      %5899 = vmatmul.mubr.f32.gmra.mrb[0].mxu0 %v5690
      %v5900 = vpop.f32.mrb[0].mxu0
      %v5901 = vadd.f32 %v5508, %v5900
      %v5902 = vpop.f32.mrb[0].mxu0
      %5903 = vmatprep.mubr.f32.mxu0 0.0
      %5904 = vmatmul.mubr.f32.gmra.mrb[0].mxu0 %v5693
      %v5905 = vpop.f32.mrb[0].mxu0
      %v5906 = vadd.f32 %v5513, %v5905
      %v5907 = vpop.f32.mrb[0].mxu0
      %5908 = vmatprep.mubr.f32.mxu0 0.0
      %5909 = vmatmul.mubr.f32.gmra.mrb[0].mxu0 %v5696
      %v5910 = vpop.f32.mrb[0].mxu0
      %v5911 = vadd.f32 %v5518, %v5910
      %v5912 = vpop.f32.mrb[0].mxu0
      %5913 = vmatprep.mubr.f32.mxu0 0.0
      %5914 = vmatmul.mubr.f32.gmra.mrb[0].mxu0 %v5699
      %v5915 = vpop.f32.mrb[0].mxu0
      %v5916 = vadd.f32 %v5523, %v5915
      %v5917 = vpop.f32.mrb[0].mxu0
      %5918 = vmatprep.mubr.f32.mxu0 0.0
      %5919 = vmatmul.mubr.f32.gmra.mrb[0].mxu0 %v5702
      %v5920 = vpop.f32.mrb[0].mxu0
      %v5921 = vadd.f32 %v5528, %v5920
      %v5922 = vpop.f32.mrb[0].mxu0
      %5923 = vmatprep.mubr.f32.mxu0 0.0
      %5924 = vmatmul.mubr.f32.gmra.mrb[0].mxu0 %v5705
      %v5925 = vpop.f32.mrb[0].mxu0
      %v5926 = vadd.f32 %v5533, %v5925
      %v5927 = vpop.f32.mrb[0].mxu0
      %5928 = vmatprep.mubr.f32.mxu0 0.0
      %5929 = vmatmul.mubr.f32.gmra.mrb[0].mxu0 %v5708
      %v5930 = vpop.f32.mrb[0].mxu0
      %v5931 = vadd.f32 %v5538, %v5930
      %v5932 = vpop.f32.mrb[0].mxu0
      %5933 = vmatprep.mubr.f32.mxu0 0.0
      %5934 = vmatmul.mubr.f32.gmra.mrb[0].mxu0 %v5711
      %v5935 = vpop.f32.mrb[0].mxu0
      %v5936 = vadd.f32 %v5543, %v5935
      %v5937 = vpop.f32.mrb[0].mxu0
      %5938 = vmatprep.mubr.f32.mxu0 0.0
      %5939 = vmatmul.mubr.f32.gmra.mrb[0].mxu0 %v5714
      %v5940 = vpop.f32.mrb[0].mxu0
      %v5941 = vadd.f32 %v5548, %v5940
      %v5942 = vpop.f32.mrb[0].mxu0
      %5943 = vmatprep.mubr.f32.mxu0 0.0
      %5944 = vmatmul.mubr.f32.gmra.mrb[0].mxu0 %v5717
      %v5945 = vpop.f32.mrb[0].mxu0
      %v5946 = vadd.f32 %v5553, %v5945
      %v5947 = vpop.f32.mrb[0].mxu0
      %5948 = vmatprep.mubr.f32.mxu0 0.0
      %5949 = vmatmul.mubr.f32.gmra.mrb[0].mxu0 %v5720
      %v5950 = vpop.f32.mrb[0].mxu0
      %v5951 = vadd.f32 %v5558, %v5950
      %v5952 = vpop.f32.mrb[0].mxu0
      %5953 = vmatprep.mubr.f32.mxu0 0.0
      %5954 = vmatmul.mubr.f32.gmra.mrb[0].mxu0 %v5723
      %v5955 = vpop.f32.mrb[0].mxu0
      %v5956 = vadd.f32 %v5563, %v5955
      %v5957 = vpop.f32.mrb[0].mxu0
      %5958 = vmatprep.mubr.f32.mxu0 0.0
      %5959 = vmatmul.mubr.f32.gmra.mrb[0].mxu0 %v5726
      %v5960 = vpop.f32.mrb[0].mxu0
      %v5961 = vadd.f32 %v5568, %v5960
      %v5962 = vpop.f32.mrb[0].mxu0
      %5963 = vmatprep.mubr.f32.mxu0 0.0
      %5964 = vmatmul.mubr.f32.gmra.mrb[0].mxu0 %v5729
      %v5965 = vpop.f32.mrb[0].mxu0
      %v5966 = vadd.f32 %v5573, %v5965
      %v5967 = vpop.f32.mrb[0].mxu0
      %5968 = vmatprep.mubr.f32.mxu0 0.0
      %5969 = vmatmul.mubr.f32.gmra.mrb[0].mxu0 %v5732
      %v5970 = vpop.f32.mrb[0].mxu0
      %v5971 = vadd.f32 %v5578, %v5970
      %v5972 = vpop.f32.mrb[0].mxu0
      %5973 = vmatprep.mubr.f32.mxu0 0.0
      %5974 = vmatmul.mubr.f32.gmra.mrb[0].mxu0 %v5735
      %v5975 = vpop.f32.mrb[0].mxu0
      %v5976 = vadd.f32 %v5583, %v5975
      %v5977 = vpop.f32.mrb[0].mxu0
      %5978 = vmatprep.mubr.f32.mxu0 0.0
      %5979 = vmatmul.mubr.f32.gmra.mrb[0].mxu0 %v5738
      %v5980 = vpop.f32.mrb[0].mxu0
      %v5981 = vadd.f32 %v5588, %v5980
      %v5982 = vpop.f32.mrb[0].mxu0
      %5983 = vmatprep.mubr.f32.mxu0 0.0
      %5984 = vmatmul.mubr.f32.gmra.mrb[0].mxu0 %v5741
      %v5985 = vpop.f32.mrb[0].mxu0
      %v5986 = vadd.f32 %v5593, %v5985
      %v5987 = vpop.f32.mrb[0].mxu0
      %5988 = vmatprep.mubr.f32.mxu0 0.0
      %5989 = vmatmul.mubr.f32.gmra.mrb[0].mxu0 %v5744
      %v5990 = vpop.f32.mrb[0].mxu0
      %v5991 = vadd.f32 %v5598, %v5990
      %v5992 = vpop.f32.mrb[0].mxu0
      %5993 = vmatprep.mubr.f32.mxu0 0.0
      %5994 = vmatmul.mubr.f32.gmra.mrb[0].mxu0 %v5747
      %v5995 = vpop.f32.mrb[0].mxu0
      %v5996 = vadd.f32 %v5603, %v5995
      %v5997 = vpop.f32.mrb[0].mxu0
      %5998 = vmatprep.mubr.f32.mxu0 0.0
      %5999 = vmatmul.mubr.f32.gmra.mrb[0].mxu0 %v5750
      %v6000 = vpop.f32.mrb[0].mxu0
      %v6001 = vadd.f32 %v5608, %v6000
      %v6002 = vpop.f32.mrb[0].mxu0
      %6003 = vmatprep.mubr.f32.mxu0 0.0
      %6004 = vmatmul.mubr.f32.gmra.mrb[0].mxu0 %v5753
      %v6005 = vpop.f32.mrb[0].mxu0
      %v6006 = vadd.f32 %v5613, %v6005
      %v6007 = vpop.f32.mrb[0].mxu0
      %6008 = vmatprep.mubr.f32.mxu0 0.0
      %6009 = vmatmul.mubr.f32.gmra.mrb[0].mxu0 %v5756
      %v6010 = vpop.f32.mrb[0].mxu0
      %v6011 = vadd.f32 %v5618, %v6010
      %v6012 = vpop.f32.mrb[0].mxu0
      %6013 = vmatprep.mubr.f32.mxu0 0.0
      %6014 = vmatmul.mubr.f32.gmra.mrb[0].mxu0 %v5759
      %v6015 = vpop.f32.mrb[0].mxu0
      %v6016 = vadd.f32 %v5623, %v6015
      %v6017 = vpop.f32.mrb[0].mxu0
      %6018 = vmatprep.mubr.f32.mxu0 0.0
      %6019 = vmatmul.mubr.f32.gmra.mrb[0].mxu0 %v5762
      %v6020 = vpop.f32.mrb[0].mxu0
      %v6021 = vadd.f32 %v5628, %v6020
      %v6022 = vpop.f32.mrb[0].mxu0
      %6023 = vmatprep.mubr.f32.mxu0 0.0
      %6024 = vmatmul.mubr.f32.gmra.mrb[0].mxu0 %v5765
      %v6025 = vpop.f32.mrb[0].mxu0
      %v6026 = vadd.f32 %v5633, %v6025
      %v6027 = vpop.f32.mrb[0].mxu0
      %6028 = vmatprep.mubr.f32.mxu0 0.0
      %6029 = vmatmul.mubr.f32.gmra.mrb[0].mxu0 %v5768
      %v6030 = vpop.f32.mrb[0].mxu0
      %v6031 = vadd.f32 %v5638, %v6030
      %v6032 = vpop.f32.mrb[0].mxu0
      %6033 = vmatprep.mubr.f32.mxu0 0.0
      %6034 = vmatmul.mubr.f32.gmra.mrb[0].mxu0 %v5771
      %v6035 = vpop.f32.mrb[0].mxu0
      %v6036 = vadd.f32 %v5643, %v6035
      %v6037 = vpop.f32.mrb[0].mxu0
      %6038 = vmatprep.mubr.f32.mxu0 0.0
      %6039 = vmatmul.mubr.f32.gmra.mrb[0].mxu0 %v5774
      %v6040 = vpop.f32.mrb[0].mxu0
      %v6041 = vadd.f32 %v5648, %v6040
      %v6042 = vpop.f32.mrb[0].mxu0
      %6043 = vmatprep.mubr.f32.mxu0 0.0
      %6044 = vmatmul.mubr.f32.gmra.mrb[0].mxu0 %v5777
      %v6045 = vpop.f32.mrb[0].mxu0
      %v6046 = vadd.f32 %v5653, %v6045
      %v6047 = vpop.f32.mrb[0].mxu0
      %6048 = vdwg.mxu0
      %v6049 = vld [vmem:[#allocation2 + $0x7] sm:$0xff]
      %v6050 = vld [vmem:[#allocation2 + $0xf] sm:$0xff]
      %v6051 = vld [vmem:[#allocation2 + $0x17] sm:$0xff]
      %v6052 = vld [vmem:[#allocation2 + $0x1f] sm:$0xff]
      %v6053 = vld [vmem:[#allocation2 + $0x27] sm:$0xff]
      %v6054 = vld [vmem:[#allocation2 + $0x2f] sm:$0xff]
      %v6055 = vld [vmem:[#allocation2 + $0x37] sm:$0xff]
      %v6056 = vld [vmem:[#allocation2 + $0x3f] sm:$0xff]
      %v6057 = vld [vmem:[#allocation2 + $0x47] sm:$0xff]
      %v6058 = vld [vmem:[#allocation2 + $0x4f] sm:$0xff]
      %v6059 = vld [vmem:[#allocation2 + $0x57] sm:$0xff]
      %v6060 = vld [vmem:[#allocation2 + $0x5f] sm:$0xff]
      %v6061 = vld [vmem:[#allocation2 + $0x67] sm:$0xff]
      %v6062 = vld [vmem:[#allocation2 + $0x6f] sm:$0xff]
      %v6063 = vld [vmem:[#allocation2 + $0x77] sm:$0xff]
      %v6064 = vld [vmem:[#allocation2 + $0x7f] sm:$0xff]
      %v6065 = vld [vmem:[#allocation2 + $0x87] sm:$0xff]
      %v6066 = vld [vmem:[#allocation2 + $0x8f] sm:$0xff]
      %v6067 = vld [vmem:[#allocation2 + $0x97] sm:$0xff]
      %v6068 = vld [vmem:[#allocation2 + $0x9f] sm:$0xff]
      %v6069 = vld [vmem:[#allocation2 + $0xa7] sm:$0xff]
      %v6070 = vld [vmem:[#allocation2 + $0xaf] sm:$0xff]
      %v6071 = vld [vmem:[#allocation2 + $0xb7] sm:$0xff]
      %v6072 = vld [vmem:[#allocation2 + $0xbf] sm:$0xff]
      %v6073 = vld [vmem:[#allocation2 + $0xc7] sm:$0xff]
      %v6074 = vld [vmem:[#allocation2 + $0xcf] sm:$0xff]
      %v6075 = vld [vmem:[#allocation2 + $0xd7] sm:$0xff]
      %v6076 = vld [vmem:[#allocation2 + $0xdf] sm:$0xff]
      %v6077 = vld [vmem:[#allocation2 + $0xe7] sm:$0xff]
      %v6078 = vld [vmem:[#allocation2 + $0xef] sm:$0xff]
      %v6079 = vld [vmem:[#allocation2 + $0xf7] sm:$0xff]
      %v6080 = vld [vmem:[#allocation2 + $0xff] sm:$0xff]
      %v6081 = vld [vmem:[#allocation2 + $0x107] sm:$0xff]
      %v6082 = vld [vmem:[#allocation2 + $0x10f] sm:$0xff]
      %v6083 = vld [vmem:[#allocation2 + $0x117] sm:$0xff]
      %v6084 = vld [vmem:[#allocation2 + $0x11f] sm:$0xff]
      %v6085 = vld [vmem:[#allocation2 + $0x127] sm:$0xff]
      %v6086 = vld [vmem:[#allocation2 + $0x12f] sm:$0xff]
      %v6087 = vld [vmem:[#allocation2 + $0x137] sm:$0xff]
      %v6088 = vld [vmem:[#allocation2 + $0x13f] sm:$0xff]
      %v6089 = vld [vmem:[#allocation2 + $0x147] sm:$0xf]
      %s6090 = scalar_lea.vmem %s5, 32
      %v6091 = vld [vmem:[%s6090] sm:$0xff]
      %v6092 = vld [vmem:[%s6090 + $0x8] sm:$0xff]
      %v6094 = vsel %vm5127, %v6049, 0
      %v6097 = vsel %vm5127, %v6050, 0
      %v6100 = vsel %vm5127, %v6051, 0
      %v6103 = vsel %vm5127, %v6052, 0
      %v6106 = vsel %vm5127, %v6053, 0
      %v6109 = vsel %vm5127, %v6054, 0
      %v6112 = vsel %vm5127, %v6055, 0
      %v6115 = vsel %vm5127, %v6056, 0
      %v6118 = vsel %vm5127, %v6057, 0
      %v6121 = vsel %vm5127, %v6058, 0
      %v6124 = vsel %vm5127, %v6059, 0
      %v6127 = vsel %vm5127, %v6060, 0
      %v6130 = vsel %vm5127, %v6061, 0
      %v6133 = vsel %vm5127, %v6062, 0
      %v6136 = vsel %vm5127, %v6063, 0
      %v6139 = vsel %vm5127, %v6064, 0
      %v6142 = vsel %vm5127, %v6065, 0
      %v6145 = vsel %vm5127, %v6066, 0
      %v6148 = vsel %vm5127, %v6067, 0
      %v6151 = vsel %vm5127, %v6068, 0
      %v6154 = vsel %vm5127, %v6069, 0
      %v6157 = vsel %vm5127, %v6070, 0
      %v6160 = vsel %vm5127, %v6071, 0
      %v6163 = vsel %vm5127, %v6072, 0
      %v6166 = vsel %vm5127, %v6073, 0
      %v6169 = vsel %vm5127, %v6074, 0
      %v6172 = vsel %vm5127, %v6075, 0
      %v6175 = vsel %vm5127, %v6076, 0
      %v6178 = vsel %vm5127, %v6077, 0
      %v6181 = vsel %vm5127, %v6078, 0
      %v6184 = vsel %vm5127, %v6079, 0
      %v6187 = vsel %vm5127, %v6080, 0
      %v6190 = vsel %vm5127, %v6081, 0
      %v6193 = vsel %vm5127, %v6082, 0
      %v6196 = vsel %vm5127, %v6083, 0
      %v6199 = vsel %vm5127, %v6084, 0
      %v6202 = vsel %vm5127, %v6085, 0
      %v6205 = vsel %vm5127, %v6086, 0
      %v6208 = vsel %vm5127, %v6087, 0
      %v6211 = vsel %vm5127, %v6088, 0
      %v6214 = vsel %vm5127, %v6089, 0
      %6216 = vmatprep.subr.mxu0 0.0
      %6217 = vmatpush1.msra.mxu0 %v6091
      %6218 = vmatprep.subr.mxu0 0.0
      %6219 = vmatpush1.msra.mxu0 %v6092
      %6220 = vmatprep.subr.mxu0 0.0
      %6221 = vmatpush1.msra.mxu0 0.0
      %6222 = vmatprep.subr.mxu0 0.0
      %6223 = vmatpush1.msra.mxu0 0.0
      %6224 = vmatprep.subr.mxu0 0.0
      %6225 = vmatpush1.msra.mxu0 0.0
      %6226 = vmatprep.subr.mxu0 0.0
      %6227 = vmatpush1.msra.mxu0 0.0
      %6228 = vmatprep.subr.mxu0 0.0
      %6229 = vmatpush1.msra.mxu0 0.0
      %6230 = vmatprep.subr.mxu0 0.0
      %6231 = vmatpush1.msra.mxu0 0.0
      %6232 = vmatprep.subr.mxu0 0.0
      %6233 = vmatpush1.msra.mxu0 0.0
      %6234 = vmatprep.subr.mxu0 0.0
      %6235 = vmatpush1.msra.mxu0 0.0
      %6236 = vmatprep.subr.mxu0 0.0
      %6237 = vmatpush1.msra.mxu0 0.0
      %6238 = vmatprep.subr.mxu0 0.0
      %6239 = vmatpush1.msra.mxu0 0.0
      %6240 = vmatprep.subr.mxu0 0.0
      %6241 = vmatpush1.msra.mxu0 0.0
      %6242 = vmatprep.subr.mxu0 0.0
      %6243 = vmatpush1.msra.mxu0 0.0
      %6244 = vmatprep.subr.mxu0 0.0
      %6245 = vmatpush1.msra.mxu0 0.0
      %6246 = vmatprep.subr.mxu0 0.0
      %6247 = vmatpush1.msra.mxu0 0.0
      %6248 = vmatprep.subr.mxu0 0.0
      %6249 = vmatpush1.msra.mxu0 0.0
      %6250 = vmatprep.subr.mxu0 0.0
      %6251 = vmatpush1.msra.mxu0 0.0
      %6252 = vmatprep.subr.mxu0 0.0
      %6253 = vmatpush1.msra.mxu0 0.0
      %6254 = vmatprep.subr.mxu0 0.0
      %6255 = vmatpush1.msra.mxu0 0.0
      %6256 = vmatprep.subr.mxu0 0.0
      %6257 = vmatpush1.msra.mxu0 0.0
      %6258 = vmatprep.subr.mxu0 0.0
      %6259 = vmatpush1.msra.mxu0 0.0
      %6260 = vmatprep.subr.mxu0 0.0
      %6261 = vmatpush1.msra.mxu0 0.0
      %6262 = vmatprep.subr.mxu0 0.0
      %6263 = vmatpush1.msra.mxu0 0.0
      %6264 = vmatprep.subr.mxu0 0.0
      %6265 = vmatpush1.msra.mxu0 0.0
      %6266 = vmatprep.subr.mxu0 0.0
      %6267 = vmatpush1.msra.mxu0 0.0
      %6268 = vmatprep.subr.mxu0 0.0
      %6269 = vmatpush1.msra.mxu0 0.0
      %6270 = vmatprep.subr.mxu0 0.0
      %6271 = vmatpush1.msra.mxu0 0.0
      %6272 = vmatprep.subr.mxu0 0.0
      %6273 = vmatpush1.msra.mxu0 0.0
      %6274 = vmatprep.subr.mxu0 0.0
      %6275 = vmatpush1.msra.mxu0 0.0
      %6276 = vmatprep.subr.mxu0 0.0
      %6277 = vmatpush1.msra.mxu0 0.0
      %6278 = vmatprep.subr.mxu0 0.0
      %6279 = vmatpush1.msra.mxu0 0.0
      %6280 = vmatprep.mubr.f32.mxu0 0.0
      %6281 = vmatmul.mubr.f32.gmra.mrb[0].mxu0 %v6094
      %v6282 = vpop.f32.mrb[0].mxu0
      %v6283 = vadd.f32 0.0, %v6282
      %v6284 = vpop.f32.mrb[0].mxu0
      %6285 = vmatprep.mubr.f32.mxu0 0.0
      %6286 = vmatmul.mubr.f32.gmra.mrb[0].mxu0 %v6097
      %v6287 = vpop.f32.mrb[0].mxu0
      %v6288 = vadd.f32 0.0, %v6287
      %v6289 = vpop.f32.mrb[0].mxu0
      %6290 = vmatprep.mubr.f32.mxu0 0.0
      %6291 = vmatmul.mubr.f32.gmra.mrb[0].mxu0 %v6100
      %v6292 = vpop.f32.mrb[0].mxu0
      %v6293 = vadd.f32 0.0, %v6292
      %v6294 = vpop.f32.mrb[0].mxu0
      %6295 = vmatprep.mubr.f32.mxu0 0.0
      %6296 = vmatmul.mubr.f32.gmra.mrb[0].mxu0 %v6103
      %v6297 = vpop.f32.mrb[0].mxu0
      %v6298 = vadd.f32 0.0, %v6297
      %v6299 = vpop.f32.mrb[0].mxu0
      %6300 = vmatprep.mubr.f32.mxu0 0.0
      %6301 = vmatmul.mubr.f32.gmra.mrb[0].mxu0 %v6106
      %v6302 = vpop.f32.mrb[0].mxu0
      %v6303 = vadd.f32 0.0, %v6302
      %v6304 = vpop.f32.mrb[0].mxu0
      %6305 = vmatprep.mubr.f32.mxu0 0.0
      %6306 = vmatmul.mubr.f32.gmra.mrb[0].mxu0 %v6109
      %v6307 = vpop.f32.mrb[0].mxu0
      %v6308 = vadd.f32 0.0, %v6307
      %v6309 = vpop.f32.mrb[0].mxu0
      %6310 = vmatprep.mubr.f32.mxu0 0.0
      %6311 = vmatmul.mubr.f32.gmra.mrb[0].mxu0 %v6112
      %v6312 = vpop.f32.mrb[0].mxu0
      %v6313 = vadd.f32 0.0, %v6312
      %v6314 = vpop.f32.mrb[0].mxu0
      %6315 = vmatprep.mubr.f32.mxu0 0.0
      %6316 = vmatmul.mubr.f32.gmra.mrb[0].mxu0 %v6115
      %v6317 = vpop.f32.mrb[0].mxu0
      %v6318 = vadd.f32 0.0, %v6317
      %v6319 = vpop.f32.mrb[0].mxu0
      %6320 = vmatprep.mubr.f32.mxu0 0.0
      %6321 = vmatmul.mubr.f32.gmra.mrb[0].mxu0 %v6118
      %v6322 = vpop.f32.mrb[0].mxu0
      %v6323 = vadd.f32 0.0, %v6322
      %v6324 = vpop.f32.mrb[0].mxu0
      %6325 = vmatprep.mubr.f32.mxu0 0.0
      %6326 = vmatmul.mubr.f32.gmra.mrb[0].mxu0 %v6121
      %v6327 = vpop.f32.mrb[0].mxu0
      %v6328 = vadd.f32 0.0, %v6327
      %v6329 = vpop.f32.mrb[0].mxu0
      %6330 = vmatprep.mubr.f32.mxu0 0.0
      %6331 = vmatmul.mubr.f32.gmra.mrb[0].mxu0 %v6124
      %v6332 = vpop.f32.mrb[0].mxu0
      %v6333 = vadd.f32 0.0, %v6332
      %v6334 = vpop.f32.mrb[0].mxu0
      %6335 = vmatprep.mubr.f32.mxu0 0.0
      %6336 = vmatmul.mubr.f32.gmra.mrb[0].mxu0 %v6127
      %v6337 = vpop.f32.mrb[0].mxu0
      %v6338 = vadd.f32 0.0, %v6337
      %v6339 = vpop.f32.mrb[0].mxu0
      %6340 = vmatprep.mubr.f32.mxu0 0.0
      %6341 = vmatmul.mubr.f32.gmra.mrb[0].mxu0 %v6130
      %v6342 = vpop.f32.mrb[0].mxu0
      %v6343 = vadd.f32 0.0, %v6342
      %v6344 = vpop.f32.mrb[0].mxu0
      %6345 = vmatprep.mubr.f32.mxu0 0.0
      %6346 = vmatmul.mubr.f32.gmra.mrb[0].mxu0 %v6133
      %v6347 = vpop.f32.mrb[0].mxu0
      %v6348 = vadd.f32 0.0, %v6347
      %v6349 = vpop.f32.mrb[0].mxu0
      %6350 = vmatprep.mubr.f32.mxu0 0.0
      %6351 = vmatmul.mubr.f32.gmra.mrb[0].mxu0 %v6136
      %v6352 = vpop.f32.mrb[0].mxu0
      %v6353 = vadd.f32 0.0, %v6352
      %v6354 = vpop.f32.mrb[0].mxu0
      %6355 = vmatprep.mubr.f32.mxu0 0.0
      %6356 = vmatmul.mubr.f32.gmra.mrb[0].mxu0 %v6139
      %v6357 = vpop.f32.mrb[0].mxu0
      %v6358 = vadd.f32 0.0, %v6357
      %v6359 = vpop.f32.mrb[0].mxu0
      %6360 = vmatprep.mubr.f32.mxu0 0.0
      %6361 = vmatmul.mubr.f32.gmra.mrb[0].mxu0 %v6142
      %v6362 = vpop.f32.mrb[0].mxu0
      %v6363 = vadd.f32 0.0, %v6362
      %v6364 = vpop.f32.mrb[0].mxu0
      %6365 = vmatprep.mubr.f32.mxu0 0.0
      %6366 = vmatmul.mubr.f32.gmra.mrb[0].mxu0 %v6145
      %v6367 = vpop.f32.mrb[0].mxu0
      %v6368 = vadd.f32 0.0, %v6367
      %v6369 = vpop.f32.mrb[0].mxu0
      %6370 = vmatprep.mubr.f32.mxu0 0.0
      %6371 = vmatmul.mubr.f32.gmra.mrb[0].mxu0 %v6148
      %v6372 = vpop.f32.mrb[0].mxu0
      %v6373 = vadd.f32 0.0, %v6372
      %v6374 = vpop.f32.mrb[0].mxu0
      %6375 = vmatprep.mubr.f32.mxu0 0.0
      %6376 = vmatmul.mubr.f32.gmra.mrb[0].mxu0 %v6151
      %v6377 = vpop.f32.mrb[0].mxu0
      %v6378 = vadd.f32 0.0, %v6377
      %v6379 = vpop.f32.mrb[0].mxu0
      %6380 = vmatprep.mubr.f32.mxu0 0.0
      %6381 = vmatmul.mubr.f32.gmra.mrb[0].mxu0 %v6154
      %v6382 = vpop.f32.mrb[0].mxu0
      %v6383 = vadd.f32 0.0, %v6382
      %v6384 = vpop.f32.mrb[0].mxu0
      %6385 = vmatprep.mubr.f32.mxu0 0.0
      %6386 = vmatmul.mubr.f32.gmra.mrb[0].mxu0 %v6157
      %v6387 = vpop.f32.mrb[0].mxu0
      %v6388 = vadd.f32 0.0, %v6387
      %v6389 = vpop.f32.mrb[0].mxu0
      %6390 = vmatprep.mubr.f32.mxu0 0.0
      %6391 = vmatmul.mubr.f32.gmra.mrb[0].mxu0 %v6160
      %v6392 = vpop.f32.mrb[0].mxu0
      %v6393 = vadd.f32 0.0, %v6392
      %v6394 = vpop.f32.mrb[0].mxu0
      %6395 = vmatprep.mubr.f32.mxu0 0.0
      %6396 = vmatmul.mubr.f32.gmra.mrb[0].mxu0 %v6163
      %v6397 = vpop.f32.mrb[0].mxu0
      %v6398 = vadd.f32 0.0, %v6397
      %v6399 = vpop.f32.mrb[0].mxu0
      %6400 = vmatprep.mubr.f32.mxu0 0.0
      %6401 = vmatmul.mubr.f32.gmra.mrb[0].mxu0 %v6166
      %v6402 = vpop.f32.mrb[0].mxu0
      %v6403 = vadd.f32 0.0, %v6402
      %v6404 = vpop.f32.mrb[0].mxu0
      %6405 = vmatprep.mubr.f32.mxu0 0.0
      %6406 = vmatmul.mubr.f32.gmra.mrb[0].mxu0 %v6169
      %v6407 = vpop.f32.mrb[0].mxu0
      %v6408 = vadd.f32 0.0, %v6407
      %v6409 = vpop.f32.mrb[0].mxu0
      %6410 = vmatprep.mubr.f32.mxu0 0.0
      %6411 = vmatmul.mubr.f32.gmra.mrb[0].mxu0 %v6172
      %v6412 = vpop.f32.mrb[0].mxu0
      %v6413 = vadd.f32 0.0, %v6412
      %v6414 = vpop.f32.mrb[0].mxu0
      %6415 = vmatprep.mubr.f32.mxu0 0.0
      %6416 = vmatmul.mubr.f32.gmra.mrb[0].mxu0 %v6175
      %v6417 = vpop.f32.mrb[0].mxu0
      %v6418 = vadd.f32 0.0, %v6417
      %v6419 = vpop.f32.mrb[0].mxu0
      %6420 = vmatprep.mubr.f32.mxu0 0.0
      %6421 = vmatmul.mubr.f32.gmra.mrb[0].mxu0 %v6178
      %v6422 = vpop.f32.mrb[0].mxu0
      %v6423 = vadd.f32 0.0, %v6422
      %v6424 = vpop.f32.mrb[0].mxu0
      %6425 = vmatprep.mubr.f32.mxu0 0.0
      %6426 = vmatmul.mubr.f32.gmra.mrb[0].mxu0 %v6181
      %v6427 = vpop.f32.mrb[0].mxu0
      %v6428 = vadd.f32 0.0, %v6427
      %v6429 = vpop.f32.mrb[0].mxu0
      %6430 = vmatprep.mubr.f32.mxu0 0.0
      %6431 = vmatmul.mubr.f32.gmra.mrb[0].mxu0 %v6184
      %v6432 = vpop.f32.mrb[0].mxu0
      %v6433 = vadd.f32 0.0, %v6432
      %v6434 = vpop.f32.mrb[0].mxu0
      %6435 = vmatprep.mubr.f32.mxu0 0.0
      %6436 = vmatmul.mubr.f32.gmra.mrb[0].mxu0 %v6187
      %v6437 = vpop.f32.mrb[0].mxu0
      %v6438 = vadd.f32 0.0, %v6437
      %v6439 = vpop.f32.mrb[0].mxu0
      %6440 = vmatprep.mubr.f32.mxu0 0.0
      %6441 = vmatmul.mubr.f32.gmra.mrb[0].mxu0 %v6190
      %v6442 = vpop.f32.mrb[0].mxu0
      %v6443 = vadd.f32 0.0, %v6442
      %v6444 = vpop.f32.mrb[0].mxu0
      %6445 = vmatprep.mubr.f32.mxu0 0.0
      %6446 = vmatmul.mubr.f32.gmra.mrb[0].mxu0 %v6193
      %v6447 = vpop.f32.mrb[0].mxu0
      %v6448 = vadd.f32 0.0, %v6447
      %v6449 = vpop.f32.mrb[0].mxu0
      %6450 = vmatprep.mubr.f32.mxu0 0.0
      %6451 = vmatmul.mubr.f32.gmra.mrb[0].mxu0 %v6196
      %v6452 = vpop.f32.mrb[0].mxu0
      %v6453 = vadd.f32 0.0, %v6452
      %v6454 = vpop.f32.mrb[0].mxu0
      %6455 = vmatprep.mubr.f32.mxu0 0.0
      %6456 = vmatmul.mubr.f32.gmra.mrb[0].mxu0 %v6199
      %v6457 = vpop.f32.mrb[0].mxu0
      %v6458 = vadd.f32 0.0, %v6457
      %v6459 = vpop.f32.mrb[0].mxu0
      %6460 = vmatprep.mubr.f32.mxu0 0.0
      %6461 = vmatmul.mubr.f32.gmra.mrb[0].mxu0 %v6202
      %v6462 = vpop.f32.mrb[0].mxu0
      %v6463 = vadd.f32 0.0, %v6462
      %v6464 = vpop.f32.mrb[0].mxu0
      %6465 = vmatprep.mubr.f32.mxu0 0.0
      %6466 = vmatmul.mubr.f32.gmra.mrb[0].mxu0 %v6205
      %v6467 = vpop.f32.mrb[0].mxu0
      %v6468 = vadd.f32 0.0, %v6467
      %v6469 = vpop.f32.mrb[0].mxu0
      %6470 = vmatprep.mubr.f32.mxu0 0.0
      %6471 = vmatmul.mubr.f32.gmra.mrb[0].mxu0 %v6208
      %v6472 = vpop.f32.mrb[0].mxu0
      %v6473 = vadd.f32 0.0, %v6472
      %v6474 = vpop.f32.mrb[0].mxu0
      %6475 = vmatprep.mubr.f32.mxu0 0.0
      %6476 = vmatmul.mubr.f32.gmra.mrb[0].mxu0 %v6211
      %v6477 = vpop.f32.mrb[0].mxu0
      %v6478 = vadd.f32 0.0, %v6477
      %v6479 = vpop.f32.mrb[0].mxu0
      %6480 = vmatprep.mubr.f32.mxu0 0.0
      %6481 = vmatmul.mubr.f32.gmra.mrb[0].mxu0 %v6214
      %v6482 = vpop.f32.mrb[0].mxu0
      %v6483 = vadd.f32 0.0, %v6482
      %v6484 = vpop.f32.mrb[0].mxu0
      %6485 = vdwg.mxu0
      %v6486 = vadd.f32 %v5846, %v6283
      %v6487 = vadd.f32 %v5851, %v6288
      %v6488 = vadd.f32 %v5856, %v6293
      %v6489 = vadd.f32 %v5861, %v6298
      %v6490 = vadd.f32 %v5866, %v6303
      %v6491 = vadd.f32 %v5871, %v6308
      %v6492 = vadd.f32 %v5876, %v6313
      %v6493 = vadd.f32 %v5881, %v6318
      %v6494 = vadd.f32 %v5886, %v6323
      %v6495 = vadd.f32 %v5891, %v6328
      %v6496 = vadd.f32 %v5896, %v6333
      %v6497 = vadd.f32 %v5901, %v6338
      %v6498 = vadd.f32 %v5906, %v6343
      %v6499 = vadd.f32 %v5911, %v6348
      %v6500 = vadd.f32 %v5916, %v6353
      %v6501 = vadd.f32 %v5921, %v6358
      %v6502 = vadd.f32 %v5926, %v6363
      %v6503 = vadd.f32 %v5931, %v6368
      %v6504 = vadd.f32 %v5936, %v6373
      %v6505 = vadd.f32 %v5941, %v6378
      %v6506 = vadd.f32 %v5946, %v6383
      %v6507 = vadd.f32 %v5951, %v6388
      %v6508 = vadd.f32 %v5956, %v6393
      %v6509 = vadd.f32 %v5961, %v6398
      %v6510 = vadd.f32 %v5966, %v6403
      %v6511 = vadd.f32 %v5971, %v6408
      %v6512 = vadd.f32 %v5976, %v6413
      %v6513 = vadd.f32 %v5981, %v6418
      %v6514 = vadd.f32 %v5986, %v6423
      %v6515 = vadd.f32 %v5991, %v6428
      %v6516 = vadd.f32 %v5996, %v6433
      %v6517 = vadd.f32 %v6001, %v6438
      %v6518 = vadd.f32 %v6006, %v6443
      %v6519 = vadd.f32 %v6011, %v6448
      %v6520 = vadd.f32 %v6016, %v6453
      %v6521 = vadd.f32 %v6021, %v6458
      %v6522 = vadd.f32 %v6026, %v6463
      %v6523 = vadd.f32 %v6031, %v6468
      %v6524 = vadd.f32 %v6036, %v6473
      %v6525 = vadd.f32 %v6041, %v6478
      %v6526 = vadd.f32 %v6046, %v6483
      %v6527 = vld [vmem:[#allocation2 + $0x17] sm:$0xff]
      %v6528 = vld [vmem:[#allocation2 + $0x1f] sm:$0xff]
      %v6529 = vld [vmem:[#allocation2 + $0x27] sm:$0xff]
      %v6530 = vld [vmem:[#allocation2 + $0x2f] sm:$0xff]
      %v6531 = vld [vmem:[#allocation2 + $0x37] sm:$0xff]
      %v6532 = vld [vmem:[#allocation2 + $0x3f] sm:$0xff]
      %v6533 = vld [vmem:[#allocation2 + $0x47] sm:$0xff]
      %v6534 = vld [vmem:[#allocation2 + $0x4f] sm:$0xff]
      %v6535 = vld [vmem:[#allocation2 + $0x57] sm:$0xff]
      %v6536 = vld [vmem:[#allocation2 + $0x5f] sm:$0xff]
      %v6537 = vld [vmem:[#allocation2 + $0x67] sm:$0xff]
      %v6538 = vld [vmem:[#allocation2 + $0x6f] sm:$0xff]
      %v6539 = vld [vmem:[#allocation2 + $0x77] sm:$0xff]
      %v6540 = vld [vmem:[#allocation2 + $0x7f] sm:$0xff]
      %v6541 = vld [vmem:[#allocation2 + $0x87] sm:$0xff]
      %v6542 = vld [vmem:[#allocation2 + $0x8f] sm:$0xff]
      %v6543 = vld [vmem:[#allocation2 + $0x97] sm:$0xff]
      %v6544 = vld [vmem:[#allocation2 + $0x9f] sm:$0xff]
      %v6545 = vld [vmem:[#allocation2 + $0xa7] sm:$0xff]
      %v6546 = vld [vmem:[#allocation2 + $0xaf] sm:$0xff]
      %v6547 = vld [vmem:[#allocation2 + $0xb7] sm:$0xff]
      %v6548 = vld [vmem:[#allocation2 + $0xbf] sm:$0xff]
      %v6549 = vld [vmem:[#allocation2 + $0xc7] sm:$0xff]
      %v6550 = vld [vmem:[#allocation2 + $0xcf] sm:$0xff]
      %v6551 = vld [vmem:[#allocation2 + $0xd7] sm:$0xff]
      %v6552 = vld [vmem:[#allocation2 + $0xdf] sm:$0xff]
      %v6553 = vld [vmem:[#allocation2 + $0xe7] sm:$0xff]
      %v6554 = vld [vmem:[#allocation2 + $0xef] sm:$0xff]
      %v6555 = vld [vmem:[#allocation2 + $0xf7] sm:$0xff]
      %v6556 = vld [vmem:[#allocation2 + $0xff] sm:$0xff]
      %v6557 = vld [vmem:[#allocation2 + $0x107] sm:$0xff]
      %v6558 = vld [vmem:[#allocation2 + $0x10f] sm:$0xff]
      %v6559 = vld [vmem:[#allocation2 + $0x117] sm:$0xff]
      %v6560 = vld [vmem:[#allocation2 + $0x11f] sm:$0xff]
      %v6561 = vld [vmem:[#allocation2 + $0x127] sm:$0xff]
      %v6562 = vld [vmem:[#allocation2 + $0x12f] sm:$0xff]
      %v6563 = vld [vmem:[#allocation2 + $0x137] sm:$0xff]
      %v6564 = vld [vmem:[#allocation2 + $0x13f] sm:$0xff]
      %v6565 = vld [vmem:[#allocation2 + $0x147] sm:$0xff]
      %v6566 = vld [vmem:[#allocation2 + $0x14f] sm:$0xff]
      %v6567 = vld [vmem:[#allocation2 + $0x157] sm:$0xf]
      %s6568 = scalar_lea.vmem %s5, 48
      %v6569 = vld [vmem:[%s6568] sm:$0xff]
      %v6570 = vld [vmem:[%s6568 + $0x8] sm:$0xff]
      %v6572 = vsel %vm5127, %v6527, 0
      %v6575 = vsel %vm5127, %v6528, 0
      %v6578 = vsel %vm5127, %v6529, 0
      %v6581 = vsel %vm5127, %v6530, 0
      %v6584 = vsel %vm5127, %v6531, 0
      %v6587 = vsel %vm5127, %v6532, 0
      %v6590 = vsel %vm5127, %v6533, 0
      %v6593 = vsel %vm5127, %v6534, 0
      %v6596 = vsel %vm5127, %v6535, 0
      %v6599 = vsel %vm5127, %v6536, 0
      %v6602 = vsel %vm5127, %v6537, 0
      %v6605 = vsel %vm5127, %v6538, 0
      %v6608 = vsel %vm5127, %v6539, 0
      %v6611 = vsel %vm5127, %v6540, 0
      %v6614 = vsel %vm5127, %v6541, 0
      %v6617 = vsel %vm5127, %v6542, 0
      %v6620 = vsel %vm5127, %v6543, 0
      %v6623 = vsel %vm5127, %v6544, 0
      %v6626 = vsel %vm5127, %v6545, 0
      %v6629 = vsel %vm5127, %v6546, 0
      %v6632 = vsel %vm5127, %v6547, 0
      %v6635 = vsel %vm5127, %v6548, 0
      %v6638 = vsel %vm5127, %v6549, 0
      %v6641 = vsel %vm5127, %v6550, 0
      %v6644 = vsel %vm5127, %v6551, 0
      %v6647 = vsel %vm5127, %v6552, 0
      %v6650 = vsel %vm5127, %v6553, 0
      %v6653 = vsel %vm5127, %v6554, 0
      %v6656 = vsel %vm5127, %v6555, 0
      %v6659 = vsel %vm5127, %v6556, 0
      %v6662 = vsel %vm5127, %v6557, 0
      %v6665 = vsel %vm5127, %v6558, 0
      %v6668 = vsel %vm5127, %v6559, 0
      %v6671 = vsel %vm5127, %v6560, 0
      %v6674 = vsel %vm5127, %v6561, 0
      %v6677 = vsel %vm5127, %v6562, 0
      %v6680 = vsel %vm5127, %v6563, 0
      %v6683 = vsel %vm5127, %v6564, 0
      %v6686 = vsel %vm5127, %v6565, 0
      %v6689 = vsel %vm5127, %v6566, 0
      %v6692 = vsel %vm5127, %v6567, 0
      %6694 = vmatprep.subr.mxu0 0.0
      %6695 = vmatpush1.msra.mxu0 %v6569
      %6696 = vmatprep.subr.mxu0 0.0
      %6697 = vmatpush1.msra.mxu0 %v6570
      %6698 = vmatprep.subr.mxu0 0.0
      %6699 = vmatpush1.msra.mxu0 0.0
      %6700 = vmatprep.subr.mxu0 0.0
      %6701 = vmatpush1.msra.mxu0 0.0
      %6702 = vmatprep.subr.mxu0 0.0
      %6703 = vmatpush1.msra.mxu0 0.0
      %6704 = vmatprep.subr.mxu0 0.0
      %6705 = vmatpush1.msra.mxu0 0.0
      %6706 = vmatprep.subr.mxu0 0.0
      %6707 = vmatpush1.msra.mxu0 0.0
      %6708 = vmatprep.subr.mxu0 0.0
      %6709 = vmatpush1.msra.mxu0 0.0
      %6710 = vmatprep.subr.mxu0 0.0
      %6711 = vmatpush1.msra.mxu0 0.0
      %6712 = vmatprep.subr.mxu0 0.0
      %6713 = vmatpush1.msra.mxu0 0.0
      %6714 = vmatprep.subr.mxu0 0.0
      %6715 = vmatpush1.msra.mxu0 0.0
      %6716 = vmatprep.subr.mxu0 0.0
      %6717 = vmatpush1.msra.mxu0 0.0
      %6718 = vmatprep.subr.mxu0 0.0
      %6719 = vmatpush1.msra.mxu0 0.0
      %6720 = vmatprep.subr.mxu0 0.0
      %6721 = vmatpush1.msra.mxu0 0.0
      %6722 = vmatprep.subr.mxu0 0.0
      %6723 = vmatpush1.msra.mxu0 0.0
      %6724 = vmatprep.subr.mxu0 0.0
      %6725 = vmatpush1.msra.mxu0 0.0
      %6726 = vmatprep.subr.mxu0 0.0
      %6727 = vmatpush1.msra.mxu0 0.0
      %6728 = vmatprep.subr.mxu0 0.0
      %6729 = vmatpush1.msra.mxu0 0.0
      %6730 = vmatprep.subr.mxu0 0.0
      %6731 = vmatpush1.msra.mxu0 0.0
      %6732 = vmatprep.subr.mxu0 0.0
      %6733 = vmatpush1.msra.mxu0 0.0
      %6734 = vmatprep.subr.mxu0 0.0
      %6735 = vmatpush1.msra.mxu0 0.0
      %6736 = vmatprep.subr.mxu0 0.0
      %6737 = vmatpush1.msra.mxu0 0.0
      %6738 = vmatprep.subr.mxu0 0.0
      %6739 = vmatpush1.msra.mxu0 0.0
      %6740 = vmatprep.subr.mxu0 0.0
      %6741 = vmatpush1.msra.mxu0 0.0
      %6742 = vmatprep.subr.mxu0 0.0
      %6743 = vmatpush1.msra.mxu0 0.0
      %6744 = vmatprep.subr.mxu0 0.0
      %6745 = vmatpush1.msra.mxu0 0.0
      %6746 = vmatprep.subr.mxu0 0.0
      %6747 = vmatpush1.msra.mxu0 0.0
      %6748 = vmatprep.subr.mxu0 0.0
      %6749 = vmatpush1.msra.mxu0 0.0
      %6750 = vmatprep.subr.mxu0 0.0
      %6751 = vmatpush1.msra.mxu0 0.0
      %6752 = vmatprep.subr.mxu0 0.0
      %6753 = vmatpush1.msra.mxu0 0.0
      %6754 = vmatprep.subr.mxu0 0.0
      %6755 = vmatpush1.msra.mxu0 0.0
      %6756 = vmatprep.subr.mxu0 0.0
      %6757 = vmatpush1.msra.mxu0 0.0
      %6758 = vmatprep.mubr.f32.mxu0 0.0
      %6759 = vmatmul.mubr.f32.gmra.mrb[0].mxu0 %v6572
      %v6760 = vpop.f32.mrb[0].mxu0
      %v6761 = vadd.f32 0.0, %v6760
      %v6762 = vpop.f32.mrb[0].mxu0
      %6763 = vmatprep.mubr.f32.mxu0 0.0
      %6764 = vmatmul.mubr.f32.gmra.mrb[0].mxu0 %v6575
      %v6765 = vpop.f32.mrb[0].mxu0
      %v6766 = vadd.f32 0.0, %v6765
      %v6767 = vpop.f32.mrb[0].mxu0
      %6768 = vmatprep.mubr.f32.mxu0 0.0
      %6769 = vmatmul.mubr.f32.gmra.mrb[0].mxu0 %v6578
      %v6770 = vpop.f32.mrb[0].mxu0
      %v6771 = vadd.f32 0.0, %v6770
      %v6772 = vpop.f32.mrb[0].mxu0
      %6773 = vmatprep.mubr.f32.mxu0 0.0
      %6774 = vmatmul.mubr.f32.gmra.mrb[0].mxu0 %v6581
      %v6775 = vpop.f32.mrb[0].mxu0
      %v6776 = vadd.f32 0.0, %v6775
      %v6777 = vpop.f32.mrb[0].mxu0
      %6778 = vmatprep.mubr.f32.mxu0 0.0
      %6779 = vmatmul.mubr.f32.gmra.mrb[0].mxu0 %v6584
      %v6780 = vpop.f32.mrb[0].mxu0
      %v6781 = vadd.f32 0.0, %v6780
      %v6782 = vpop.f32.mrb[0].mxu0
      %6783 = vmatprep.mubr.f32.mxu0 0.0
      %6784 = vmatmul.mubr.f32.gmra.mrb[0].mxu0 %v6587
      %v6785 = vpop.f32.mrb[0].mxu0
      %v6786 = vadd.f32 0.0, %v6785
      %v6787 = vpop.f32.mrb[0].mxu0
      %6788 = vmatprep.mubr.f32.mxu0 0.0
      %6789 = vmatmul.mubr.f32.gmra.mrb[0].mxu0 %v6590
      %v6790 = vpop.f32.mrb[0].mxu0
      %v6791 = vadd.f32 0.0, %v6790
      %v6792 = vpop.f32.mrb[0].mxu0
      %6793 = vmatprep.mubr.f32.mxu0 0.0
      %6794 = vmatmul.mubr.f32.gmra.mrb[0].mxu0 %v6593
      %v6795 = vpop.f32.mrb[0].mxu0
      %v6796 = vadd.f32 0.0, %v6795
      %v6797 = vpop.f32.mrb[0].mxu0
      %6798 = vmatprep.mubr.f32.mxu0 0.0
      %6799 = vmatmul.mubr.f32.gmra.mrb[0].mxu0 %v6596
      %v6800 = vpop.f32.mrb[0].mxu0
      %v6801 = vadd.f32 0.0, %v6800
      %v6802 = vpop.f32.mrb[0].mxu0
      %6803 = vmatprep.mubr.f32.mxu0 0.0
      %6804 = vmatmul.mubr.f32.gmra.mrb[0].mxu0 %v6599
      %v6805 = vpop.f32.mrb[0].mxu0
      %v6806 = vadd.f32 0.0, %v6805
      %v6807 = vpop.f32.mrb[0].mxu0
      %6808 = vmatprep.mubr.f32.mxu0 0.0
      %6809 = vmatmul.mubr.f32.gmra.mrb[0].mxu0 %v6602
      %v6810 = vpop.f32.mrb[0].mxu0
      %v6811 = vadd.f32 0.0, %v6810
      %v6812 = vpop.f32.mrb[0].mxu0
      %6813 = vmatprep.mubr.f32.mxu0 0.0
      %6814 = vmatmul.mubr.f32.gmra.mrb[0].mxu0 %v6605
      %v6815 = vpop.f32.mrb[0].mxu0
      %v6816 = vadd.f32 0.0, %v6815
      %v6817 = vpop.f32.mrb[0].mxu0
      %6818 = vmatprep.mubr.f32.mxu0 0.0
      %6819 = vmatmul.mubr.f32.gmra.mrb[0].mxu0 %v6608
      %v6820 = vpop.f32.mrb[0].mxu0
      %v6821 = vadd.f32 0.0, %v6820
      %v6822 = vpop.f32.mrb[0].mxu0
      %6823 = vmatprep.mubr.f32.mxu0 0.0
      %6824 = vmatmul.mubr.f32.gmra.mrb[0].mxu0 %v6611
      %v6825 = vpop.f32.mrb[0].mxu0
      %v6826 = vadd.f32 0.0, %v6825
      %v6827 = vpop.f32.mrb[0].mxu0
      %6828 = vmatprep.mubr.f32.mxu0 0.0
      %6829 = vmatmul.mubr.f32.gmra.mrb[0].mxu0 %v6614
      %v6830 = vpop.f32.mrb[0].mxu0
      %v6831 = vadd.f32 0.0, %v6830
      %v6832 = vpop.f32.mrb[0].mxu0
      %6833 = vmatprep.mubr.f32.mxu0 0.0
      %6834 = vmatmul.mubr.f32.gmra.mrb[0].mxu0 %v6617
      %v6835 = vpop.f32.mrb[0].mxu0
      %v6836 = vadd.f32 0.0, %v6835
      %v6837 = vpop.f32.mrb[0].mxu0
      %6838 = vmatprep.mubr.f32.mxu0 0.0
      %6839 = vmatmul.mubr.f32.gmra.mrb[0].mxu0 %v6620
      %v6840 = vpop.f32.mrb[0].mxu0
      %v6841 = vadd.f32 0.0, %v6840
      %v6842 = vpop.f32.mrb[0].mxu0
      %6843 = vmatprep.mubr.f32.mxu0 0.0
      %6844 = vmatmul.mubr.f32.gmra.mrb[0].mxu0 %v6623
      %v6845 = vpop.f32.mrb[0].mxu0
      %v6846 = vadd.f32 0.0, %v6845
      %v6847 = vpop.f32.mrb[0].mxu0
      %6848 = vmatprep.mubr.f32.mxu0 0.0
      %6849 = vmatmul.mubr.f32.gmra.mrb[0].mxu0 %v6626
      %v6850 = vpop.f32.mrb[0].mxu0
      %v6851 = vadd.f32 0.0, %v6850
      %v6852 = vpop.f32.mrb[0].mxu0
      %6853 = vmatprep.mubr.f32.mxu0 0.0
      %6854 = vmatmul.mubr.f32.gmra.mrb[0].mxu0 %v6629
      %v6855 = vpop.f32.mrb[0].mxu0
      %v6856 = vadd.f32 0.0, %v6855
      %v6857 = vpop.f32.mrb[0].mxu0
      %6858 = vmatprep.mubr.f32.mxu0 0.0
      %6859 = vmatmul.mubr.f32.gmra.mrb[0].mxu0 %v6632
      %v6860 = vpop.f32.mrb[0].mxu0
      %v6861 = vadd.f32 0.0, %v6860
      %v6862 = vpop.f32.mrb[0].mxu0
      %6863 = vmatprep.mubr.f32.mxu0 0.0
      %6864 = vmatmul.mubr.f32.gmra.mrb[0].mxu0 %v6635
      %v6865 = vpop.f32.mrb[0].mxu0
      %v6866 = vadd.f32 0.0, %v6865
      %v6867 = vpop.f32.mrb[0].mxu0
      %6868 = vmatprep.mubr.f32.mxu0 0.0
      %6869 = vmatmul.mubr.f32.gmra.mrb[0].mxu0 %v6638
      %v6870 = vpop.f32.mrb[0].mxu0
      %v6871 = vadd.f32 0.0, %v6870
      %v6872 = vpop.f32.mrb[0].mxu0
      %6873 = vmatprep.mubr.f32.mxu0 0.0
      %6874 = vmatmul.mubr.f32.gmra.mrb[0].mxu0 %v6641
      %v6875 = vpop.f32.mrb[0].mxu0
      %v6876 = vadd.f32 0.0, %v6875
      %v6877 = vpop.f32.mrb[0].mxu0
      %6878 = vmatprep.mubr.f32.mxu0 0.0
      %6879 = vmatmul.mubr.f32.gmra.mrb[0].mxu0 %v6644
      %v6880 = vpop.f32.mrb[0].mxu0
      %v6881 = vadd.f32 0.0, %v6880
      %v6882 = vpop.f32.mrb[0].mxu0
      %6883 = vmatprep.mubr.f32.mxu0 0.0
      %6884 = vmatmul.mubr.f32.gmra.mrb[0].mxu0 %v6647
      %v6885 = vpop.f32.mrb[0].mxu0
      %v6886 = vadd.f32 0.0, %v6885
      %v6887 = vpop.f32.mrb[0].mxu0
      %6888 = vmatprep.mubr.f32.mxu0 0.0
      %6889 = vmatmul.mubr.f32.gmra.mrb[0].mxu0 %v6650
      %v6890 = vpop.f32.mrb[0].mxu0
      %v6891 = vadd.f32 0.0, %v6890
      %v6892 = vpop.f32.mrb[0].mxu0
      %6893 = vmatprep.mubr.f32.mxu0 0.0
      %6894 = vmatmul.mubr.f32.gmra.mrb[0].mxu0 %v6653
      %v6895 = vpop.f32.mrb[0].mxu0
      %v6896 = vadd.f32 0.0, %v6895
      %v6897 = vpop.f32.mrb[0].mxu0
      %6898 = vmatprep.mubr.f32.mxu0 0.0
      %6899 = vmatmul.mubr.f32.gmra.mrb[0].mxu0 %v6656
      %v6900 = vpop.f32.mrb[0].mxu0
      %v6901 = vadd.f32 0.0, %v6900
      %v6902 = vpop.f32.mrb[0].mxu0
      %6903 = vmatprep.mubr.f32.mxu0 0.0
      %6904 = vmatmul.mubr.f32.gmra.mrb[0].mxu0 %v6659
      %v6905 = vpop.f32.mrb[0].mxu0
      %v6906 = vadd.f32 0.0, %v6905
      %v6907 = vpop.f32.mrb[0].mxu0
      %6908 = vmatprep.mubr.f32.mxu0 0.0
      %6909 = vmatmul.mubr.f32.gmra.mrb[0].mxu0 %v6662
      %v6910 = vpop.f32.mrb[0].mxu0
      %v6911 = vadd.f32 0.0, %v6910
      %v6912 = vpop.f32.mrb[0].mxu0
      %6913 = vmatprep.mubr.f32.mxu0 0.0
      %6914 = vmatmul.mubr.f32.gmra.mrb[0].mxu0 %v6665
      %v6915 = vpop.f32.mrb[0].mxu0
      %v6916 = vadd.f32 0.0, %v6915
      %v6917 = vpop.f32.mrb[0].mxu0
      %6918 = vmatprep.mubr.f32.mxu0 0.0
      %6919 = vmatmul.mubr.f32.gmra.mrb[0].mxu0 %v6668
      %v6920 = vpop.f32.mrb[0].mxu0
      %v6921 = vadd.f32 0.0, %v6920
      %v6922 = vpop.f32.mrb[0].mxu0
      %6923 = vmatprep.mubr.f32.mxu0 0.0
      %6924 = vmatmul.mubr.f32.gmra.mrb[0].mxu0 %v6671
      %v6925 = vpop.f32.mrb[0].mxu0
      %v6926 = vadd.f32 0.0, %v6925
      %v6927 = vpop.f32.mrb[0].mxu0
      %6928 = vmatprep.mubr.f32.mxu0 0.0
      %6929 = vmatmul.mubr.f32.gmra.mrb[0].mxu0 %v6674
      %v6930 = vpop.f32.mrb[0].mxu0
      %v6931 = vadd.f32 0.0, %v6930
      %v6932 = vpop.f32.mrb[0].mxu0
      %6933 = vmatprep.mubr.f32.mxu0 0.0
      %6934 = vmatmul.mubr.f32.gmra.mrb[0].mxu0 %v6677
      %v6935 = vpop.f32.mrb[0].mxu0
      %v6936 = vadd.f32 0.0, %v6935
      %v6937 = vpop.f32.mrb[0].mxu0
      %6938 = vmatprep.mubr.f32.mxu0 0.0
      %6939 = vmatmul.mubr.f32.gmra.mrb[0].mxu0 %v6680
      %v6940 = vpop.f32.mrb[0].mxu0
      %v6941 = vadd.f32 0.0, %v6940
      %v6942 = vpop.f32.mrb[0].mxu0
      %6943 = vmatprep.mubr.f32.mxu0 0.0
      %6944 = vmatmul.mubr.f32.gmra.mrb[0].mxu0 %v6683
      %v6945 = vpop.f32.mrb[0].mxu0
      %v6946 = vadd.f32 0.0, %v6945
      %v6947 = vpop.f32.mrb[0].mxu0
      %6948 = vmatprep.mubr.f32.mxu0 0.0
      %6949 = vmatmul.mubr.f32.gmra.mrb[0].mxu0 %v6686
      %v6950 = vpop.f32.mrb[0].mxu0
      %v6951 = vadd.f32 0.0, %v6950
      %v6952 = vpop.f32.mrb[0].mxu0
      %6953 = vmatprep.mubr.f32.mxu0 0.0
      %6954 = vmatmul.mubr.f32.gmra.mrb[0].mxu0 %v6689
      %v6955 = vpop.f32.mrb[0].mxu0
      %v6956 = vadd.f32 0.0, %v6955
      %v6957 = vpop.f32.mrb[0].mxu0
      %6958 = vmatprep.mubr.f32.mxu0 0.0
      %6959 = vmatmul.mubr.f32.gmra.mrb[0].mxu0 %v6692
      %v6960 = vpop.f32.mrb[0].mxu0
      %v6961 = vadd.f32 0.0, %v6960
      %v6962 = vpop.f32.mrb[0].mxu0
      %6963 = vdwg.mxu0
      %v6964 = vadd.f32 %v6486, %v6761
      %v6965 = vadd.f32 %v6487, %v6766
      %v6966 = vadd.f32 %v6488, %v6771
      %v6967 = vadd.f32 %v6489, %v6776
      %v6968 = vadd.f32 %v6490, %v6781
      %v6969 = vadd.f32 %v6491, %v6786
      %v6970 = vadd.f32 %v6492, %v6791
      %v6971 = vadd.f32 %v6493, %v6796
      %v6972 = vadd.f32 %v6494, %v6801
      %v6973 = vadd.f32 %v6495, %v6806
      %v6974 = vadd.f32 %v6496, %v6811
      %v6975 = vadd.f32 %v6497, %v6816
      %v6976 = vadd.f32 %v6498, %v6821
      %v6977 = vadd.f32 %v6499, %v6826
      %v6978 = vadd.f32 %v6500, %v6831
      %v6979 = vadd.f32 %v6501, %v6836
      %v6980 = vadd.f32 %v6502, %v6841
      %v6981 = vadd.f32 %v6503, %v6846
      %v6982 = vadd.f32 %v6504, %v6851
      %v6983 = vadd.f32 %v6505, %v6856
      %v6984 = vadd.f32 %v6506, %v6861
      %v6985 = vadd.f32 %v6507, %v6866
      %v6986 = vadd.f32 %v6508, %v6871
      %v6987 = vadd.f32 %v6509, %v6876
      %v6988 = vadd.f32 %v6510, %v6881
      %v6989 = vadd.f32 %v6511, %v6886
      %v6990 = vadd.f32 %v6512, %v6891
      %v6991 = vadd.f32 %v6513, %v6896
      %v6992 = vadd.f32 %v6514, %v6901
      %v6993 = vadd.f32 %v6515, %v6906
      %v6994 = vadd.f32 %v6516, %v6911
      %v6995 = vadd.f32 %v6517, %v6916
      %v6996 = vadd.f32 %v6518, %v6921
      %v6997 = vadd.f32 %v6519, %v6926
      %v6998 = vadd.f32 %v6520, %v6931
      %v6999 = vadd.f32 %v6521, %v6936
      %v7000 = vadd.f32 %v6522, %v6941
      %v7001 = vadd.f32 %v6523, %v6946
      %v7002 = vadd.f32 %v6524, %v6951
      %v7003 = vadd.f32 %v6525, %v6956
      %v7004 = vadd.f32 %v6526, %v6961
      %v7005 = vld [vmem:[#allocation2 + $0x18] sm:$0xff]
      %v7006 = vld [vmem:[#allocation2 + $0x20] sm:$0xff]
      %v7007 = vld [vmem:[#allocation2 + $0x28] sm:$0xff]
      %v7008 = vld [vmem:[#allocation2 + $0x30] sm:$0xff]
      %v7009 = vld [vmem:[#allocation2 + $0x38] sm:$0xff]
      %v7010 = vld [vmem:[#allocation2 + $0x40] sm:$0xff]
      %v7011 = vld [vmem:[#allocation2 + $0x48] sm:$0xff]
      %v7012 = vld [vmem:[#allocation2 + $0x50] sm:$0xff]
      %v7013 = vld [vmem:[#allocation2 + $0x58] sm:$0xff]
      %v7014 = vld [vmem:[#allocation2 + $0x60] sm:$0xff]
      %v7015 = vld [vmem:[#allocation2 + $0x68] sm:$0xff]
      %v7016 = vld [vmem:[#allocation2 + $0x70] sm:$0xff]
      %v7017 = vld [vmem:[#allocation2 + $0x78] sm:$0xff]
      %v7018 = vld [vmem:[#allocation2 + $0x80] sm:$0xff]
      %v7019 = vld [vmem:[#allocation2 + $0x88] sm:$0xff]
      %v7020 = vld [vmem:[#allocation2 + $0x90] sm:$0xff]
      %v7021 = vld [vmem:[#allocation2 + $0x98] sm:$0xff]
      %v7022 = vld [vmem:[#allocation2 + $0xa0] sm:$0xff]
      %v7023 = vld [vmem:[#allocation2 + $0xa8] sm:$0xff]
      %v7024 = vld [vmem:[#allocation2 + $0xb0] sm:$0xff]
      %v7025 = vld [vmem:[#allocation2 + $0xb8] sm:$0xff]
      %v7026 = vld [vmem:[#allocation2 + $0xc0] sm:$0xff]
      %v7027 = vld [vmem:[#allocation2 + $0xc8] sm:$0xff]
      %v7028 = vld [vmem:[#allocation2 + $0xd0] sm:$0xff]
      %v7029 = vld [vmem:[#allocation2 + $0xd8] sm:$0xff]
      %v7030 = vld [vmem:[#allocation2 + $0xe0] sm:$0xff]
      %v7031 = vld [vmem:[#allocation2 + $0xe8] sm:$0xff]
      %v7032 = vld [vmem:[#allocation2 + $0xf0] sm:$0xff]
      %v7033 = vld [vmem:[#allocation2 + $0xf8] sm:$0xff]
      %v7034 = vld [vmem:[#allocation2 + $0x100] sm:$0xff]
      %v7035 = vld [vmem:[#allocation2 + $0x108] sm:$0xff]
      %v7036 = vld [vmem:[#allocation2 + $0x110] sm:$0xff]
      %v7037 = vld [vmem:[#allocation2 + $0x118] sm:$0xff]
      %v7038 = vld [vmem:[#allocation2 + $0x120] sm:$0xff]
      %v7039 = vld [vmem:[#allocation2 + $0x128] sm:$0xff]
      %v7040 = vld [vmem:[#allocation2 + $0x130] sm:$0xff]
      %v7041 = vld [vmem:[#allocation2 + $0x138] sm:$0xff]
      %v7042 = vld [vmem:[#allocation2 + $0x140] sm:$0xff]
      %v7043 = vld [vmem:[#allocation2 + $0x148] sm:$0xff]
      %v7044 = vld [vmem:[#allocation2 + $0x150] sm:$0xff]
      %v7045 = vld [vmem:[#allocation2 + $0x158] sm:$0xf]
      %s7046 = scalar_lea.vmem %s5, 64
      %v7047 = vld [vmem:[%s7046] sm:$0xff]
      %v7048 = vld [vmem:[%s7046 + $0x8] sm:$0xff]
      %v7050 = vsel %vm5127, %v7005, 0
      %v7053 = vsel %vm5127, %v7006, 0
      %v7056 = vsel %vm5127, %v7007, 0
      %v7059 = vsel %vm5127, %v7008, 0
      %v7062 = vsel %vm5127, %v7009, 0
      %v7065 = vsel %vm5127, %v7010, 0
      %v7068 = vsel %vm5127, %v7011, 0
      %v7071 = vsel %vm5127, %v7012, 0
      %v7074 = vsel %vm5127, %v7013, 0
      %v7077 = vsel %vm5127, %v7014, 0
      %v7080 = vsel %vm5127, %v7015, 0
      %v7083 = vsel %vm5127, %v7016, 0
      %v7086 = vsel %vm5127, %v7017, 0
      %v7089 = vsel %vm5127, %v7018, 0
      %v7092 = vsel %vm5127, %v7019, 0
      %v7095 = vsel %vm5127, %v7020, 0
      %v7098 = vsel %vm5127, %v7021, 0
      %v7101 = vsel %vm5127, %v7022, 0
      %v7104 = vsel %vm5127, %v7023, 0
      %v7107 = vsel %vm5127, %v7024, 0
      %v7110 = vsel %vm5127, %v7025, 0
      %v7113 = vsel %vm5127, %v7026, 0
      %v7116 = vsel %vm5127, %v7027, 0
      %v7119 = vsel %vm5127, %v7028, 0
      %v7122 = vsel %vm5127, %v7029, 0
      %v7125 = vsel %vm5127, %v7030, 0
      %v7128 = vsel %vm5127, %v7031, 0
      %v7131 = vsel %vm5127, %v7032, 0
      %v7134 = vsel %vm5127, %v7033, 0
      %v7137 = vsel %vm5127, %v7034, 0
      %v7140 = vsel %vm5127, %v7035, 0
      %v7143 = vsel %vm5127, %v7036, 0
      %v7146 = vsel %vm5127, %v7037, 0
      %v7149 = vsel %vm5127, %v7038, 0
      %v7152 = vsel %vm5127, %v7039, 0
      %v7155 = vsel %vm5127, %v7040, 0
      %v7158 = vsel %vm5127, %v7041, 0
      %v7161 = vsel %vm5127, %v7042, 0
      %v7164 = vsel %vm5127, %v7043, 0
      %v7167 = vsel %vm5127, %v7044, 0
      %v7170 = vsel %vm5127, %v7045, 0
      %7172 = vmatprep.subr.mxu0 0.0
      %7173 = vmatpush1.msra.mxu0 %v7047
      %7174 = vmatprep.subr.mxu0 0.0
      %7175 = vmatpush1.msra.mxu0 %v7048
      %7176 = vmatprep.subr.mxu0 0.0
      %7177 = vmatpush1.msra.mxu0 0.0
      %7178 = vmatprep.subr.mxu0 0.0
      %7179 = vmatpush1.msra.mxu0 0.0
      %7180 = vmatprep.subr.mxu0 0.0
      %7181 = vmatpush1.msra.mxu0 0.0
      %7182 = vmatprep.subr.mxu0 0.0
      %7183 = vmatpush1.msra.mxu0 0.0
      %7184 = vmatprep.subr.mxu0 0.0
      %7185 = vmatpush1.msra.mxu0 0.0
      %7186 = vmatprep.subr.mxu0 0.0
      %7187 = vmatpush1.msra.mxu0 0.0
      %7188 = vmatprep.subr.mxu0 0.0
      %7189 = vmatpush1.msra.mxu0 0.0
      %7190 = vmatprep.subr.mxu0 0.0
      %7191 = vmatpush1.msra.mxu0 0.0
      %7192 = vmatprep.subr.mxu0 0.0
      %7193 = vmatpush1.msra.mxu0 0.0
      %7194 = vmatprep.subr.mxu0 0.0
      %7195 = vmatpush1.msra.mxu0 0.0
      %7196 = vmatprep.subr.mxu0 0.0
      %7197 = vmatpush1.msra.mxu0 0.0
      %7198 = vmatprep.subr.mxu0 0.0
      %7199 = vmatpush1.msra.mxu0 0.0
      %7200 = vmatprep.subr.mxu0 0.0
      %7201 = vmatpush1.msra.mxu0 0.0
      %7202 = vmatprep.subr.mxu0 0.0
      %7203 = vmatpush1.msra.mxu0 0.0
      %7204 = vmatprep.subr.mxu0 0.0
      %7205 = vmatpush1.msra.mxu0 0.0
      %7206 = vmatprep.subr.mxu0 0.0
      %7207 = vmatpush1.msra.mxu0 0.0
      %7208 = vmatprep.subr.mxu0 0.0
      %7209 = vmatpush1.msra.mxu0 0.0
      %7210 = vmatprep.subr.mxu0 0.0
      %7211 = vmatpush1.msra.mxu0 0.0
      %7212 = vmatprep.subr.mxu0 0.0
      %7213 = vmatpush1.msra.mxu0 0.0
      %7214 = vmatprep.subr.mxu0 0.0
      %7215 = vmatpush1.msra.mxu0 0.0
      %7216 = vmatprep.subr.mxu0 0.0
      %7217 = vmatpush1.msra.mxu0 0.0
      %7218 = vmatprep.subr.mxu0 0.0
      %7219 = vmatpush1.msra.mxu0 0.0
      %7220 = vmatprep.subr.mxu0 0.0
      %7221 = vmatpush1.msra.mxu0 0.0
      %7222 = vmatprep.subr.mxu0 0.0
      %7223 = vmatpush1.msra.mxu0 0.0
      %7224 = vmatprep.subr.mxu0 0.0
      %7225 = vmatpush1.msra.mxu0 0.0
      %7226 = vmatprep.subr.mxu0 0.0
      %7227 = vmatpush1.msra.mxu0 0.0
      %7228 = vmatprep.subr.mxu0 0.0
      %7229 = vmatpush1.msra.mxu0 0.0
      %7230 = vmatprep.subr.mxu0 0.0
      %7231 = vmatpush1.msra.mxu0 0.0
      %7232 = vmatprep.subr.mxu0 0.0
      %7233 = vmatpush1.msra.mxu0 0.0
      %7234 = vmatprep.subr.mxu0 0.0
      %7235 = vmatpush1.msra.mxu0 0.0
      %7236 = vmatprep.mubr.f32.mxu0 0.0
      %7237 = vmatmul.mubr.f32.gmra.mrb[0].mxu0 %v7050
      %v7238 = vpop.f32.mrb[0].mxu0
      %v7239 = vadd.f32 0.0, %v7238
      %v7240 = vpop.f32.mrb[0].mxu0
      %7241 = vmatprep.mubr.f32.mxu0 0.0
      %7242 = vmatmul.mubr.f32.gmra.mrb[0].mxu0 %v7053
      %v7243 = vpop.f32.mrb[0].mxu0
      %v7244 = vadd.f32 0.0, %v7243
      %v7245 = vpop.f32.mrb[0].mxu0
      %7246 = vmatprep.mubr.f32.mxu0 0.0
      %7247 = vmatmul.mubr.f32.gmra.mrb[0].mxu0 %v7056
      %v7248 = vpop.f32.mrb[0].mxu0
      %v7249 = vadd.f32 0.0, %v7248
      %v7250 = vpop.f32.mrb[0].mxu0
      %7251 = vmatprep.mubr.f32.mxu0 0.0
      %7252 = vmatmul.mubr.f32.gmra.mrb[0].mxu0 %v7059
      %v7253 = vpop.f32.mrb[0].mxu0
      %v7254 = vadd.f32 0.0, %v7253
      %v7255 = vpop.f32.mrb[0].mxu0
      %7256 = vmatprep.mubr.f32.mxu0 0.0
      %7257 = vmatmul.mubr.f32.gmra.mrb[0].mxu0 %v7062
      %v7258 = vpop.f32.mrb[0].mxu0
      %v7259 = vadd.f32 0.0, %v7258
      %v7260 = vpop.f32.mrb[0].mxu0
      %7261 = vmatprep.mubr.f32.mxu0 0.0
      %7262 = vmatmul.mubr.f32.gmra.mrb[0].mxu0 %v7065
      %v7263 = vpop.f32.mrb[0].mxu0
      %v7264 = vadd.f32 0.0, %v7263
      %v7265 = vpop.f32.mrb[0].mxu0
      %7266 = vmatprep.mubr.f32.mxu0 0.0
      %7267 = vmatmul.mubr.f32.gmra.mrb[0].mxu0 %v7068
      %v7268 = vpop.f32.mrb[0].mxu0
      %v7269 = vadd.f32 0.0, %v7268
      %v7270 = vpop.f32.mrb[0].mxu0
      %7271 = vmatprep.mubr.f32.mxu0 0.0
      %7272 = vmatmul.mubr.f32.gmra.mrb[0].mxu0 %v7071
      %v7273 = vpop.f32.mrb[0].mxu0
      %v7274 = vadd.f32 0.0, %v7273
      %v7275 = vpop.f32.mrb[0].mxu0
      %7276 = vmatprep.mubr.f32.mxu0 0.0
      %7277 = vmatmul.mubr.f32.gmra.mrb[0].mxu0 %v7074
      %v7278 = vpop.f32.mrb[0].mxu0
      %v7279 = vadd.f32 0.0, %v7278
      %v7280 = vpop.f32.mrb[0].mxu0
      %7281 = vmatprep.mubr.f32.mxu0 0.0
      %7282 = vmatmul.mubr.f32.gmra.mrb[0].mxu0 %v7077
      %v7283 = vpop.f32.mrb[0].mxu0
      %v7284 = vadd.f32 0.0, %v7283
      %v7285 = vpop.f32.mrb[0].mxu0
      %7286 = vmatprep.mubr.f32.mxu0 0.0
      %7287 = vmatmul.mubr.f32.gmra.mrb[0].mxu0 %v7080
      %v7288 = vpop.f32.mrb[0].mxu0
      %v7289 = vadd.f32 0.0, %v7288
      %v7290 = vpop.f32.mrb[0].mxu0
      %7291 = vmatprep.mubr.f32.mxu0 0.0
      %7292 = vmatmul.mubr.f32.gmra.mrb[0].mxu0 %v7083
      %v7293 = vpop.f32.mrb[0].mxu0
      %v7294 = vadd.f32 0.0, %v7293
      %v7295 = vpop.f32.mrb[0].mxu0
      %7296 = vmatprep.mubr.f32.mxu0 0.0
      %7297 = vmatmul.mubr.f32.gmra.mrb[0].mxu0 %v7086
      %v7298 = vpop.f32.mrb[0].mxu0
      %v7299 = vadd.f32 0.0, %v7298
      %v7300 = vpop.f32.mrb[0].mxu0
      %7301 = vmatprep.mubr.f32.mxu0 0.0
      %7302 = vmatmul.mubr.f32.gmra.mrb[0].mxu0 %v7089
      %v7303 = vpop.f32.mrb[0].mxu0
      %v7304 = vadd.f32 0.0, %v7303
      %v7305 = vpop.f32.mrb[0].mxu0
      %7306 = vmatprep.mubr.f32.mxu0 0.0
      %7307 = vmatmul.mubr.f32.gmra.mrb[0].mxu0 %v7092
      %v7308 = vpop.f32.mrb[0].mxu0
      %v7309 = vadd.f32 0.0, %v7308
      %v7310 = vpop.f32.mrb[0].mxu0
      %7311 = vmatprep.mubr.f32.mxu0 0.0
      %7312 = vmatmul.mubr.f32.gmra.mrb[0].mxu0 %v7095
      %v7313 = vpop.f32.mrb[0].mxu0
      %v7314 = vadd.f32 0.0, %v7313
      %v7315 = vpop.f32.mrb[0].mxu0
      %7316 = vmatprep.mubr.f32.mxu0 0.0
      %7317 = vmatmul.mubr.f32.gmra.mrb[0].mxu0 %v7098
      %v7318 = vpop.f32.mrb[0].mxu0
      %v7319 = vadd.f32 0.0, %v7318
      %v7320 = vpop.f32.mrb[0].mxu0
      %7321 = vmatprep.mubr.f32.mxu0 0.0
      %7322 = vmatmul.mubr.f32.gmra.mrb[0].mxu0 %v7101
      %v7323 = vpop.f32.mrb[0].mxu0
      %v7324 = vadd.f32 0.0, %v7323
      %v7325 = vpop.f32.mrb[0].mxu0
      %7326 = vmatprep.mubr.f32.mxu0 0.0
      %7327 = vmatmul.mubr.f32.gmra.mrb[0].mxu0 %v7104
      %v7328 = vpop.f32.mrb[0].mxu0
      %v7329 = vadd.f32 0.0, %v7328
      %v7330 = vpop.f32.mrb[0].mxu0
      %7331 = vmatprep.mubr.f32.mxu0 0.0
      %7332 = vmatmul.mubr.f32.gmra.mrb[0].mxu0 %v7107
      %v7333 = vpop.f32.mrb[0].mxu0
      %v7334 = vadd.f32 0.0, %v7333
      %v7335 = vpop.f32.mrb[0].mxu0
      %7336 = vmatprep.mubr.f32.mxu0 0.0
      %7337 = vmatmul.mubr.f32.gmra.mrb[0].mxu0 %v7110
      %v7338 = vpop.f32.mrb[0].mxu0
      %v7339 = vadd.f32 0.0, %v7338
      %v7340 = vpop.f32.mrb[0].mxu0
      %7341 = vmatprep.mubr.f32.mxu0 0.0
      %7342 = vmatmul.mubr.f32.gmra.mrb[0].mxu0 %v7113
      %v7343 = vpop.f32.mrb[0].mxu0
      %v7344 = vadd.f32 0.0, %v7343
      %v7345 = vpop.f32.mrb[0].mxu0
      %7346 = vmatprep.mubr.f32.mxu0 0.0
      %7347 = vmatmul.mubr.f32.gmra.mrb[0].mxu0 %v7116
      %v7348 = vpop.f32.mrb[0].mxu0
      %v7349 = vadd.f32 0.0, %v7348
      %v7350 = vpop.f32.mrb[0].mxu0
      %7351 = vmatprep.mubr.f32.mxu0 0.0
      %7352 = vmatmul.mubr.f32.gmra.mrb[0].mxu0 %v7119
      %v7353 = vpop.f32.mrb[0].mxu0
      %v7354 = vadd.f32 0.0, %v7353
      %v7355 = vpop.f32.mrb[0].mxu0
      %7356 = vmatprep.mubr.f32.mxu0 0.0
      %7357 = vmatmul.mubr.f32.gmra.mrb[0].mxu0 %v7122
      %v7358 = vpop.f32.mrb[0].mxu0
      %v7359 = vadd.f32 0.0, %v7358
      %v7360 = vpop.f32.mrb[0].mxu0
      %7361 = vmatprep.mubr.f32.mxu0 0.0
      %7362 = vmatmul.mubr.f32.gmra.mrb[0].mxu0 %v7125
      %v7363 = vpop.f32.mrb[0].mxu0
      %v7364 = vadd.f32 0.0, %v7363
      %v7365 = vpop.f32.mrb[0].mxu0
      %7366 = vmatprep.mubr.f32.mxu0 0.0
      %7367 = vmatmul.mubr.f32.gmra.mrb[0].mxu0 %v7128
      %v7368 = vpop.f32.mrb[0].mxu0
      %v7369 = vadd.f32 0.0, %v7368
      %v7370 = vpop.f32.mrb[0].mxu0
      %7371 = vmatprep.mubr.f32.mxu0 0.0
      %7372 = vmatmul.mubr.f32.gmra.mrb[0].mxu0 %v7131
      %v7373 = vpop.f32.mrb[0].mxu0
      %v7374 = vadd.f32 0.0, %v7373
      %v7375 = vpop.f32.mrb[0].mxu0
      %7376 = vmatprep.mubr.f32.mxu0 0.0
      %7377 = vmatmul.mubr.f32.gmra.mrb[0].mxu0 %v7134
      %v7378 = vpop.f32.mrb[0].mxu0
      %v7379 = vadd.f32 0.0, %v7378
      %v7380 = vpop.f32.mrb[0].mxu0
      %7381 = vmatprep.mubr.f32.mxu0 0.0
      %7382 = vmatmul.mubr.f32.gmra.mrb[0].mxu0 %v7137
      %v7383 = vpop.f32.mrb[0].mxu0
      %v7384 = vadd.f32 0.0, %v7383
      %v7385 = vpop.f32.mrb[0].mxu0
      %7386 = vmatprep.mubr.f32.mxu0 0.0
      %7387 = vmatmul.mubr.f32.gmra.mrb[0].mxu0 %v7140
      %v7388 = vpop.f32.mrb[0].mxu0
      %v7389 = vadd.f32 0.0, %v7388
      %v7390 = vpop.f32.mrb[0].mxu0
      %7391 = vmatprep.mubr.f32.mxu0 0.0
      %7392 = vmatmul.mubr.f32.gmra.mrb[0].mxu0 %v7143
      %v7393 = vpop.f32.mrb[0].mxu0
      %v7394 = vadd.f32 0.0, %v7393
      %v7395 = vpop.f32.mrb[0].mxu0
      %7396 = vmatprep.mubr.f32.mxu0 0.0
      %7397 = vmatmul.mubr.f32.gmra.mrb[0].mxu0 %v7146
      %v7398 = vpop.f32.mrb[0].mxu0
      %v7399 = vadd.f32 0.0, %v7398
      %v7400 = vpop.f32.mrb[0].mxu0
      %7401 = vmatprep.mubr.f32.mxu0 0.0
      %7402 = vmatmul.mubr.f32.gmra.mrb[0].mxu0 %v7149
      %v7403 = vpop.f32.mrb[0].mxu0
      %v7404 = vadd.f32 0.0, %v7403
      %v7405 = vpop.f32.mrb[0].mxu0
      %7406 = vmatprep.mubr.f32.mxu0 0.0
      %7407 = vmatmul.mubr.f32.gmra.mrb[0].mxu0 %v7152
      %v7408 = vpop.f32.mrb[0].mxu0
      %v7409 = vadd.f32 0.0, %v7408
      %v7410 = vpop.f32.mrb[0].mxu0
      %7411 = vmatprep.mubr.f32.mxu0 0.0
      %7412 = vmatmul.mubr.f32.gmra.mrb[0].mxu0 %v7155
      %v7413 = vpop.f32.mrb[0].mxu0
      %v7414 = vadd.f32 0.0, %v7413
      %v7415 = vpop.f32.mrb[0].mxu0
      %7416 = vmatprep.mubr.f32.mxu0 0.0
      %7417 = vmatmul.mubr.f32.gmra.mrb[0].mxu0 %v7158
      %v7418 = vpop.f32.mrb[0].mxu0
      %v7419 = vadd.f32 0.0, %v7418
      %v7420 = vpop.f32.mrb[0].mxu0
      %7421 = vmatprep.mubr.f32.mxu0 0.0
      %7422 = vmatmul.mubr.f32.gmra.mrb[0].mxu0 %v7161
      %v7423 = vpop.f32.mrb[0].mxu0
      %v7424 = vadd.f32 0.0, %v7423
      %v7425 = vpop.f32.mrb[0].mxu0
      %7426 = vmatprep.mubr.f32.mxu0 0.0
      %7427 = vmatmul.mubr.f32.gmra.mrb[0].mxu0 %v7164
      %v7428 = vpop.f32.mrb[0].mxu0
      %v7429 = vadd.f32 0.0, %v7428
      %v7430 = vpop.f32.mrb[0].mxu0
      %7431 = vmatprep.mubr.f32.mxu0 0.0
      %7432 = vmatmul.mubr.f32.gmra.mrb[0].mxu0 %v7167
      %v7433 = vpop.f32.mrb[0].mxu0
      %v7434 = vadd.f32 0.0, %v7433
      %v7435 = vpop.f32.mrb[0].mxu0
      %7436 = vmatprep.mubr.f32.mxu0 0.0
      %7437 = vmatmul.mubr.f32.gmra.mrb[0].mxu0 %v7170
      %v7438 = vpop.f32.mrb[0].mxu0
      %v7439 = vadd.f32 0.0, %v7438
      %v7440 = vpop.f32.mrb[0].mxu0
      %7441 = vdwg.mxu0
      %v7442 = vadd.f32 %v6964, %v7239
      %v7443 = vadd.f32 %v6965, %v7244
      %v7444 = vadd.f32 %v6966, %v7249
      %v7445 = vadd.f32 %v6967, %v7254
      %v7446 = vadd.f32 %v6968, %v7259
      %v7447 = vadd.f32 %v6969, %v7264
      %v7448 = vadd.f32 %v6970, %v7269
      %v7449 = vadd.f32 %v6971, %v7274
      %v7450 = vadd.f32 %v6972, %v7279
      %v7451 = vadd.f32 %v6973, %v7284
      %v7452 = vadd.f32 %v6974, %v7289
      %v7453 = vadd.f32 %v6975, %v7294
      %v7454 = vadd.f32 %v6976, %v7299
      %v7455 = vadd.f32 %v6977, %v7304
      %v7456 = vadd.f32 %v6978, %v7309
      %v7457 = vadd.f32 %v6979, %v7314
      %v7458 = vadd.f32 %v6980, %v7319
      %v7459 = vadd.f32 %v6981, %v7324
      %v7460 = vadd.f32 %v6982, %v7329
      %v7461 = vadd.f32 %v6983, %v7334
      %v7462 = vadd.f32 %v6984, %v7339
      %v7463 = vadd.f32 %v6985, %v7344
      %v7464 = vadd.f32 %v6986, %v7349
      %v7465 = vadd.f32 %v6987, %v7354
      %v7466 = vadd.f32 %v6988, %v7359
      %v7467 = vadd.f32 %v6989, %v7364
      %v7468 = vadd.f32 %v6990, %v7369
      %v7469 = vadd.f32 %v6991, %v7374
      %v7470 = vadd.f32 %v6992, %v7379
      %v7471 = vadd.f32 %v6993, %v7384
      %v7472 = vadd.f32 %v6994, %v7389
      %v7473 = vadd.f32 %v6995, %v7394
      %v7474 = vadd.f32 %v6996, %v7399
      %v7475 = vadd.f32 %v6997, %v7404
      %v7476 = vadd.f32 %v6998, %v7409
      %v7477 = vadd.f32 %v6999, %v7414
      %v7478 = vadd.f32 %v7000, %v7419
      %v7479 = vadd.f32 %v7001, %v7424
      %v7480 = vadd.f32 %v7002, %v7429
      %v7481 = vadd.f32 %v7003, %v7434
      %v7482 = vadd.f32 %v7004, %v7439
      %v7483 = vld [vmem:[#allocation2 + $0x19] sm:$0xff]
      %v7484 = vld [vmem:[#allocation2 + $0x21] sm:$0xff]
      %v7485 = vld [vmem:[#allocation2 + $0x29] sm:$0xff]
      %v7486 = vld [vmem:[#allocation2 + $0x31] sm:$0xff]
      %v7487 = vld [vmem:[#allocation2 + $0x39] sm:$0xff]
      %v7488 = vld [vmem:[#allocation2 + $0x41] sm:$0xff]
      %v7489 = vld [vmem:[#allocation2 + $0x49] sm:$0xff]
      %v7490 = vld [vmem:[#allocation2 + $0x51] sm:$0xff]
      %v7491 = vld [vmem:[#allocation2 + $0x59] sm:$0xff]
      %v7492 = vld [vmem:[#allocation2 + $0x61] sm:$0xff]
      %v7493 = vld [vmem:[#allocation2 + $0x69] sm:$0xff]
      %v7494 = vld [vmem:[#allocation2 + $0x71] sm:$0xff]
      %v7495 = vld [vmem:[#allocation2 + $0x79] sm:$0xff]
      %v7496 = vld [vmem:[#allocation2 + $0x81] sm:$0xff]
      %v7497 = vld [vmem:[#allocation2 + $0x89] sm:$0xff]
      %v7498 = vld [vmem:[#allocation2 + $0x91] sm:$0xff]
      %v7499 = vld [vmem:[#allocation2 + $0x99] sm:$0xff]
      %v7500 = vld [vmem:[#allocation2 + $0xa1] sm:$0xff]
      %v7501 = vld [vmem:[#allocation2 + $0xa9] sm:$0xff]
      %v7502 = vld [vmem:[#allocation2 + $0xb1] sm:$0xff]
      %v7503 = vld [vmem:[#allocation2 + $0xb9] sm:$0xff]
      %v7504 = vld [vmem:[#allocation2 + $0xc1] sm:$0xff]
      %v7505 = vld [vmem:[#allocation2 + $0xc9] sm:$0xff]
      %v7506 = vld [vmem:[#allocation2 + $0xd1] sm:$0xff]
      %v7507 = vld [vmem:[#allocation2 + $0xd9] sm:$0xff]
      %v7508 = vld [vmem:[#allocation2 + $0xe1] sm:$0xff]
      %v7509 = vld [vmem:[#allocation2 + $0xe9] sm:$0xff]
      %v7510 = vld [vmem:[#allocation2 + $0xf1] sm:$0xff]
      %v7511 = vld [vmem:[#allocation2 + $0xf9] sm:$0xff]
      %v7512 = vld [vmem:[#allocation2 + $0x101] sm:$0xff]
      %v7513 = vld [vmem:[#allocation2 + $0x109] sm:$0xff]
      %v7514 = vld [vmem:[#allocation2 + $0x111] sm:$0xff]
      %v7515 = vld [vmem:[#allocation2 + $0x119] sm:$0xff]
      %v7516 = vld [vmem:[#allocation2 + $0x121] sm:$0xff]
      %v7517 = vld [vmem:[#allocation2 + $0x129] sm:$0xff]
      %v7518 = vld [vmem:[#allocation2 + $0x131] sm:$0xff]
      %v7519 = vld [vmem:[#allocation2 + $0x139] sm:$0xff]
      %v7520 = vld [vmem:[#allocation2 + $0x141] sm:$0xff]
      %v7521 = vld [vmem:[#allocation2 + $0x149] sm:$0xff]
      %v7522 = vld [vmem:[#allocation2 + $0x151] sm:$0xff]
      %v7523 = vld [vmem:[#allocation2 + $0x159] sm:$0xf]
      %s7524 = scalar_lea.vmem %s5, 80
      %v7525 = vld [vmem:[%s7524] sm:$0xff]
      %v7526 = vld [vmem:[%s7524 + $0x8] sm:$0xff]
      %v7528 = vsel %vm5127, %v7483, 0
      %v7531 = vsel %vm5127, %v7484, 0
      %v7534 = vsel %vm5127, %v7485, 0
      %v7537 = vsel %vm5127, %v7486, 0
      %v7540 = vsel %vm5127, %v7487, 0
      %v7543 = vsel %vm5127, %v7488, 0
      %v7546 = vsel %vm5127, %v7489, 0
      %v7549 = vsel %vm5127, %v7490, 0
      %v7552 = vsel %vm5127, %v7491, 0
      %v7555 = vsel %vm5127, %v7492, 0
      %v7558 = vsel %vm5127, %v7493, 0
      %v7561 = vsel %vm5127, %v7494, 0
      %v7564 = vsel %vm5127, %v7495, 0
      %v7567 = vsel %vm5127, %v7496, 0
      %v7570 = vsel %vm5127, %v7497, 0
      %v7573 = vsel %vm5127, %v7498, 0
      %v7576 = vsel %vm5127, %v7499, 0
      %v7579 = vsel %vm5127, %v7500, 0
      %v7582 = vsel %vm5127, %v7501, 0
      %v7585 = vsel %vm5127, %v7502, 0
      %v7588 = vsel %vm5127, %v7503, 0
      %v7591 = vsel %vm5127, %v7504, 0
      %v7594 = vsel %vm5127, %v7505, 0
      %v7597 = vsel %vm5127, %v7506, 0
      %v7600 = vsel %vm5127, %v7507, 0
      %v7603 = vsel %vm5127, %v7508, 0
      %v7606 = vsel %vm5127, %v7509, 0
      %v7609 = vsel %vm5127, %v7510, 0
      %v7612 = vsel %vm5127, %v7511, 0
      %v7615 = vsel %vm5127, %v7512, 0
      %v7618 = vsel %vm5127, %v7513, 0
      %v7621 = vsel %vm5127, %v7514, 0
      %v7624 = vsel %vm5127, %v7515, 0
      %v7627 = vsel %vm5127, %v7516, 0
      %v7630 = vsel %vm5127, %v7517, 0
      %v7633 = vsel %vm5127, %v7518, 0
      %v7636 = vsel %vm5127, %v7519, 0
      %v7639 = vsel %vm5127, %v7520, 0
      %v7642 = vsel %vm5127, %v7521, 0
      %v7645 = vsel %vm5127, %v7522, 0
      %v7648 = vsel %vm5127, %v7523, 0
      %7650 = vmatprep.subr.mxu0 0.0
      %7651 = vmatpush1.msra.mxu0 %v7525
      %7652 = vmatprep.subr.mxu0 0.0
      %7653 = vmatpush1.msra.mxu0 %v7526
      %7654 = vmatprep.subr.mxu0 0.0
      %7655 = vmatpush1.msra.mxu0 0.0
      %7656 = vmatprep.subr.mxu0 0.0
      %7657 = vmatpush1.msra.mxu0 0.0
      %7658 = vmatprep.subr.mxu0 0.0
      %7659 = vmatpush1.msra.mxu0 0.0
      %7660 = vmatprep.subr.mxu0 0.0
      %7661 = vmatpush1.msra.mxu0 0.0
      %7662 = vmatprep.subr.mxu0 0.0
      %7663 = vmatpush1.msra.mxu0 0.0
      %7664 = vmatprep.subr.mxu0 0.0
      %7665 = vmatpush1.msra.mxu0 0.0
      %7666 = vmatprep.subr.mxu0 0.0
      %7667 = vmatpush1.msra.mxu0 0.0
      %7668 = vmatprep.subr.mxu0 0.0
      %7669 = vmatpush1.msra.mxu0 0.0
      %7670 = vmatprep.subr.mxu0 0.0
      %7671 = vmatpush1.msra.mxu0 0.0
      %7672 = vmatprep.subr.mxu0 0.0
      %7673 = vmatpush1.msra.mxu0 0.0
      %7674 = vmatprep.subr.mxu0 0.0
      %7675 = vmatpush1.msra.mxu0 0.0
      %7676 = vmatprep.subr.mxu0 0.0
      %7677 = vmatpush1.msra.mxu0 0.0
      %7678 = vmatprep.subr.mxu0 0.0
      %7679 = vmatpush1.msra.mxu0 0.0
      %7680 = vmatprep.subr.mxu0 0.0
      %7681 = vmatpush1.msra.mxu0 0.0
      %7682 = vmatprep.subr.mxu0 0.0
      %7683 = vmatpush1.msra.mxu0 0.0
      %7684 = vmatprep.subr.mxu0 0.0
      %7685 = vmatpush1.msra.mxu0 0.0
      %7686 = vmatprep.subr.mxu0 0.0
      %7687 = vmatpush1.msra.mxu0 0.0
      %7688 = vmatprep.subr.mxu0 0.0
      %7689 = vmatpush1.msra.mxu0 0.0
      %7690 = vmatprep.subr.mxu0 0.0
      %7691 = vmatpush1.msra.mxu0 0.0
      %7692 = vmatprep.subr.mxu0 0.0
      %7693 = vmatpush1.msra.mxu0 0.0
      %7694 = vmatprep.subr.mxu0 0.0
      %7695 = vmatpush1.msra.mxu0 0.0
      %7696 = vmatprep.subr.mxu0 0.0
      %7697 = vmatpush1.msra.mxu0 0.0
      %7698 = vmatprep.subr.mxu0 0.0
      %7699 = vmatpush1.msra.mxu0 0.0
      %7700 = vmatprep.subr.mxu0 0.0
      %7701 = vmatpush1.msra.mxu0 0.0
      %7702 = vmatprep.subr.mxu0 0.0
      %7703 = vmatpush1.msra.mxu0 0.0
      %7704 = vmatprep.subr.mxu0 0.0
      %7705 = vmatpush1.msra.mxu0 0.0
      %7706 = vmatprep.subr.mxu0 0.0
      %7707 = vmatpush1.msra.mxu0 0.0
      %7708 = vmatprep.subr.mxu0 0.0
      %7709 = vmatpush1.msra.mxu0 0.0
      %7710 = vmatprep.subr.mxu0 0.0
      %7711 = vmatpush1.msra.mxu0 0.0
      %7712 = vmatprep.subr.mxu0 0.0
      %7713 = vmatpush1.msra.mxu0 0.0
      %7714 = vmatprep.mubr.f32.mxu0 0.0
      %7715 = vmatmul.mubr.f32.gmra.mrb[0].mxu0 %v7528
      %v7716 = vpop.f32.mrb[0].mxu0
      %v7717 = vadd.f32 0.0, %v7716
      %v7718 = vpop.f32.mrb[0].mxu0
      %7719 = vmatprep.mubr.f32.mxu0 0.0
      %7720 = vmatmul.mubr.f32.gmra.mrb[0].mxu0 %v7531
      %v7721 = vpop.f32.mrb[0].mxu0
      %v7722 = vadd.f32 0.0, %v7721
      %v7723 = vpop.f32.mrb[0].mxu0
      %7724 = vmatprep.mubr.f32.mxu0 0.0
      %7725 = vmatmul.mubr.f32.gmra.mrb[0].mxu0 %v7534
      %v7726 = vpop.f32.mrb[0].mxu0
      %v7727 = vadd.f32 0.0, %v7726
      %v7728 = vpop.f32.mrb[0].mxu0
      %7729 = vmatprep.mubr.f32.mxu0 0.0
      %7730 = vmatmul.mubr.f32.gmra.mrb[0].mxu0 %v7537
      %v7731 = vpop.f32.mrb[0].mxu0
      %v7732 = vadd.f32 0.0, %v7731
      %v7733 = vpop.f32.mrb[0].mxu0
      %7734 = vmatprep.mubr.f32.mxu0 0.0
      %7735 = vmatmul.mubr.f32.gmra.mrb[0].mxu0 %v7540
      %v7736 = vpop.f32.mrb[0].mxu0
      %v7737 = vadd.f32 0.0, %v7736
      %v7738 = vpop.f32.mrb[0].mxu0
      %7739 = vmatprep.mubr.f32.mxu0 0.0
      %7740 = vmatmul.mubr.f32.gmra.mrb[0].mxu0 %v7543
      %v7741 = vpop.f32.mrb[0].mxu0
      %v7742 = vadd.f32 0.0, %v7741
      %v7743 = vpop.f32.mrb[0].mxu0
      %7744 = vmatprep.mubr.f32.mxu0 0.0
      %7745 = vmatmul.mubr.f32.gmra.mrb[0].mxu0 %v7546
      %v7746 = vpop.f32.mrb[0].mxu0
      %v7747 = vadd.f32 0.0, %v7746
      %v7748 = vpop.f32.mrb[0].mxu0
      %7749 = vmatprep.mubr.f32.mxu0 0.0
      %7750 = vmatmul.mubr.f32.gmra.mrb[0].mxu0 %v7549
      %v7751 = vpop.f32.mrb[0].mxu0
      %v7752 = vadd.f32 0.0, %v7751
      %v7753 = vpop.f32.mrb[0].mxu0
      %7754 = vmatprep.mubr.f32.mxu0 0.0
      %7755 = vmatmul.mubr.f32.gmra.mrb[0].mxu0 %v7552
      %v7756 = vpop.f32.mrb[0].mxu0
      %v7757 = vadd.f32 0.0, %v7756
      %v7758 = vpop.f32.mrb[0].mxu0
      %7759 = vmatprep.mubr.f32.mxu0 0.0
      %7760 = vmatmul.mubr.f32.gmra.mrb[0].mxu0 %v7555
      %v7761 = vpop.f32.mrb[0].mxu0
      %v7762 = vadd.f32 0.0, %v7761
      %v7763 = vpop.f32.mrb[0].mxu0
      %7764 = vmatprep.mubr.f32.mxu0 0.0
      %7765 = vmatmul.mubr.f32.gmra.mrb[0].mxu0 %v7558
      %v7766 = vpop.f32.mrb[0].mxu0
      %v7767 = vadd.f32 0.0, %v7766
      %v7768 = vpop.f32.mrb[0].mxu0
      %7769 = vmatprep.mubr.f32.mxu0 0.0
      %7770 = vmatmul.mubr.f32.gmra.mrb[0].mxu0 %v7561
      %v7771 = vpop.f32.mrb[0].mxu0
      %v7772 = vadd.f32 0.0, %v7771
      %v7773 = vpop.f32.mrb[0].mxu0
      %7774 = vmatprep.mubr.f32.mxu0 0.0
      %7775 = vmatmul.mubr.f32.gmra.mrb[0].mxu0 %v7564
      %v7776 = vpop.f32.mrb[0].mxu0
      %v7777 = vadd.f32 0.0, %v7776
      %v7778 = vpop.f32.mrb[0].mxu0
      %7779 = vmatprep.mubr.f32.mxu0 0.0
      %7780 = vmatmul.mubr.f32.gmra.mrb[0].mxu0 %v7567
      %v7781 = vpop.f32.mrb[0].mxu0
      %v7782 = vadd.f32 0.0, %v7781
      %v7783 = vpop.f32.mrb[0].mxu0
      %7784 = vmatprep.mubr.f32.mxu0 0.0
      %7785 = vmatmul.mubr.f32.gmra.mrb[0].mxu0 %v7570
      %v7786 = vpop.f32.mrb[0].mxu0
      %v7787 = vadd.f32 0.0, %v7786
      %v7788 = vpop.f32.mrb[0].mxu0
      %7789 = vmatprep.mubr.f32.mxu0 0.0
      %7790 = vmatmul.mubr.f32.gmra.mrb[0].mxu0 %v7573
      %v7791 = vpop.f32.mrb[0].mxu0
      %v7792 = vadd.f32 0.0, %v7791
      %v7793 = vpop.f32.mrb[0].mxu0
      %7794 = vmatprep.mubr.f32.mxu0 0.0
      %7795 = vmatmul.mubr.f32.gmra.mrb[0].mxu0 %v7576
      %v7796 = vpop.f32.mrb[0].mxu0
      %v7797 = vadd.f32 0.0, %v7796
      %v7798 = vpop.f32.mrb[0].mxu0
      %7799 = vmatprep.mubr.f32.mxu0 0.0
      %7800 = vmatmul.mubr.f32.gmra.mrb[0].mxu0 %v7579
      %v7801 = vpop.f32.mrb[0].mxu0
      %v7802 = vadd.f32 0.0, %v7801
      %v7803 = vpop.f32.mrb[0].mxu0
      %7804 = vmatprep.mubr.f32.mxu0 0.0
      %7805 = vmatmul.mubr.f32.gmra.mrb[0].mxu0 %v7582
      %v7806 = vpop.f32.mrb[0].mxu0
      %v7807 = vadd.f32 0.0, %v7806
      %v7808 = vpop.f32.mrb[0].mxu0
      %7809 = vmatprep.mubr.f32.mxu0 0.0
      %7810 = vmatmul.mubr.f32.gmra.mrb[0].mxu0 %v7585
      %v7811 = vpop.f32.mrb[0].mxu0
      %v7812 = vadd.f32 0.0, %v7811
      %v7813 = vpop.f32.mrb[0].mxu0
      %7814 = vmatprep.mubr.f32.mxu0 0.0
      %7815 = vmatmul.mubr.f32.gmra.mrb[0].mxu0 %v7588
      %v7816 = vpop.f32.mrb[0].mxu0
      %v7817 = vadd.f32 0.0, %v7816
      %v7818 = vpop.f32.mrb[0].mxu0
      %7819 = vmatprep.mubr.f32.mxu0 0.0
      %7820 = vmatmul.mubr.f32.gmra.mrb[0].mxu0 %v7591
      %v7821 = vpop.f32.mrb[0].mxu0
      %v7822 = vadd.f32 0.0, %v7821
      %v7823 = vpop.f32.mrb[0].mxu0
      %7824 = vmatprep.mubr.f32.mxu0 0.0
      %7825 = vmatmul.mubr.f32.gmra.mrb[0].mxu0 %v7594
      %v7826 = vpop.f32.mrb[0].mxu0
      %v7827 = vadd.f32 0.0, %v7826
      %v7828 = vpop.f32.mrb[0].mxu0
      %7829 = vmatprep.mubr.f32.mxu0 0.0
      %7830 = vmatmul.mubr.f32.gmra.mrb[0].mxu0 %v7597
      %v7831 = vpop.f32.mrb[0].mxu0
      %v7832 = vadd.f32 0.0, %v7831
      %v7833 = vpop.f32.mrb[0].mxu0
      %7834 = vmatprep.mubr.f32.mxu0 0.0
      %7835 = vmatmul.mubr.f32.gmra.mrb[0].mxu0 %v7600
      %v7836 = vpop.f32.mrb[0].mxu0
      %v7837 = vadd.f32 0.0, %v7836
      %v7838 = vpop.f32.mrb[0].mxu0
      %7839 = vmatprep.mubr.f32.mxu0 0.0
      %7840 = vmatmul.mubr.f32.gmra.mrb[0].mxu0 %v7603
      %v7841 = vpop.f32.mrb[0].mxu0
      %v7842 = vadd.f32 0.0, %v7841
      %v7843 = vpop.f32.mrb[0].mxu0
      %7844 = vmatprep.mubr.f32.mxu0 0.0
      %7845 = vmatmul.mubr.f32.gmra.mrb[0].mxu0 %v7606
      %v7846 = vpop.f32.mrb[0].mxu0
      %v7847 = vadd.f32 0.0, %v7846
      %v7848 = vpop.f32.mrb[0].mxu0
      %7849 = vmatprep.mubr.f32.mxu0 0.0
      %7850 = vmatmul.mubr.f32.gmra.mrb[0].mxu0 %v7609
      %v7851 = vpop.f32.mrb[0].mxu0
      %v7852 = vadd.f32 0.0, %v7851
      %v7853 = vpop.f32.mrb[0].mxu0
      %7854 = vmatprep.mubr.f32.mxu0 0.0
      %7855 = vmatmul.mubr.f32.gmra.mrb[0].mxu0 %v7612
      %v7856 = vpop.f32.mrb[0].mxu0
      %v7857 = vadd.f32 0.0, %v7856
      %v7858 = vpop.f32.mrb[0].mxu0
      %7859 = vmatprep.mubr.f32.mxu0 0.0
      %7860 = vmatmul.mubr.f32.gmra.mrb[0].mxu0 %v7615
      %v7861 = vpop.f32.mrb[0].mxu0
      %v7862 = vadd.f32 0.0, %v7861
      %v7863 = vpop.f32.mrb[0].mxu0
      %7864 = vmatprep.mubr.f32.mxu0 0.0
      %7865 = vmatmul.mubr.f32.gmra.mrb[0].mxu0 %v7618
      %v7866 = vpop.f32.mrb[0].mxu0
      %v7867 = vadd.f32 0.0, %v7866
      %v7868 = vpop.f32.mrb[0].mxu0
      %7869 = vmatprep.mubr.f32.mxu0 0.0
      %7870 = vmatmul.mubr.f32.gmra.mrb[0].mxu0 %v7621
      %v7871 = vpop.f32.mrb[0].mxu0
      %v7872 = vadd.f32 0.0, %v7871
      %v7873 = vpop.f32.mrb[0].mxu0
      %7874 = vmatprep.mubr.f32.mxu0 0.0
      %7875 = vmatmul.mubr.f32.gmra.mrb[0].mxu0 %v7624
      %v7876 = vpop.f32.mrb[0].mxu0
      %v7877 = vadd.f32 0.0, %v7876
      %v7878 = vpop.f32.mrb[0].mxu0
      %7879 = vmatprep.mubr.f32.mxu0 0.0
      %7880 = vmatmul.mubr.f32.gmra.mrb[0].mxu0 %v7627
      %v7881 = vpop.f32.mrb[0].mxu0
      %v7882 = vadd.f32 0.0, %v7881
      %v7883 = vpop.f32.mrb[0].mxu0
      %7884 = vmatprep.mubr.f32.mxu0 0.0
      %7885 = vmatmul.mubr.f32.gmra.mrb[0].mxu0 %v7630
      %v7886 = vpop.f32.mrb[0].mxu0
      %v7887 = vadd.f32 0.0, %v7886
      %v7888 = vpop.f32.mrb[0].mxu0
      %7889 = vmatprep.mubr.f32.mxu0 0.0
      %7890 = vmatmul.mubr.f32.gmra.mrb[0].mxu0 %v7633
      %v7891 = vpop.f32.mrb[0].mxu0
      %v7892 = vadd.f32 0.0, %v7891
      %v7893 = vpop.f32.mrb[0].mxu0
      %7894 = vmatprep.mubr.f32.mxu0 0.0
      %7895 = vmatmul.mubr.f32.gmra.mrb[0].mxu0 %v7636
      %v7896 = vpop.f32.mrb[0].mxu0
      %v7897 = vadd.f32 0.0, %v7896
      %v7898 = vpop.f32.mrb[0].mxu0
      %7899 = vmatprep.mubr.f32.mxu0 0.0
      %7900 = vmatmul.mubr.f32.gmra.mrb[0].mxu0 %v7639
      %v7901 = vpop.f32.mrb[0].mxu0
      %v7902 = vadd.f32 0.0, %v7901
      %v7903 = vpop.f32.mrb[0].mxu0
      %7904 = vmatprep.mubr.f32.mxu0 0.0
      %7905 = vmatmul.mubr.f32.gmra.mrb[0].mxu0 %v7642
      %v7906 = vpop.f32.mrb[0].mxu0
      %v7907 = vadd.f32 0.0, %v7906
      %v7908 = vpop.f32.mrb[0].mxu0
      %7909 = vmatprep.mubr.f32.mxu0 0.0
      %7910 = vmatmul.mubr.f32.gmra.mrb[0].mxu0 %v7645
      %v7911 = vpop.f32.mrb[0].mxu0
      %v7912 = vadd.f32 0.0, %v7911
      %v7913 = vpop.f32.mrb[0].mxu0
      %7914 = vmatprep.mubr.f32.mxu0 0.0
      %7915 = vmatmul.mubr.f32.gmra.mrb[0].mxu0 %v7648
      %v7916 = vpop.f32.mrb[0].mxu0
      %v7917 = vadd.f32 0.0, %v7916
      %v7918 = vpop.f32.mrb[0].mxu0
      %7919 = vdwg.mxu0
      %v7920 = vadd.f32 %v7442, %v7717
      %v7921 = vadd.f32 %v7443, %v7722
      %v7922 = vadd.f32 %v7444, %v7727
      %v7923 = vadd.f32 %v7445, %v7732
      %v7924 = vadd.f32 %v7446, %v7737
      %v7925 = vadd.f32 %v7447, %v7742
      %v7926 = vadd.f32 %v7448, %v7747
      %v7927 = vadd.f32 %v7449, %v7752
      %v7928 = vadd.f32 %v7450, %v7757
      %v7929 = vadd.f32 %v7451, %v7762
      %v7930 = vadd.f32 %v7452, %v7767
      %v7931 = vadd.f32 %v7453, %v7772
      %v7932 = vadd.f32 %v7454, %v7777
      %v7933 = vadd.f32 %v7455, %v7782
      %v7934 = vadd.f32 %v7456, %v7787
      %v7935 = vadd.f32 %v7457, %v7792
      %v7936 = vadd.f32 %v7458, %v7797
      %v7937 = vadd.f32 %v7459, %v7802
      %v7938 = vadd.f32 %v7460, %v7807
      %v7939 = vadd.f32 %v7461, %v7812
      %v7940 = vadd.f32 %v7462, %v7817
      %v7941 = vadd.f32 %v7463, %v7822
      %v7942 = vadd.f32 %v7464, %v7827
      %v7943 = vadd.f32 %v7465, %v7832
      %v7944 = vadd.f32 %v7466, %v7837
      %v7945 = vadd.f32 %v7467, %v7842
      %v7946 = vadd.f32 %v7468, %v7847
      %v7947 = vadd.f32 %v7469, %v7852
      %v7948 = vadd.f32 %v7470, %v7857
      %v7949 = vadd.f32 %v7471, %v7862
      %v7950 = vadd.f32 %v7472, %v7867
      %v7951 = vadd.f32 %v7473, %v7872
      %v7952 = vadd.f32 %v7474, %v7877
      %v7953 = vadd.f32 %v7475, %v7882
      %v7954 = vadd.f32 %v7476, %v7887
      %v7955 = vadd.f32 %v7477, %v7892
      %v7956 = vadd.f32 %v7478, %v7897
      %v7957 = vadd.f32 %v7479, %v7902
      %v7958 = vadd.f32 %v7480, %v7907
      %v7959 = vadd.f32 %v7481, %v7912
      %v7960 = vadd.f32 %v7482, %v7917
      %v7961 = vld [vmem:[#allocation2 + $0x29] sm:$0xff]
      %v7962 = vld [vmem:[#allocation2 + $0x31] sm:$0xff]
      %v7963 = vld [vmem:[#allocation2 + $0x39] sm:$0xff]
      %v7964 = vld [vmem:[#allocation2 + $0x41] sm:$0xff]
      %v7965 = vld [vmem:[#allocation2 + $0x49] sm:$0xff]
      %v7966 = vld [vmem:[#allocation2 + $0x51] sm:$0xff]
      %v7967 = vld [vmem:[#allocation2 + $0x59] sm:$0xff]
      %v7968 = vld [vmem:[#allocation2 + $0x61] sm:$0xff]
      %v7969 = vld [vmem:[#allocation2 + $0x69] sm:$0xff]
      %v7970 = vld [vmem:[#allocation2 + $0x71] sm:$0xff]
      %v7971 = vld [vmem:[#allocation2 + $0x79] sm:$0xff]
      %v7972 = vld [vmem:[#allocation2 + $0x81] sm:$0xff]
      %v7973 = vld [vmem:[#allocation2 + $0x89] sm:$0xff]
      %v7974 = vld [vmem:[#allocation2 + $0x91] sm:$0xff]
      %v7975 = vld [vmem:[#allocation2 + $0x99] sm:$0xff]
      %v7976 = vld [vmem:[#allocation2 + $0xa1] sm:$0xff]
      %v7977 = vld [vmem:[#allocation2 + $0xa9] sm:$0xff]
      %v7978 = vld [vmem:[#allocation2 + $0xb1] sm:$0xff]
      %v7979 = vld [vmem:[#allocation2 + $0xb9] sm:$0xff]
      %v7980 = vld [vmem:[#allocation2 + $0xc1] sm:$0xff]
      %v7981 = vld [vmem:[#allocation2 + $0xc9] sm:$0xff]
      %v7982 = vld [vmem:[#allocation2 + $0xd1] sm:$0xff]
      %v7983 = vld [vmem:[#allocation2 + $0xd9] sm:$0xff]
      %v7984 = vld [vmem:[#allocation2 + $0xe1] sm:$0xff]
      %v7985 = vld [vmem:[#allocation2 + $0xe9] sm:$0xff]
      %v7986 = vld [vmem:[#allocation2 + $0xf1] sm:$0xff]
      %v7987 = vld [vmem:[#allocation2 + $0xf9] sm:$0xff]
      %v7988 = vld [vmem:[#allocation2 + $0x101] sm:$0xff]
      %v7989 = vld [vmem:[#allocation2 + $0x109] sm:$0xff]
      %v7990 = vld [vmem:[#allocation2 + $0x111] sm:$0xff]
      %v7991 = vld [vmem:[#allocation2 + $0x119] sm:$0xff]
      %v7992 = vld [vmem:[#allocation2 + $0x121] sm:$0xff]
      %v7993 = vld [vmem:[#allocation2 + $0x129] sm:$0xff]
      %v7994 = vld [vmem:[#allocation2 + $0x131] sm:$0xff]
      %v7995 = vld [vmem:[#allocation2 + $0x139] sm:$0xff]
      %v7996 = vld [vmem:[#allocation2 + $0x141] sm:$0xff]
      %v7997 = vld [vmem:[#allocation2 + $0x149] sm:$0xff]
      %v7998 = vld [vmem:[#allocation2 + $0x151] sm:$0xff]
      %v7999 = vld [vmem:[#allocation2 + $0x159] sm:$0xff]
      %v8000 = vld [vmem:[#allocation2 + $0x161] sm:$0xff]
      %v8001 = vld [vmem:[#allocation2 + $0x169] sm:$0xf]
      %s8002 = scalar_lea.vmem %s5, 96
      %v8003 = vld [vmem:[%s8002] sm:$0xff]
      %v8004 = vld [vmem:[%s8002 + $0x8] sm:$0xff]
      %v8006 = vsel %vm5127, %v7961, 0
      %v8009 = vsel %vm5127, %v7962, 0
      %v8012 = vsel %vm5127, %v7963, 0
      %v8015 = vsel %vm5127, %v7964, 0
      %v8018 = vsel %vm5127, %v7965, 0
      %v8021 = vsel %vm5127, %v7966, 0
      %v8024 = vsel %vm5127, %v7967, 0
      %v8027 = vsel %vm5127, %v7968, 0
      %v8030 = vsel %vm5127, %v7969, 0
      %v8033 = vsel %vm5127, %v7970, 0
      %v8036 = vsel %vm5127, %v7971, 0
      %v8039 = vsel %vm5127, %v7972, 0
      %v8042 = vsel %vm5127, %v7973, 0
      %v8045 = vsel %vm5127, %v7974, 0
      %v8048 = vsel %vm5127, %v7975, 0
      %v8051 = vsel %vm5127, %v7976, 0
      %v8054 = vsel %vm5127, %v7977, 0
      %v8057 = vsel %vm5127, %v7978, 0
      %v8060 = vsel %vm5127, %v7979, 0
      %v8063 = vsel %vm5127, %v7980, 0
      %v8066 = vsel %vm5127, %v7981, 0
      %v8069 = vsel %vm5127, %v7982, 0
      %v8072 = vsel %vm5127, %v7983, 0
      %v8075 = vsel %vm5127, %v7984, 0
      %v8078 = vsel %vm5127, %v7985, 0
      %v8081 = vsel %vm5127, %v7986, 0
      %v8084 = vsel %vm5127, %v7987, 0
      %v8087 = vsel %vm5127, %v7988, 0
      %v8090 = vsel %vm5127, %v7989, 0
      %v8093 = vsel %vm5127, %v7990, 0
      %v8096 = vsel %vm5127, %v7991, 0
      %v8099 = vsel %vm5127, %v7992, 0
      %v8102 = vsel %vm5127, %v7993, 0
      %v8105 = vsel %vm5127, %v7994, 0
      %v8108 = vsel %vm5127, %v7995, 0
      %v8111 = vsel %vm5127, %v7996, 0
      %v8114 = vsel %vm5127, %v7997, 0
      %v8117 = vsel %vm5127, %v7998, 0
      %v8120 = vsel %vm5127, %v7999, 0
      %v8123 = vsel %vm5127, %v8000, 0
      %v8126 = vsel %vm5127, %v8001, 0
      %8128 = vmatprep.subr.mxu0 0.0
      %8129 = vmatpush1.msra.mxu0 %v8003
      %8130 = vmatprep.subr.mxu0 0.0
      %8131 = vmatpush1.msra.mxu0 %v8004
      %8132 = vmatprep.subr.mxu0 0.0
      %8133 = vmatpush1.msra.mxu0 0.0
      %8134 = vmatprep.subr.mxu0 0.0
      %8135 = vmatpush1.msra.mxu0 0.0
      %8136 = vmatprep.subr.mxu0 0.0
      %8137 = vmatpush1.msra.mxu0 0.0
      %8138 = vmatprep.subr.mxu0 0.0
      %8139 = vmatpush1.msra.mxu0 0.0
      %8140 = vmatprep.subr.mxu0 0.0
      %8141 = vmatpush1.msra.mxu0 0.0
      %8142 = vmatprep.subr.mxu0 0.0
      %8143 = vmatpush1.msra.mxu0 0.0
      %8144 = vmatprep.subr.mxu0 0.0
      %8145 = vmatpush1.msra.mxu0 0.0
      %8146 = vmatprep.subr.mxu0 0.0
      %8147 = vmatpush1.msra.mxu0 0.0
      %8148 = vmatprep.subr.mxu0 0.0
      %8149 = vmatpush1.msra.mxu0 0.0
      %8150 = vmatprep.subr.mxu0 0.0
      %8151 = vmatpush1.msra.mxu0 0.0
      %8152 = vmatprep.subr.mxu0 0.0
      %8153 = vmatpush1.msra.mxu0 0.0
      %8154 = vmatprep.subr.mxu0 0.0
      %8155 = vmatpush1.msra.mxu0 0.0
      %8156 = vmatprep.subr.mxu0 0.0
      %8157 = vmatpush1.msra.mxu0 0.0
      %8158 = vmatprep.subr.mxu0 0.0
      %8159 = vmatpush1.msra.mxu0 0.0
      %8160 = vmatprep.subr.mxu0 0.0
      %8161 = vmatpush1.msra.mxu0 0.0
      %8162 = vmatprep.subr.mxu0 0.0
      %8163 = vmatpush1.msra.mxu0 0.0
      %8164 = vmatprep.subr.mxu0 0.0
      %8165 = vmatpush1.msra.mxu0 0.0
      %8166 = vmatprep.subr.mxu0 0.0
      %8167 = vmatpush1.msra.mxu0 0.0
      %8168 = vmatprep.subr.mxu0 0.0
      %8169 = vmatpush1.msra.mxu0 0.0
      %8170 = vmatprep.subr.mxu0 0.0
      %8171 = vmatpush1.msra.mxu0 0.0
      %8172 = vmatprep.subr.mxu0 0.0
      %8173 = vmatpush1.msra.mxu0 0.0
      %8174 = vmatprep.subr.mxu0 0.0
      %8175 = vmatpush1.msra.mxu0 0.0
      %8176 = vmatprep.subr.mxu0 0.0
      %8177 = vmatpush1.msra.mxu0 0.0
      %8178 = vmatprep.subr.mxu0 0.0
      %8179 = vmatpush1.msra.mxu0 0.0
      %8180 = vmatprep.subr.mxu0 0.0
      %8181 = vmatpush1.msra.mxu0 0.0
      %8182 = vmatprep.subr.mxu0 0.0
      %8183 = vmatpush1.msra.mxu0 0.0
      %8184 = vmatprep.subr.mxu0 0.0
      %8185 = vmatpush1.msra.mxu0 0.0
      %8186 = vmatprep.subr.mxu0 0.0
      %8187 = vmatpush1.msra.mxu0 0.0
      %8188 = vmatprep.subr.mxu0 0.0
      %8189 = vmatpush1.msra.mxu0 0.0
      %8190 = vmatprep.subr.mxu0 0.0
      %8191 = vmatpush1.msra.mxu0 0.0
      %8192 = vmatprep.mubr.f32.mxu0 0.0
      %8193 = vmatmul.mubr.f32.gmra.mrb[0].mxu0 %v8006
      %v8194 = vpop.f32.mrb[0].mxu0
      %v8195 = vadd.f32 0.0, %v8194
      %v8196 = vpop.f32.mrb[0].mxu0
      %8197 = vmatprep.mubr.f32.mxu0 0.0
      %8198 = vmatmul.mubr.f32.gmra.mrb[0].mxu0 %v8009
      %v8199 = vpop.f32.mrb[0].mxu0
      %v8200 = vadd.f32 0.0, %v8199
      %v8201 = vpop.f32.mrb[0].mxu0
      %8202 = vmatprep.mubr.f32.mxu0 0.0
      %8203 = vmatmul.mubr.f32.gmra.mrb[0].mxu0 %v8012
      %v8204 = vpop.f32.mrb[0].mxu0
      %v8205 = vadd.f32 0.0, %v8204
      %v8206 = vpop.f32.mrb[0].mxu0
      %8207 = vmatprep.mubr.f32.mxu0 0.0
      %8208 = vmatmul.mubr.f32.gmra.mrb[0].mxu0 %v8015
      %v8209 = vpop.f32.mrb[0].mxu0
      %v8210 = vadd.f32 0.0, %v8209
      %v8211 = vpop.f32.mrb[0].mxu0
      %8212 = vmatprep.mubr.f32.mxu0 0.0
      %8213 = vmatmul.mubr.f32.gmra.mrb[0].mxu0 %v8018
      %v8214 = vpop.f32.mrb[0].mxu0
      %v8215 = vadd.f32 0.0, %v8214
      %v8216 = vpop.f32.mrb[0].mxu0
      %8217 = vmatprep.mubr.f32.mxu0 0.0
      %8218 = vmatmul.mubr.f32.gmra.mrb[0].mxu0 %v8021
      %v8219 = vpop.f32.mrb[0].mxu0
      %v8220 = vadd.f32 0.0, %v8219
      %v8221 = vpop.f32.mrb[0].mxu0
      %8222 = vmatprep.mubr.f32.mxu0 0.0
      %8223 = vmatmul.mubr.f32.gmra.mrb[0].mxu0 %v8024
      %v8224 = vpop.f32.mrb[0].mxu0
      %v8225 = vadd.f32 0.0, %v8224
      %v8226 = vpop.f32.mrb[0].mxu0
      %8227 = vmatprep.mubr.f32.mxu0 0.0
      %8228 = vmatmul.mubr.f32.gmra.mrb[0].mxu0 %v8027
      %v8229 = vpop.f32.mrb[0].mxu0
      %v8230 = vadd.f32 0.0, %v8229
      %v8231 = vpop.f32.mrb[0].mxu0
      %8232 = vmatprep.mubr.f32.mxu0 0.0
      %8233 = vmatmul.mubr.f32.gmra.mrb[0].mxu0 %v8030
      %v8234 = vpop.f32.mrb[0].mxu0
      %v8235 = vadd.f32 0.0, %v8234
      %v8236 = vpop.f32.mrb[0].mxu0
      %8237 = vmatprep.mubr.f32.mxu0 0.0
      %8238 = vmatmul.mubr.f32.gmra.mrb[0].mxu0 %v8033
      %v8239 = vpop.f32.mrb[0].mxu0
      %v8240 = vadd.f32 0.0, %v8239
      %v8241 = vpop.f32.mrb[0].mxu0
      %8242 = vmatprep.mubr.f32.mxu0 0.0
      %8243 = vmatmul.mubr.f32.gmra.mrb[0].mxu0 %v8036
      %v8244 = vpop.f32.mrb[0].mxu0
      %v8245 = vadd.f32 0.0, %v8244
      %v8246 = vpop.f32.mrb[0].mxu0
      %8247 = vmatprep.mubr.f32.mxu0 0.0
      %8248 = vmatmul.mubr.f32.gmra.mrb[0].mxu0 %v8039
      %v8249 = vpop.f32.mrb[0].mxu0
      %v8250 = vadd.f32 0.0, %v8249
      %v8251 = vpop.f32.mrb[0].mxu0
      %8252 = vmatprep.mubr.f32.mxu0 0.0
      %8253 = vmatmul.mubr.f32.gmra.mrb[0].mxu0 %v8042
      %v8254 = vpop.f32.mrb[0].mxu0
      %v8255 = vadd.f32 0.0, %v8254
      %v8256 = vpop.f32.mrb[0].mxu0
      %8257 = vmatprep.mubr.f32.mxu0 0.0
      %8258 = vmatmul.mubr.f32.gmra.mrb[0].mxu0 %v8045
      %v8259 = vpop.f32.mrb[0].mxu0
      %v8260 = vadd.f32 0.0, %v8259
      %v8261 = vpop.f32.mrb[0].mxu0
      %8262 = vmatprep.mubr.f32.mxu0 0.0
      %8263 = vmatmul.mubr.f32.gmra.mrb[0].mxu0 %v8048
      %v8264 = vpop.f32.mrb[0].mxu0
      %v8265 = vadd.f32 0.0, %v8264
      %v8266 = vpop.f32.mrb[0].mxu0
      %8267 = vmatprep.mubr.f32.mxu0 0.0
      %8268 = vmatmul.mubr.f32.gmra.mrb[0].mxu0 %v8051
      %v8269 = vpop.f32.mrb[0].mxu0
      %v8270 = vadd.f32 0.0, %v8269
      %v8271 = vpop.f32.mrb[0].mxu0
      %8272 = vmatprep.mubr.f32.mxu0 0.0
      %8273 = vmatmul.mubr.f32.gmra.mrb[0].mxu0 %v8054
      %v8274 = vpop.f32.mrb[0].mxu0
      %v8275 = vadd.f32 0.0, %v8274
      %v8276 = vpop.f32.mrb[0].mxu0
      %8277 = vmatprep.mubr.f32.mxu0 0.0
      %8278 = vmatmul.mubr.f32.gmra.mrb[0].mxu0 %v8057
      %v8279 = vpop.f32.mrb[0].mxu0
      %v8280 = vadd.f32 0.0, %v8279
      %v8281 = vpop.f32.mrb[0].mxu0
      %8282 = vmatprep.mubr.f32.mxu0 0.0
      %8283 = vmatmul.mubr.f32.gmra.mrb[0].mxu0 %v8060
      %v8284 = vpop.f32.mrb[0].mxu0
      %v8285 = vadd.f32 0.0, %v8284
      %v8286 = vpop.f32.mrb[0].mxu0
      %8287 = vmatprep.mubr.f32.mxu0 0.0
      %8288 = vmatmul.mubr.f32.gmra.mrb[0].mxu0 %v8063
      %v8289 = vpop.f32.mrb[0].mxu0
      %v8290 = vadd.f32 0.0, %v8289
      %v8291 = vpop.f32.mrb[0].mxu0
      %8292 = vmatprep.mubr.f32.mxu0 0.0
      %8293 = vmatmul.mubr.f32.gmra.mrb[0].mxu0 %v8066
      %v8294 = vpop.f32.mrb[0].mxu0
      %v8295 = vadd.f32 0.0, %v8294
      %v8296 = vpop.f32.mrb[0].mxu0
      %8297 = vmatprep.mubr.f32.mxu0 0.0
      %8298 = vmatmul.mubr.f32.gmra.mrb[0].mxu0 %v8069
      %v8299 = vpop.f32.mrb[0].mxu0
      %v8300 = vadd.f32 0.0, %v8299
      %v8301 = vpop.f32.mrb[0].mxu0
      %8302 = vmatprep.mubr.f32.mxu0 0.0
      %8303 = vmatmul.mubr.f32.gmra.mrb[0].mxu0 %v8072
      %v8304 = vpop.f32.mrb[0].mxu0
      %v8305 = vadd.f32 0.0, %v8304
      %v8306 = vpop.f32.mrb[0].mxu0
      %8307 = vmatprep.mubr.f32.mxu0 0.0
      %8308 = vmatmul.mubr.f32.gmra.mrb[0].mxu0 %v8075
      %v8309 = vpop.f32.mrb[0].mxu0
      %v8310 = vadd.f32 0.0, %v8309
      %v8311 = vpop.f32.mrb[0].mxu0
      %8312 = vmatprep.mubr.f32.mxu0 0.0
      %8313 = vmatmul.mubr.f32.gmra.mrb[0].mxu0 %v8078
      %v8314 = vpop.f32.mrb[0].mxu0
      %v8315 = vadd.f32 0.0, %v8314
      %v8316 = vpop.f32.mrb[0].mxu0
      %8317 = vmatprep.mubr.f32.mxu0 0.0
      %8318 = vmatmul.mubr.f32.gmra.mrb[0].mxu0 %v8081
      %v8319 = vpop.f32.mrb[0].mxu0
      %v8320 = vadd.f32 0.0, %v8319
      %v8321 = vpop.f32.mrb[0].mxu0
      %8322 = vmatprep.mubr.f32.mxu0 0.0
      %8323 = vmatmul.mubr.f32.gmra.mrb[0].mxu0 %v8084
      %v8324 = vpop.f32.mrb[0].mxu0
      %v8325 = vadd.f32 0.0, %v8324
      %v8326 = vpop.f32.mrb[0].mxu0
      %8327 = vmatprep.mubr.f32.mxu0 0.0
      %8328 = vmatmul.mubr.f32.gmra.mrb[0].mxu0 %v8087
      %v8329 = vpop.f32.mrb[0].mxu0
      %v8330 = vadd.f32 0.0, %v8329
      %v8331 = vpop.f32.mrb[0].mxu0
      %8332 = vmatprep.mubr.f32.mxu0 0.0
      %8333 = vmatmul.mubr.f32.gmra.mrb[0].mxu0 %v8090
      %v8334 = vpop.f32.mrb[0].mxu0
      %v8335 = vadd.f32 0.0, %v8334
      %v8336 = vpop.f32.mrb[0].mxu0
      %8337 = vmatprep.mubr.f32.mxu0 0.0
      %8338 = vmatmul.mubr.f32.gmra.mrb[0].mxu0 %v8093
      %v8339 = vpop.f32.mrb[0].mxu0
      %v8340 = vadd.f32 0.0, %v8339
      %v8341 = vpop.f32.mrb[0].mxu0
      %8342 = vmatprep.mubr.f32.mxu0 0.0
      %8343 = vmatmul.mubr.f32.gmra.mrb[0].mxu0 %v8096
      %v8344 = vpop.f32.mrb[0].mxu0
      %v8345 = vadd.f32 0.0, %v8344
      %v8346 = vpop.f32.mrb[0].mxu0
      %8347 = vmatprep.mubr.f32.mxu0 0.0
      %8348 = vmatmul.mubr.f32.gmra.mrb[0].mxu0 %v8099
      %v8349 = vpop.f32.mrb[0].mxu0
      %v8350 = vadd.f32 0.0, %v8349
      %v8351 = vpop.f32.mrb[0].mxu0
      %8352 = vmatprep.mubr.f32.mxu0 0.0
      %8353 = vmatmul.mubr.f32.gmra.mrb[0].mxu0 %v8102
      %v8354 = vpop.f32.mrb[0].mxu0
      %v8355 = vadd.f32 0.0, %v8354
      %v8356 = vpop.f32.mrb[0].mxu0
      %8357 = vmatprep.mubr.f32.mxu0 0.0
      %8358 = vmatmul.mubr.f32.gmra.mrb[0].mxu0 %v8105
      %v8359 = vpop.f32.mrb[0].mxu0
      %v8360 = vadd.f32 0.0, %v8359
      %v8361 = vpop.f32.mrb[0].mxu0
      %8362 = vmatprep.mubr.f32.mxu0 0.0
      %8363 = vmatmul.mubr.f32.gmra.mrb[0].mxu0 %v8108
      %v8364 = vpop.f32.mrb[0].mxu0
      %v8365 = vadd.f32 0.0, %v8364
      %v8366 = vpop.f32.mrb[0].mxu0
      %8367 = vmatprep.mubr.f32.mxu0 0.0
      %8368 = vmatmul.mubr.f32.gmra.mrb[0].mxu0 %v8111
      %v8369 = vpop.f32.mrb[0].mxu0
      %v8370 = vadd.f32 0.0, %v8369
      %v8371 = vpop.f32.mrb[0].mxu0
      %8372 = vmatprep.mubr.f32.mxu0 0.0
      %8373 = vmatmul.mubr.f32.gmra.mrb[0].mxu0 %v8114
      %v8374 = vpop.f32.mrb[0].mxu0
      %v8375 = vadd.f32 0.0, %v8374
      %v8376 = vpop.f32.mrb[0].mxu0
      %8377 = vmatprep.mubr.f32.mxu0 0.0
      %8378 = vmatmul.mubr.f32.gmra.mrb[0].mxu0 %v8117
      %v8379 = vpop.f32.mrb[0].mxu0
      %v8380 = vadd.f32 0.0, %v8379
      %v8381 = vpop.f32.mrb[0].mxu0
      %8382 = vmatprep.mubr.f32.mxu0 0.0
      %8383 = vmatmul.mubr.f32.gmra.mrb[0].mxu0 %v8120
      %v8384 = vpop.f32.mrb[0].mxu0
      %v8385 = vadd.f32 0.0, %v8384
      %v8386 = vpop.f32.mrb[0].mxu0
      %8387 = vmatprep.mubr.f32.mxu0 0.0
      %8388 = vmatmul.mubr.f32.gmra.mrb[0].mxu0 %v8123
      %v8389 = vpop.f32.mrb[0].mxu0
      %v8390 = vadd.f32 0.0, %v8389
      %v8391 = vpop.f32.mrb[0].mxu0
      %8392 = vmatprep.mubr.f32.mxu0 0.0
      %8393 = vmatmul.mubr.f32.gmra.mrb[0].mxu0 %v8126
      %v8394 = vpop.f32.mrb[0].mxu0
      %v8395 = vadd.f32 0.0, %v8394
      %v8396 = vpop.f32.mrb[0].mxu0
      %8397 = vdwg.mxu0
      %v8398 = vadd.f32 %v7920, %v8195
      %v8399 = vadd.f32 %v7921, %v8200
      %v8400 = vadd.f32 %v7922, %v8205
      %v8401 = vadd.f32 %v7923, %v8210
      %v8402 = vadd.f32 %v7924, %v8215
      %v8403 = vadd.f32 %v7925, %v8220
      %v8404 = vadd.f32 %v7926, %v8225
      %v8405 = vadd.f32 %v7927, %v8230
      %v8406 = vadd.f32 %v7928, %v8235
      %v8407 = vadd.f32 %v7929, %v8240
      %v8408 = vadd.f32 %v7930, %v8245
      %v8409 = vadd.f32 %v7931, %v8250
      %v8410 = vadd.f32 %v7932, %v8255
      %v8411 = vadd.f32 %v7933, %v8260
      %v8412 = vadd.f32 %v7934, %v8265
      %v8413 = vadd.f32 %v7935, %v8270
      %v8414 = vadd.f32 %v7936, %v8275
      %v8415 = vadd.f32 %v7937, %v8280
      %v8416 = vadd.f32 %v7938, %v8285
      %v8417 = vadd.f32 %v7939, %v8290
      %v8418 = vadd.f32 %v7940, %v8295
      %v8419 = vadd.f32 %v7941, %v8300
      %v8420 = vadd.f32 %v7942, %v8305
      %v8421 = vadd.f32 %v7943, %v8310
      %v8422 = vadd.f32 %v7944, %v8315
      %v8423 = vadd.f32 %v7945, %v8320
      %v8424 = vadd.f32 %v7946, %v8325
      %v8425 = vadd.f32 %v7947, %v8330
      %v8426 = vadd.f32 %v7948, %v8335
      %v8427 = vadd.f32 %v7949, %v8340
      %v8428 = vadd.f32 %v7950, %v8345
      %v8429 = vadd.f32 %v7951, %v8350
      %v8430 = vadd.f32 %v7952, %v8355
      %v8431 = vadd.f32 %v7953, %v8360
      %v8432 = vadd.f32 %v7954, %v8365
      %v8433 = vadd.f32 %v7955, %v8370
      %v8434 = vadd.f32 %v7956, %v8375
      %v8435 = vadd.f32 %v7957, %v8380
      %v8436 = vadd.f32 %v7958, %v8385
      %v8437 = vadd.f32 %v7959, %v8390
      %v8438 = vadd.f32 %v7960, %v8395
      %v8439 = vld [vmem:[#allocation2 + $0x2a] sm:$0xff]
      %v8440 = vld [vmem:[#allocation2 + $0x32] sm:$0xff]
      %v8441 = vld [vmem:[#allocation2 + $0x3a] sm:$0xff]
      %v8442 = vld [vmem:[#allocation2 + $0x42] sm:$0xff]
      %v8443 = vld [vmem:[#allocation2 + $0x4a] sm:$0xff]
      %v8444 = vld [vmem:[#allocation2 + $0x52] sm:$0xff]
      %v8445 = vld [vmem:[#allocation2 + $0x5a] sm:$0xff]
      %v8446 = vld [vmem:[#allocation2 + $0x62] sm:$0xff]
      %v8447 = vld [vmem:[#allocation2 + $0x6a] sm:$0xff]
      %v8448 = vld [vmem:[#allocation2 + $0x72] sm:$0xff]
      %v8449 = vld [vmem:[#allocation2 + $0x7a] sm:$0xff]
      %v8450 = vld [vmem:[#allocation2 + $0x82] sm:$0xff]
      %v8451 = vld [vmem:[#allocation2 + $0x8a] sm:$0xff]
      %v8452 = vld [vmem:[#allocation2 + $0x92] sm:$0xff]
      %v8453 = vld [vmem:[#allocation2 + $0x9a] sm:$0xff]
      %v8454 = vld [vmem:[#allocation2 + $0xa2] sm:$0xff]
      %v8455 = vld [vmem:[#allocation2 + $0xaa] sm:$0xff]
      %v8456 = vld [vmem:[#allocation2 + $0xb2] sm:$0xff]
      %v8457 = vld [vmem:[#allocation2 + $0xba] sm:$0xff]
      %v8458 = vld [vmem:[#allocation2 + $0xc2] sm:$0xff]
      %v8459 = vld [vmem:[#allocation2 + $0xca] sm:$0xff]
      %v8460 = vld [vmem:[#allocation2 + $0xd2] sm:$0xff]
      %v8461 = vld [vmem:[#allocation2 + $0xda] sm:$0xff]
      %v8462 = vld [vmem:[#allocation2 + $0xe2] sm:$0xff]
      %v8463 = vld [vmem:[#allocation2 + $0xea] sm:$0xff]
      %v8464 = vld [vmem:[#allocation2 + $0xf2] sm:$0xff]
      %v8465 = vld [vmem:[#allocation2 + $0xfa] sm:$0xff]
      %v8466 = vld [vmem:[#allocation2 + $0x102] sm:$0xff]
      %v8467 = vld [vmem:[#allocation2 + $0x10a] sm:$0xff]
      %v8468 = vld [vmem:[#allocation2 + $0x112] sm:$0xff]
      %v8469 = vld [vmem:[#allocation2 + $0x11a] sm:$0xff]
      %v8470 = vld [vmem:[#allocation2 + $0x122] sm:$0xff]
      %v8471 = vld [vmem:[#allocation2 + $0x12a] sm:$0xff]
      %v8472 = vld [vmem:[#allocation2 + $0x132] sm:$0xff]
      %v8473 = vld [vmem:[#allocation2 + $0x13a] sm:$0xff]
      %v8474 = vld [vmem:[#allocation2 + $0x142] sm:$0xff]
      %v8475 = vld [vmem:[#allocation2 + $0x14a] sm:$0xff]
      %v8476 = vld [vmem:[#allocation2 + $0x152] sm:$0xff]
      %v8477 = vld [vmem:[#allocation2 + $0x15a] sm:$0xff]
      %v8478 = vld [vmem:[#allocation2 + $0x162] sm:$0xff]
      %v8479 = vld [vmem:[#allocation2 + $0x16a] sm:$0xf]
      %s8480 = scalar_lea.vmem %s5, 112
      %v8481 = vld [vmem:[%s8480] sm:$0xff]
      %v8482 = vld [vmem:[%s8480 + $0x8] sm:$0xff]
      %v8484 = vsel %vm5127, %v8439, 0
      %v8487 = vsel %vm5127, %v8440, 0
      %v8490 = vsel %vm5127, %v8441, 0
      %v8493 = vsel %vm5127, %v8442, 0
      %v8496 = vsel %vm5127, %v8443, 0
      %v8499 = vsel %vm5127, %v8444, 0
      %v8502 = vsel %vm5127, %v8445, 0
      %v8505 = vsel %vm5127, %v8446, 0
      %v8508 = vsel %vm5127, %v8447, 0
      %v8511 = vsel %vm5127, %v8448, 0
      %v8514 = vsel %vm5127, %v8449, 0
      %v8517 = vsel %vm5127, %v8450, 0
      %v8520 = vsel %vm5127, %v8451, 0
      %v8523 = vsel %vm5127, %v8452, 0
      %v8526 = vsel %vm5127, %v8453, 0
      %v8529 = vsel %vm5127, %v8454, 0
      %v8532 = vsel %vm5127, %v8455, 0
      %v8535 = vsel %vm5127, %v8456, 0
      %v8538 = vsel %vm5127, %v8457, 0
      %v8541 = vsel %vm5127, %v8458, 0
      %v8544 = vsel %vm5127, %v8459, 0
      %v8547 = vsel %vm5127, %v8460, 0
      %v8550 = vsel %vm5127, %v8461, 0
      %v8553 = vsel %vm5127, %v8462, 0
      %v8556 = vsel %vm5127, %v8463, 0
      %v8559 = vsel %vm5127, %v8464, 0
      %v8562 = vsel %vm5127, %v8465, 0
      %v8565 = vsel %vm5127, %v8466, 0
      %v8568 = vsel %vm5127, %v8467, 0
      %v8571 = vsel %vm5127, %v8468, 0
      %v8574 = vsel %vm5127, %v8469, 0
      %v8577 = vsel %vm5127, %v8470, 0
      %v8580 = vsel %vm5127, %v8471, 0
      %v8583 = vsel %vm5127, %v8472, 0
      %v8586 = vsel %vm5127, %v8473, 0
      %v8589 = vsel %vm5127, %v8474, 0
      %v8592 = vsel %vm5127, %v8475, 0
      %v8595 = vsel %vm5127, %v8476, 0
      %v8598 = vsel %vm5127, %v8477, 0
      %v8601 = vsel %vm5127, %v8478, 0
      %v8604 = vsel %vm5127, %v8479, 0
      %8606 = vmatprep.subr.mxu0 0.0
      %8607 = vmatpush1.msra.mxu0 %v8481
      %8608 = vmatprep.subr.mxu0 0.0
      %8609 = vmatpush1.msra.mxu0 %v8482
      %8610 = vmatprep.subr.mxu0 0.0
      %8611 = vmatpush1.msra.mxu0 0.0
      %8612 = vmatprep.subr.mxu0 0.0
      %8613 = vmatpush1.msra.mxu0 0.0
      %8614 = vmatprep.subr.mxu0 0.0
      %8615 = vmatpush1.msra.mxu0 0.0
      %8616 = vmatprep.subr.mxu0 0.0
      %8617 = vmatpush1.msra.mxu0 0.0
      %8618 = vmatprep.subr.mxu0 0.0
      %8619 = vmatpush1.msra.mxu0 0.0
      %8620 = vmatprep.subr.mxu0 0.0
      %8621 = vmatpush1.msra.mxu0 0.0
      %8622 = vmatprep.subr.mxu0 0.0
      %8623 = vmatpush1.msra.mxu0 0.0
      %8624 = vmatprep.subr.mxu0 0.0
      %8625 = vmatpush1.msra.mxu0 0.0
      %8626 = vmatprep.subr.mxu0 0.0
      %8627 = vmatpush1.msra.mxu0 0.0
      %8628 = vmatprep.subr.mxu0 0.0
      %8629 = vmatpush1.msra.mxu0 0.0
      %8630 = vmatprep.subr.mxu0 0.0
      %8631 = vmatpush1.msra.mxu0 0.0
      %8632 = vmatprep.subr.mxu0 0.0
      %8633 = vmatpush1.msra.mxu0 0.0
      %8634 = vmatprep.subr.mxu0 0.0
      %8635 = vmatpush1.msra.mxu0 0.0
      %8636 = vmatprep.subr.mxu0 0.0
      %8637 = vmatpush1.msra.mxu0 0.0
      %8638 = vmatprep.subr.mxu0 0.0
      %8639 = vmatpush1.msra.mxu0 0.0
      %8640 = vmatprep.subr.mxu0 0.0
      %8641 = vmatpush1.msra.mxu0 0.0
      %8642 = vmatprep.subr.mxu0 0.0
      %8643 = vmatpush1.msra.mxu0 0.0
      %8644 = vmatprep.subr.mxu0 0.0
      %8645 = vmatpush1.msra.mxu0 0.0
      %8646 = vmatprep.subr.mxu0 0.0
      %8647 = vmatpush1.msra.mxu0 0.0
      %8648 = vmatprep.subr.mxu0 0.0
      %8649 = vmatpush1.msra.mxu0 0.0
      %8650 = vmatprep.subr.mxu0 0.0
      %8651 = vmatpush1.msra.mxu0 0.0
      %8652 = vmatprep.subr.mxu0 0.0
      %8653 = vmatpush1.msra.mxu0 0.0
      %8654 = vmatprep.subr.mxu0 0.0
      %8655 = vmatpush1.msra.mxu0 0.0
      %8656 = vmatprep.subr.mxu0 0.0
      %8657 = vmatpush1.msra.mxu0 0.0
      %8658 = vmatprep.subr.mxu0 0.0
      %8659 = vmatpush1.msra.mxu0 0.0
      %8660 = vmatprep.subr.mxu0 0.0
      %8661 = vmatpush1.msra.mxu0 0.0
      %8662 = vmatprep.subr.mxu0 0.0
      %8663 = vmatpush1.msra.mxu0 0.0
      %8664 = vmatprep.subr.mxu0 0.0
      %8665 = vmatpush1.msra.mxu0 0.0
      %8666 = vmatprep.subr.mxu0 0.0
      %8667 = vmatpush1.msra.mxu0 0.0
      %8668 = vmatprep.subr.mxu0 0.0
      %8669 = vmatpush1.msra.mxu0 0.0
      %8670 = vmatprep.mubr.f32.mxu0 0.0
      %8671 = vmatmul.mubr.f32.gmra.mrb[0].mxu0 %v8484
      %v8672 = vpop.f32.mrb[0].mxu0
      %v8673 = vadd.f32 0.0, %v8672
      %v8674 = vpop.f32.mrb[0].mxu0
      %8675 = vmatprep.mubr.f32.mxu0 0.0
      %8676 = vmatmul.mubr.f32.gmra.mrb[0].mxu0 %v8487
      %v8677 = vpop.f32.mrb[0].mxu0
      %v8678 = vadd.f32 0.0, %v8677
      %v8679 = vpop.f32.mrb[0].mxu0
      %8680 = vmatprep.mubr.f32.mxu0 0.0
      %8681 = vmatmul.mubr.f32.gmra.mrb[0].mxu0 %v8490
      %v8682 = vpop.f32.mrb[0].mxu0
      %v8683 = vadd.f32 0.0, %v8682
      %v8684 = vpop.f32.mrb[0].mxu0
      %8685 = vmatprep.mubr.f32.mxu0 0.0
      %8686 = vmatmul.mubr.f32.gmra.mrb[0].mxu0 %v8493
      %v8687 = vpop.f32.mrb[0].mxu0
      %v8688 = vadd.f32 0.0, %v8687
      %v8689 = vpop.f32.mrb[0].mxu0
      %8690 = vmatprep.mubr.f32.mxu0 0.0
      %8691 = vmatmul.mubr.f32.gmra.mrb[0].mxu0 %v8496
      %v8692 = vpop.f32.mrb[0].mxu0
      %v8693 = vadd.f32 0.0, %v8692
      %v8694 = vpop.f32.mrb[0].mxu0
      %8695 = vmatprep.mubr.f32.mxu0 0.0
      %8696 = vmatmul.mubr.f32.gmra.mrb[0].mxu0 %v8499
      %v8697 = vpop.f32.mrb[0].mxu0
      %v8698 = vadd.f32 0.0, %v8697
      %v8699 = vpop.f32.mrb[0].mxu0
      %8700 = vmatprep.mubr.f32.mxu0 0.0
      %8701 = vmatmul.mubr.f32.gmra.mrb[0].mxu0 %v8502
      %v8702 = vpop.f32.mrb[0].mxu0
      %v8703 = vadd.f32 0.0, %v8702
      %v8704 = vpop.f32.mrb[0].mxu0
      %8705 = vmatprep.mubr.f32.mxu0 0.0
      %8706 = vmatmul.mubr.f32.gmra.mrb[0].mxu0 %v8505
      %v8707 = vpop.f32.mrb[0].mxu0
      %v8708 = vadd.f32 0.0, %v8707
      %v8709 = vpop.f32.mrb[0].mxu0
      %8710 = vmatprep.mubr.f32.mxu0 0.0
      %8711 = vmatmul.mubr.f32.gmra.mrb[0].mxu0 %v8508
      %v8712 = vpop.f32.mrb[0].mxu0
      %v8713 = vadd.f32 0.0, %v8712
      %v8714 = vpop.f32.mrb[0].mxu0
      %8715 = vmatprep.mubr.f32.mxu0 0.0
      %8716 = vmatmul.mubr.f32.gmra.mrb[0].mxu0 %v8511
      %v8717 = vpop.f32.mrb[0].mxu0
      %v8718 = vadd.f32 0.0, %v8717
      %v8719 = vpop.f32.mrb[0].mxu0
      %8720 = vmatprep.mubr.f32.mxu0 0.0
      %8721 = vmatmul.mubr.f32.gmra.mrb[0].mxu0 %v8514
      %v8722 = vpop.f32.mrb[0].mxu0
      %v8723 = vadd.f32 0.0, %v8722
      %v8724 = vpop.f32.mrb[0].mxu0
      %8725 = vmatprep.mubr.f32.mxu0 0.0
      %8726 = vmatmul.mubr.f32.gmra.mrb[0].mxu0 %v8517
      %v8727 = vpop.f32.mrb[0].mxu0
      %v8728 = vadd.f32 0.0, %v8727
      %v8729 = vpop.f32.mrb[0].mxu0
      %8730 = vmatprep.mubr.f32.mxu0 0.0
      %8731 = vmatmul.mubr.f32.gmra.mrb[0].mxu0 %v8520
      %v8732 = vpop.f32.mrb[0].mxu0
      %v8733 = vadd.f32 0.0, %v8732
      %v8734 = vpop.f32.mrb[0].mxu0
      %8735 = vmatprep.mubr.f32.mxu0 0.0
      %8736 = vmatmul.mubr.f32.gmra.mrb[0].mxu0 %v8523
      %v8737 = vpop.f32.mrb[0].mxu0
      %v8738 = vadd.f32 0.0, %v8737
      %v8739 = vpop.f32.mrb[0].mxu0
      %8740 = vmatprep.mubr.f32.mxu0 0.0
      %8741 = vmatmul.mubr.f32.gmra.mrb[0].mxu0 %v8526
      %v8742 = vpop.f32.mrb[0].mxu0
      %v8743 = vadd.f32 0.0, %v8742
      %v8744 = vpop.f32.mrb[0].mxu0
      %8745 = vmatprep.mubr.f32.mxu0 0.0
      %8746 = vmatmul.mubr.f32.gmra.mrb[0].mxu0 %v8529
      %v8747 = vpop.f32.mrb[0].mxu0
      %v8748 = vadd.f32 0.0, %v8747
      %v8749 = vpop.f32.mrb[0].mxu0
      %8750 = vmatprep.mubr.f32.mxu0 0.0
      %8751 = vmatmul.mubr.f32.gmra.mrb[0].mxu0 %v8532
      %v8752 = vpop.f32.mrb[0].mxu0
      %v8753 = vadd.f32 0.0, %v8752
      %v8754 = vpop.f32.mrb[0].mxu0
      %8755 = vmatprep.mubr.f32.mxu0 0.0
      %8756 = vmatmul.mubr.f32.gmra.mrb[0].mxu0 %v8535
      %v8757 = vpop.f32.mrb[0].mxu0
      %v8758 = vadd.f32 0.0, %v8757
      %v8759 = vpop.f32.mrb[0].mxu0
      %8760 = vmatprep.mubr.f32.mxu0 0.0
      %8761 = vmatmul.mubr.f32.gmra.mrb[0].mxu0 %v8538
      %v8762 = vpop.f32.mrb[0].mxu0
      %v8763 = vadd.f32 0.0, %v8762
      %v8764 = vpop.f32.mrb[0].mxu0
      %8765 = vmatprep.mubr.f32.mxu0 0.0
      %8766 = vmatmul.mubr.f32.gmra.mrb[0].mxu0 %v8541
      %v8767 = vpop.f32.mrb[0].mxu0
      %v8768 = vadd.f32 0.0, %v8767
      %v8769 = vpop.f32.mrb[0].mxu0
      %8770 = vmatprep.mubr.f32.mxu0 0.0
      %8771 = vmatmul.mubr.f32.gmra.mrb[0].mxu0 %v8544
      %v8772 = vpop.f32.mrb[0].mxu0
      %v8773 = vadd.f32 0.0, %v8772
      %v8774 = vpop.f32.mrb[0].mxu0
      %8775 = vmatprep.mubr.f32.mxu0 0.0
      %8776 = vmatmul.mubr.f32.gmra.mrb[0].mxu0 %v8547
      %v8777 = vpop.f32.mrb[0].mxu0
      %v8778 = vadd.f32 0.0, %v8777
      %v8779 = vpop.f32.mrb[0].mxu0
      %8780 = vmatprep.mubr.f32.mxu0 0.0
      %8781 = vmatmul.mubr.f32.gmra.mrb[0].mxu0 %v8550
      %v8782 = vpop.f32.mrb[0].mxu0
      %v8783 = vadd.f32 0.0, %v8782
      %v8784 = vpop.f32.mrb[0].mxu0
      %8785 = vmatprep.mubr.f32.mxu0 0.0
      %8786 = vmatmul.mubr.f32.gmra.mrb[0].mxu0 %v8553
      %v8787 = vpop.f32.mrb[0].mxu0
      %v8788 = vadd.f32 0.0, %v8787
      %v8789 = vpop.f32.mrb[0].mxu0
      %8790 = vmatprep.mubr.f32.mxu0 0.0
      %8791 = vmatmul.mubr.f32.gmra.mrb[0].mxu0 %v8556
      %v8792 = vpop.f32.mrb[0].mxu0
      %v8793 = vadd.f32 0.0, %v8792
      %v8794 = vpop.f32.mrb[0].mxu0
      %8795 = vmatprep.mubr.f32.mxu0 0.0
      %8796 = vmatmul.mubr.f32.gmra.mrb[0].mxu0 %v8559
      %v8797 = vpop.f32.mrb[0].mxu0
      %v8798 = vadd.f32 0.0, %v8797
      %v8799 = vpop.f32.mrb[0].mxu0
      %8800 = vmatprep.mubr.f32.mxu0 0.0
      %8801 = vmatmul.mubr.f32.gmra.mrb[0].mxu0 %v8562
      %v8802 = vpop.f32.mrb[0].mxu0
      %v8803 = vadd.f32 0.0, %v8802
      %v8804 = vpop.f32.mrb[0].mxu0
      %8805 = vmatprep.mubr.f32.mxu0 0.0
      %8806 = vmatmul.mubr.f32.gmra.mrb[0].mxu0 %v8565
      %v8807 = vpop.f32.mrb[0].mxu0
      %v8808 = vadd.f32 0.0, %v8807
      %v8809 = vpop.f32.mrb[0].mxu0
      %8810 = vmatprep.mubr.f32.mxu0 0.0
      %8811 = vmatmul.mubr.f32.gmra.mrb[0].mxu0 %v8568
      %v8812 = vpop.f32.mrb[0].mxu0
      %v8813 = vadd.f32 0.0, %v8812
      %v8814 = vpop.f32.mrb[0].mxu0
      %8815 = vmatprep.mubr.f32.mxu0 0.0
      %8816 = vmatmul.mubr.f32.gmra.mrb[0].mxu0 %v8571
      %v8817 = vpop.f32.mrb[0].mxu0
      %v8818 = vadd.f32 0.0, %v8817
      %v8819 = vpop.f32.mrb[0].mxu0
      %8820 = vmatprep.mubr.f32.mxu0 0.0
      %8821 = vmatmul.mubr.f32.gmra.mrb[0].mxu0 %v8574
      %v8822 = vpop.f32.mrb[0].mxu0
      %v8823 = vadd.f32 0.0, %v8822
      %v8824 = vpop.f32.mrb[0].mxu0
      %8825 = vmatprep.mubr.f32.mxu0 0.0
      %8826 = vmatmul.mubr.f32.gmra.mrb[0].mxu0 %v8577
      %v8827 = vpop.f32.mrb[0].mxu0
      %v8828 = vadd.f32 0.0, %v8827
      %v8829 = vpop.f32.mrb[0].mxu0
      %8830 = vmatprep.mubr.f32.mxu0 0.0
      %8831 = vmatmul.mubr.f32.gmra.mrb[0].mxu0 %v8580
      %v8832 = vpop.f32.mrb[0].mxu0
      %v8833 = vadd.f32 0.0, %v8832
      %v8834 = vpop.f32.mrb[0].mxu0
      %8835 = vmatprep.mubr.f32.mxu0 0.0
      %8836 = vmatmul.mubr.f32.gmra.mrb[0].mxu0 %v8583
      %v8837 = vpop.f32.mrb[0].mxu0
      %v8838 = vadd.f32 0.0, %v8837
      %v8839 = vpop.f32.mrb[0].mxu0
      %8840 = vmatprep.mubr.f32.mxu0 0.0
      %8841 = vmatmul.mubr.f32.gmra.mrb[0].mxu0 %v8586
      %v8842 = vpop.f32.mrb[0].mxu0
      %v8843 = vadd.f32 0.0, %v8842
      %v8844 = vpop.f32.mrb[0].mxu0
      %8845 = vmatprep.mubr.f32.mxu0 0.0
      %8846 = vmatmul.mubr.f32.gmra.mrb[0].mxu0 %v8589
      %v8847 = vpop.f32.mrb[0].mxu0
      %v8848 = vadd.f32 0.0, %v8847
      %v8849 = vpop.f32.mrb[0].mxu0
      %8850 = vmatprep.mubr.f32.mxu0 0.0
      %8851 = vmatmul.mubr.f32.gmra.mrb[0].mxu0 %v8592
      %v8852 = vpop.f32.mrb[0].mxu0
      %v8853 = vadd.f32 0.0, %v8852
      %v8854 = vpop.f32.mrb[0].mxu0
      %8855 = vmatprep.mubr.f32.mxu0 0.0
      %8856 = vmatmul.mubr.f32.gmra.mrb[0].mxu0 %v8595
      %v8857 = vpop.f32.mrb[0].mxu0
      %v8858 = vadd.f32 0.0, %v8857
      %v8859 = vpop.f32.mrb[0].mxu0
      %8860 = vmatprep.mubr.f32.mxu0 0.0
      %8861 = vmatmul.mubr.f32.gmra.mrb[0].mxu0 %v8598
      %v8862 = vpop.f32.mrb[0].mxu0
      %v8863 = vadd.f32 0.0, %v8862
      %v8864 = vpop.f32.mrb[0].mxu0
      %8865 = vmatprep.mubr.f32.mxu0 0.0
      %8866 = vmatmul.mubr.f32.gmra.mrb[0].mxu0 %v8601
      %v8867 = vpop.f32.mrb[0].mxu0
      %v8868 = vadd.f32 0.0, %v8867
      %v8869 = vpop.f32.mrb[0].mxu0
      %8870 = vmatprep.mubr.f32.mxu0 0.0
      %8871 = vmatmul.mubr.f32.gmra.mrb[0].mxu0 %v8604
      %v8872 = vpop.f32.mrb[0].mxu0
      %v8873 = vadd.f32 0.0, %v8872
      %v8874 = vpop.f32.mrb[0].mxu0
      %8875 = vdwg.mxu0
      %v8876 = vadd.f32 %v8398, %v8673
      %v8877 = vadd.f32 %v8399, %v8678
      %v8878 = vadd.f32 %v8400, %v8683
      %v8879 = vadd.f32 %v8401, %v8688
      %v8880 = vadd.f32 %v8402, %v8693
      %v8881 = vadd.f32 %v8403, %v8698
      %v8882 = vadd.f32 %v8404, %v8703
      %v8883 = vadd.f32 %v8405, %v8708
      %v8884 = vadd.f32 %v8406, %v8713
      %v8885 = vadd.f32 %v8407, %v8718
      %v8886 = vadd.f32 %v8408, %v8723
      %v8887 = vadd.f32 %v8409, %v8728
      %v8888 = vadd.f32 %v8410, %v8733
      %v8889 = vadd.f32 %v8411, %v8738
      %v8890 = vadd.f32 %v8412, %v8743
      %v8891 = vadd.f32 %v8413, %v8748
      %v8892 = vadd.f32 %v8414, %v8753
      %v8893 = vadd.f32 %v8415, %v8758
      %v8894 = vadd.f32 %v8416, %v8763
      %v8895 = vadd.f32 %v8417, %v8768
      %v8896 = vadd.f32 %v8418, %v8773
      %v8897 = vadd.f32 %v8419, %v8778
      %v8898 = vadd.f32 %v8420, %v8783
      %v8899 = vadd.f32 %v8421, %v8788
      %v8900 = vadd.f32 %v8422, %v8793
      %v8901 = vadd.f32 %v8423, %v8798
      %v8902 = vadd.f32 %v8424, %v8803
      %v8903 = vadd.f32 %v8425, %v8808
      %v8904 = vadd.f32 %v8426, %v8813
      %v8905 = vadd.f32 %v8427, %v8818
      %v8906 = vadd.f32 %v8428, %v8823
      %v8907 = vadd.f32 %v8429, %v8828
      %v8908 = vadd.f32 %v8430, %v8833
      %v8909 = vadd.f32 %v8431, %v8838
      %v8910 = vadd.f32 %v8432, %v8843
      %v8911 = vadd.f32 %v8433, %v8848
      %v8912 = vadd.f32 %v8434, %v8853
      %v8913 = vadd.f32 %v8435, %v8858
      %v8914 = vadd.f32 %v8436, %v8863
      %v8915 = vadd.f32 %v8437, %v8868
      %v8916 = vadd.f32 %v8438, %v8873
      %v8917 = vld [vmem:[#allocation2 + $0x2b] sm:$0xff]
      %v8918 = vld [vmem:[#allocation2 + $0x33] sm:$0xff]
      %v8919 = vld [vmem:[#allocation2 + $0x3b] sm:$0xff]
      %v8920 = vld [vmem:[#allocation2 + $0x43] sm:$0xff]
      %v8921 = vld [vmem:[#allocation2 + $0x4b] sm:$0xff]
      %v8922 = vld [vmem:[#allocation2 + $0x53] sm:$0xff]
      %v8923 = vld [vmem:[#allocation2 + $0x5b] sm:$0xff]
      %v8924 = vld [vmem:[#allocation2 + $0x63] sm:$0xff]
      %v8925 = vld [vmem:[#allocation2 + $0x6b] sm:$0xff]
      %v8926 = vld [vmem:[#allocation2 + $0x73] sm:$0xff]
      %v8927 = vld [vmem:[#allocation2 + $0x7b] sm:$0xff]
      %v8928 = vld [vmem:[#allocation2 + $0x83] sm:$0xff]
      %v8929 = vld [vmem:[#allocation2 + $0x8b] sm:$0xff]
      %v8930 = vld [vmem:[#allocation2 + $0x93] sm:$0xff]
      %v8931 = vld [vmem:[#allocation2 + $0x9b] sm:$0xff]
      %v8932 = vld [vmem:[#allocation2 + $0xa3] sm:$0xff]
      %v8933 = vld [vmem:[#allocation2 + $0xab] sm:$0xff]
      %v8934 = vld [vmem:[#allocation2 + $0xb3] sm:$0xff]
      %v8935 = vld [vmem:[#allocation2 + $0xbb] sm:$0xff]
      %v8936 = vld [vmem:[#allocation2 + $0xc3] sm:$0xff]
      %v8937 = vld [vmem:[#allocation2 + $0xcb] sm:$0xff]
      %v8938 = vld [vmem:[#allocation2 + $0xd3] sm:$0xff]
      %v8939 = vld [vmem:[#allocation2 + $0xdb] sm:$0xff]
      %v8940 = vld [vmem:[#allocation2 + $0xe3] sm:$0xff]
      %v8941 = vld [vmem:[#allocation2 + $0xeb] sm:$0xff]
      %v8942 = vld [vmem:[#allocation2 + $0xf3] sm:$0xff]
      %v8943 = vld [vmem:[#allocation2 + $0xfb] sm:$0xff]
      %v8944 = vld [vmem:[#allocation2 + $0x103] sm:$0xff]
      %v8945 = vld [vmem:[#allocation2 + $0x10b] sm:$0xff]
      %v8946 = vld [vmem:[#allocation2 + $0x113] sm:$0xff]
      %v8947 = vld [vmem:[#allocation2 + $0x11b] sm:$0xff]
      %v8948 = vld [vmem:[#allocation2 + $0x123] sm:$0xff]
      %v8949 = vld [vmem:[#allocation2 + $0x12b] sm:$0xff]
      %v8950 = vld [vmem:[#allocation2 + $0x133] sm:$0xff]
      %v8951 = vld [vmem:[#allocation2 + $0x13b] sm:$0xff]
      %v8952 = vld [vmem:[#allocation2 + $0x143] sm:$0xff]
      %v8953 = vld [vmem:[#allocation2 + $0x14b] sm:$0xff]
      %v8954 = vld [vmem:[#allocation2 + $0x153] sm:$0xff]
      %v8955 = vld [vmem:[#allocation2 + $0x15b] sm:$0xff]
      %v8956 = vld [vmem:[#allocation2 + $0x163] sm:$0xff]
      %v8957 = vld [vmem:[#allocation2 + $0x16b] sm:$0xf]
      %s8958 = scalar_lea.vmem %s5, 128
      %v8959 = vld [vmem:[%s8958] sm:$0xff]
      %v8960 = vld [vmem:[%s8958 + $0x8] sm:$0xff]
      %v8962 = vsel %vm5127, %v8917, 0
      %v8965 = vsel %vm5127, %v8918, 0
      %v8968 = vsel %vm5127, %v8919, 0
      %v8971 = vsel %vm5127, %v8920, 0
      %v8974 = vsel %vm5127, %v8921, 0
      %v8977 = vsel %vm5127, %v8922, 0
      %v8980 = vsel %vm5127, %v8923, 0
      %v8983 = vsel %vm5127, %v8924, 0
      %v8986 = vsel %vm5127, %v8925, 0
      %v8989 = vsel %vm5127, %v8926, 0
      %v8992 = vsel %vm5127, %v8927, 0
      %v8995 = vsel %vm5127, %v8928, 0
      %v8998 = vsel %vm5127, %v8929, 0
      %v9001 = vsel %vm5127, %v8930, 0
      %v9004 = vsel %vm5127, %v8931, 0
      %v9007 = vsel %vm5127, %v8932, 0
      %v9010 = vsel %vm5127, %v8933, 0
      %v9013 = vsel %vm5127, %v8934, 0
      %v9016 = vsel %vm5127, %v8935, 0
      %v9019 = vsel %vm5127, %v8936, 0
      %v9022 = vsel %vm5127, %v8937, 0
      %v9025 = vsel %vm5127, %v8938, 0
      %v9028 = vsel %vm5127, %v8939, 0
      %v9031 = vsel %vm5127, %v8940, 0
      %v9034 = vsel %vm5127, %v8941, 0
      %v9037 = vsel %vm5127, %v8942, 0
      %v9040 = vsel %vm5127, %v8943, 0
      %v9043 = vsel %vm5127, %v8944, 0
      %v9046 = vsel %vm5127, %v8945, 0
      %v9049 = vsel %vm5127, %v8946, 0
      %v9052 = vsel %vm5127, %v8947, 0
      %v9055 = vsel %vm5127, %v8948, 0
      %v9058 = vsel %vm5127, %v8949, 0
      %v9061 = vsel %vm5127, %v8950, 0
      %v9064 = vsel %vm5127, %v8951, 0
      %v9067 = vsel %vm5127, %v8952, 0
      %v9070 = vsel %vm5127, %v8953, 0
      %v9073 = vsel %vm5127, %v8954, 0
      %v9076 = vsel %vm5127, %v8955, 0
      %v9079 = vsel %vm5127, %v8956, 0
      %v9082 = vsel %vm5127, %v8957, 0
      %9084 = vmatprep.subr.mxu0 0.0
      %9085 = vmatpush1.msra.mxu0 %v8959
      %9086 = vmatprep.subr.mxu0 0.0
      %9087 = vmatpush1.msra.mxu0 %v8960
      %9088 = vmatprep.subr.mxu0 0.0
      %9089 = vmatpush1.msra.mxu0 0.0
      %9090 = vmatprep.subr.mxu0 0.0
      %9091 = vmatpush1.msra.mxu0 0.0
      %9092 = vmatprep.subr.mxu0 0.0
      %9093 = vmatpush1.msra.mxu0 0.0
      %9094 = vmatprep.subr.mxu0 0.0
      %9095 = vmatpush1.msra.mxu0 0.0
      %9096 = vmatprep.subr.mxu0 0.0
      %9097 = vmatpush1.msra.mxu0 0.0
      %9098 = vmatprep.subr.mxu0 0.0
      %9099 = vmatpush1.msra.mxu0 0.0
      %9100 = vmatprep.subr.mxu0 0.0
      %9101 = vmatpush1.msra.mxu0 0.0
      %9102 = vmatprep.subr.mxu0 0.0
      %9103 = vmatpush1.msra.mxu0 0.0
      %9104 = vmatprep.subr.mxu0 0.0
      %9105 = vmatpush1.msra.mxu0 0.0
      %9106 = vmatprep.subr.mxu0 0.0
      %9107 = vmatpush1.msra.mxu0 0.0
      %9108 = vmatprep.subr.mxu0 0.0
      %9109 = vmatpush1.msra.mxu0 0.0
      %9110 = vmatprep.subr.mxu0 0.0
      %9111 = vmatpush1.msra.mxu0 0.0
      %9112 = vmatprep.subr.mxu0 0.0
      %9113 = vmatpush1.msra.mxu0 0.0
      %9114 = vmatprep.subr.mxu0 0.0
      %9115 = vmatpush1.msra.mxu0 0.0
      %9116 = vmatprep.subr.mxu0 0.0
      %9117 = vmatpush1.msra.mxu0 0.0
      %9118 = vmatprep.subr.mxu0 0.0
      %9119 = vmatpush1.msra.mxu0 0.0
      %9120 = vmatprep.subr.mxu0 0.0
      %9121 = vmatpush1.msra.mxu0 0.0
      %9122 = vmatprep.subr.mxu0 0.0
      %9123 = vmatpush1.msra.mxu0 0.0
      %9124 = vmatprep.subr.mxu0 0.0
      %9125 = vmatpush1.msra.mxu0 0.0
      %9126 = vmatprep.subr.mxu0 0.0
      %9127 = vmatpush1.msra.mxu0 0.0
      %9128 = vmatprep.subr.mxu0 0.0
      %9129 = vmatpush1.msra.mxu0 0.0
      %9130 = vmatprep.subr.mxu0 0.0
      %9131 = vmatpush1.msra.mxu0 0.0
      %9132 = vmatprep.subr.mxu0 0.0
      %9133 = vmatpush1.msra.mxu0 0.0
      %9134 = vmatprep.subr.mxu0 0.0
      %9135 = vmatpush1.msra.mxu0 0.0
      %9136 = vmatprep.subr.mxu0 0.0
      %9137 = vmatpush1.msra.mxu0 0.0
      %9138 = vmatprep.subr.mxu0 0.0
      %9139 = vmatpush1.msra.mxu0 0.0
      %9140 = vmatprep.subr.mxu0 0.0
      %9141 = vmatpush1.msra.mxu0 0.0
      %9142 = vmatprep.subr.mxu0 0.0
      %9143 = vmatpush1.msra.mxu0 0.0
      %9144 = vmatprep.subr.mxu0 0.0
      %9145 = vmatpush1.msra.mxu0 0.0
      %9146 = vmatprep.subr.mxu0 0.0
      %9147 = vmatpush1.msra.mxu0 0.0
      %9148 = vmatprep.mubr.f32.mxu0 0.0
      %9149 = vmatmul.mubr.f32.gmra.mrb[0].mxu0 %v8962
      %v9150 = vpop.f32.mrb[0].mxu0
      %v9151 = vadd.f32 0.0, %v9150
      %v9152 = vpop.f32.mrb[0].mxu0
      %9153 = vmatprep.mubr.f32.mxu0 0.0
      %9154 = vmatmul.mubr.f32.gmra.mrb[0].mxu0 %v8965
      %v9155 = vpop.f32.mrb[0].mxu0
      %v9156 = vadd.f32 0.0, %v9155
      %v9157 = vpop.f32.mrb[0].mxu0
      %9158 = vmatprep.mubr.f32.mxu0 0.0
      %9159 = vmatmul.mubr.f32.gmra.mrb[0].mxu0 %v8968
      %v9160 = vpop.f32.mrb[0].mxu0
      %v9161 = vadd.f32 0.0, %v9160
      %v9162 = vpop.f32.mrb[0].mxu0
      %9163 = vmatprep.mubr.f32.mxu0 0.0
      %9164 = vmatmul.mubr.f32.gmra.mrb[0].mxu0 %v8971
      %v9165 = vpop.f32.mrb[0].mxu0
      %v9166 = vadd.f32 0.0, %v9165
      %v9167 = vpop.f32.mrb[0].mxu0
      %9168 = vmatprep.mubr.f32.mxu0 0.0
      %9169 = vmatmul.mubr.f32.gmra.mrb[0].mxu0 %v8974
      %v9170 = vpop.f32.mrb[0].mxu0
      %v9171 = vadd.f32 0.0, %v9170
      %v9172 = vpop.f32.mrb[0].mxu0
      %9173 = vmatprep.mubr.f32.mxu0 0.0
      %9174 = vmatmul.mubr.f32.gmra.mrb[0].mxu0 %v8977
      %v9175 = vpop.f32.mrb[0].mxu0
      %v9176 = vadd.f32 0.0, %v9175
      %v9177 = vpop.f32.mrb[0].mxu0
      %9178 = vmatprep.mubr.f32.mxu0 0.0
      %9179 = vmatmul.mubr.f32.gmra.mrb[0].mxu0 %v8980
      %v9180 = vpop.f32.mrb[0].mxu0
      %v9181 = vadd.f32 0.0, %v9180
      %v9182 = vpop.f32.mrb[0].mxu0
      %9183 = vmatprep.mubr.f32.mxu0 0.0
      %9184 = vmatmul.mubr.f32.gmra.mrb[0].mxu0 %v8983
      %v9185 = vpop.f32.mrb[0].mxu0
      %v9186 = vadd.f32 0.0, %v9185
      %v9187 = vpop.f32.mrb[0].mxu0
      %9188 = vmatprep.mubr.f32.mxu0 0.0
      %9189 = vmatmul.mubr.f32.gmra.mrb[0].mxu0 %v8986
      %v9190 = vpop.f32.mrb[0].mxu0
      %v9191 = vadd.f32 0.0, %v9190
      %v9192 = vpop.f32.mrb[0].mxu0
      %9193 = vmatprep.mubr.f32.mxu0 0.0
      %9194 = vmatmul.mubr.f32.gmra.mrb[0].mxu0 %v8989
      %v9195 = vpop.f32.mrb[0].mxu0
      %v9196 = vadd.f32 0.0, %v9195
      %v9197 = vpop.f32.mrb[0].mxu0
      %9198 = vmatprep.mubr.f32.mxu0 0.0
      %9199 = vmatmul.mubr.f32.gmra.mrb[0].mxu0 %v8992
      %v9200 = vpop.f32.mrb[0].mxu0
      %v9201 = vadd.f32 0.0, %v9200
      %v9202 = vpop.f32.mrb[0].mxu0
      %9203 = vmatprep.mubr.f32.mxu0 0.0
      %9204 = vmatmul.mubr.f32.gmra.mrb[0].mxu0 %v8995
      %v9205 = vpop.f32.mrb[0].mxu0
      %v9206 = vadd.f32 0.0, %v9205
      %v9207 = vpop.f32.mrb[0].mxu0
      %9208 = vmatprep.mubr.f32.mxu0 0.0
      %9209 = vmatmul.mubr.f32.gmra.mrb[0].mxu0 %v8998
      %v9210 = vpop.f32.mrb[0].mxu0
      %v9211 = vadd.f32 0.0, %v9210
      %v9212 = vpop.f32.mrb[0].mxu0
      %9213 = vmatprep.mubr.f32.mxu0 0.0
      %9214 = vmatmul.mubr.f32.gmra.mrb[0].mxu0 %v9001
      %v9215 = vpop.f32.mrb[0].mxu0
      %v9216 = vadd.f32 0.0, %v9215
      %v9217 = vpop.f32.mrb[0].mxu0
      %9218 = vmatprep.mubr.f32.mxu0 0.0
      %9219 = vmatmul.mubr.f32.gmra.mrb[0].mxu0 %v9004
      %v9220 = vpop.f32.mrb[0].mxu0
      %v9221 = vadd.f32 0.0, %v9220
      %v9222 = vpop.f32.mrb[0].mxu0
      %9223 = vmatprep.mubr.f32.mxu0 0.0
      %9224 = vmatmul.mubr.f32.gmra.mrb[0].mxu0 %v9007
      %v9225 = vpop.f32.mrb[0].mxu0
      %v9226 = vadd.f32 0.0, %v9225
      %v9227 = vpop.f32.mrb[0].mxu0
      %9228 = vmatprep.mubr.f32.mxu0 0.0
      %9229 = vmatmul.mubr.f32.gmra.mrb[0].mxu0 %v9010
      %v9230 = vpop.f32.mrb[0].mxu0
      %v9231 = vadd.f32 0.0, %v9230
      %v9232 = vpop.f32.mrb[0].mxu0
      %9233 = vmatprep.mubr.f32.mxu0 0.0
      %9234 = vmatmul.mubr.f32.gmra.mrb[0].mxu0 %v9013
      %v9235 = vpop.f32.mrb[0].mxu0
      %v9236 = vadd.f32 0.0, %v9235
      %v9237 = vpop.f32.mrb[0].mxu0
      %9238 = vmatprep.mubr.f32.mxu0 0.0
      %9239 = vmatmul.mubr.f32.gmra.mrb[0].mxu0 %v9016
      %v9240 = vpop.f32.mrb[0].mxu0
      %v9241 = vadd.f32 0.0, %v9240
      %v9242 = vpop.f32.mrb[0].mxu0
      %9243 = vmatprep.mubr.f32.mxu0 0.0
      %9244 = vmatmul.mubr.f32.gmra.mrb[0].mxu0 %v9019
      %v9245 = vpop.f32.mrb[0].mxu0
      %v9246 = vadd.f32 0.0, %v9245
      %v9247 = vpop.f32.mrb[0].mxu0
      %9248 = vmatprep.mubr.f32.mxu0 0.0
      %9249 = vmatmul.mubr.f32.gmra.mrb[0].mxu0 %v9022
      %v9250 = vpop.f32.mrb[0].mxu0
      %v9251 = vadd.f32 0.0, %v9250
      %v9252 = vpop.f32.mrb[0].mxu0
      %9253 = vmatprep.mubr.f32.mxu0 0.0
      %9254 = vmatmul.mubr.f32.gmra.mrb[0].mxu0 %v9025
      %v9255 = vpop.f32.mrb[0].mxu0
      %v9256 = vadd.f32 0.0, %v9255
      %v9257 = vpop.f32.mrb[0].mxu0
      %9258 = vmatprep.mubr.f32.mxu0 0.0
      %9259 = vmatmul.mubr.f32.gmra.mrb[0].mxu0 %v9028
      %v9260 = vpop.f32.mrb[0].mxu0
      %v9261 = vadd.f32 0.0, %v9260
      %v9262 = vpop.f32.mrb[0].mxu0
      %9263 = vmatprep.mubr.f32.mxu0 0.0
      %9264 = vmatmul.mubr.f32.gmra.mrb[0].mxu0 %v9031
      %v9265 = vpop.f32.mrb[0].mxu0
      %v9266 = vadd.f32 0.0, %v9265
      %v9267 = vpop.f32.mrb[0].mxu0
      %9268 = vmatprep.mubr.f32.mxu0 0.0
      %9269 = vmatmul.mubr.f32.gmra.mrb[0].mxu0 %v9034
      %v9270 = vpop.f32.mrb[0].mxu0
      %v9271 = vadd.f32 0.0, %v9270
      %v9272 = vpop.f32.mrb[0].mxu0
      %9273 = vmatprep.mubr.f32.mxu0 0.0
      %9274 = vmatmul.mubr.f32.gmra.mrb[0].mxu0 %v9037
      %v9275 = vpop.f32.mrb[0].mxu0
      %v9276 = vadd.f32 0.0, %v9275
      %v9277 = vpop.f32.mrb[0].mxu0
      %9278 = vmatprep.mubr.f32.mxu0 0.0
      %9279 = vmatmul.mubr.f32.gmra.mrb[0].mxu0 %v9040
      %v9280 = vpop.f32.mrb[0].mxu0
      %v9281 = vadd.f32 0.0, %v9280
      %v9282 = vpop.f32.mrb[0].mxu0
      %9283 = vmatprep.mubr.f32.mxu0 0.0
      %9284 = vmatmul.mubr.f32.gmra.mrb[0].mxu0 %v9043
      %v9285 = vpop.f32.mrb[0].mxu0
      %v9286 = vadd.f32 0.0, %v9285
      %v9287 = vpop.f32.mrb[0].mxu0
      %9288 = vmatprep.mubr.f32.mxu0 0.0
      %9289 = vmatmul.mubr.f32.gmra.mrb[0].mxu0 %v9046
      %v9290 = vpop.f32.mrb[0].mxu0
      %v9291 = vadd.f32 0.0, %v9290
      %v9292 = vpop.f32.mrb[0].mxu0
      %9293 = vmatprep.mubr.f32.mxu0 0.0
      %9294 = vmatmul.mubr.f32.gmra.mrb[0].mxu0 %v9049
      %v9295 = vpop.f32.mrb[0].mxu0
      %v9296 = vadd.f32 0.0, %v9295
      %v9297 = vpop.f32.mrb[0].mxu0
      %9298 = vmatprep.mubr.f32.mxu0 0.0
      %9299 = vmatmul.mubr.f32.gmra.mrb[0].mxu0 %v9052
      %v9300 = vpop.f32.mrb[0].mxu0
      %v9301 = vadd.f32 0.0, %v9300
      %v9302 = vpop.f32.mrb[0].mxu0
      %9303 = vmatprep.mubr.f32.mxu0 0.0
      %9304 = vmatmul.mubr.f32.gmra.mrb[0].mxu0 %v9055
      %v9305 = vpop.f32.mrb[0].mxu0
      %v9306 = vadd.f32 0.0, %v9305
      %v9307 = vpop.f32.mrb[0].mxu0
      %9308 = vmatprep.mubr.f32.mxu0 0.0
      %9309 = vmatmul.mubr.f32.gmra.mrb[0].mxu0 %v9058
      %v9310 = vpop.f32.mrb[0].mxu0
      %v9311 = vadd.f32 0.0, %v9310
      %v9312 = vpop.f32.mrb[0].mxu0
      %9313 = vmatprep.mubr.f32.mxu0 0.0
      %9314 = vmatmul.mubr.f32.gmra.mrb[0].mxu0 %v9061
      %v9315 = vpop.f32.mrb[0].mxu0
      %v9316 = vadd.f32 0.0, %v9315
      %v9317 = vpop.f32.mrb[0].mxu0
      %9318 = vmatprep.mubr.f32.mxu0 0.0
      %9319 = vmatmul.mubr.f32.gmra.mrb[0].mxu0 %v9064
      %v9320 = vpop.f32.mrb[0].mxu0
      %v9321 = vadd.f32 0.0, %v9320
      %v9322 = vpop.f32.mrb[0].mxu0
      %9323 = vmatprep.mubr.f32.mxu0 0.0
      %9324 = vmatmul.mubr.f32.gmra.mrb[0].mxu0 %v9067
      %v9325 = vpop.f32.mrb[0].mxu0
      %v9326 = vadd.f32 0.0, %v9325
      %v9327 = vpop.f32.mrb[0].mxu0
      %9328 = vmatprep.mubr.f32.mxu0 0.0
      %9329 = vmatmul.mubr.f32.gmra.mrb[0].mxu0 %v9070
      %v9330 = vpop.f32.mrb[0].mxu0
      %v9331 = vadd.f32 0.0, %v9330
      %v9332 = vpop.f32.mrb[0].mxu0
      %9333 = vmatprep.mubr.f32.mxu0 0.0
      %9334 = vmatmul.mubr.f32.gmra.mrb[0].mxu0 %v9073
      %v9335 = vpop.f32.mrb[0].mxu0
      %v9336 = vadd.f32 0.0, %v9335
      %v9337 = vpop.f32.mrb[0].mxu0
      %9338 = vmatprep.mubr.f32.mxu0 0.0
      %9339 = vmatmul.mubr.f32.gmra.mrb[0].mxu0 %v9076
      %v9340 = vpop.f32.mrb[0].mxu0
      %v9341 = vadd.f32 0.0, %v9340
      %v9342 = vpop.f32.mrb[0].mxu0
      %9343 = vmatprep.mubr.f32.mxu0 0.0
      %9344 = vmatmul.mubr.f32.gmra.mrb[0].mxu0 %v9079
      %v9345 = vpop.f32.mrb[0].mxu0
      %v9346 = vadd.f32 0.0, %v9345
      %v9347 = vpop.f32.mrb[0].mxu0
      %9348 = vmatprep.mubr.f32.mxu0 0.0
      %9349 = vmatmul.mubr.f32.gmra.mrb[0].mxu0 %v9082
      %v9350 = vpop.f32.mrb[0].mxu0
      %v9351 = vadd.f32 0.0, %v9350
      %v9352 = vpop.f32.mrb[0].mxu0
      %9353 = vdwg.mxu0
      %v9354 = vadd.f32 %v8876, %v9151
      %v9355 = vadd.f32 %v8877, %v9156
      %v9356 = vadd.f32 %v8878, %v9161
      %v9357 = vadd.f32 %v8879, %v9166
      %v9358 = vadd.f32 %v8880, %v9171
      %v9359 = vadd.f32 %v8881, %v9176
      %v9360 = vadd.f32 %v8882, %v9181
      %v9361 = vadd.f32 %v8883, %v9186
      %v9362 = vadd.f32 %v8884, %v9191
      %v9363 = vadd.f32 %v8885, %v9196
      %v9364 = vadd.f32 %v8886, %v9201
      %v9365 = vadd.f32 %v8887, %v9206
      %v9366 = vadd.f32 %v8888, %v9211
      %v9367 = vadd.f32 %v8889, %v9216
      %v9368 = vadd.f32 %v8890, %v9221
      %v9369 = vadd.f32 %v8891, %v9226
      %v9370 = vadd.f32 %v8892, %v9231
      %v9371 = vadd.f32 %v8893, %v9236
      %v9372 = vadd.f32 %v8894, %v9241
      %v9373 = vadd.f32 %v8895, %v9246
      %v9374 = vadd.f32 %v8896, %v9251
      %v9375 = vadd.f32 %v8897, %v9256
      %v9376 = vadd.f32 %v8898, %v9261
      %v9377 = vadd.f32 %v8899, %v9266
      %v9378 = vadd.f32 %v8900, %v9271
      %v9379 = vadd.f32 %v8901, %v9276
      %v9380 = vadd.f32 %v8902, %v9281
      %v9381 = vadd.f32 %v8903, %v9286
      %v9382 = vadd.f32 %v8904, %v9291
      %v9383 = vadd.f32 %v8905, %v9296
      %v9384 = vadd.f32 %v8906, %v9301
      %v9385 = vadd.f32 %v8907, %v9306
      %v9386 = vadd.f32 %v8908, %v9311
      %v9387 = vadd.f32 %v8909, %v9316
      %v9388 = vadd.f32 %v8910, %v9321
      %v9389 = vadd.f32 %v8911, %v9326
      %v9390 = vadd.f32 %v8912, %v9331
      %v9391 = vadd.f32 %v8913, %v9336
      %v9392 = vadd.f32 %v8914, %v9341
      %v9393 = vadd.f32 %v8915, %v9346
      %v9394 = vadd.f32 %v8916, %v9351
      %v9395 = vld [vmem:[%s6] sm:$0x1]
      %v9397 = vlaneseq
      %v9398 = vshrl.u32 %v9397, 7
      %v9399 = vsub.s32 0, %v9398
      %v9400 = vrot.slane %v9395, %v9399
      %v9402 = vadd.f32 %v9354, %v9400
      %v9403 = vadd.f32 %v9355, %v9400
      %v9404 = vadd.f32 %v9356, %v9400
      %v9405 = vadd.f32 %v9357, %v9400
      %v9406 = vadd.f32 %v9358, %v9400
      %v9407 = vadd.f32 %v9359, %v9400
      %v9408 = vadd.f32 %v9360, %v9400
      %v9409 = vadd.f32 %v9361, %v9400
      %v9410 = vadd.f32 %v9362, %v9400
      %v9411 = vadd.f32 %v9363, %v9400
      %v9412 = vadd.f32 %v9364, %v9400
      %v9413 = vadd.f32 %v9365, %v9400
      %v9414 = vadd.f32 %v9366, %v9400
      %v9415 = vadd.f32 %v9367, %v9400
      %v9416 = vadd.f32 %v9368, %v9400
      %v9417 = vadd.f32 %v9369, %v9400
      %v9418 = vadd.f32 %v9370, %v9400
      %v9419 = vadd.f32 %v9371, %v9400
      %v9420 = vadd.f32 %v9372, %v9400
      %v9421 = vadd.f32 %v9373, %v9400
      %v9422 = vadd.f32 %v9374, %v9400
      %v9423 = vadd.f32 %v9375, %v9400
      %v9424 = vadd.f32 %v9376, %v9400
      %v9425 = vadd.f32 %v9377, %v9400
      %v9426 = vadd.f32 %v9378, %v9400
      %v9427 = vadd.f32 %v9379, %v9400
      %v9428 = vadd.f32 %v9380, %v9400
      %v9429 = vadd.f32 %v9381, %v9400
      %v9430 = vadd.f32 %v9382, %v9400
      %v9431 = vadd.f32 %v9383, %v9400
      %v9432 = vadd.f32 %v9384, %v9400
      %v9433 = vadd.f32 %v9385, %v9400
      %v9434 = vadd.f32 %v9386, %v9400
      %v9435 = vadd.f32 %v9387, %v9400
      %v9436 = vadd.f32 %v9388, %v9400
      %v9437 = vadd.f32 %v9389, %v9400
      %v9438 = vadd.f32 %v9390, %v9400
      %v9439 = vadd.f32 %v9391, %v9400
      %v9440 = vadd.f32 %v9392, %v9400
      %v9441 = vadd.f32 %v9393, %v9400
      %v9442 = vadd.f32 %v9394, %v9400
      %v9443 = vmax.f32 %v9402, 0.0
      %v9444 = vmax.f32 %v9403, 0.0
      %v9445 = vmax.f32 %v9404, 0.0
      %v9446 = vmax.f32 %v9405, 0.0
      %v9447 = vmax.f32 %v9406, 0.0
      %v9448 = vmax.f32 %v9407, 0.0
      %v9449 = vmax.f32 %v9408, 0.0
      %v9450 = vmax.f32 %v9409, 0.0
      %v9451 = vmax.f32 %v9410, 0.0
      %v9452 = vmax.f32 %v9411, 0.0
      %v9453 = vmax.f32 %v9412, 0.0
      %v9454 = vmax.f32 %v9413, 0.0
      %v9455 = vmax.f32 %v9414, 0.0
      %v9456 = vmax.f32 %v9415, 0.0
      %v9457 = vmax.f32 %v9416, 0.0
      %v9458 = vmax.f32 %v9417, 0.0
      %v9459 = vmax.f32 %v9418, 0.0
      %v9460 = vmax.f32 %v9419, 0.0
      %v9461 = vmax.f32 %v9420, 0.0
      %v9462 = vmax.f32 %v9421, 0.0
      %v9463 = vmax.f32 %v9422, 0.0
      %v9464 = vmax.f32 %v9423, 0.0
      %v9465 = vmax.f32 %v9424, 0.0
      %v9466 = vmax.f32 %v9425, 0.0
      %v9467 = vmax.f32 %v9426, 0.0
      %v9468 = vmax.f32 %v9427, 0.0
      %v9469 = vmax.f32 %v9428, 0.0
      %v9470 = vmax.f32 %v9429, 0.0
      %v9471 = vmax.f32 %v9430, 0.0
      %v9472 = vmax.f32 %v9431, 0.0
      %v9473 = vmax.f32 %v9432, 0.0
      %v9474 = vmax.f32 %v9433, 0.0
      %v9475 = vmax.f32 %v9434, 0.0
      %v9476 = vmax.f32 %v9435, 0.0
      %v9477 = vmax.f32 %v9436, 0.0
      %v9478 = vmax.f32 %v9437, 0.0
      %v9479 = vmax.f32 %v9438, 0.0
      %v9480 = vmax.f32 %v9439, 0.0
      %v9481 = vmax.f32 %v9440, 0.0
      %v9482 = vmax.f32 %v9441, 0.0
      %v9483 = vmax.f32 %v9442, 0.0
      %v9484 = vsel %vm5045, %v9443, 0.0
      %v9485 = vsel %vm5046, %v9444, 0.0
      %v9486 = vsel %vm5047, %v9445, 0.0
      %v9487 = vsel %vm5048, %v9446, 0.0
      %v9488 = vsel %vm5049, %v9447, 0.0
      %v9489 = vsel %vm5050, %v9448, 0.0
      %v9490 = vsel %vm5051, %v9449, 0.0
      %v9491 = vsel %vm5052, %v9450, 0.0
      %v9492 = vsel %vm5053, %v9451, 0.0
      %v9493 = vsel %vm5054, %v9452, 0.0
      %v9494 = vsel %vm5055, %v9453, 0.0
      %v9495 = vsel %vm5056, %v9454, 0.0
      %v9496 = vsel %vm5057, %v9455, 0.0
      %v9497 = vsel %vm5058, %v9456, 0.0
      %v9498 = vsel %vm5059, %v9457, 0.0
      %v9499 = vsel %vm5060, %v9458, 0.0
      %v9500 = vsel %vm5061, %v9459, 0.0
      %v9501 = vsel %vm5062, %v9460, 0.0
      %v9502 = vsel %vm5063, %v9461, 0.0
      %v9503 = vsel %vm5064, %v9462, 0.0
      %v9504 = vsel %vm5065, %v9463, 0.0
      %v9505 = vsel %vm5066, %v9464, 0.0
      %v9506 = vsel %vm5067, %v9465, 0.0
      %v9507 = vsel %vm5068, %v9466, 0.0
      %v9508 = vsel %vm5069, %v9467, 0.0
      %v9509 = vsel %vm5070, %v9468, 0.0
      %v9510 = vsel %vm5071, %v9469, 0.0
      %v9511 = vsel %vm5072, %v9470, 0.0
      %v9512 = vsel %vm5073, %v9471, 0.0
      %v9513 = vsel %vm5074, %v9472, 0.0
      %v9514 = vsel %vm5075, %v9473, 0.0
      %v9515 = vsel %vm5076, %v9474, 0.0
      %v9516 = vsel %vm5077, %v9475, 0.0
      %v9517 = vsel %vm5078, %v9476, 0.0
      %v9518 = vsel %vm5079, %v9477, 0.0
      %v9519 = vsel %vm5080, %v9478, 0.0
      %v9520 = vsel %vm5081, %v9479, 0.0
      %v9521 = vsel %vm5082, %v9480, 0.0
      %v9522 = vsel %vm5083, %v9481, 0.0
      %v9523 = vsel %vm5084, %v9482, 0.0
      %v9524 = vsel %vm5085, %v9483, 0.0
      %vm9525 = vcmask 261120
      %v9526 = vsel %vm9525, %v9484, 0.0
      %v9527 = vsel %vm9525, %v9485, 0.0
      %v9528 = vadd.f32 %v9526, %v9527
      %v9529 = vsel %vm9525, %v9486, 0.0
      %v9530 = vadd.f32 %v9528, %v9529
      %v9531 = vsel %vm9525, %v9487, 0.0
      %v9532 = vadd.f32 %v9530, %v9531
      %v9533 = vsel %vm9525, %v9488, 0.0
      %v9534 = vadd.f32 %v9532, %v9533
      %v9535 = vsel %vm9525, %v9489, 0.0
      %v9536 = vadd.f32 %v9534, %v9535
      %v9537 = vsel %vm9525, %v9490, 0.0
      %v9538 = vadd.f32 %v9536, %v9537
      %v9539 = vsel %vm9525, %v9491, 0.0
      %v9540 = vadd.f32 %v9538, %v9539
      %v9541 = vsel %vm9525, %v9492, 0.0
      %v9542 = vadd.f32 %v9540, %v9541
      %v9543 = vsel %vm9525, %v9493, 0.0
      %v9544 = vadd.f32 %v9542, %v9543
      %v9545 = vsel %vm9525, %v9494, 0.0
      %v9546 = vadd.f32 %v9544, %v9545
      %v9547 = vsel %vm9525, %v9495, 0.0
      %v9548 = vadd.f32 %v9546, %v9547
      %v9549 = vsel %vm9525, %v9496, 0.0
      %v9550 = vadd.f32 %v9548, %v9549
      %v9551 = vsel %vm9525, %v9497, 0.0
      %v9552 = vadd.f32 %v9550, %v9551
      %v9553 = vsel %vm9525, %v9498, 0.0
      %v9554 = vadd.f32 %v9552, %v9553
      %v9555 = vsel %vm9525, %v9499, 0.0
      %v9556 = vadd.f32 %v9554, %v9555
      %v9557 = vsel %vm9525, %v9500, 0.0
      %v9558 = vadd.f32 %v9556, %v9557
      %v9559 = vsel %vm9525, %v9501, 0.0
      %v9560 = vadd.f32 %v9558, %v9559
      %v9561 = vsel %vm9525, %v9502, 0.0
      %v9562 = vadd.f32 %v9560, %v9561
      %v9563 = vsel %vm9525, %v9503, 0.0
      %v9564 = vadd.f32 %v9562, %v9563
      %v9565 = vsel %vm9525, %v9504, 0.0
      %v9566 = vadd.f32 %v9564, %v9565
      %v9567 = vsel %vm9525, %v9505, 0.0
      %v9568 = vadd.f32 %v9566, %v9567
      %v9569 = vsel %vm9525, %v9506, 0.0
      %v9570 = vadd.f32 %v9568, %v9569
      %v9571 = vsel %vm9525, %v9507, 0.0
      %v9572 = vadd.f32 %v9570, %v9571
      %v9573 = vsel %vm9525, %v9508, 0.0
      %v9574 = vadd.f32 %v9572, %v9573
      %v9575 = vsel %vm9525, %v9509, 0.0
      %v9576 = vadd.f32 %v9574, %v9575
      %v9577 = vsel %vm9525, %v9510, 0.0
      %v9578 = vadd.f32 %v9576, %v9577
      %v9579 = vsel %vm9525, %v9511, 0.0
      %v9580 = vadd.f32 %v9578, %v9579
      %v9581 = vsel %vm9525, %v9512, 0.0
      %v9582 = vadd.f32 %v9580, %v9581
      %v9583 = vsel %vm9525, %v9513, 0.0
      %v9584 = vadd.f32 %v9582, %v9583
      %v9585 = vsel %vm9525, %v9514, 0.0
      %v9586 = vadd.f32 %v9584, %v9585
      %v9587 = vsel %vm9525, %v9515, 0.0
      %v9588 = vadd.f32 %v9586, %v9587
      %v9589 = vsel %vm9525, %v9516, 0.0
      %v9590 = vadd.f32 %v9588, %v9589
      %v9591 = vsel %vm9525, %v9517, 0.0
      %v9592 = vadd.f32 %v9590, %v9591
      %v9593 = vsel %vm9525, %v9518, 0.0
      %v9594 = vadd.f32 %v9592, %v9593
      %v9595 = vsel %vm9525, %v9519, 0.0
      %v9596 = vadd.f32 %v9594, %v9595
      %v9597 = vsel %vm9525, %v9520, 0.0
      %v9598 = vadd.f32 %v9596, %v9597
      %v9599 = vsel %vm9525, %v9521, 0.0
      %v9600 = vadd.f32 %v9598, %v9599
      %v9601 = vsel %vm9525, %v9522, 0.0
      %v9602 = vadd.f32 %v9600, %v9601
      %v9603 = vsel %vm9525, %v9523, 0.0
      %v9604 = vadd.f32 %v9602, %v9603
      %vm9605 = vcmask 257024
      %v9606 = vsel %vm9605, %v9524, 0.0
      %v9607 = vadd.f32 %v9604, %v9606
      %v9608 = vrot.slane %v9607, 4
      %v9609 = vadd.f32 %v9607, %v9608
      %v9610 = vrot.slane %v9609, 2
      %v9611 = vadd.f32 %v9609, %v9610
      %v9612 = vrot.slane %v9611, 1
      %v9613 = vadd.f32 %v9611, %v9612
      %v9614 = vmul.f32 %v9613, 0.00390625
      %s9615 = sld [smem:[#allocation4 + %s32]]
      %v9616 = vlaneseq
      %v9617 = vand.u32 %v9616, 127
      %v9618 = vstv %s9615
      %vm9619 = vcmp.eq.s32.totalorder %v9617, %v9618
      %v9620 = vsel %vm9619, 1, 0
      %v9621 = vcvt.s32.f32 %v9620
      %v9622 = vld [vmem:[%s7] sm:$0xf]
      %vm9623 = vcmask 31744
      %v9625 = vsel %vm9623, %v9621, 0
      %vm9627 = vcmask 1043456
      %v9629 = vsel %vm9627, %v9622, 0
      %9631 = vmatprep.subr.mxu0 0.0
      %9632 = vmatpush1.msra.mxu0 %v9629
      %9633 = vmatprep.subr.mxu0 0.0
      %9634 = vmatpush1.msra.mxu0 0.0
      %9635 = vmatprep.subr.mxu0 0.0
      %9636 = vmatpush1.msra.mxu0 0.0
      %9637 = vmatprep.subr.mxu0 0.0
      %9638 = vmatpush1.msra.mxu0 0.0
      %9639 = vmatprep.subr.mxu0 0.0
      %9640 = vmatpush1.msra.mxu0 0.0
      %9641 = vmatprep.subr.mxu0 0.0
      %9642 = vmatpush1.msra.mxu0 0.0
      %9643 = vmatprep.subr.mxu0 0.0
      %9644 = vmatpush1.msra.mxu0 0.0
      %9645 = vmatprep.subr.mxu0 0.0
      %9646 = vmatpush1.msra.mxu0 0.0
      %9647 = vmatprep.subr.mxu0 0.0
      %9648 = vmatpush1.msra.mxu0 0.0
      %9649 = vmatprep.subr.mxu0 0.0
      %9650 = vmatpush1.msra.mxu0 0.0
      %9651 = vmatprep.subr.mxu0 0.0
      %9652 = vmatpush1.msra.mxu0 0.0
      %9653 = vmatprep.subr.mxu0 0.0
      %9654 = vmatpush1.msra.mxu0 0.0
      %9655 = vmatprep.subr.mxu0 0.0
      %9656 = vmatpush1.msra.mxu0 0.0
      %9657 = vmatprep.subr.mxu0 0.0
      %9658 = vmatpush1.msra.mxu0 0.0
      %9659 = vmatprep.subr.mxu0 0.0
      %9660 = vmatpush1.msra.mxu0 0.0
      %9661 = vmatprep.subr.mxu0 0.0
      %9662 = vmatpush1.msra.mxu0 0.0
      %9663 = vmatprep.subr.mxu0 0.0
      %9664 = vmatpush1.msra.mxu0 0.0
      %9665 = vmatprep.subr.mxu0 0.0
      %9666 = vmatpush1.msra.mxu0 0.0
      %9667 = vmatprep.subr.mxu0 0.0
      %9668 = vmatpush1.msra.mxu0 0.0
      %9669 = vmatprep.subr.mxu0 0.0
      %9670 = vmatpush1.msra.mxu0 0.0
      %9671 = vmatprep.subr.mxu0 0.0
      %9672 = vmatpush1.msra.mxu0 0.0
      %9673 = vmatprep.subr.mxu0 0.0
      %9674 = vmatpush1.msra.mxu0 0.0
      %9675 = vmatprep.subr.mxu0 0.0
      %9676 = vmatpush1.msra.mxu0 0.0
      %9677 = vmatprep.subr.mxu0 0.0
      %9678 = vmatpush1.msra.mxu0 0.0
      %9679 = vmatprep.subr.mxu0 0.0
      %9680 = vmatpush1.msra.mxu0 0.0
      %9681 = vmatprep.subr.mxu0 0.0
      %9682 = vmatpush1.msra.mxu0 0.0
      %9683 = vmatprep.subr.mxu0 0.0
      %9684 = vmatpush1.msra.mxu0 0.0
      %9685 = vmatprep.subr.mxu0 0.0
      %9686 = vmatpush1.msra.mxu0 0.0
      %9687 = vmatprep.subr.mxu0 0.0
      %9688 = vmatpush1.msra.mxu0 0.0
      %9689 = vmatprep.subr.mxu0 0.0
      %9690 = vmatpush1.msra.mxu0 0.0
      %9691 = vmatprep.subr.mxu0 0.0
      %9692 = vmatpush1.msra.mxu0 0.0
      %9693 = vmatprep.subr.mxu0 0.0
      %9694 = vmatpush1.msra.mxu0 0.0
      %9695 = vmatprep.mubr.f32.mxu0 0.0
      %9696 = vmatmul.mubr.f32.gmra.mrb[0].mxu0 %v9625
      %v9697 = vpop.f32.mrb[0].mxu0
      %v9698 = vadd.f32 0.0, %v9697
      %v9699 = vpop.f32.mrb[0].mxu0
      %9700 = vdwg.mxu0
      %v9701 = vld [vmem:[%s8] sm:$0xff]
      %v9702 = vld [vmem:[%s8 + $0x8] sm:$0xff]
      %v9703 = vld [vmem:[%s8 + $0x10] sm:$0xff]
      %v9704 = vld [vmem:[%s8 + $0x18] sm:$0xff]
      %v9705 = vld [vmem:[%s9] sm:$0xff]
      %vm9706 = vcmask 64512
      %v9708 = vsel %vm9706, %v9698, 0
      %9710 = vmatprep.subr.mxu0 0.0
      %9711 = vmatpush1.msra.mxu0 %v9705
      %9712 = vmatprep.subr.mxu0 0.0
      %9713 = vmatpush1.msra.mxu0 0.0
      %9714 = vmatprep.subr.mxu0 0.0
      %9715 = vmatpush1.msra.mxu0 0.0
      %9716 = vmatprep.subr.mxu0 0.0
      %9717 = vmatpush1.msra.mxu0 0.0
      %9718 = vmatprep.subr.mxu0 0.0
      %9719 = vmatpush1.msra.mxu0 0.0
      %9720 = vmatprep.subr.mxu0 0.0
      %9721 = vmatpush1.msra.mxu0 0.0
      %9722 = vmatprep.subr.mxu0 0.0
      %9723 = vmatpush1.msra.mxu0 0.0
      %9724 = vmatprep.subr.mxu0 0.0
      %9725 = vmatpush1.msra.mxu0 0.0
      %9726 = vmatprep.subr.mxu0 0.0
      %9727 = vmatpush1.msra.mxu0 0.0
      %9728 = vmatprep.subr.mxu0 0.0
      %9729 = vmatpush1.msra.mxu0 0.0
      %9730 = vmatprep.subr.mxu0 0.0
      %9731 = vmatpush1.msra.mxu0 0.0
      %9732 = vmatprep.subr.mxu0 0.0
      %9733 = vmatpush1.msra.mxu0 0.0
      %9734 = vmatprep.subr.mxu0 0.0
      %9735 = vmatpush1.msra.mxu0 0.0
      %9736 = vmatprep.subr.mxu0 0.0
      %9737 = vmatpush1.msra.mxu0 0.0
      %9738 = vmatprep.subr.mxu0 0.0
      %9739 = vmatpush1.msra.mxu0 0.0
      %9740 = vmatprep.subr.mxu0 0.0
      %9741 = vmatpush1.msra.mxu0 0.0
      %9742 = vmatprep.subr.mxu0 0.0
      %9743 = vmatpush1.msra.mxu0 0.0
      %9744 = vmatprep.subr.mxu0 0.0
      %9745 = vmatpush1.msra.mxu0 0.0
      %9746 = vmatprep.subr.mxu0 0.0
      %9747 = vmatpush1.msra.mxu0 0.0
      %9748 = vmatprep.subr.mxu0 0.0
      %9749 = vmatpush1.msra.mxu0 0.0
      %9750 = vmatprep.subr.mxu0 0.0
      %9751 = vmatpush1.msra.mxu0 0.0
      %9752 = vmatprep.subr.mxu0 0.0
      %9753 = vmatpush1.msra.mxu0 0.0
      %9754 = vmatprep.subr.mxu0 0.0
      %9755 = vmatpush1.msra.mxu0 0.0
      %9756 = vmatprep.subr.mxu0 0.0
      %9757 = vmatpush1.msra.mxu0 0.0
      %9758 = vmatprep.subr.mxu0 0.0
      %9759 = vmatpush1.msra.mxu0 0.0
      %9760 = vmatprep.subr.mxu0 0.0
      %9761 = vmatpush1.msra.mxu0 0.0
      %9762 = vmatprep.subr.mxu0 0.0
      %9763 = vmatpush1.msra.mxu0 0.0
      %9764 = vmatprep.subr.mxu0 0.0
      %9765 = vmatpush1.msra.mxu0 0.0
      %9766 = vmatprep.subr.mxu0 0.0
      %9767 = vmatpush1.msra.mxu0 0.0
      %9768 = vmatprep.subr.mxu0 0.0
      %9769 = vmatpush1.msra.mxu0 0.0
      %9770 = vmatprep.subr.mxu0 0.0
      %9771 = vmatpush1.msra.mxu0 0.0
      %9772 = vmatprep.subr.mxu0 0.0
      %9773 = vmatpush1.msra.mxu0 0.0
      %9774 = vmatprep.mubr.f32.mxu0 0.0
      %9775 = vmatmul.mubr.f32.gmra.mrb[0].mxu0 %v9708
      %v9776 = vpop.f32.mrb[0].mxu0
      %v9777 = vadd.f32 0.0, %v9776
      %v9778 = vpop.f32.mrb[0].mxu0
      %9779 = vdwg.mxu0
      %v9781 = vsel %vm9525, %v9614, 0
      %9783 = vmatprep.subr.mxu0 0.0
      %9784 = vmatpush1.msra.mxu0 %v9701
      %9785 = vmatprep.subr.mxu0 0.0
      %9786 = vmatpush1.msra.mxu0 %v9702
      %9787 = vmatprep.subr.mxu0 0.0
      %9788 = vmatpush1.msra.mxu0 %v9703
      %9789 = vmatprep.subr.mxu0 0.0
      %9790 = vmatpush1.msra.mxu0 %v9704
      %9791 = vmatprep.subr.mxu0 0.0
      %9792 = vmatpush1.msra.mxu0 0.0
      %9793 = vmatprep.subr.mxu0 0.0
      %9794 = vmatpush1.msra.mxu0 0.0
      %9795 = vmatprep.subr.mxu0 0.0
      %9796 = vmatpush1.msra.mxu0 0.0
      %9797 = vmatprep.subr.mxu0 0.0
      %9798 = vmatpush1.msra.mxu0 0.0
      %9799 = vmatprep.subr.mxu0 0.0
      %9800 = vmatpush1.msra.mxu0 0.0
      %9801 = vmatprep.subr.mxu0 0.0
      %9802 = vmatpush1.msra.mxu0 0.0
      %9803 = vmatprep.subr.mxu0 0.0
      %9804 = vmatpush1.msra.mxu0 0.0
      %9805 = vmatprep.subr.mxu0 0.0
      %9806 = vmatpush1.msra.mxu0 0.0
      %9807 = vmatprep.subr.mxu0 0.0
      %9808 = vmatpush1.msra.mxu0 0.0
      %9809 = vmatprep.subr.mxu0 0.0
      %9810 = vmatpush1.msra.mxu0 0.0
      %9811 = vmatprep.subr.mxu0 0.0
      %9812 = vmatpush1.msra.mxu0 0.0
      %9813 = vmatprep.subr.mxu0 0.0
      %9814 = vmatpush1.msra.mxu0 0.0
      %9815 = vmatprep.subr.mxu0 0.0
      %9816 = vmatpush1.msra.mxu0 0.0
      %9817 = vmatprep.subr.mxu0 0.0
      %9818 = vmatpush1.msra.mxu0 0.0
      %9819 = vmatprep.subr.mxu0 0.0
      %9820 = vmatpush1.msra.mxu0 0.0
      %9821 = vmatprep.subr.mxu0 0.0
      %9822 = vmatpush1.msra.mxu0 0.0
      %9823 = vmatprep.subr.mxu0 0.0
      %9824 = vmatpush1.msra.mxu0 0.0
      %9825 = vmatprep.subr.mxu0 0.0
      %9826 = vmatpush1.msra.mxu0 0.0
      %9827 = vmatprep.subr.mxu0 0.0
      %9828 = vmatpush1.msra.mxu0 0.0
      %9829 = vmatprep.subr.mxu0 0.0
      %9830 = vmatpush1.msra.mxu0 0.0
      %9831 = vmatprep.subr.mxu0 0.0
      %9832 = vmatpush1.msra.mxu0 0.0
      %9833 = vmatprep.subr.mxu0 0.0
      %9834 = vmatpush1.msra.mxu0 0.0
      %9835 = vmatprep.subr.mxu0 0.0
      %9836 = vmatpush1.msra.mxu0 0.0
      %9837 = vmatprep.subr.mxu0 0.0
      %9838 = vmatpush1.msra.mxu0 0.0
      %9839 = vmatprep.subr.mxu0 0.0
      %9840 = vmatpush1.msra.mxu0 0.0
      %9841 = vmatprep.subr.mxu0 0.0
      %9842 = vmatpush1.msra.mxu0 0.0
      %9843 = vmatprep.subr.mxu0 0.0
      %9844 = vmatpush1.msra.mxu0 0.0
      %9845 = vmatprep.subr.mxu0 0.0
      %9846 = vmatpush1.msra.mxu0 0.0
      %9847 = vmatprep.mubr.f32.mxu0 0.0
      %9848 = vmatmul.mubr.f32.gmra.mrb[0].mxu0 %v9781
      %v9849 = vpop.f32.mrb[0].mxu0
      %v9850 = vadd.f32 %v9777, %v9849
      %v9851 = vpop.f32.mrb[0].mxu0
      %9852 = vdwg.mxu0
      %v9853 = vld [vmem:[%s10] sm:$0x1]
      %v9854 = vadd.f32 %v9850, %v9853
      %v9855 = vmax.f32 %v9854, 0.0
      %v9856 = vld [vmem:[%s11] sm:$0xff]
      %v9857 = vld [vmem:[%s11 + $0x8] sm:$0xff]
      %v9858 = vld [vmem:[%s11 + $0x10] sm:$0xff]
      %v9859 = vld [vmem:[%s11 + $0x18] sm:$0xff]
      %v9860 = vld [vmem:[%s11 + $0x20] sm:$0xff]
      %v9861 = vld [vmem:[%s11 + $0x28] sm:$0xff]
      %v9862 = vld [vmem:[%s11 + $0x30] sm:$0xff]
      %v9863 = vld [vmem:[%s11 + $0x38] sm:$0xff]
      %v9864 = vld [vmem:[%s11 + $0x40] sm:$0xff]
      %v9865 = vld [vmem:[%s11 + $0x48] sm:$0xff]
      %v9866 = vld [vmem:[%s11 + $0x50] sm:$0xff]
      %v9867 = vld [vmem:[%s11 + $0x58] sm:$0xff]
      %v9868 = vld [vmem:[%s11 + $0x60] sm:$0xff]
      %v9869 = vld [vmem:[%s11 + $0x68] sm:$0xff]
      %v9870 = vld [vmem:[%s11 + $0x70] sm:$0xff]
      %v9871 = vld [vmem:[%s11 + $0x78] sm:$0xff]
      %v9872 = vld [vmem:[%s12] sm:$0x1]
      %9873 = vmatprep.subr.mxu0 0.0
      %9874 = vmatpush1.msra.mxu0 %v9856
      %9875 = vmatprep.subr.mxu0 0.0
      %9876 = vmatpush1.msra.mxu0 %v9857
      %9877 = vmatprep.subr.mxu0 0.0
      %9878 = vmatpush1.msra.mxu0 %v9858
      %9879 = vmatprep.subr.mxu0 0.0
      %9880 = vmatpush1.msra.mxu0 %v9859
      %9881 = vmatprep.subr.mxu0 0.0
      %9882 = vmatpush1.msra.mxu0 %v9860
      %9883 = vmatprep.subr.mxu0 0.0
      %9884 = vmatpush1.msra.mxu0 %v9861
      %9885 = vmatprep.subr.mxu0 0.0
      %9886 = vmatpush1.msra.mxu0 %v9862
      %9887 = vmatprep.subr.mxu0 0.0
      %9888 = vmatpush1.msra.mxu0 %v9863
      %9889 = vmatprep.subr.mxu0 0.0
      %9890 = vmatpush1.msra.mxu0 %v9864
      %9891 = vmatprep.subr.mxu0 0.0
      %9892 = vmatpush1.msra.mxu0 %v9865
      %9893 = vmatprep.subr.mxu0 0.0
      %9894 = vmatpush1.msra.mxu0 %v9866
      %9895 = vmatprep.subr.mxu0 0.0
      %9896 = vmatpush1.msra.mxu0 %v9867
      %9897 = vmatprep.subr.mxu0 0.0
      %9898 = vmatpush1.msra.mxu0 %v9868
      %9899 = vmatprep.subr.mxu0 0.0
      %9900 = vmatpush1.msra.mxu0 %v9869
      %9901 = vmatprep.subr.mxu0 0.0
      %9902 = vmatpush1.msra.mxu0 %v9870
      %9903 = vmatprep.subr.mxu0 0.0
      %9904 = vmatpush1.msra.mxu0 %v9871
      %9905 = vmatprep.subr.mxu0 0.0
      %9906 = vmatpush1.msra.mxu0 0.0
      %9907 = vmatprep.subr.mxu0 0.0
      %9908 = vmatpush1.msra.mxu0 0.0
      %9909 = vmatprep.subr.mxu0 0.0
      %9910 = vmatpush1.msra.mxu0 0.0
      %9911 = vmatprep.subr.mxu0 0.0
      %9912 = vmatpush1.msra.mxu0 0.0
      %9913 = vmatprep.subr.mxu0 0.0
      %9914 = vmatpush1.msra.mxu0 0.0
      %9915 = vmatprep.subr.mxu0 0.0
      %9916 = vmatpush1.msra.mxu0 0.0
      %9917 = vmatprep.subr.mxu0 0.0
      %9918 = vmatpush1.msra.mxu0 0.0
      %9919 = vmatprep.subr.mxu0 0.0
      %9920 = vmatpush1.msra.mxu0 0.0
      %9921 = vmatprep.subr.mxu0 0.0
      %9922 = vmatpush1.msra.mxu0 0.0
      %9923 = vmatprep.subr.mxu0 0.0
      %9924 = vmatpush1.msra.mxu0 0.0
      %9925 = vmatprep.subr.mxu0 0.0
      %9926 = vmatpush1.msra.mxu0 0.0
      %9927 = vmatprep.subr.mxu0 0.0
      %9928 = vmatpush1.msra.mxu0 0.0
      %9929 = vmatprep.subr.mxu0 0.0
      %9930 = vmatpush1.msra.mxu0 0.0
      %9931 = vmatprep.subr.mxu0 0.0
      %9932 = vmatpush1.msra.mxu0 0.0
      %9933 = vmatprep.subr.mxu0 0.0
      %9934 = vmatpush1.msra.mxu0 0.0
      %9935 = vmatprep.subr.mxu0 0.0
      %9936 = vmatpush1.msra.mxu0 0.0
      %9937 = vmatprep.mubr.f32.mxu0 0.0
      %9938 = vmatmul.mubr.f32.gmra.mrb[0].mxu0 %v9855
      %v9939 = vpop.f32.mrb[0].mxu0
      %v9940 = vadd.f32 %v9872, %v9939
      %v9941 = vpop.f32.mrb[0].mxu0
      %9942 = vdwg.mxu0
      %v9943 = vmax.f32 %v9940, 0.0
      %v9944 = vld [vmem:[%s13] sm:$0xff]
      %v9945 = vld [vmem:[%s13 + $0x8] sm:$0xff]
      %v9946 = vld [vmem:[%s13 + $0x10] sm:$0xff]
      %v9947 = vld [vmem:[%s13 + $0x18] sm:$0xff]
      %v9948 = vld [vmem:[%s13 + $0x20] sm:$0xff]
      %v9949 = vld [vmem:[%s13 + $0x28] sm:$0xff]
      %v9950 = vld [vmem:[%s13 + $0x30] sm:$0xff]
      %v9951 = vld [vmem:[%s13 + $0x38] sm:$0xff]
      %v9952 = vld [vmem:[%s14] sm:$0x1]
      %vm9953 = vcmask 523264
      %v9955 = vsel %vm9953, %v9943, 0
      %9957 = vmatprep.subr.mxu0 0.0
      %9958 = vmatpush1.msra.mxu0 %v9944
      %9959 = vmatprep.subr.mxu0 0.0
      %9960 = vmatpush1.msra.mxu0 %v9945
      %9961 = vmatprep.subr.mxu0 0.0
      %9962 = vmatpush1.msra.mxu0 %v9946
      %9963 = vmatprep.subr.mxu0 0.0
      %9964 = vmatpush1.msra.mxu0 %v9947
      %9965 = vmatprep.subr.mxu0 0.0
      %9966 = vmatpush1.msra.mxu0 %v9948
      %9967 = vmatprep.subr.mxu0 0.0
      %9968 = vmatpush1.msra.mxu0 %v9949
      %9969 = vmatprep.subr.mxu0 0.0
      %9970 = vmatpush1.msra.mxu0 %v9950
      %9971 = vmatprep.subr.mxu0 0.0
      %9972 = vmatpush1.msra.mxu0 %v9951
      %9973 = vmatprep.subr.mxu0 0.0
      %9974 = vmatpush1.msra.mxu0 0.0
      %9975 = vmatprep.subr.mxu0 0.0
      %9976 = vmatpush1.msra.mxu0 0.0
      %9977 = vmatprep.subr.mxu0 0.0
      %9978 = vmatpush1.msra.mxu0 0.0
      %9979 = vmatprep.subr.mxu0 0.0
      %9980 = vmatpush1.msra.mxu0 0.0
      %9981 = vmatprep.subr.mxu0 0.0
      %9982 = vmatpush1.msra.mxu0 0.0
      %9983 = vmatprep.subr.mxu0 0.0
      %9984 = vmatpush1.msra.mxu0 0.0
      %9985 = vmatprep.subr.mxu0 0.0
      %9986 = vmatpush1.msra.mxu0 0.0
      %9987 = vmatprep.subr.mxu0 0.0
      %9988 = vmatpush1.msra.mxu0 0.0
      %9989 = vmatprep.subr.mxu0 0.0
      %9990 = vmatpush1.msra.mxu0 0.0
      %9991 = vmatprep.subr.mxu0 0.0
      %9992 = vmatpush1.msra.mxu0 0.0
      %9993 = vmatprep.subr.mxu0 0.0
      %9994 = vmatpush1.msra.mxu0 0.0
      %9995 = vmatprep.subr.mxu0 0.0
      %9996 = vmatpush1.msra.mxu0 0.0
      %9997 = vmatprep.subr.mxu0 0.0
      %9998 = vmatpush1.msra.mxu0 0.0
      %9999 = vmatprep.subr.mxu0 0.0
      %10000 = vmatpush1.msra.mxu0 0.0
      %10001 = vmatprep.subr.mxu0 0.0
      %10002 = vmatpush1.msra.mxu0 0.0
      %10003 = vmatprep.subr.mxu0 0.0
      %10004 = vmatpush1.msra.mxu0 0.0
      %10005 = vmatprep.subr.mxu0 0.0
      %10006 = vmatpush1.msra.mxu0 0.0
      %10007 = vmatprep.subr.mxu0 0.0
      %10008 = vmatpush1.msra.mxu0 0.0
      %10009 = vmatprep.subr.mxu0 0.0
      %10010 = vmatpush1.msra.mxu0 0.0
      %10011 = vmatprep.subr.mxu0 0.0
      %10012 = vmatpush1.msra.mxu0 0.0
      %10013 = vmatprep.subr.mxu0 0.0
      %10014 = vmatpush1.msra.mxu0 0.0
      %10015 = vmatprep.subr.mxu0 0.0
      %10016 = vmatpush1.msra.mxu0 0.0
      %10017 = vmatprep.subr.mxu0 0.0
      %10018 = vmatpush1.msra.mxu0 0.0
      %10019 = vmatprep.subr.mxu0 0.0
      %10020 = vmatpush1.msra.mxu0 0.0
      %10021 = vmatprep.mubr.f32.mxu0 0.0
      %10022 = vmatmul.mubr.f32.gmra.mrb[0].mxu0 %v9955
      %v10023 = vpop.f32.mrb[0].mxu0
      %v10024 = vadd.f32 %v9952, %v10023
      %v10025 = vpop.f32.mrb[0].mxu0
      %10026 = vdwg.mxu0
      %10027 = vst [vmem:[%s470] sm:$0x1] %v10024
      %p10028 = scmp.lt.s32.totalorder %s32, 1
      %s10029 = scalar_select %p10028, %s32, 1
      %s10030 = scalar_lea.vmem %s15, %s10029
      // Predicated region
      $region77: #{pallas_forward.1} parent=75 // pred_check
        %p10031 = pneg %p349
      $region78: #{pallas_forward.1} parent=75 // pred_check_branch
        %10033 = sbr.rel (%p10031) target = $region80
      $region79: #{pallas_forward.1} parent=75 // pred_region
        _
      $region80: #{pallas_forward.1} parent=75 // pred_fallthru
        _
    $region76: #{pallas_forward.1} parent=5 // pred_fallthru
      _
    %p10034 = scmp.le.s32.totalorder 2, %s27
    // Predicated region
    $region81: #{pallas_forward.1} parent=5 // pred_check
      %p10035 = pneg %p10034
    $region82: #{pallas_forward.1} parent=5 // pred_check_branch
      %10037 = sbr.rel (%p10035) target = $region84
    $region83: #{pallas_forward.1} parent=5 // pred_region
      %s10038 = ssub.s32 %s27, 2
      // Predicated region
      $region85: #{pallas_forward.1} parent=83 // pred_check
        %p10039 = pneg %p355
      $region86: #{pallas_forward.1} parent=83 // pred_check_branch
        %10041 = sbr.rel (%p10039) target = $region88
      $region87: #{pallas_forward.1} parent=83 // pred_region
        %p10042 = scmp.lt.s32.totalorder %s33, 1
        %s10043 = scalar_select %p10042, %s33, 1
        %s10044 = scalar_lea.vmem %s15, %s10043
      $region88: #{pallas_forward.1} parent=83 // pred_fallthru
        _
    $region84: #{pallas_forward.1} parent=5 // pred_fallthru
      _
  $region6: #{pallas_forward.1} parent=0 // loop_footer
    %s31 = sadd.s32 1, %s27
  $region7: #{pallas_forward.1} parent=0 // loop_footer_branch
    %26 = sbr.rel target = $region3
  $region8: #{pallas_forward.1} parent=0 // loop_exit
    _

</llo_original>
